<compile_context>
chip_gen: v5e
topology: v5e:2x2
jax: 0.10.0
libtpu: 0.0.40
codegen_flags: <defaults>
</compile_context>

<pallas_src>
import jax
import jax.numpy as jnp
from jax.experimental import pallas as pl
from jax.experimental.pallas import tpu as pltpu

EPS = 1e-5


def residual_block_kernel(x_ref, w1_ref, g1_ref, be1_ref,
                          w2_ref, g2_ref, be2_ref,
                          o_ref, xpad_ref, patch_ref):
    # x_ref  : (N, H, W, C)        f32 input
    # wK_ref : (KP, CO)            bf16 packed im2col weights, row = k*C + ci
    # gK/beK : (1, CO)             f32 BN affine (zero-padded past C)
    # o_ref  : (N*H*W, CO)         f32 lane-dense output slab
    # xpad   : (N, H+2, W+2, C)    f32 scratch, reused for x then y1
    # patch  : (N*H*W, KP)         f32 packed im2col patch scratch
    N, H, W, C = x_ref.shape
    NHW = N * H * W
    CO = o_ref.shape[-1]
    inv_count = 1.0 / NHW

    # Zero-fill both scratches exactly once: the halo of xpad and the K tail
    # (lanes 9*C..KP) of the patch stay zero for both convolutions.
    xpad_ref[...] = jnp.zeros(xpad_ref.shape, xpad_ref.dtype)
    patch_ref[...] = jnp.zeros(patch_ref.shape, patch_ref.dtype)
    xpad_ref[:, 1:H + 1, 1:W + 1, :] = x_ref[...]

    def fill_patch():
        # Write each 3x3 tap's C real channels straight into its K lane slot
        # (no concatenate, no 128-lane-per-tap inflation).
        for k in range(9):
            dh, dw = k // 3, k % 3
            tap = xpad_ref[:, dh:dh + H, dw:dw + W, :].reshape(NHW, C)
            patch_ref[:, k * C:(k + 1) * C] = tap

    def conv_bn(w_ref, g_ref, b_ref):
        # bf16 MXU matmul with f32 accumulation, then one-pass training-mode
        # BatchNorm (biased variance) in f32.
        y = jnp.dot(patch_ref[...].astype(jnp.bfloat16), w_ref[...],
                    preferred_element_type=jnp.float32)
        s1 = jnp.sum(y, axis=0, keepdims=True)
        s2 = jnp.sum(y * y, axis=0, keepdims=True)
        mean = s1 * inv_count
        var = jnp.maximum(s2 * inv_count - mean * mean, 0.0)
        scale = jax.lax.rsqrt(var + EPS) * g_ref[...]
        return (y - mean) * scale + b_ref[...]

    # conv1 (bias cancelled by BN) -> bn1 -> relu.
    fill_patch()
    y1 = jnp.maximum(conv_bn(w1_ref, g1_ref, be1_ref), 0.0)

    # Re-pad the interior with y1 (halo stays zero) and run conv2 -> bn2.
    xpad_ref[:, 1:H + 1, 1:W + 1, :] = y1[:, :C].reshape(N, H, W, C)
    fill_patch()
    y2 = conv_bn(w2_ref, g2_ref, be2_ref)

    # Residual add (+x) then ReLU, stored as one unmasked full-lane slab.
    res = x_ref[...].reshape(NHW, C)
    if CO > C:
        res = jnp.concatenate(
            [res, jnp.zeros((NHW, CO - C), jnp.float32)], axis=-1)
    o_ref[...] = jnp.maximum(y2 + res, 0.0)


def residual_block(x, w1, b1, g1, be1, w2, b2, g2, be2):
    """x: (N, H, W, C) f32 NHWC; wK: (3,3,C,C) HWIO; gK/beK/bK: (C,).

    Conv biases b1/b2 are accepted for interface parity with nn.Conv2d but
    are NOT used: a per-channel constant bias is exactly cancelled by the
    training-mode BatchNorm mean subtraction that immediately follows each
    conv (verified against the biased reference below).
    """
    del b1, b2  # redundant under training-mode BN
    N, H, W, C = x.shape
    NHW = N * H * W
    K = 9 * C
    KP = ((K + 127) // 128) * 128       # packed-K lanes (one block for C<=14)
    CO = ((C + 127) // 128) * 128       # lane-dense output channel padding

    def prep_w(wgt):
        # (3,3,C,C) HWIO -> (KP, CO) bf16; row index = (dh*3+dw)*C + ci.
        wp = jnp.zeros((KP, CO), jnp.float32)
        wp = wp.at[:K, :C].set(wgt.astype(jnp.float32).reshape(K, C))
        return wp.astype(jnp.bfloat16)

    def prep_v(v):
        vp = jnp.zeros((1, CO), jnp.float32)
        return vp.at[:, :C].set(v.astype(jnp.float32).reshape(1, C))

    args = (x.astype(jnp.float32),
            prep_w(w1), prep_v(g1), prep_v(be1),
            prep_w(w2), prep_v(g2), prep_v(be2))

    def full_spec(shape):
        nd = len(shape)
        return pl.BlockSpec(tuple(shape), lambda i, _nd=nd: (0,) * _nd)

    out = pl.pallas_call(
        residual_block_kernel,
        out_shape=jax.ShapeDtypeStruct((NHW, CO), jnp.float32),
        grid_spec=pltpu.PrefetchScalarGridSpec(
            num_scalar_prefetch=0,
            grid=(1,),
            in_specs=[full_spec(a.shape) for a in args],
            out_specs=full_spec((NHW, CO)),
            scratch_shapes=[
                pltpu.VMEM((N, H + 2, W + 2, C), jnp.float32),  # padded act
                pltpu.VMEM((NHW, KP), jnp.float32),             # packed patch
            ]),
        compiler_params=pltpu.CompilerParams(
            dimension_semantics=("arbitrary",),
            vmem_limit_bytes=32 * 1024 * 1024),
    )(*args)

    # Lane-dense slab -> NHWC (channel tail is zero padding; contiguous slice).
    return out[:, :C].reshape(N, H, W, C)


def residual_block_ref(x, w1, b1, g1, be1, w2, b2, g2, be2):
    """Pure-JAX reference (NHWC / HWIO) mirroring the PyTorch forward,
    including the conv biases (proves the bias cancellation)."""
    def conv(y, w, b):
        z = jax.lax.conv_general_dilated(
            y, w, window_strides=(1, 1), padding="SAME",
            dimension_numbers=("NHWC", "HWIO", "NHWC"))
        return z + b.reshape(1, 1, 1, -1)

    def bn(y, g, b):
        m = y.mean(axis=(0, 1, 2), keepdims=True)
        v = ((y - m) ** 2).mean(axis=(0, 1, 2), keepdims=True)
        return (y - m) * jax.lax.rsqrt(v + EPS) * g.reshape(1, 1, 1, -1) \
            + b.reshape(1, 1, 1, -1)

    out = jnp.maximum(bn(conv(x, w1, b1), g1, be1), 0.0)
    out = bn(conv(out, w2, b2), g2, be2)
    return jnp.maximum(out + x, 0.0)


if __name__ == "__main__":
    N, H, W, C = 2, 16, 16, 4  # small shapes consistent with ResidualBlock(channels=4)

    key = jax.random.PRNGKey(0)
    kx, kw1, kb1, kg1, kbe1, kw2, kb2, kg2, kbe2 = jax.random.split(key, 9)

    x = jax.random.normal(kx, (N, H, W, C), jnp.float32)

    # Deterministic synthetic parameters (conv weights HWIO, BN affine per channel).
    w1 = jax.random.normal(kw1, (3, 3, C, C), jnp.float32) * 0.1
    b1 = jax.random.normal(kb1, (C,), jnp.float32) * 0.1   # non-zero: cancelled by BN
    g1 = 1.0 + 0.1 * jax.random.normal(kg1, (C,), jnp.float32)
    be1 = 0.1 * jax.random.normal(kbe1, (C,), jnp.float32)
    w2 = jax.random.normal(kw2, (3, 3, C, C), jnp.float32) * 0.1
    b2 = jax.random.normal(kb2, (C,), jnp.float32) * 0.1
    g2 = 1.0 + 0.1 * jax.random.normal(kg2, (C,), jnp.float32)
    be2 = 0.1 * jax.random.normal(kbe2, (C,), jnp.float32)

    out = residual_block(x, w1, b1, g1, be1, w2, b2, g2, be2)
    out = jax.block_until_ready(out)

    ref = residual_block_ref(x, w1, b1, g1, be1, w2, b2, g2, be2)
    ref = jax.block_until_ready(ref)

    assert out.shape == (N, H, W, C)
    # Tolerance covers bf16 matmul operands (f32 accumulation / BN stats):
    # ~0.3% relative error through two conv+BN stages.
    max_err = float(jnp.max(jnp.abs(out - ref)))
    assert max_err < 2e-2, f"mismatch vs reference: max abs err {max_err}"

    print("KERNEL_OK")
</pallas_src>

<mosaic_0001>
module attributes {stable_mosaic.version = 11 : i64} {
  func.func @residual_block_kernel(%arg0: i32, %arg1: memref<2x16x16x4xf32, #tpu.memory_space<vmem>>, %arg2: memref<128x128xbf16, #tpu.memory_space<vmem>>, %arg3: memref<1x128xf32, #tpu.memory_space<vmem>>, %arg4: memref<1x128xf32, #tpu.memory_space<vmem>>, %arg5: memref<128x128xbf16, #tpu.memory_space<vmem>>, %arg6: memref<1x128xf32, #tpu.memory_space<vmem>>, %arg7: memref<1x128xf32, #tpu.memory_space<vmem>>, %arg8: memref<512x128xf32, #tpu.memory_space<vmem>>, %arg9: memref<2x18x18x4xf32, #tpu.memory_space<vmem>>, %arg10: memref<512x128xf32, #tpu.memory_space<vmem>>) attributes {dimension_semantics = [#tpu.dimension_semantics<arbitrary>], iteration_bounds = array<i64: 1>, scalar_prefetch = 0 : i64, scratch_operands = 2 : i64, tpu.core_type = #tpu.core_type<tc>, window_params = [{pipeline_mode = #tpu.pipeline_mode<synchronous>, transform_indices = @transform_0, window_bounds = array<i64: 2, 16, 16, 4>}, {pipeline_mode = #tpu.pipeline_mode<synchronous>, transform_indices = @transform_1, window_bounds = array<i64: 128, 128>}, {pipeline_mode = #tpu.pipeline_mode<synchronous>, transform_indices = @transform_2, window_bounds = array<i64: 1, 128>}, {pipeline_mode = #tpu.pipeline_mode<synchronous>, transform_indices = @transform_3, window_bounds = array<i64: 1, 128>}, {pipeline_mode = #tpu.pipeline_mode<synchronous>, transform_indices = @transform_4, window_bounds = array<i64: 128, 128>}, {pipeline_mode = #tpu.pipeline_mode<synchronous>, transform_indices = @transform_5, window_bounds = array<i64: 1, 128>}, {pipeline_mode = #tpu.pipeline_mode<synchronous>, transform_indices = @transform_6, window_bounds = array<i64: 1, 128>}, {pipeline_mode = #tpu.pipeline_mode<synchronous>, transform_indices = @transform_7, window_bounds = array<i64: 512, 128>}]} {
    %cst = arith.constant 0.000000e+00 : f32
    %0 = vector.broadcast %cst : f32 to vector<2x18x18x4xf32>
    %c0 = arith.constant 0 : index
    %c0_0 = arith.constant 0 : index
    %c0_1 = arith.constant 0 : index
    %c0_2 = arith.constant 0 : index
    %1 = vector.load %arg9[%c0, %c0_0, %c0_1, %c0_2] : memref<2x18x18x4xf32, #tpu.memory_space<vmem>>, vector<2x18x18x4xf32>
    tpu.vector_store %arg9[%c0, %c0_0, %c0_1, %c0_2], %0 {strides = array<i32>} : memref<2x18x18x4xf32, #tpu.memory_space<vmem>>, vector<2x18x18x4xf32>,
    %cst_3 = arith.constant 0.000000e+00 : f32
    %2 = vector.broadcast %cst_3 : f32 to vector<512x128xf32>
    %c0_4 = arith.constant 0 : index
    %c0_5 = arith.constant 0 : index
    %3 = vector.load %arg10[%c0_4, %c0_5] : memref<512x128xf32, #tpu.memory_space<vmem>>, vector<512x128xf32>
    tpu.vector_store %arg10[%c0_4, %c0_5], %2 {strides = array<i32>} : memref<512x128xf32, #tpu.memory_space<vmem>>, vector<512x128xf32>,
    %c0_6 = arith.constant 0 : index
    %c0_7 = arith.constant 0 : index
    %c0_8 = arith.constant 0 : index
    %c0_9 = arith.constant 0 : index
    %4 = vector.load %arg1[%c0_6, %c0_7, %c0_8, %c0_9] : memref<2x16x16x4xf32, #tpu.memory_space<vmem>>, vector<2x16x16x4xf32>
    %c0_10 = arith.constant 0 : index
    %c1 = arith.constant 1 : index
    %c1_11 = arith.constant 1 : index
    %c0_12 = arith.constant 0 : index
    %5 = vector.load %arg9[%c0_10, %c1, %c1_11, %c0_12] : memref<2x18x18x4xf32, #tpu.memory_space<vmem>>, vector<2x16x16x4xf32>
    tpu.vector_store %arg9[%c0_10, %c1, %c1_11, %c0_12], %4 {strides = array<i32>} : memref<2x18x18x4xf32, #tpu.memory_space<vmem>>, vector<2x16x16x4xf32>,
    %c0_13 = arith.constant 0 : index
    %c0_14 = arith.constant 0 : index
    %c0_15 = arith.constant 0 : index
    %c0_16 = arith.constant 0 : index
    %6 = vector.load %arg9[%c0_13, %c0_14, %c0_15, %c0_16] : memref<2x18x18x4xf32, #tpu.memory_space<vmem>>, vector<2x16x16x4xf32>
    %7 = vector.shape_cast %6 : vector<2x16x16x4xf32> to vector<512x4xf32>
    %c0_17 = arith.constant 0 : index
    %c0_18 = arith.constant 0 : index
    %8 = vector.load %arg10[%c0_17, %c0_18] : memref<512x128xf32, #tpu.memory_space<vmem>>, vector<512x4xf32>
    tpu.vector_store %arg10[%c0_17, %c0_18], %7 {strides = array<i32>} : memref<512x128xf32, #tpu.memory_space<vmem>>, vector<512x4xf32>,
    %c0_19 = arith.constant 0 : index
    %c0_20 = arith.constant 0 : index
    %c1_21 = arith.constant 1 : index
    %c0_22 = arith.constant 0 : index
    %9 = vector.load %arg9[%c0_19, %c0_20, %c1_21, %c0_22] : memref<2x18x18x4xf32, #tpu.memory_space<vmem>>, vector<2x16x16x4xf32>
    %10 = vector.shape_cast %9 : vector<2x16x16x4xf32> to vector<512x4xf32>
    %c0_23 = arith.constant 0 : index
    %c4 = arith.constant 4 : index
    %11 = vector.load %arg10[%c0_23, %c4] : memref<512x128xf32, #tpu.memory_space<vmem>>, vector<512x4xf32>
    tpu.vector_store %arg10[%c0_23, %c4], %10 {strides = array<i32>} : memref<512x128xf32, #tpu.memory_space<vmem>>, vector<512x4xf32>,
    %c0_24 = arith.constant 0 : index
    %c0_25 = arith.constant 0 : index
    %c2 = arith.constant 2 : index
    %c0_26 = arith.constant 0 : index
    %12 = vector.load %arg9[%c0_24, %c0_25, %c2, %c0_26] : memref<2x18x18x4xf32, #tpu.memory_space<vmem>>, vector<2x16x16x4xf32>
    %13 = vector.shape_cast %12 : vector<2x16x16x4xf32> to vector<512x4xf32>
    %c0_27 = arith.constant 0 : index
    %c8 = arith.constant 8 : index
    %14 = vector.load %arg10[%c0_27, %c8] : memref<512x128xf32, #tpu.memory_space<vmem>>, vector<512x4xf32>
    tpu.vector_store %arg10[%c0_27, %c8], %13 {strides = array<i32>} : memref<512x128xf32, #tpu.memory_space<vmem>>, vector<512x4xf32>,
    %c0_28 = arith.constant 0 : index
    %c1_29 = arith.constant 1 : index
    %c0_30 = arith.constant 0 : index
    %c0_31 = arith.constant 0 : index
    %15 = vector.load %arg9[%c0_28, %c1_29, %c0_30, %c0_31] : memref<2x18x18x4xf32, #tpu.memory_space<vmem>>, vector<2x16x16x4xf32>
    %16 = vector.shape_cast %15 : vector<2x16x16x4xf32> to vector<512x4xf32>
    %c0_32 = arith.constant 0 : index
    %c12 = arith.constant 12 : index
    %17 = vector.load %arg10[%c0_32, %c12] : memref<512x128xf32, #tpu.memory_space<vmem>>, vector<512x4xf32>
    tpu.vector_store %arg10[%c0_32, %c12], %16 {strides = array<i32>} : memref<512x128xf32, #tpu.memory_space<vmem>>, vector<512x4xf32>,
    %c0_33 = arith.constant 0 : index
    %c1_34 = arith.constant 1 : index
    %c1_35 = arith.constant 1 : index
    %c0_36 = arith.constant 0 : index
    %18 = vector.load %arg9[%c0_33, %c1_34, %c1_35, %c0_36] : memref<2x18x18x4xf32, #tpu.memory_space<vmem>>, vector<2x16x16x4xf32>
    %19 = vector.shape_cast %18 : vector<2x16x16x4xf32> to vector<512x4xf32>
    %c0_37 = arith.constant 0 : index
    %c16 = arith.constant 16 : index
    %20 = vector.load %arg10[%c0_37, %c16] : memref<512x128xf32, #tpu.memory_space<vmem>>, vector<512x4xf32>
    tpu.vector_store %arg10[%c0_37, %c16], %19 {strides = array<i32>} : memref<512x128xf32, #tpu.memory_space<vmem>>, vector<512x4xf32>,
    %c0_38 = arith.constant 0 : index
    %c1_39 = arith.constant 1 : index
    %c2_40 = arith.constant 2 : index
    %c0_41 = arith.constant 0 : index
    %21 = vector.load %arg9[%c0_38, %c1_39, %c2_40, %c0_41] : memref<2x18x18x4xf32, #tpu.memory_space<vmem>>, vector<2x16x16x4xf32>
    %22 = vector.shape_cast %21 : vector<2x16x16x4xf32> to vector<512x4xf32>
    %c0_42 = arith.constant 0 : index
    %c20 = arith.constant 20 : index
    %23 = vector.load %arg10[%c0_42, %c20] : memref<512x128xf32, #tpu.memory_space<vmem>>, vector<512x4xf32>
    tpu.vector_store %arg10[%c0_42, %c20], %22 {strides = array<i32>} : memref<512x128xf32, #tpu.memory_space<vmem>>, vector<512x4xf32>,
    %c0_43 = arith.constant 0 : index
    %c2_44 = arith.constant 2 : index
    %c0_45 = arith.constant 0 : index
    %c0_46 = arith.constant 0 : index
    %24 = vector.load %arg9[%c0_43, %c2_44, %c0_45, %c0_46] : memref<2x18x18x4xf32, #tpu.memory_space<vmem>>, vector<2x16x16x4xf32>
    %25 = vector.shape_cast %24 : vector<2x16x16x4xf32> to vector<512x4xf32>
    %c0_47 = arith.constant 0 : index
    %c24 = arith.constant 24 : index
    %26 = vector.load %arg10[%c0_47, %c24] : memref<512x128xf32, #tpu.memory_space<vmem>>, vector<512x4xf32>
    tpu.vector_store %arg10[%c0_47, %c24], %25 {strides = array<i32>} : memref<512x128xf32, #tpu.memory_space<vmem>>, vector<512x4xf32>,
    %c0_48 = arith.constant 0 : index
    %c2_49 = arith.constant 2 : index
    %c1_50 = arith.constant 1 : index
    %c0_51 = arith.constant 0 : index
    %27 = vector.load %arg9[%c0_48, %c2_49, %c1_50, %c0_51] : memref<2x18x18x4xf32, #tpu.memory_space<vmem>>, vector<2x16x16x4xf32>
    %28 = vector.shape_cast %27 : vector<2x16x16x4xf32> to vector<512x4xf32>
    %c0_52 = arith.constant 0 : index
    %c28 = arith.constant 28 : index
    %29 = vector.load %arg10[%c0_52, %c28] : memref<512x128xf32, #tpu.memory_space<vmem>>, vector<512x4xf32>
    tpu.vector_store %arg10[%c0_52, %c28], %28 {strides = array<i32>} : memref<512x128xf32, #tpu.memory_space<vmem>>, vector<512x4xf32>,
    %c0_53 = arith.constant 0 : index
    %c2_54 = arith.constant 2 : index
    %c2_55 = arith.constant 2 : index
    %c0_56 = arith.constant 0 : index
    %30 = vector.load %arg9[%c0_53, %c2_54, %c2_55, %c0_56] : memref<2x18x18x4xf32, #tpu.memory_space<vmem>>, vector<2x16x16x4xf32>
    %31 = vector.shape_cast %30 : vector<2x16x16x4xf32> to vector<512x4xf32>
    %c0_57 = arith.constant 0 : index
    %c32 = arith.constant 32 : index
    %32 = vector.load %arg10[%c0_57, %c32] : memref<512x128xf32, #tpu.memory_space<vmem>>, vector<512x4xf32>
    tpu.vector_store %arg10[%c0_57, %c32], %31 {strides = array<i32>} : memref<512x128xf32, #tpu.memory_space<vmem>>, vector<512x4xf32>,
    %c0_58 = arith.constant 0 : index
    %c0_59 = arith.constant 0 : index
    %33 = vector.load %arg10[%c0_58, %c0_59] : memref<512x128xf32, #tpu.memory_space<vmem>>, vector<512x128xf32>
    %34 = arith.truncf %33 : vector<512x128xf32> to vector<512x128xbf16>
    %c0_60 = arith.constant 0 : index
    %c0_61 = arith.constant 0 : index
    %35 = vector.load %arg2[%c0_60, %c0_61] : memref<128x128xbf16, #tpu.memory_space<vmem>>, vector<128x128xbf16>
    %cst_62 = arith.constant dense<0.000000e+00> : vector<512x128xf32>
    %36 = tpu.matmul %34, %35, %cst_62 {dimension_numbers = #tpu.dot_dimension_numbers<[1], [0], [0], [1], [0, 0, 1, 1], [], []>} : vector<512x128xbf16>, vector<128x128xbf16>, vector<512x128xf32> -> vector<512x128xf32>
    %cst_63 = arith.constant dense<0.000000e+00> : vector<128xf32>
    %37 = vector.multi_reduction <add>, %36, %cst_63 [0] : vector<512x128xf32> to vector<128xf32>
    %38 = vector.shape_cast %37 : vector<128xf32> to vector<1x128xf32>
    %39 = arith.mulf %36, %36 : vector<512x128xf32>
    %cst_64 = arith.constant dense<0.000000e+00> : vector<128xf32>
    %40 = vector.multi_reduction <add>, %39, %cst_64 [0] : vector<512x128xf32> to vector<128xf32>
    %41 = vector.shape_cast %40 : vector<128xf32> to vector<1x128xf32>
    %cst_65 = arith.constant 0.001953125 : f32
    %42 = vector.broadcast %cst_65 : f32 to vector<1x128xf32>
    %43 = arith.mulf %38, %42 : vector<1x128xf32>
    %cst_66 = arith.constant 0.001953125 : f32
    %44 = vector.broadcast %cst_66 : f32 to vector<1x128xf32>
    %45 = arith.mulf %41, %44 : vector<1x128xf32>
    %46 = arith.mulf %43, %43 : vector<1x128xf32>
    %47 = arith.subf %45, %46 : vector<1x128xf32>
    %cst_67 = arith.constant 0.000000e+00 : f32
    %48 = vector.broadcast %cst_67 : f32 to vector<1x128xf32>
    %49 = arith.maximumf %47, %48 : vector<1x128xf32>
    %cst_68 = arith.constant 9.99999974E-6 : f32
    %50 = vector.broadcast %cst_68 : f32 to vector<1x128xf32>
    %51 = arith.addf %49, %50 : vector<1x128xf32>
    %52 = math.rsqrt %51 : vector<1x128xf32>
    %c0_69 = arith.constant 0 : index
    %c0_70 = arith.constant 0 : index
    %53 = vector.load %arg3[%c0_69, %c0_70] : memref<1x128xf32, #tpu.memory_space<vmem>>, vector<1x128xf32>
    %54 = arith.mulf %52, %53 : vector<1x128xf32>
    %55 = vector.broadcast %43 : vector<1x128xf32> to vector<512x128xf32>
    %56 = arith.subf %36, %55 : vector<512x128xf32>
    %57 = vector.broadcast %54 : vector<1x128xf32> to vector<512x128xf32>
    %58 = arith.mulf %56, %57 : vector<512x128xf32>
    %c0_71 = arith.constant 0 : index
    %c0_72 = arith.constant 0 : index
    %59 = vector.load %arg4[%c0_71, %c0_72] : memref<1x128xf32, #tpu.memory_space<vmem>>, vector<1x128xf32>
    %60 = vector.broadcast %59 : vector<1x128xf32> to vector<512x128xf32>
    %61 = arith.addf %58, %60 : vector<512x128xf32>
    %cst_73 = arith.constant 0.000000e+00 : f32
    %62 = vector.broadcast %cst_73 : f32 to vector<512x128xf32>
    %63 = arith.maximumf %61, %62 : vector<512x128xf32>
    %64 = vector.extract_strided_slice %63 {offsets = [0, 0], sizes = [512, 4], strides = [1, 1]} : vector<512x128xf32> to vector<512x4xf32>
    %65 = vector.shape_cast %64 : vector<512x4xf32> to vector<2x16x16x4xf32>
    %c0_74 = arith.constant 0 : index
    %c1_75 = arith.constant 1 : index
    %c1_76 = arith.constant 1 : index
    %c0_77 = arith.constant 0 : index
    %66 = vector.load %arg9[%c0_74, %c1_75, %c1_76, %c0_77] : memref<2x18x18x4xf32, #tpu.memory_space<vmem>>, vector<2x16x16x4xf32>
    tpu.vector_store %arg9[%c0_74, %c1_75, %c1_76, %c0_77], %65 {strides = array<i32>} : memref<2x18x18x4xf32, #tpu.memory_space<vmem>>, vector<2x16x16x4xf32>,
    %c0_78 = arith.constant 0 : index
    %c0_79 = arith.constant 0 : index
    %c0_80 = arith.constant 0 : index
    %c0_81 = arith.constant 0 : index
    %67 = vector.load %arg9[%c0_78, %c0_79, %c0_80, %c0_81] : memref<2x18x18x4xf32, #tpu.memory_space<vmem>>, vector<2x16x16x4xf32>
    %68 = vector.shape_cast %67 : vector<2x16x16x4xf32> to vector<512x4xf32>
    %c0_82 = arith.constant 0 : index
    %c0_83 = arith.constant 0 : index
    %69 = vector.load %arg10[%c0_82, %c0_83] : memref<512x128xf32, #tpu.memory_space<vmem>>, vector<512x4xf32>
    tpu.vector_store %arg10[%c0_82, %c0_83], %68 {strides = array<i32>} : memref<512x128xf32, #tpu.memory_space<vmem>>, vector<512x4xf32>,
    %c0_84 = arith.constant 0 : index
    %c0_85 = arith.constant 0 : index
    %c1_86 = arith.constant 1 : index
    %c0_87 = arith.constant 0 : index
    %70 = vector.load %arg9[%c0_84, %c0_85, %c1_86, %c0_87] : memref<2x18x18x4xf32, #tpu.memory_space<vmem>>, vector<2x16x16x4xf32>
    %71 = vector.shape_cast %70 : vector<2x16x16x4xf32> to vector<512x4xf32>
    %c0_88 = arith.constant 0 : index
    %c4_89 = arith.constant 4 : index
    %72 = vector.load %arg10[%c0_88, %c4_89] : memref<512x128xf32, #tpu.memory_space<vmem>>, vector<512x4xf32>
    tpu.vector_store %arg10[%c0_88, %c4_89], %71 {strides = array<i32>} : memref<512x128xf32, #tpu.memory_space<vmem>>, vector<512x4xf32>,
    %c0_90 = arith.constant 0 : index
    %c0_91 = arith.constant 0 : index
    %c2_92 = arith.constant 2 : index
    %c0_93 = arith.constant 0 : index
    %73 = vector.load %arg9[%c0_90, %c0_91, %c2_92, %c0_93] : memref<2x18x18x4xf32, #tpu.memory_space<vmem>>, vector<2x16x16x4xf32>
    %74 = vector.shape_cast %73 : vector<2x16x16x4xf32> to vector<512x4xf32>
    %c0_94 = arith.constant 0 : index
    %c8_95 = arith.constant 8 : index
    %75 = vector.load %arg10[%c0_94, %c8_95] : memref<512x128xf32, #tpu.memory_space<vmem>>, vector<512x4xf32>
    tpu.vector_store %arg10[%c0_94, %c8_95], %74 {strides = array<i32>} : memref<512x128xf32, #tpu.memory_space<vmem>>, vector<512x4xf32>,
    %c0_96 = arith.constant 0 : index
    %c1_97 = arith.constant 1 : index
    %c0_98 = arith.constant 0 : index
    %c0_99 = arith.constant 0 : index
    %76 = vector.load %arg9[%c0_96, %c1_97, %c0_98, %c0_99] : memref<2x18x18x4xf32, #tpu.memory_space<vmem>>, vector<2x16x16x4xf32>
    %77 = vector.shape_cast %76 : vector<2x16x16x4xf32> to vector<512x4xf32>
    %c0_100 = arith.constant 0 : index
    %c12_101 = arith.constant 12 : index
    %78 = vector.load %arg10[%c0_100, %c12_101] : memref<512x128xf32, #tpu.memory_space<vmem>>, vector<512x4xf32>
    tpu.vector_store %arg10[%c0_100, %c12_101], %77 {strides = array<i32>} : memref<512x128xf32, #tpu.memory_space<vmem>>, vector<512x4xf32>,
    %c0_102 = arith.constant 0 : index
    %c1_103 = arith.constant 1 : index
    %c1_104 = arith.constant 1 : index
    %c0_105 = arith.constant 0 : index
    %79 = vector.load %arg9[%c0_102, %c1_103, %c1_104, %c0_105] : memref<2x18x18x4xf32, #tpu.memory_space<vmem>>, vector<2x16x16x4xf32>
    %80 = vector.shape_cast %79 : vector<2x16x16x4xf32> to vector<512x4xf32>
    %c0_106 = arith.constant 0 : index
    %c16_107 = arith.constant 16 : index
    %81 = vector.load %arg10[%c0_106, %c16_107] : memref<512x128xf32, #tpu.memory_space<vmem>>, vector<512x4xf32>
    tpu.vector_store %arg10[%c0_106, %c16_107], %80 {strides = array<i32>} : memref<512x128xf32, #tpu.memory_space<vmem>>, vector<512x4xf32>,
    %c0_108 = arith.constant 0 : index
    %c1_109 = arith.constant 1 : index
    %c2_110 = arith.constant 2 : index
    %c0_111 = arith.constant 0 : index
    %82 = vector.load %arg9[%c0_108, %c1_109, %c2_110, %c0_111] : memref<2x18x18x4xf32, #tpu.memory_space<vmem>>, vector<2x16x16x4xf32>
    %83 = vector.shape_cast %82 : vector<2x16x16x4xf32> to vector<512x4xf32>
    %c0_112 = arith.constant 0 : index
    %c20_113 = arith.constant 20 : index
    %84 = vector.load %arg10[%c0_112, %c20_113] : memref<512x128xf32, #tpu.memory_space<vmem>>, vector<512x4xf32>
    tpu.vector_store %arg10[%c0_112, %c20_113], %83 {strides = array<i32>} : memref<512x128xf32, #tpu.memory_space<vmem>>, vector<512x4xf32>,
    %c0_114 = arith.constant 0 : index
    %c2_115 = arith.constant 2 : index
    %c0_116 = arith.constant 0 : index
    %c0_117 = arith.constant 0 : index
    %85 = vector.load %arg9[%c0_114, %c2_115, %c0_116, %c0_117] : memref<2x18x18x4xf32, #tpu.memory_space<vmem>>, vector<2x16x16x4xf32>
    %86 = vector.shape_cast %85 : vector<2x16x16x4xf32> to vector<512x4xf32>
    %c0_118 = arith.constant 0 : index
    %c24_119 = arith.constant 24 : index
    %87 = vector.load %arg10[%c0_118, %c24_119] : memref<512x128xf32, #tpu.memory_space<vmem>>, vector<512x4xf32>
    tpu.vector_store %arg10[%c0_118, %c24_119], %86 {strides = array<i32>} : memref<512x128xf32, #tpu.memory_space<vmem>>, vector<512x4xf32>,
    %c0_120 = arith.constant 0 : index
    %c2_121 = arith.constant 2 : index
    %c1_122 = arith.constant 1 : index
    %c0_123 = arith.constant 0 : index
    %88 = vector.load %arg9[%c0_120, %c2_121, %c1_122, %c0_123] : memref<2x18x18x4xf32, #tpu.memory_space<vmem>>, vector<2x16x16x4xf32>
    %89 = vector.shape_cast %88 : vector<2x16x16x4xf32> to vector<512x4xf32>
    %c0_124 = arith.constant 0 : index
    %c28_125 = arith.constant 28 : index
    %90 = vector.load %arg10[%c0_124, %c28_125] : memref<512x128xf32, #tpu.memory_space<vmem>>, vector<512x4xf32>
    tpu.vector_store %arg10[%c0_124, %c28_125], %89 {strides = array<i32>} : memref<512x128xf32, #tpu.memory_space<vmem>>, vector<512x4xf32>,
    %c0_126 = arith.constant 0 : index
    %c2_127 = arith.constant 2 : index
    %c2_128 = arith.constant 2 : index
    %c0_129 = arith.constant 0 : index
    %91 = vector.load %arg9[%c0_126, %c2_127, %c2_128, %c0_129] : memref<2x18x18x4xf32, #tpu.memory_space<vmem>>, vector<2x16x16x4xf32>
    %92 = vector.shape_cast %91 : vector<2x16x16x4xf32> to vector<512x4xf32>
    %c0_130 = arith.constant 0 : index
    %c32_131 = arith.constant 32 : index
    %93 = vector.load %arg10[%c0_130, %c32_131] : memref<512x128xf32, #tpu.memory_space<vmem>>, vector<512x4xf32>
    tpu.vector_store %arg10[%c0_130, %c32_131], %92 {strides = array<i32>} : memref<512x128xf32, #tpu.memory_space<vmem>>, vector<512x4xf32>,
    %c0_132 = arith.constant 0 : index
    %c0_133 = arith.constant 0 : index
    %94 = vector.load %arg10[%c0_132, %c0_133] : memref<512x128xf32, #tpu.memory_space<vmem>>, vector<512x128xf32>
    %95 = arith.truncf %94 : vector<512x128xf32> to vector<512x128xbf16>
    %c0_134 = arith.constant 0 : index
    %c0_135 = arith.constant 0 : index
    %96 = vector.load %arg5[%c0_134, %c0_135] : memref<128x128xbf16, #tpu.memory_space<vmem>>, vector<128x128xbf16>
    %cst_136 = arith.constant dense<0.000000e+00> : vector<512x128xf32>
    %97 = tpu.matmul %95, %96, %cst_136 {dimension_numbers = #tpu.dot_dimension_numbers<[1], [0], [0], [1], [0, 0, 1, 1], [], []>} : vector<512x128xbf16>, vector<128x128xbf16>, vector<512x128xf32> -> vector<512x128xf32>
    %cst_137 = arith.constant dense<0.000000e+00> : vector<128xf32>
    %98 = vector.multi_reduction <add>, %97, %cst_137 [0] : vector<512x128xf32> to vector<128xf32>
    %99 = vector.shape_cast %98 : vector<128xf32> to vector<1x128xf32>
    %100 = arith.mulf %97, %97 : vector<512x128xf32>
    %cst_138 = arith.constant dense<0.000000e+00> : vector<128xf32>
    %101 = vector.multi_reduction <add>, %100, %cst_138 [0] : vector<512x128xf32> to vector<128xf32>
    %102 = vector.shape_cast %101 : vector<128xf32> to vector<1x128xf32>
    %cst_139 = arith.constant 0.001953125 : f32
    %103 = vector.broadcast %cst_139 : f32 to vector<1x128xf32>
    %104 = arith.mulf %99, %103 : vector<1x128xf32>
    %cst_140 = arith.constant 0.001953125 : f32
    %105 = vector.broadcast %cst_140 : f32 to vector<1x128xf32>
    %106 = arith.mulf %102, %105 : vector<1x128xf32>
    %107 = arith.mulf %104, %104 : vector<1x128xf32>
    %108 = arith.subf %106, %107 : vector<1x128xf32>
    %cst_141 = arith.constant 0.000000e+00 : f32
    %109 = vector.broadcast %cst_141 : f32 to vector<1x128xf32>
    %110 = arith.maximumf %108, %109 : vector<1x128xf32>
    %cst_142 = arith.constant 9.99999974E-6 : f32
    %111 = vector.broadcast %cst_142 : f32 to vector<1x128xf32>
    %112 = arith.addf %110, %111 : vector<1x128xf32>
    %113 = math.rsqrt %112 : vector<1x128xf32>
    %c0_143 = arith.constant 0 : index
    %c0_144 = arith.constant 0 : index
    %114 = vector.load %arg6[%c0_143, %c0_144] : memref<1x128xf32, #tpu.memory_space<vmem>>, vector<1x128xf32>
    %115 = arith.mulf %113, %114 : vector<1x128xf32>
    %116 = vector.broadcast %104 : vector<1x128xf32> to vector<512x128xf32>
    %117 = arith.subf %97, %116 : vector<512x128xf32>
    %118 = vector.broadcast %115 : vector<1x128xf32> to vector<512x128xf32>
    %119 = arith.mulf %117, %118 : vector<512x128xf32>
    %c0_145 = arith.constant 0 : index
    %c0_146 = arith.constant 0 : index
    %120 = vector.load %arg7[%c0_145, %c0_146] : memref<1x128xf32, #tpu.memory_space<vmem>>, vector<1x128xf32>
    %121 = vector.broadcast %120 : vector<1x128xf32> to vector<512x128xf32>
    %122 = arith.addf %119, %121 : vector<512x128xf32>
    %c0_147 = arith.constant 0 : index
    %c0_148 = arith.constant 0 : index
    %c0_149 = arith.constant 0 : index
    %c0_150 = arith.constant 0 : index
    %123 = vector.load %arg1[%c0_147, %c0_148, %c0_149, %c0_150] : memref<2x16x16x4xf32, #tpu.memory_space<vmem>>, vector<2x16x16x4xf32>
    %124 = vector.shape_cast %123 : vector<2x16x16x4xf32> to vector<512x4xf32>
    %cst_151 = arith.constant 0.000000e+00 : f32
    %125 = vector.broadcast %cst_151 : f32 to vector<512x124xf32>
    %126 = tpu.concatenate %124, %125 in 1 : vector<512x4xf32>, vector<512x124xf32> -> vector<512x128xf32>
    %127 = arith.addf %122, %126 : vector<512x128xf32>
    %cst_152 = arith.constant 0.000000e+00 : f32
    %128 = vector.broadcast %cst_152 : f32 to vector<512x128xf32>
    %129 = arith.maximumf %127, %128 : vector<512x128xf32>
    %c0_153 = arith.constant 0 : index
    %c0_154 = arith.constant 0 : index
    %130 = vector.load %arg8[%c0_153, %c0_154] : memref<512x128xf32, #tpu.memory_space<vmem>>, vector<512x128xf32>
    tpu.vector_store %arg8[%c0_153, %c0_154], %129 {strides = array<i32>} : memref<512x128xf32, #tpu.memory_space<vmem>>, vector<512x128xf32>,
    return
  }
  func.func @transform_0(%arg0: i32) -> (i32, i32, i32, i32) {
    %c0_i32 = arith.constant 0 : i32
    %c0_i32_0 = arith.constant 0 : i32
    %c0_i32_1 = arith.constant 0 : i32
    %c0_i32_2 = arith.constant 0 : i32
    %c0_i32_3 = arith.constant 0 : i32
    return %c0_i32, %c0_i32_0, %c0_i32_1, %c0_i32_2 : i32, i32, i32, i32
  }
  func.func @transform_1(%arg0: i32) -> (i32, i32) {
    %c0_i32 = arith.constant 0 : i32
    %c0_i32_0 = arith.constant 0 : i32
    %c0_i32_1 = arith.constant 0 : i32
    return %c0_i32, %c0_i32_0 : i32, i32
  }
  func.func @transform_2(%arg0: i32) -> (i32, i32) {
    %c0_i32 = arith.constant 0 : i32
    %c0_i32_0 = arith.constant 0 : i32
    %c0_i32_1 = arith.constant 0 : i32
    return %c0_i32, %c0_i32_0 : i32, i32
  }
  func.func @transform_3(%arg0: i32) -> (i32, i32) {
    %c0_i32 = arith.constant 0 : i32
    %c0_i32_0 = arith.constant 0 : i32
    %c0_i32_1 = arith.constant 0 : i32
    return %c0_i32, %c0_i32_0 : i32, i32
  }
  func.func @transform_4(%arg0: i32) -> (i32, i32) {
    %c0_i32 = arith.constant 0 : i32
    %c0_i32_0 = arith.constant 0 : i32
    %c0_i32_1 = arith.constant 0 : i32
    return %c0_i32, %c0_i32_0 : i32, i32
  }
  func.func @transform_5(%arg0: i32) -> (i32, i32) {
    %c0_i32 = arith.constant 0 : i32
    %c0_i32_0 = arith.constant 0 : i32
    %c0_i32_1 = arith.constant 0 : i32
    return %c0_i32, %c0_i32_0 : i32, i32
  }
  func.func @transform_6(%arg0: i32) -> (i32, i32) {
    %c0_i32 = arith.constant 0 : i32
    %c0_i32_0 = arith.constant 0 : i32
    %c0_i32_1 = arith.constant 0 : i32
    return %c0_i32, %c0_i32_0 : i32, i32
  }
  func.func @transform_7(%arg0: i32) -> (i32, i32) {
    %c0_i32 = arith.constant 0 : i32
    %c0_i32_0 = arith.constant 0 : i32
    %c0_i32_1 = arith.constant 0 : i32
    return %c0_i32, %c0_i32_0 : i32, i32
  }
}

</mosaic_0001>

<llo_original>
// kernel: tpu_custom_call.1
$region0: #{tpu_custom_call.1}
  #allocation0 [shape = 'u32[]', space=smem, size = 0x4, offset = 0x4, fixed_abs, tag = 'smem constant byte address 0x4 - core index']
  #allocation1 [shape = 'u32[72,128]{1,0:T(1,128)}', space=vmem, size = 0x9000, scoped, tag = 'internal scratch']
  #allocation2 [shape = 'f32[2,18,18,4]{3,2,1,0:T(8,128)}', space=vmem, size = 0x6c000, scoped, tag = 'scratch operand']
  #allocation3 [shape = 'f32[512,128]{1,0:T(8,128)}', space=vmem, size = 0x40000, scoped, tag = 'scratch operand']
  %s0 = inlined_call_operand.vmem [shape: f32[2,16,16,4], index: 0, kind: input, shape index: {}]
  %s1 = inlined_call_operand.vmem [shape: bf16[128,128], index: 1, kind: input, shape index: {}]
  %s2 = inlined_call_operand.vmem [shape: f32[1,128], index: 2, kind: input, shape index: {}]
  %s3 = inlined_call_operand.vmem [shape: f32[1,128], index: 3, kind: input, shape index: {}]
  %s4 = inlined_call_operand.vmem [shape: bf16[128,128], index: 4, kind: input, shape index: {}]
  %s5 = inlined_call_operand.vmem [shape: f32[1,128], index: 5, kind: input, shape index: {}]
  %s6 = inlined_call_operand.vmem [shape: f32[1,128], index: 6, kind: input, shape index: {}]
  %s7 = inlined_call_operand.hbm [shape: f32[512,128], index: 7, kind: output, shape index: {}]
  %s8 = sld [smem:[#allocation0]]
  $region38: #{tpu_custom_call.1} parent=0
    _
  %s10 = ssub.s32 1, %s8
  %s11 = scalar_select 0, %s10, %s8
  $region1: #{tpu_custom_call.1} parent=0
    #allocation4 [shape = 'u8[262144]{0}', space=vmem, size = 0x40000, scoped, tag = 'output window, operand 0, single buffered']
    #allocation5 [shape = 's32[1]{0}', space=sflag, size = 0x4, scoped, tag = 'scoped memory for tpu_custom_call.1']
    %12 = vsyncpa [#allocation5], 0
    // Predicated region
    $region2: #{tpu_custom_call.1} parent=1 // pred_check
      _
    $region3: #{tpu_custom_call.1} parent=1 // pred_check_branch
      %14 = sbr.rel (0) target = $region5
    $region4: #{tpu_custom_call.1} parent=1 // pred_region
      _
    $region5: #{tpu_custom_call.1} parent=1 // pred_fallthru
      _
    // Predicated region
    $region6: #{tpu_custom_call.1} parent=1 // pred_check
      _
    $region7: #{tpu_custom_call.1} parent=1 // pred_check_branch
      %16 = sbr.rel (0) target = $region9
    $region8: #{tpu_custom_call.1} parent=1 // pred_region
      _
    $region9: #{tpu_custom_call.1} parent=1 // pred_fallthru
      _
    // Predicated region
    $region10: #{tpu_custom_call.1} parent=1 // pred_check
      _
    $region11: #{tpu_custom_call.1} parent=1 // pred_check_branch
      %18 = sbr.rel (0) target = $region13
    $region12: #{tpu_custom_call.1} parent=1 // pred_region
      _
    $region13: #{tpu_custom_call.1} parent=1 // pred_fallthru
      _
    // Predicated region
    $region14: #{tpu_custom_call.1} parent=1 // pred_check
      _
    $region15: #{tpu_custom_call.1} parent=1 // pred_check_branch
      %20 = sbr.rel (0) target = $region17
    $region16: #{tpu_custom_call.1} parent=1 // pred_region
      _
    $region17: #{tpu_custom_call.1} parent=1 // pred_fallthru
      _
    // Predicated region
    $region18: #{tpu_custom_call.1} parent=1 // pred_check
      _
    $region19: #{tpu_custom_call.1} parent=1 // pred_check_branch
      %22 = sbr.rel (0) target = $region21
    $region20: #{tpu_custom_call.1} parent=1 // pred_region
      _
    $region21: #{tpu_custom_call.1} parent=1 // pred_fallthru
      _
    // Predicated region
    $region22: #{tpu_custom_call.1} parent=1 // pred_check
      _
    $region23: #{tpu_custom_call.1} parent=1 // pred_check_branch
      %24 = sbr.rel (0) target = $region25
    $region24: #{tpu_custom_call.1} parent=1 // pred_region
      _
    $region25: #{tpu_custom_call.1} parent=1 // pred_fallthru
      _
    // Predicated region
    $region26: #{tpu_custom_call.1} parent=1 // pred_check
      _
    $region27: #{tpu_custom_call.1} parent=1 // pred_check_branch
      %26 = sbr.rel (0) target = $region29
    $region28: #{tpu_custom_call.1} parent=1 // pred_region
      _
    $region29: #{tpu_custom_call.1} parent=1 // pred_fallthru
      _
    %vm27 = vcmask 31744
    %28 = vst.msk [vmem:[#allocation2] sm:$0xff] %vm27, 0.0
    %29 = vst.msk [vmem:[#allocation2 + $0x8] sm:$0xff] %vm27, 0.0
    %vm30 = vcmask 25600
    %31 = vst.msk [vmem:[#allocation2 + $0x10] sm:$0x3] %vm30, 0.0
    %32 = vst.msk [vmem:[#allocation2 + $0x18] sm:$0xff] %vm27, 0.0
    %33 = vst.msk [vmem:[#allocation2 + $0x20] sm:$0xff] %vm27, 0.0
    %34 = vst.msk [vmem:[#allocation2 + $0x28] sm:$0x3] %vm30, 0.0
    %35 = vst.msk [vmem:[#allocation2 + $0x30] sm:$0xff] %vm27, 0.0
    %36 = vst.msk [vmem:[#allocation2 + $0x38] sm:$0xff] %vm27, 0.0
    %37 = vst.msk [vmem:[#allocation2 + $0x40] sm:$0x3] %vm30, 0.0
    %38 = vst.msk [vmem:[#allocation2 + $0x48] sm:$0xff] %vm27, 0.0
    %39 = vst.msk [vmem:[#allocation2 + $0x50] sm:$0xff] %vm27, 0.0
    %40 = vst.msk [vmem:[#allocation2 + $0x58] sm:$0x3] %vm30, 0.0
    %41 = vst.msk [vmem:[#allocation2 + $0x60] sm:$0xff] %vm27, 0.0
    %42 = vst.msk [vmem:[#allocation2 + $0x68] sm:$0xff] %vm27, 0.0
    %43 = vst.msk [vmem:[#allocation2 + $0x70] sm:$0x3] %vm30, 0.0
    %44 = vst.msk [vmem:[#allocation2 + $0x78] sm:$0xff] %vm27, 0.0
    %45 = vst.msk [vmem:[#allocation2 + $0x80] sm:$0xff] %vm27, 0.0
    %46 = vst.msk [vmem:[#allocation2 + $0x88] sm:$0x3] %vm30, 0.0
    %47 = vst.msk [vmem:[#allocation2 + $0x90] sm:$0xff] %vm27, 0.0
    %48 = vst.msk [vmem:[#allocation2 + $0x98] sm:$0xff] %vm27, 0.0
    %49 = vst.msk [vmem:[#allocation2 + $0xa0] sm:$0x3] %vm30, 0.0
    %50 = vst.msk [vmem:[#allocation2 + $0xa8] sm:$0xff] %vm27, 0.0
    %51 = vst.msk [vmem:[#allocation2 + $0xb0] sm:$0xff] %vm27, 0.0
    %52 = vst.msk [vmem:[#allocation2 + $0xb8] sm:$0x3] %vm30, 0.0
    %53 = vst.msk [vmem:[#allocation2 + $0xc0] sm:$0xff] %vm27, 0.0
    %54 = vst.msk [vmem:[#allocation2 + $0xc8] sm:$0xff] %vm27, 0.0
    %55 = vst.msk [vmem:[#allocation2 + $0xd0] sm:$0x3] %vm30, 0.0
    %56 = vst.msk [vmem:[#allocation2 + $0xd8] sm:$0xff] %vm27, 0.0
    %57 = vst.msk [vmem:[#allocation2 + $0xe0] sm:$0xff] %vm27, 0.0
    %58 = vst.msk [vmem:[#allocation2 + $0xe8] sm:$0x3] %vm30, 0.0
    %59 = vst.msk [vmem:[#allocation2 + $0xf0] sm:$0xff] %vm27, 0.0
    %60 = vst.msk [vmem:[#allocation2 + $0xf8] sm:$0xff] %vm27, 0.0
    %61 = vst.msk [vmem:[#allocation2 + $0x100] sm:$0x3] %vm30, 0.0
    %62 = vst.msk [vmem:[#allocation2 + $0x108] sm:$0xff] %vm27, 0.0
    %63 = vst.msk [vmem:[#allocation2 + $0x110] sm:$0xff] %vm27, 0.0
    %64 = vst.msk [vmem:[#allocation2 + $0x118] sm:$0x3] %vm30, 0.0
    %65 = vst.msk [vmem:[#allocation2 + $0x120] sm:$0xff] %vm27, 0.0
    %66 = vst.msk [vmem:[#allocation2 + $0x128] sm:$0xff] %vm27, 0.0
    %67 = vst.msk [vmem:[#allocation2 + $0x130] sm:$0x3] %vm30, 0.0
    %68 = vst.msk [vmem:[#allocation2 + $0x138] sm:$0xff] %vm27, 0.0
    %69 = vst.msk [vmem:[#allocation2 + $0x140] sm:$0xff] %vm27, 0.0
    %70 = vst.msk [vmem:[#allocation2 + $0x148] sm:$0x3] %vm30, 0.0
    %71 = vst.msk [vmem:[#allocation2 + $0x150] sm:$0xff] %vm27, 0.0
    %72 = vst.msk [vmem:[#allocation2 + $0x158] sm:$0xff] %vm27, 0.0
    %73 = vst.msk [vmem:[#allocation2 + $0x160] sm:$0x3] %vm30, 0.0
    %74 = vst.msk [vmem:[#allocation2 + $0x168] sm:$0xff] %vm27, 0.0
    %75 = vst.msk [vmem:[#allocation2 + $0x170] sm:$0xff] %vm27, 0.0
    %76 = vst.msk [vmem:[#allocation2 + $0x178] sm:$0x3] %vm30, 0.0
    %77 = vst.msk [vmem:[#allocation2 + $0x180] sm:$0xff] %vm27, 0.0
    %78 = vst.msk [vmem:[#allocation2 + $0x188] sm:$0xff] %vm27, 0.0
    %79 = vst.msk [vmem:[#allocation2 + $0x190] sm:$0x3] %vm30, 0.0
    %80 = vst.msk [vmem:[#allocation2 + $0x198] sm:$0xff] %vm27, 0.0
    %81 = vst.msk [vmem:[#allocation2 + $0x1a0] sm:$0xff] %vm27, 0.0
    %82 = vst.msk [vmem:[#allocation2 + $0x1a8] sm:$0x3] %vm30, 0.0
    %83 = vst.msk [vmem:[#allocation2 + $0x1b0] sm:$0xff] %vm27, 0.0
    %84 = vst.msk [vmem:[#allocation2 + $0x1b8] sm:$0xff] %vm27, 0.0
    %85 = vst.msk [vmem:[#allocation2 + $0x1c0] sm:$0x3] %vm30, 0.0
    %86 = vst.msk [vmem:[#allocation2 + $0x1c8] sm:$0xff] %vm27, 0.0
    %87 = vst.msk [vmem:[#allocation2 + $0x1d0] sm:$0xff] %vm27, 0.0
    %88 = vst.msk [vmem:[#allocation2 + $0x1d8] sm:$0x3] %vm30, 0.0
    %89 = vst.msk [vmem:[#allocation2 + $0x1e0] sm:$0xff] %vm27, 0.0
    %90 = vst.msk [vmem:[#allocation2 + $0x1e8] sm:$0xff] %vm27, 0.0
    %91 = vst.msk [vmem:[#allocation2 + $0x1f0] sm:$0x3] %vm30, 0.0
    %92 = vst.msk [vmem:[#allocation2 + $0x1f8] sm:$0xff] %vm27, 0.0
    %93 = vst.msk [vmem:[#allocation2 + $0x200] sm:$0xff] %vm27, 0.0
    %94 = vst.msk [vmem:[#allocation2 + $0x208] sm:$0x3] %vm30, 0.0
    %95 = vst.msk [vmem:[#allocation2 + $0x210] sm:$0xff] %vm27, 0.0
    %96 = vst.msk [vmem:[#allocation2 + $0x218] sm:$0xff] %vm27, 0.0
    %97 = vst.msk [vmem:[#allocation2 + $0x220] sm:$0x3] %vm30, 0.0
    %98 = vst.msk [vmem:[#allocation2 + $0x228] sm:$0xff] %vm27, 0.0
    %99 = vst.msk [vmem:[#allocation2 + $0x230] sm:$0xff] %vm27, 0.0
    %100 = vst.msk [vmem:[#allocation2 + $0x238] sm:$0x3] %vm30, 0.0
    %101 = vst.msk [vmem:[#allocation2 + $0x240] sm:$0xff] %vm27, 0.0
    %102 = vst.msk [vmem:[#allocation2 + $0x248] sm:$0xff] %vm27, 0.0
    %103 = vst.msk [vmem:[#allocation2 + $0x250] sm:$0x3] %vm30, 0.0
    %104 = vst.msk [vmem:[#allocation2 + $0x258] sm:$0xff] %vm27, 0.0
    %105 = vst.msk [vmem:[#allocation2 + $0x260] sm:$0xff] %vm27, 0.0
    %106 = vst.msk [vmem:[#allocation2 + $0x268] sm:$0x3] %vm30, 0.0
    %107 = vst.msk [vmem:[#allocation2 + $0x270] sm:$0xff] %vm27, 0.0
    %108 = vst.msk [vmem:[#allocation2 + $0x278] sm:$0xff] %vm27, 0.0
    %109 = vst.msk [vmem:[#allocation2 + $0x280] sm:$0x3] %vm30, 0.0
    %110 = vst.msk [vmem:[#allocation2 + $0x288] sm:$0xff] %vm27, 0.0
    %111 = vst.msk [vmem:[#allocation2 + $0x290] sm:$0xff] %vm27, 0.0
    %112 = vst.msk [vmem:[#allocation2 + $0x298] sm:$0x3] %vm30, 0.0
    %113 = vst.msk [vmem:[#allocation2 + $0x2a0] sm:$0xff] %vm27, 0.0
    %114 = vst.msk [vmem:[#allocation2 + $0x2a8] sm:$0xff] %vm27, 0.0
    %115 = vst.msk [vmem:[#allocation2 + $0x2b0] sm:$0x3] %vm30, 0.0
    %116 = vst.msk [vmem:[#allocation2 + $0x2b8] sm:$0xff] %vm27, 0.0
    %117 = vst.msk [vmem:[#allocation2 + $0x2c0] sm:$0xff] %vm27, 0.0
    %118 = vst.msk [vmem:[#allocation2 + $0x2c8] sm:$0x3] %vm30, 0.0
    %119 = vst.msk [vmem:[#allocation2 + $0x2d0] sm:$0xff] %vm27, 0.0
    %120 = vst.msk [vmem:[#allocation2 + $0x2d8] sm:$0xff] %vm27, 0.0
    %121 = vst.msk [vmem:[#allocation2 + $0x2e0] sm:$0x3] %vm30, 0.0
    %122 = vst.msk [vmem:[#allocation2 + $0x2e8] sm:$0xff] %vm27, 0.0
    %123 = vst.msk [vmem:[#allocation2 + $0x2f0] sm:$0xff] %vm27, 0.0
    %124 = vst.msk [vmem:[#allocation2 + $0x2f8] sm:$0x3] %vm30, 0.0
    %125 = vst.msk [vmem:[#allocation2 + $0x300] sm:$0xff] %vm27, 0.0
    %126 = vst.msk [vmem:[#allocation2 + $0x308] sm:$0xff] %vm27, 0.0
    %127 = vst.msk [vmem:[#allocation2 + $0x310] sm:$0x3] %vm30, 0.0
    %128 = vst.msk [vmem:[#allocation2 + $0x318] sm:$0xff] %vm27, 0.0
    %129 = vst.msk [vmem:[#allocation2 + $0x320] sm:$0xff] %vm27, 0.0
    %130 = vst.msk [vmem:[#allocation2 + $0x328] sm:$0x3] %vm30, 0.0
    %131 = vst.msk [vmem:[#allocation2 + $0x330] sm:$0xff] %vm27, 0.0
    %132 = vst.msk [vmem:[#allocation2 + $0x338] sm:$0xff] %vm27, 0.0
    %133 = vst.msk [vmem:[#allocation2 + $0x340] sm:$0x3] %vm30, 0.0
    %134 = vst.msk [vmem:[#allocation2 + $0x348] sm:$0xff] %vm27, 0.0
    %135 = vst.msk [vmem:[#allocation2 + $0x350] sm:$0xff] %vm27, 0.0
    %136 = vst.msk [vmem:[#allocation2 + $0x358] sm:$0x3] %vm30, 0.0
    %137 = vst [vmem:[#allocation3] sm:$0xff] 0.0
    %138 = vst [vmem:[#allocation3 + $0x8] sm:$0xff] 0.0
    %139 = vst [vmem:[#allocation3 + $0x10] sm:$0xff] 0.0
    %140 = vst [vmem:[#allocation3 + $0x18] sm:$0xff] 0.0
    %141 = vst [vmem:[#allocation3 + $0x20] sm:$0xff] 0.0
    %142 = vst [vmem:[#allocation3 + $0x28] sm:$0xff] 0.0
    %143 = vst [vmem:[#allocation3 + $0x30] sm:$0xff] 0.0
    %144 = vst [vmem:[#allocation3 + $0x38] sm:$0xff] 0.0
    %145 = vst [vmem:[#allocation3 + $0x40] sm:$0xff] 0.0
    %146 = vst [vmem:[#allocation3 + $0x48] sm:$0xff] 0.0
    %147 = vst [vmem:[#allocation3 + $0x50] sm:$0xff] 0.0
    %148 = vst [vmem:[#allocation3 + $0x58] sm:$0xff] 0.0
    %149 = vst [vmem:[#allocation3 + $0x60] sm:$0xff] 0.0
    %150 = vst [vmem:[#allocation3 + $0x68] sm:$0xff] 0.0
    %151 = vst [vmem:[#allocation3 + $0x70] sm:$0xff] 0.0
    %152 = vst [vmem:[#allocation3 + $0x78] sm:$0xff] 0.0
    %153 = vst [vmem:[#allocation3 + $0x80] sm:$0xff] 0.0
    %154 = vst [vmem:[#allocation3 + $0x88] sm:$0xff] 0.0
    %155 = vst [vmem:[#allocation3 + $0x90] sm:$0xff] 0.0
    %156 = vst [vmem:[#allocation3 + $0x98] sm:$0xff] 0.0
    %157 = vst [vmem:[#allocation3 + $0xa0] sm:$0xff] 0.0
    %158 = vst [vmem:[#allocation3 + $0xa8] sm:$0xff] 0.0
    %159 = vst [vmem:[#allocation3 + $0xb0] sm:$0xff] 0.0
    %160 = vst [vmem:[#allocation3 + $0xb8] sm:$0xff] 0.0
    %161 = vst [vmem:[#allocation3 + $0xc0] sm:$0xff] 0.0
    %162 = vst [vmem:[#allocation3 + $0xc8] sm:$0xff] 0.0
    %163 = vst [vmem:[#allocation3 + $0xd0] sm:$0xff] 0.0
    %164 = vst [vmem:[#allocation3 + $0xd8] sm:$0xff] 0.0
    %165 = vst [vmem:[#allocation3 + $0xe0] sm:$0xff] 0.0
    %166 = vst [vmem:[#allocation3 + $0xe8] sm:$0xff] 0.0
    %167 = vst [vmem:[#allocation3 + $0xf0] sm:$0xff] 0.0
    %168 = vst [vmem:[#allocation3 + $0xf8] sm:$0xff] 0.0
    %169 = vst [vmem:[#allocation3 + $0x100] sm:$0xff] 0.0
    %170 = vst [vmem:[#allocation3 + $0x108] sm:$0xff] 0.0
    %171 = vst [vmem:[#allocation3 + $0x110] sm:$0xff] 0.0
    %172 = vst [vmem:[#allocation3 + $0x118] sm:$0xff] 0.0
    %173 = vst [vmem:[#allocation3 + $0x120] sm:$0xff] 0.0
    %174 = vst [vmem:[#allocation3 + $0x128] sm:$0xff] 0.0
    %175 = vst [vmem:[#allocation3 + $0x130] sm:$0xff] 0.0
    %176 = vst [vmem:[#allocation3 + $0x138] sm:$0xff] 0.0
    %177 = vst [vmem:[#allocation3 + $0x140] sm:$0xff] 0.0
    %178 = vst [vmem:[#allocation3 + $0x148] sm:$0xff] 0.0
    %179 = vst [vmem:[#allocation3 + $0x150] sm:$0xff] 0.0
    %180 = vst [vmem:[#allocation3 + $0x158] sm:$0xff] 0.0
    %181 = vst [vmem:[#allocation3 + $0x160] sm:$0xff] 0.0
    %182 = vst [vmem:[#allocation3 + $0x168] sm:$0xff] 0.0
    %183 = vst [vmem:[#allocation3 + $0x170] sm:$0xff] 0.0
    %184 = vst [vmem:[#allocation3 + $0x178] sm:$0xff] 0.0
    %185 = vst [vmem:[#allocation3 + $0x180] sm:$0xff] 0.0
    %186 = vst [vmem:[#allocation3 + $0x188] sm:$0xff] 0.0
    %187 = vst [vmem:[#allocation3 + $0x190] sm:$0xff] 0.0
    %188 = vst [vmem:[#allocation3 + $0x198] sm:$0xff] 0.0
    %189 = vst [vmem:[#allocation3 + $0x1a0] sm:$0xff] 0.0
    %190 = vst [vmem:[#allocation3 + $0x1a8] sm:$0xff] 0.0
    %191 = vst [vmem:[#allocation3 + $0x1b0] sm:$0xff] 0.0
    %192 = vst [vmem:[#allocation3 + $0x1b8] sm:$0xff] 0.0
    %193 = vst [vmem:[#allocation3 + $0x1c0] sm:$0xff] 0.0
    %194 = vst [vmem:[#allocation3 + $0x1c8] sm:$0xff] 0.0
    %195 = vst [vmem:[#allocation3 + $0x1d0] sm:$0xff] 0.0
    %196 = vst [vmem:[#allocation3 + $0x1d8] sm:$0xff] 0.0
    %197 = vst [vmem:[#allocation3 + $0x1e0] sm:$0xff] 0.0
    %198 = vst [vmem:[#allocation3 + $0x1e8] sm:$0xff] 0.0
    %199 = vst [vmem:[#allocation3 + $0x1f0] sm:$0xff] 0.0
    %200 = vst [vmem:[#allocation3 + $0x1f8] sm:$0xff] 0.0
    %v201 = vld [vmem:[%s0] sm:$0xff]
    %v202 = vld [vmem:[%s0 + $0x8] sm:$0xff]
    %v203 = vld [vmem:[%s0 + $0x10] sm:$0xff]
    %v204 = vld [vmem:[%s0 + $0x18] sm:$0xff]
    %v205 = vld [vmem:[%s0 + $0x20] sm:$0xff]
    %v206 = vld [vmem:[%s0 + $0x28] sm:$0xff]
    %v207 = vld [vmem:[%s0 + $0x30] sm:$0xff]
    %v208 = vld [vmem:[%s0 + $0x38] sm:$0xff]
    %v209 = vld [vmem:[%s0 + $0x40] sm:$0xff]
    %v210 = vld [vmem:[%s0 + $0x48] sm:$0xff]
    %v211 = vld [vmem:[%s0 + $0x50] sm:$0xff]
    %v212 = vld [vmem:[%s0 + $0x58] sm:$0xff]
    %v213 = vld [vmem:[%s0 + $0x60] sm:$0xff]
    %v214 = vld [vmem:[%s0 + $0x68] sm:$0xff]
    %v215 = vld [vmem:[%s0 + $0x70] sm:$0xff]
    %v216 = vld [vmem:[%s0 + $0x78] sm:$0xff]
    %v217 = vld [vmem:[%s0 + $0x80] sm:$0xff]
    %v218 = vld [vmem:[%s0 + $0x88] sm:$0xff]
    %v219 = vld [vmem:[%s0 + $0x90] sm:$0xff]
    %v220 = vld [vmem:[%s0 + $0x98] sm:$0xff]
    %v221 = vld [vmem:[%s0 + $0xa0] sm:$0xff]
    %v222 = vld [vmem:[%s0 + $0xa8] sm:$0xff]
    %v223 = vld [vmem:[%s0 + $0xb0] sm:$0xff]
    %v224 = vld [vmem:[%s0 + $0xb8] sm:$0xff]
    %v225 = vld [vmem:[%s0 + $0xc0] sm:$0xff]
    %v226 = vld [vmem:[%s0 + $0xc8] sm:$0xff]
    %v227 = vld [vmem:[%s0 + $0xd0] sm:$0xff]
    %v228 = vld [vmem:[%s0 + $0xd8] sm:$0xff]
    %v229 = vld [vmem:[%s0 + $0xe0] sm:$0xff]
    %v230 = vld [vmem:[%s0 + $0xe8] sm:$0xff]
    %v231 = vld [vmem:[%s0 + $0xf0] sm:$0xff]
    %v232 = vld [vmem:[%s0 + $0xf8] sm:$0xff]
    %v233 = vld [vmem:[%s0 + $0x100] sm:$0xff]
    %v234 = vld [vmem:[%s0 + $0x108] sm:$0xff]
    %v235 = vld [vmem:[%s0 + $0x110] sm:$0xff]
    %v236 = vld [vmem:[%s0 + $0x118] sm:$0xff]
    %v237 = vld [vmem:[%s0 + $0x120] sm:$0xff]
    %v238 = vld [vmem:[%s0 + $0x128] sm:$0xff]
    %v239 = vld [vmem:[%s0 + $0x130] sm:$0xff]
    %v240 = vld [vmem:[%s0 + $0x138] sm:$0xff]
    %v241 = vld [vmem:[%s0 + $0x140] sm:$0xff]
    %v242 = vld [vmem:[%s0 + $0x148] sm:$0xff]
    %v243 = vld [vmem:[%s0 + $0x150] sm:$0xff]
    %v244 = vld [vmem:[%s0 + $0x158] sm:$0xff]
    %v245 = vld [vmem:[%s0 + $0x160] sm:$0xff]
    %v246 = vld [vmem:[%s0 + $0x168] sm:$0xff]
    %v247 = vld [vmem:[%s0 + $0x170] sm:$0xff]
    %v248 = vld [vmem:[%s0 + $0x178] sm:$0xff]
    %v249 = vld [vmem:[%s0 + $0x180] sm:$0xff]
    %v250 = vld [vmem:[%s0 + $0x188] sm:$0xff]
    %v251 = vld [vmem:[%s0 + $0x190] sm:$0xff]
    %v252 = vld [vmem:[%s0 + $0x198] sm:$0xff]
    %v253 = vld [vmem:[%s0 + $0x1a0] sm:$0xff]
    %v254 = vld [vmem:[%s0 + $0x1a8] sm:$0xff]
    %v255 = vld [vmem:[%s0 + $0x1b0] sm:$0xff]
    %v256 = vld [vmem:[%s0 + $0x1b8] sm:$0xff]
    %v257 = vld [vmem:[%s0 + $0x1c0] sm:$0xff]
    %v258 = vld [vmem:[%s0 + $0x1c8] sm:$0xff]
    %v259 = vld [vmem:[%s0 + $0x1d0] sm:$0xff]
    %v260 = vld [vmem:[%s0 + $0x1d8] sm:$0xff]
    %v261 = vld [vmem:[%s0 + $0x1e0] sm:$0xff]
    %v262 = vld [vmem:[%s0 + $0x1e8] sm:$0xff]
    %v263 = vld [vmem:[%s0 + $0x1f0] sm:$0xff]
    %v264 = vld [vmem:[%s0 + $0x1f8] sm:$0xff]
    %s265 = scalar_lea.vmem [#allocation2], 24
    %266 = vst.msk [vmem:[%s265 + $0x1] sm:$0xff] %vm27, %v201
    %267 = vst.msk [vmem:[%s265 + $0x9] sm:$0xff] %vm27, %v202
    %268 = vst.msk [vmem:[%s265 + $0x19] sm:$0xff] %vm27, %v203
    %269 = vst.msk [vmem:[%s265 + $0x21] sm:$0xff] %vm27, %v204
    %270 = vst.msk [vmem:[%s265 + $0x31] sm:$0xff] %vm27, %v205
    %271 = vst.msk [vmem:[%s265 + $0x39] sm:$0xff] %vm27, %v206
    %272 = vst.msk [vmem:[%s265 + $0x49] sm:$0xff] %vm27, %v207
    %273 = vst.msk [vmem:[%s265 + $0x51] sm:$0xff] %vm27, %v208
    %274 = vst.msk [vmem:[%s265 + $0x61] sm:$0xff] %vm27, %v209
    %275 = vst.msk [vmem:[%s265 + $0x69] sm:$0xff] %vm27, %v210
    %276 = vst.msk [vmem:[%s265 + $0x79] sm:$0xff] %vm27, %v211
    %277 = vst.msk [vmem:[%s265 + $0x81] sm:$0xff] %vm27, %v212
    %278 = vst.msk [vmem:[%s265 + $0x91] sm:$0xff] %vm27, %v213
    %279 = vst.msk [vmem:[%s265 + $0x99] sm:$0xff] %vm27, %v214
    %280 = vst.msk [vmem:[%s265 + $0xa9] sm:$0xff] %vm27, %v215
    %281 = vst.msk [vmem:[%s265 + $0xb1] sm:$0xff] %vm27, %v216
    %282 = vst.msk [vmem:[%s265 + $0xc1] sm:$0xff] %vm27, %v217
    %283 = vst.msk [vmem:[%s265 + $0xc9] sm:$0xff] %vm27, %v218
    %284 = vst.msk [vmem:[%s265 + $0xd9] sm:$0xff] %vm27, %v219
    %285 = vst.msk [vmem:[%s265 + $0xe1] sm:$0xff] %vm27, %v220
    %286 = vst.msk [vmem:[%s265 + $0xf1] sm:$0xff] %vm27, %v221
    %287 = vst.msk [vmem:[%s265 + $0xf9] sm:$0xff] %vm27, %v222
    %288 = vst.msk [vmem:[%s265 + $0x109] sm:$0xff] %vm27, %v223
    %289 = vst.msk [vmem:[%s265 + $0x111] sm:$0xff] %vm27, %v224
    %290 = vst.msk [vmem:[%s265 + $0x121] sm:$0xff] %vm27, %v225
    %291 = vst.msk [vmem:[%s265 + $0x129] sm:$0xff] %vm27, %v226
    %292 = vst.msk [vmem:[%s265 + $0x139] sm:$0xff] %vm27, %v227
    %293 = vst.msk [vmem:[%s265 + $0x141] sm:$0xff] %vm27, %v228
    %294 = vst.msk [vmem:[%s265 + $0x151] sm:$0xff] %vm27, %v229
    %295 = vst.msk [vmem:[%s265 + $0x159] sm:$0xff] %vm27, %v230
    %296 = vst.msk [vmem:[%s265 + $0x169] sm:$0xff] %vm27, %v231
    %297 = vst.msk [vmem:[%s265 + $0x171] sm:$0xff] %vm27, %v232
    %298 = vst.msk [vmem:[%s265 + $0x1b1] sm:$0xff] %vm27, %v233
    %299 = vst.msk [vmem:[%s265 + $0x1b9] sm:$0xff] %vm27, %v234
    %300 = vst.msk [vmem:[%s265 + $0x1c9] sm:$0xff] %vm27, %v235
    %301 = vst.msk [vmem:[%s265 + $0x1d1] sm:$0xff] %vm27, %v236
    %302 = vst.msk [vmem:[%s265 + $0x1e1] sm:$0xff] %vm27, %v237
    %303 = vst.msk [vmem:[%s265 + $0x1e9] sm:$0xff] %vm27, %v238
    %304 = vst.msk [vmem:[%s265 + $0x1f9] sm:$0xff] %vm27, %v239
    %305 = vst.msk [vmem:[%s265 + $0x201] sm:$0xff] %vm27, %v240
    %306 = vst.msk [vmem:[%s265 + $0x211] sm:$0xff] %vm27, %v241
    %307 = vst.msk [vmem:[%s265 + $0x219] sm:$0xff] %vm27, %v242
    %308 = vst.msk [vmem:[%s265 + $0x229] sm:$0xff] %vm27, %v243
    %309 = vst.msk [vmem:[%s265 + $0x231] sm:$0xff] %vm27, %v244
    %310 = vst.msk [vmem:[%s265 + $0x241] sm:$0xff] %vm27, %v245
    %311 = vst.msk [vmem:[%s265 + $0x249] sm:$0xff] %vm27, %v246
    %312 = vst.msk [vmem:[%s265 + $0x259] sm:$0xff] %vm27, %v247
    %313 = vst.msk [vmem:[%s265 + $0x261] sm:$0xff] %vm27, %v248
    %314 = vst.msk [vmem:[%s265 + $0x271] sm:$0xff] %vm27, %v249
    %315 = vst.msk [vmem:[%s265 + $0x279] sm:$0xff] %vm27, %v250
    %316 = vst.msk [vmem:[%s265 + $0x289] sm:$0xff] %vm27, %v251
    %317 = vst.msk [vmem:[%s265 + $0x291] sm:$0xff] %vm27, %v252
    %318 = vst.msk [vmem:[%s265 + $0x2a1] sm:$0xff] %vm27, %v253
    %319 = vst.msk [vmem:[%s265 + $0x2a9] sm:$0xff] %vm27, %v254
    %320 = vst.msk [vmem:[%s265 + $0x2b9] sm:$0xff] %vm27, %v255
    %321 = vst.msk [vmem:[%s265 + $0x2c1] sm:$0xff] %vm27, %v256
    %322 = vst.msk [vmem:[%s265 + $0x2d1] sm:$0xff] %vm27, %v257
    %323 = vst.msk [vmem:[%s265 + $0x2d9] sm:$0xff] %vm27, %v258
    %324 = vst.msk [vmem:[%s265 + $0x2e9] sm:$0xff] %vm27, %v259
    %325 = vst.msk [vmem:[%s265 + $0x2f1] sm:$0xff] %vm27, %v260
    %326 = vst.msk [vmem:[%s265 + $0x301] sm:$0xff] %vm27, %v261
    %327 = vst.msk [vmem:[%s265 + $0x309] sm:$0xff] %vm27, %v262
    %328 = vst.msk [vmem:[%s265 + $0x319] sm:$0xff] %vm27, %v263
    %329 = vst.msk [vmem:[%s265 + $0x321] sm:$0xff] %vm27, %v264
    %v330 = vld [vmem:[#allocation2] sm:$0xff]
    %v331 = vld [vmem:[#allocation2 + $0x8] sm:$0xff]
    %v332 = vld [vmem:[#allocation2 + $0x18] sm:$0xff]
    %v333 = vld [vmem:[#allocation2 + $0x20] sm:$0xff]
    %v334 = vld [vmem:[#allocation2 + $0x30] sm:$0xff]
    %v335 = vld [vmem:[#allocation2 + $0x38] sm:$0xff]
    %v336 = vld [vmem:[#allocation2 + $0x48] sm:$0xff]
    %v337 = vld [vmem:[#allocation2 + $0x50] sm:$0xff]
    %v338 = vld [vmem:[#allocation2 + $0x60] sm:$0xff]
    %v339 = vld [vmem:[#allocation2 + $0x68] sm:$0xff]
    %v340 = vld [vmem:[#allocation2 + $0x78] sm:$0xff]
    %v341 = vld [vmem:[#allocation2 + $0x80] sm:$0xff]
    %v342 = vld [vmem:[#allocation2 + $0x90] sm:$0xff]
    %v343 = vld [vmem:[#allocation2 + $0x98] sm:$0xff]
    %v344 = vld [vmem:[#allocation2 + $0xa8] sm:$0xff]
    %v345 = vld [vmem:[#allocation2 + $0xb0] sm:$0xff]
    %v346 = vld [vmem:[#allocation2 + $0xc0] sm:$0xff]
    %v347 = vld [vmem:[#allocation2 + $0xc8] sm:$0xff]
    %v348 = vld [vmem:[#allocation2 + $0xd8] sm:$0xff]
    %v349 = vld [vmem:[#allocation2 + $0xe0] sm:$0xff]
    %v350 = vld [vmem:[#allocation2 + $0xf0] sm:$0xff]
    %v351 = vld [vmem:[#allocation2 + $0xf8] sm:$0xff]
    %v352 = vld [vmem:[#allocation2 + $0x108] sm:$0xff]
    %v353 = vld [vmem:[#allocation2 + $0x110] sm:$0xff]
    %v354 = vld [vmem:[#allocation2 + $0x120] sm:$0xff]
    %v355 = vld [vmem:[#allocation2 + $0x128] sm:$0xff]
    %v356 = vld [vmem:[#allocation2 + $0x138] sm:$0xff]
    %v357 = vld [vmem:[#allocation2 + $0x140] sm:$0xff]
    %v358 = vld [vmem:[#allocation2 + $0x150] sm:$0xff]
    %v359 = vld [vmem:[#allocation2 + $0x158] sm:$0xff]
    %v360 = vld [vmem:[#allocation2 + $0x168] sm:$0xff]
    %v361 = vld [vmem:[#allocation2 + $0x170] sm:$0xff]
    %v362 = vld [vmem:[#allocation2 + $0x1b0] sm:$0xff]
    %v363 = vld [vmem:[#allocation2 + $0x1b8] sm:$0xff]
    %v364 = vld [vmem:[#allocation2 + $0x1c8] sm:$0xff]
    %v365 = vld [vmem:[#allocation2 + $0x1d0] sm:$0xff]
    %v366 = vld [vmem:[#allocation2 + $0x1e0] sm:$0xff]
    %v367 = vld [vmem:[#allocation2 + $0x1e8] sm:$0xff]
    %v368 = vld [vmem:[#allocation2 + $0x1f8] sm:$0xff]
    %v369 = vld [vmem:[#allocation2 + $0x200] sm:$0xff]
    %v370 = vld [vmem:[#allocation2 + $0x210] sm:$0xff]
    %v371 = vld [vmem:[#allocation2 + $0x218] sm:$0xff]
    %v372 = vld [vmem:[#allocation2 + $0x228] sm:$0xff]
    %v373 = vld [vmem:[#allocation2 + $0x230] sm:$0xff]
    %v374 = vld [vmem:[#allocation2 + $0x240] sm:$0xff]
    %v375 = vld [vmem:[#allocation2 + $0x248] sm:$0xff]
    %v376 = vld [vmem:[#allocation2 + $0x258] sm:$0xff]
    %v377 = vld [vmem:[#allocation2 + $0x260] sm:$0xff]
    %v378 = vld [vmem:[#allocation2 + $0x270] sm:$0xff]
    %v379 = vld [vmem:[#allocation2 + $0x278] sm:$0xff]
    %v380 = vld [vmem:[#allocation2 + $0x288] sm:$0xff]
    %v381 = vld [vmem:[#allocation2 + $0x290] sm:$0xff]
    %v382 = vld [vmem:[#allocation2 + $0x2a0] sm:$0xff]
    %v383 = vld [vmem:[#allocation2 + $0x2a8] sm:$0xff]
    %v384 = vld [vmem:[#allocation2 + $0x2b8] sm:$0xff]
    %v385 = vld [vmem:[#allocation2 + $0x2c0] sm:$0xff]
    %v386 = vld [vmem:[#allocation2 + $0x2d0] sm:$0xff]
    %v387 = vld [vmem:[#allocation2 + $0x2d8] sm:$0xff]
    %v388 = vld [vmem:[#allocation2 + $0x2e8] sm:$0xff]
    %v389 = vld [vmem:[#allocation2 + $0x2f0] sm:$0xff]
    %v390 = vld [vmem:[#allocation2 + $0x300] sm:$0xff]
    %v391 = vld [vmem:[#allocation2 + $0x308] sm:$0xff]
    %v392 = vld [vmem:[#allocation2 + $0x318] sm:$0xff]
    %v393 = vld [vmem:[#allocation2 + $0x320] sm:$0xff]
    %394 = vst.msk [vmem:[#allocation3] sm:$0xff] %vm27, %v330
    %395 = vst.msk [vmem:[#allocation3 + $0x8] sm:$0xff] %vm27, %v331
    %396 = vst.msk [vmem:[#allocation3 + $0x10] sm:$0xff] %vm27, %v332
    %397 = vst.msk [vmem:[#allocation3 + $0x18] sm:$0xff] %vm27, %v333
    %398 = vst.msk [vmem:[#allocation3 + $0x20] sm:$0xff] %vm27, %v334
    %399 = vst.msk [vmem:[#allocation3 + $0x28] sm:$0xff] %vm27, %v335
    %400 = vst.msk [vmem:[#allocation3 + $0x30] sm:$0xff] %vm27, %v336
    %401 = vst.msk [vmem:[#allocation3 + $0x38] sm:$0xff] %vm27, %v337
    %402 = vst.msk [vmem:[#allocation3 + $0x40] sm:$0xff] %vm27, %v338
    %403 = vst.msk [vmem:[#allocation3 + $0x48] sm:$0xff] %vm27, %v339
    %404 = vst.msk [vmem:[#allocation3 + $0x50] sm:$0xff] %vm27, %v340
    %405 = vst.msk [vmem:[#allocation3 + $0x58] sm:$0xff] %vm27, %v341
    %406 = vst.msk [vmem:[#allocation3 + $0x60] sm:$0xff] %vm27, %v342
    %407 = vst.msk [vmem:[#allocation3 + $0x68] sm:$0xff] %vm27, %v343
    %408 = vst.msk [vmem:[#allocation3 + $0x70] sm:$0xff] %vm27, %v344
    %409 = vst.msk [vmem:[#allocation3 + $0x78] sm:$0xff] %vm27, %v345
    %410 = vst.msk [vmem:[#allocation3 + $0x80] sm:$0xff] %vm27, %v346
    %411 = vst.msk [vmem:[#allocation3 + $0x88] sm:$0xff] %vm27, %v347
    %412 = vst.msk [vmem:[#allocation3 + $0x90] sm:$0xff] %vm27, %v348
    %413 = vst.msk [vmem:[#allocation3 + $0x98] sm:$0xff] %vm27, %v349
    %414 = vst.msk [vmem:[#allocation3 + $0xa0] sm:$0xff] %vm27, %v350
    %415 = vst.msk [vmem:[#allocation3 + $0xa8] sm:$0xff] %vm27, %v351
    %416 = vst.msk [vmem:[#allocation3 + $0xb0] sm:$0xff] %vm27, %v352
    %417 = vst.msk [vmem:[#allocation3 + $0xb8] sm:$0xff] %vm27, %v353
    %418 = vst.msk [vmem:[#allocation3 + $0xc0] sm:$0xff] %vm27, %v354
    %419 = vst.msk [vmem:[#allocation3 + $0xc8] sm:$0xff] %vm27, %v355
    %420 = vst.msk [vmem:[#allocation3 + $0xd0] sm:$0xff] %vm27, %v356
    %421 = vst.msk [vmem:[#allocation3 + $0xd8] sm:$0xff] %vm27, %v357
    %422 = vst.msk [vmem:[#allocation3 + $0xe0] sm:$0xff] %vm27, %v358
    %423 = vst.msk [vmem:[#allocation3 + $0xe8] sm:$0xff] %vm27, %v359
    %424 = vst.msk [vmem:[#allocation3 + $0xf0] sm:$0xff] %vm27, %v360
    %425 = vst.msk [vmem:[#allocation3 + $0xf8] sm:$0xff] %vm27, %v361
    %426 = vst.msk [vmem:[#allocation3 + $0x100] sm:$0xff] %vm27, %v362
    %427 = vst.msk [vmem:[#allocation3 + $0x108] sm:$0xff] %vm27, %v363
    %428 = vst.msk [vmem:[#allocation3 + $0x110] sm:$0xff] %vm27, %v364
    %429 = vst.msk [vmem:[#allocation3 + $0x118] sm:$0xff] %vm27, %v365
    %430 = vst.msk [vmem:[#allocation3 + $0x120] sm:$0xff] %vm27, %v366
    %431 = vst.msk [vmem:[#allocation3 + $0x128] sm:$0xff] %vm27, %v367
    %432 = vst.msk [vmem:[#allocation3 + $0x130] sm:$0xff] %vm27, %v368
    %433 = vst.msk [vmem:[#allocation3 + $0x138] sm:$0xff] %vm27, %v369
    %434 = vst.msk [vmem:[#allocation3 + $0x140] sm:$0xff] %vm27, %v370
    %435 = vst.msk [vmem:[#allocation3 + $0x148] sm:$0xff] %vm27, %v371
    %436 = vst.msk [vmem:[#allocation3 + $0x150] sm:$0xff] %vm27, %v372
    %437 = vst.msk [vmem:[#allocation3 + $0x158] sm:$0xff] %vm27, %v373
    %438 = vst.msk [vmem:[#allocation3 + $0x160] sm:$0xff] %vm27, %v374
    %439 = vst.msk [vmem:[#allocation3 + $0x168] sm:$0xff] %vm27, %v375
    %440 = vst.msk [vmem:[#allocation3 + $0x170] sm:$0xff] %vm27, %v376
    %441 = vst.msk [vmem:[#allocation3 + $0x178] sm:$0xff] %vm27, %v377
    %442 = vst.msk [vmem:[#allocation3 + $0x180] sm:$0xff] %vm27, %v378
    %443 = vst.msk [vmem:[#allocation3 + $0x188] sm:$0xff] %vm27, %v379
    %444 = vst.msk [vmem:[#allocation3 + $0x190] sm:$0xff] %vm27, %v380
    %445 = vst.msk [vmem:[#allocation3 + $0x198] sm:$0xff] %vm27, %v381
    %446 = vst.msk [vmem:[#allocation3 + $0x1a0] sm:$0xff] %vm27, %v382
    %447 = vst.msk [vmem:[#allocation3 + $0x1a8] sm:$0xff] %vm27, %v383
    %448 = vst.msk [vmem:[#allocation3 + $0x1b0] sm:$0xff] %vm27, %v384
    %449 = vst.msk [vmem:[#allocation3 + $0x1b8] sm:$0xff] %vm27, %v385
    %450 = vst.msk [vmem:[#allocation3 + $0x1c0] sm:$0xff] %vm27, %v386
    %451 = vst.msk [vmem:[#allocation3 + $0x1c8] sm:$0xff] %vm27, %v387
    %452 = vst.msk [vmem:[#allocation3 + $0x1d0] sm:$0xff] %vm27, %v388
    %453 = vst.msk [vmem:[#allocation3 + $0x1d8] sm:$0xff] %vm27, %v389
    %454 = vst.msk [vmem:[#allocation3 + $0x1e0] sm:$0xff] %vm27, %v390
    %455 = vst.msk [vmem:[#allocation3 + $0x1e8] sm:$0xff] %vm27, %v391
    %456 = vst.msk [vmem:[#allocation3 + $0x1f0] sm:$0xff] %vm27, %v392
    %457 = vst.msk [vmem:[#allocation3 + $0x1f8] sm:$0xff] %vm27, %v393
    %v458 = vld [vmem:[#allocation2 + $0x1] sm:$0xff]
    %v459 = vld [vmem:[#allocation2 + $0x9] sm:$0xff]
    %v460 = vld [vmem:[#allocation2 + $0x19] sm:$0xff]
    %v461 = vld [vmem:[#allocation2 + $0x21] sm:$0xff]
    %v462 = vld [vmem:[#allocation2 + $0x31] sm:$0xff]
    %v463 = vld [vmem:[#allocation2 + $0x39] sm:$0xff]
    %v464 = vld [vmem:[#allocation2 + $0x49] sm:$0xff]
    %v465 = vld [vmem:[#allocation2 + $0x51] sm:$0xff]
    %v466 = vld [vmem:[#allocation2 + $0x61] sm:$0xff]
    %v467 = vld [vmem:[#allocation2 + $0x69] sm:$0xff]
    %v468 = vld [vmem:[#allocation2 + $0x79] sm:$0xff]
    %v469 = vld [vmem:[#allocation2 + $0x81] sm:$0xff]
    %v470 = vld [vmem:[#allocation2 + $0x91] sm:$0xff]
    %v471 = vld [vmem:[#allocation2 + $0x99] sm:$0xff]
    %v472 = vld [vmem:[#allocation2 + $0xa9] sm:$0xff]
    %v473 = vld [vmem:[#allocation2 + $0xb1] sm:$0xff]
    %v474 = vld [vmem:[#allocation2 + $0xc1] sm:$0xff]
    %v475 = vld [vmem:[#allocation2 + $0xc9] sm:$0xff]
    %v476 = vld [vmem:[#allocation2 + $0xd9] sm:$0xff]
    %v477 = vld [vmem:[#allocation2 + $0xe1] sm:$0xff]
    %v478 = vld [vmem:[#allocation2 + $0xf1] sm:$0xff]
    %v479 = vld [vmem:[#allocation2 + $0xf9] sm:$0xff]
    %v480 = vld [vmem:[#allocation2 + $0x109] sm:$0xff]
    %v481 = vld [vmem:[#allocation2 + $0x111] sm:$0xff]
    %v482 = vld [vmem:[#allocation2 + $0x121] sm:$0xff]
    %v483 = vld [vmem:[#allocation2 + $0x129] sm:$0xff]
    %v484 = vld [vmem:[#allocation2 + $0x139] sm:$0xff]
    %v485 = vld [vmem:[#allocation2 + $0x141] sm:$0xff]
    %v486 = vld [vmem:[#allocation2 + $0x151] sm:$0xff]
    %v487 = vld [vmem:[#allocation2 + $0x159] sm:$0xff]
    %v488 = vld [vmem:[#allocation2 + $0x169] sm:$0xff]
    %v489 = vld [vmem:[#allocation2 + $0x171] sm:$0xff]
    %v490 = vld [vmem:[#allocation2 + $0x1b1] sm:$0xff]
    %v491 = vld [vmem:[#allocation2 + $0x1b9] sm:$0xff]
    %v492 = vld [vmem:[#allocation2 + $0x1c9] sm:$0xff]
    %v493 = vld [vmem:[#allocation2 + $0x1d1] sm:$0xff]
    %v494 = vld [vmem:[#allocation2 + $0x1e1] sm:$0xff]
    %v495 = vld [vmem:[#allocation2 + $0x1e9] sm:$0xff]
    %v496 = vld [vmem:[#allocation2 + $0x1f9] sm:$0xff]
    %v497 = vld [vmem:[#allocation2 + $0x201] sm:$0xff]
    %v498 = vld [vmem:[#allocation2 + $0x211] sm:$0xff]
    %v499 = vld [vmem:[#allocation2 + $0x219] sm:$0xff]
    %v500 = vld [vmem:[#allocation2 + $0x229] sm:$0xff]
    %v501 = vld [vmem:[#allocation2 + $0x231] sm:$0xff]
    %v502 = vld [vmem:[#allocation2 + $0x241] sm:$0xff]
    %v503 = vld [vmem:[#allocation2 + $0x249] sm:$0xff]
    %v504 = vld [vmem:[#allocation2 + $0x259] sm:$0xff]
    %v505 = vld [vmem:[#allocation2 + $0x261] sm:$0xff]
    %v506 = vld [vmem:[#allocation2 + $0x271] sm:$0xff]
    %v507 = vld [vmem:[#allocation2 + $0x279] sm:$0xff]
    %v508 = vld [vmem:[#allocation2 + $0x289] sm:$0xff]
    %v509 = vld [vmem:[#allocation2 + $0x291] sm:$0xff]
    %v510 = vld [vmem:[#allocation2 + $0x2a1] sm:$0xff]
    %v511 = vld [vmem:[#allocation2 + $0x2a9] sm:$0xff]
    %v512 = vld [vmem:[#allocation2 + $0x2b9] sm:$0xff]
    %v513 = vld [vmem:[#allocation2 + $0x2c1] sm:$0xff]
    %v514 = vld [vmem:[#allocation2 + $0x2d1] sm:$0xff]
    %v515 = vld [vmem:[#allocation2 + $0x2d9] sm:$0xff]
    %v516 = vld [vmem:[#allocation2 + $0x2e9] sm:$0xff]
    %v517 = vld [vmem:[#allocation2 + $0x2f1] sm:$0xff]
    %v518 = vld [vmem:[#allocation2 + $0x301] sm:$0xff]
    %v519 = vld [vmem:[#allocation2 + $0x309] sm:$0xff]
    %v520 = vld [vmem:[#allocation2 + $0x319] sm:$0xff]
    %v521 = vld [vmem:[#allocation2 + $0x321] sm:$0xff]
    %586 = vrot.lane.b32.xlu0 %v458, 4
    %v587 = vpop.permute.xlu0 %586
    %588 = vrot.lane.b32.xlu0 %v459, 4
    %v589 = vpop.permute.xlu0 %588
    %590 = vrot.lane.b32.xlu0 %v460, 4
    %v591 = vpop.permute.xlu0 %590
    %592 = vrot.lane.b32.xlu0 %v461, 4
    %v593 = vpop.permute.xlu0 %592
    %594 = vrot.lane.b32.xlu0 %v462, 4
    %v595 = vpop.permute.xlu0 %594
    %596 = vrot.lane.b32.xlu0 %v463, 4
    %v597 = vpop.permute.xlu0 %596
    %598 = vrot.lane.b32.xlu0 %v464, 4
    %v599 = vpop.permute.xlu0 %598
    %600 = vrot.lane.b32.xlu0 %v465, 4
    %v601 = vpop.permute.xlu0 %600
    %602 = vrot.lane.b32.xlu0 %v466, 4
    %v603 = vpop.permute.xlu0 %602
    %604 = vrot.lane.b32.xlu0 %v467, 4
    %v605 = vpop.permute.xlu0 %604
    %606 = vrot.lane.b32.xlu0 %v468, 4
    %v607 = vpop.permute.xlu0 %606
    %608 = vrot.lane.b32.xlu0 %v469, 4
    %v609 = vpop.permute.xlu0 %608
    %610 = vrot.lane.b32.xlu0 %v470, 4
    %v611 = vpop.permute.xlu0 %610
    %612 = vrot.lane.b32.xlu0 %v471, 4
    %v613 = vpop.permute.xlu0 %612
    %614 = vrot.lane.b32.xlu0 %v472, 4
    %v615 = vpop.permute.xlu0 %614
    %616 = vrot.lane.b32.xlu0 %v473, 4
    %v617 = vpop.permute.xlu0 %616
    %618 = vrot.lane.b32.xlu0 %v474, 4
    %v619 = vpop.permute.xlu0 %618
    %620 = vrot.lane.b32.xlu0 %v475, 4
    %v621 = vpop.permute.xlu0 %620
    %622 = vrot.lane.b32.xlu0 %v476, 4
    %v623 = vpop.permute.xlu0 %622
    %624 = vrot.lane.b32.xlu0 %v477, 4
    %v625 = vpop.permute.xlu0 %624
    %626 = vrot.lane.b32.xlu0 %v478, 4
    %v627 = vpop.permute.xlu0 %626
    %628 = vrot.lane.b32.xlu0 %v479, 4
    %v629 = vpop.permute.xlu0 %628
    %630 = vrot.lane.b32.xlu0 %v480, 4
    %v631 = vpop.permute.xlu0 %630
    %632 = vrot.lane.b32.xlu0 %v481, 4
    %v633 = vpop.permute.xlu0 %632
    %634 = vrot.lane.b32.xlu0 %v482, 4
    %v635 = vpop.permute.xlu0 %634
    %636 = vrot.lane.b32.xlu0 %v483, 4
    %v637 = vpop.permute.xlu0 %636
    %638 = vrot.lane.b32.xlu0 %v484, 4
    %v639 = vpop.permute.xlu0 %638
    %640 = vrot.lane.b32.xlu0 %v485, 4
    %v641 = vpop.permute.xlu0 %640
    %642 = vrot.lane.b32.xlu0 %v486, 4
    %v643 = vpop.permute.xlu0 %642
    %644 = vrot.lane.b32.xlu0 %v487, 4
    %v645 = vpop.permute.xlu0 %644
    %646 = vrot.lane.b32.xlu0 %v488, 4
    %v647 = vpop.permute.xlu0 %646
    %648 = vrot.lane.b32.xlu0 %v489, 4
    %v649 = vpop.permute.xlu0 %648
    %650 = vrot.lane.b32.xlu0 %v490, 4
    %v651 = vpop.permute.xlu0 %650
    %652 = vrot.lane.b32.xlu0 %v491, 4
    %v653 = vpop.permute.xlu0 %652
    %654 = vrot.lane.b32.xlu0 %v492, 4
    %v655 = vpop.permute.xlu0 %654
    %656 = vrot.lane.b32.xlu0 %v493, 4
    %v657 = vpop.permute.xlu0 %656
    %658 = vrot.lane.b32.xlu0 %v494, 4
    %v659 = vpop.permute.xlu0 %658
    %660 = vrot.lane.b32.xlu0 %v495, 4
    %v661 = vpop.permute.xlu0 %660
    %662 = vrot.lane.b32.xlu0 %v496, 4
    %v663 = vpop.permute.xlu0 %662
    %664 = vrot.lane.b32.xlu0 %v497, 4
    %v665 = vpop.permute.xlu0 %664
    %666 = vrot.lane.b32.xlu0 %v498, 4
    %v667 = vpop.permute.xlu0 %666
    %668 = vrot.lane.b32.xlu0 %v499, 4
    %v669 = vpop.permute.xlu0 %668
    %670 = vrot.lane.b32.xlu0 %v500, 4
    %v671 = vpop.permute.xlu0 %670
    %672 = vrot.lane.b32.xlu0 %v501, 4
    %v673 = vpop.permute.xlu0 %672
    %674 = vrot.lane.b32.xlu0 %v502, 4
    %v675 = vpop.permute.xlu0 %674
    %676 = vrot.lane.b32.xlu0 %v503, 4
    %v677 = vpop.permute.xlu0 %676
    %678 = vrot.lane.b32.xlu0 %v504, 4
    %v679 = vpop.permute.xlu0 %678
    %680 = vrot.lane.b32.xlu0 %v505, 4
    %v681 = vpop.permute.xlu0 %680
    %682 = vrot.lane.b32.xlu0 %v506, 4
    %v683 = vpop.permute.xlu0 %682
    %684 = vrot.lane.b32.xlu0 %v507, 4
    %v685 = vpop.permute.xlu0 %684
    %686 = vrot.lane.b32.xlu0 %v508, 4
    %v687 = vpop.permute.xlu0 %686
    %688 = vrot.lane.b32.xlu0 %v509, 4
    %v689 = vpop.permute.xlu0 %688
    %690 = vrot.lane.b32.xlu0 %v510, 4
    %v691 = vpop.permute.xlu0 %690
    %692 = vrot.lane.b32.xlu0 %v511, 4
    %v693 = vpop.permute.xlu0 %692
    %694 = vrot.lane.b32.xlu0 %v512, 4
    %v695 = vpop.permute.xlu0 %694
    %696 = vrot.lane.b32.xlu0 %v513, 4
    %v697 = vpop.permute.xlu0 %696
    %698 = vrot.lane.b32.xlu0 %v514, 4
    %v699 = vpop.permute.xlu0 %698
    %700 = vrot.lane.b32.xlu0 %v515, 4
    %v701 = vpop.permute.xlu0 %700
    %702 = vrot.lane.b32.xlu0 %v516, 4
    %v703 = vpop.permute.xlu0 %702
    %704 = vrot.lane.b32.xlu0 %v517, 4
    %v705 = vpop.permute.xlu0 %704
    %706 = vrot.lane.b32.xlu0 %v518, 4
    %v707 = vpop.permute.xlu0 %706
    %708 = vrot.lane.b32.xlu0 %v519, 4
    %v709 = vpop.permute.xlu0 %708
    %710 = vrot.lane.b32.xlu0 %v520, 4
    %v711 = vpop.permute.xlu0 %710
    %712 = vrot.lane.b32.xlu0 %v521, 4
    %v713 = vpop.permute.xlu0 %712
    %vm778 = vcmask 64544
    %779 = vst.msk [vmem:[#allocation3] sm:$0xff] %vm778, %v587
    %780 = vst.msk [vmem:[#allocation3 + $0x8] sm:$0xff] %vm778, %v589
    %781 = vst.msk [vmem:[#allocation3 + $0x10] sm:$0xff] %vm778, %v591
    %782 = vst.msk [vmem:[#allocation3 + $0x18] sm:$0xff] %vm778, %v593
    %783 = vst.msk [vmem:[#allocation3 + $0x20] sm:$0xff] %vm778, %v595
    %784 = vst.msk [vmem:[#allocation3 + $0x28] sm:$0xff] %vm778, %v597
    %785 = vst.msk [vmem:[#allocation3 + $0x30] sm:$0xff] %vm778, %v599
    %786 = vst.msk [vmem:[#allocation3 + $0x38] sm:$0xff] %vm778, %v601
    %787 = vst.msk [vmem:[#allocation3 + $0x40] sm:$0xff] %vm778, %v603
    %788 = vst.msk [vmem:[#allocation3 + $0x48] sm:$0xff] %vm778, %v605
    %789 = vst.msk [vmem:[#allocation3 + $0x50] sm:$0xff] %vm778, %v607
    %790 = vst.msk [vmem:[#allocation3 + $0x58] sm:$0xff] %vm778, %v609
    %791 = vst.msk [vmem:[#allocation3 + $0x60] sm:$0xff] %vm778, %v611
    %792 = vst.msk [vmem:[#allocation3 + $0x68] sm:$0xff] %vm778, %v613
    %793 = vst.msk [vmem:[#allocation3 + $0x70] sm:$0xff] %vm778, %v615
    %794 = vst.msk [vmem:[#allocation3 + $0x78] sm:$0xff] %vm778, %v617
    %795 = vst.msk [vmem:[#allocation3 + $0x80] sm:$0xff] %vm778, %v619
    %796 = vst.msk [vmem:[#allocation3 + $0x88] sm:$0xff] %vm778, %v621
    %797 = vst.msk [vmem:[#allocation3 + $0x90] sm:$0xff] %vm778, %v623
    %798 = vst.msk [vmem:[#allocation3 + $0x98] sm:$0xff] %vm778, %v625
    %799 = vst.msk [vmem:[#allocation3 + $0xa0] sm:$0xff] %vm778, %v627
    %800 = vst.msk [vmem:[#allocation3 + $0xa8] sm:$0xff] %vm778, %v629
    %801 = vst.msk [vmem:[#allocation3 + $0xb0] sm:$0xff] %vm778, %v631
    %802 = vst.msk [vmem:[#allocation3 + $0xb8] sm:$0xff] %vm778, %v633
    %803 = vst.msk [vmem:[#allocation3 + $0xc0] sm:$0xff] %vm778, %v635
    %804 = vst.msk [vmem:[#allocation3 + $0xc8] sm:$0xff] %vm778, %v637
    %805 = vst.msk [vmem:[#allocation3 + $0xd0] sm:$0xff] %vm778, %v639
    %806 = vst.msk [vmem:[#allocation3 + $0xd8] sm:$0xff] %vm778, %v641
    %807 = vst.msk [vmem:[#allocation3 + $0xe0] sm:$0xff] %vm778, %v643
    %808 = vst.msk [vmem:[#allocation3 + $0xe8] sm:$0xff] %vm778, %v645
    %809 = vst.msk [vmem:[#allocation3 + $0xf0] sm:$0xff] %vm778, %v647
    %810 = vst.msk [vmem:[#allocation3 + $0xf8] sm:$0xff] %vm778, %v649
    %811 = vst.msk [vmem:[#allocation3 + $0x100] sm:$0xff] %vm778, %v651
    %812 = vst.msk [vmem:[#allocation3 + $0x108] sm:$0xff] %vm778, %v653
    %813 = vst.msk [vmem:[#allocation3 + $0x110] sm:$0xff] %vm778, %v655
    %814 = vst.msk [vmem:[#allocation3 + $0x118] sm:$0xff] %vm778, %v657
    %815 = vst.msk [vmem:[#allocation3 + $0x120] sm:$0xff] %vm778, %v659
    %816 = vst.msk [vmem:[#allocation3 + $0x128] sm:$0xff] %vm778, %v661
    %817 = vst.msk [vmem:[#allocation3 + $0x130] sm:$0xff] %vm778, %v663
    %818 = vst.msk [vmem:[#allocation3 + $0x138] sm:$0xff] %vm778, %v665
    %819 = vst.msk [vmem:[#allocation3 + $0x140] sm:$0xff] %vm778, %v667
    %820 = vst.msk [vmem:[#allocation3 + $0x148] sm:$0xff] %vm778, %v669
    %821 = vst.msk [vmem:[#allocation3 + $0x150] sm:$0xff] %vm778, %v671
    %822 = vst.msk [vmem:[#allocation3 + $0x158] sm:$0xff] %vm778, %v673
    %823 = vst.msk [vmem:[#allocation3 + $0x160] sm:$0xff] %vm778, %v675
    %824 = vst.msk [vmem:[#allocation3 + $0x168] sm:$0xff] %vm778, %v677
    %825 = vst.msk [vmem:[#allocation3 + $0x170] sm:$0xff] %vm778, %v679
    %826 = vst.msk [vmem:[#allocation3 + $0x178] sm:$0xff] %vm778, %v681
    %827 = vst.msk [vmem:[#allocation3 + $0x180] sm:$0xff] %vm778, %v683
    %828 = vst.msk [vmem:[#allocation3 + $0x188] sm:$0xff] %vm778, %v685
    %829 = vst.msk [vmem:[#allocation3 + $0x190] sm:$0xff] %vm778, %v687
    %830 = vst.msk [vmem:[#allocation3 + $0x198] sm:$0xff] %vm778, %v689
    %831 = vst.msk [vmem:[#allocation3 + $0x1a0] sm:$0xff] %vm778, %v691
    %832 = vst.msk [vmem:[#allocation3 + $0x1a8] sm:$0xff] %vm778, %v693
    %833 = vst.msk [vmem:[#allocation3 + $0x1b0] sm:$0xff] %vm778, %v695
    %834 = vst.msk [vmem:[#allocation3 + $0x1b8] sm:$0xff] %vm778, %v697
    %835 = vst.msk [vmem:[#allocation3 + $0x1c0] sm:$0xff] %vm778, %v699
    %836 = vst.msk [vmem:[#allocation3 + $0x1c8] sm:$0xff] %vm778, %v701
    %837 = vst.msk [vmem:[#allocation3 + $0x1d0] sm:$0xff] %vm778, %v703
    %838 = vst.msk [vmem:[#allocation3 + $0x1d8] sm:$0xff] %vm778, %v705
    %839 = vst.msk [vmem:[#allocation3 + $0x1e0] sm:$0xff] %vm778, %v707
    %840 = vst.msk [vmem:[#allocation3 + $0x1e8] sm:$0xff] %vm778, %v709
    %841 = vst.msk [vmem:[#allocation3 + $0x1f0] sm:$0xff] %vm778, %v711
    %842 = vst.msk [vmem:[#allocation3 + $0x1f8] sm:$0xff] %vm778, %v713
    %v843 = vld [vmem:[#allocation2 + $0x2] sm:$0xff]
    %v844 = vld [vmem:[#allocation2 + $0xa] sm:$0xff]
    %v845 = vld [vmem:[#allocation2 + $0x1a] sm:$0xff]
    %v846 = vld [vmem:[#allocation2 + $0x22] sm:$0xff]
    %v847 = vld [vmem:[#allocation2 + $0x32] sm:$0xff]
    %v848 = vld [vmem:[#allocation2 + $0x3a] sm:$0xff]
    %v849 = vld [vmem:[#allocation2 + $0x4a] sm:$0xff]
    %v850 = vld [vmem:[#allocation2 + $0x52] sm:$0xff]
    %v851 = vld [vmem:[#allocation2 + $0x62] sm:$0xff]
    %v852 = vld [vmem:[#allocation2 + $0x6a] sm:$0xff]
    %v853 = vld [vmem:[#allocation2 + $0x7a] sm:$0xff]
    %v854 = vld [vmem:[#allocation2 + $0x82] sm:$0xff]
    %v855 = vld [vmem:[#allocation2 + $0x92] sm:$0xff]
    %v856 = vld [vmem:[#allocation2 + $0x9a] sm:$0xff]
    %v857 = vld [vmem:[#allocation2 + $0xaa] sm:$0xff]
    %v858 = vld [vmem:[#allocation2 + $0xb2] sm:$0xff]
    %v859 = vld [vmem:[#allocation2 + $0xc2] sm:$0xff]
    %v860 = vld [vmem:[#allocation2 + $0xca] sm:$0xff]
    %v861 = vld [vmem:[#allocation2 + $0xda] sm:$0xff]
    %v862 = vld [vmem:[#allocation2 + $0xe2] sm:$0xff]
    %v863 = vld [vmem:[#allocation2 + $0xf2] sm:$0xff]
    %v864 = vld [vmem:[#allocation2 + $0xfa] sm:$0xff]
    %v865 = vld [vmem:[#allocation2 + $0x10a] sm:$0xff]
    %v866 = vld [vmem:[#allocation2 + $0x112] sm:$0xff]
    %v867 = vld [vmem:[#allocation2 + $0x122] sm:$0xff]
    %v868 = vld [vmem:[#allocation2 + $0x12a] sm:$0xff]
    %v869 = vld [vmem:[#allocation2 + $0x13a] sm:$0xff]
    %v870 = vld [vmem:[#allocation2 + $0x142] sm:$0xff]
    %v871 = vld [vmem:[#allocation2 + $0x152] sm:$0xff]
    %v872 = vld [vmem:[#allocation2 + $0x15a] sm:$0xff]
    %v873 = vld [vmem:[#allocation2 + $0x16a] sm:$0xff]
    %v874 = vld [vmem:[#allocation2 + $0x172] sm:$0xff]
    %v875 = vld [vmem:[#allocation2 + $0x1b2] sm:$0xff]
    %v876 = vld [vmem:[#allocation2 + $0x1ba] sm:$0xff]
    %v877 = vld [vmem:[#allocation2 + $0x1ca] sm:$0xff]
    %v878 = vld [vmem:[#allocation2 + $0x1d2] sm:$0xff]
    %v879 = vld [vmem:[#allocation2 + $0x1e2] sm:$0xff]
    %v880 = vld [vmem:[#allocation2 + $0x1ea] sm:$0xff]
    %v881 = vld [vmem:[#allocation2 + $0x1fa] sm:$0xff]
    %v882 = vld [vmem:[#allocation2 + $0x202] sm:$0xff]
    %v883 = vld [vmem:[#allocation2 + $0x212] sm:$0xff]
    %v884 = vld [vmem:[#allocation2 + $0x21a] sm:$0xff]
    %v885 = vld [vmem:[#allocation2 + $0x22a] sm:$0xff]
    %v886 = vld [vmem:[#allocation2 + $0x232] sm:$0xff]
    %v887 = vld [vmem:[#allocation2 + $0x242] sm:$0xff]
    %v888 = vld [vmem:[#allocation2 + $0x24a] sm:$0xff]
    %v889 = vld [vmem:[#allocation2 + $0x25a] sm:$0xff]
    %v890 = vld [vmem:[#allocation2 + $0x262] sm:$0xff]
    %v891 = vld [vmem:[#allocation2 + $0x272] sm:$0xff]
    %v892 = vld [vmem:[#allocation2 + $0x27a] sm:$0xff]
    %v893 = vld [vmem:[#allocation2 + $0x28a] sm:$0xff]
    %v894 = vld [vmem:[#allocation2 + $0x292] sm:$0xff]
    %v895 = vld [vmem:[#allocation2 + $0x2a2] sm:$0xff]
    %v896 = vld [vmem:[#allocation2 + $0x2aa] sm:$0xff]
    %v897 = vld [vmem:[#allocation2 + $0x2ba] sm:$0xff]
    %v898 = vld [vmem:[#allocation2 + $0x2c2] sm:$0xff]
    %v899 = vld [vmem:[#allocation2 + $0x2d2] sm:$0xff]
    %v900 = vld [vmem:[#allocation2 + $0x2da] sm:$0xff]
    %v901 = vld [vmem:[#allocation2 + $0x2ea] sm:$0xff]
    %v902 = vld [vmem:[#allocation2 + $0x2f2] sm:$0xff]
    %v903 = vld [vmem:[#allocation2 + $0x302] sm:$0xff]
    %v904 = vld [vmem:[#allocation2 + $0x30a] sm:$0xff]
    %v905 = vld [vmem:[#allocation2 + $0x31a] sm:$0xff]
    %v906 = vld [vmem:[#allocation2 + $0x322] sm:$0xff]
    %971 = vrot.lane.b32.xlu0 %v843, 8
    %v972 = vpop.permute.xlu0 %971
    %973 = vrot.lane.b32.xlu0 %v844, 8
    %v974 = vpop.permute.xlu0 %973
    %975 = vrot.lane.b32.xlu0 %v845, 8
    %v976 = vpop.permute.xlu0 %975
    %977 = vrot.lane.b32.xlu0 %v846, 8
    %v978 = vpop.permute.xlu0 %977
    %979 = vrot.lane.b32.xlu0 %v847, 8
    %v980 = vpop.permute.xlu0 %979
    %981 = vrot.lane.b32.xlu0 %v848, 8
    %v982 = vpop.permute.xlu0 %981
    %983 = vrot.lane.b32.xlu0 %v849, 8
    %v984 = vpop.permute.xlu0 %983
    %985 = vrot.lane.b32.xlu0 %v850, 8
    %v986 = vpop.permute.xlu0 %985
    %987 = vrot.lane.b32.xlu0 %v851, 8
    %v988 = vpop.permute.xlu0 %987
    %989 = vrot.lane.b32.xlu0 %v852, 8
    %v990 = vpop.permute.xlu0 %989
    %991 = vrot.lane.b32.xlu0 %v853, 8
    %v992 = vpop.permute.xlu0 %991
    %993 = vrot.lane.b32.xlu0 %v854, 8
    %v994 = vpop.permute.xlu0 %993
    %995 = vrot.lane.b32.xlu0 %v855, 8
    %v996 = vpop.permute.xlu0 %995
    %997 = vrot.lane.b32.xlu0 %v856, 8
    %v998 = vpop.permute.xlu0 %997
    %999 = vrot.lane.b32.xlu0 %v857, 8
    %v1000 = vpop.permute.xlu0 %999
    %1001 = vrot.lane.b32.xlu0 %v858, 8
    %v1002 = vpop.permute.xlu0 %1001
    %1003 = vrot.lane.b32.xlu0 %v859, 8
    %v1004 = vpop.permute.xlu0 %1003
    %1005 = vrot.lane.b32.xlu0 %v860, 8
    %v1006 = vpop.permute.xlu0 %1005
    %1007 = vrot.lane.b32.xlu0 %v861, 8
    %v1008 = vpop.permute.xlu0 %1007
    %1009 = vrot.lane.b32.xlu0 %v862, 8
    %v1010 = vpop.permute.xlu0 %1009
    %1011 = vrot.lane.b32.xlu0 %v863, 8
    %v1012 = vpop.permute.xlu0 %1011
    %1013 = vrot.lane.b32.xlu0 %v864, 8
    %v1014 = vpop.permute.xlu0 %1013
    %1015 = vrot.lane.b32.xlu0 %v865, 8
    %v1016 = vpop.permute.xlu0 %1015
    %1017 = vrot.lane.b32.xlu0 %v866, 8
    %v1018 = vpop.permute.xlu0 %1017
    %1019 = vrot.lane.b32.xlu0 %v867, 8
    %v1020 = vpop.permute.xlu0 %1019
    %1021 = vrot.lane.b32.xlu0 %v868, 8
    %v1022 = vpop.permute.xlu0 %1021
    %1023 = vrot.lane.b32.xlu0 %v869, 8
    %v1024 = vpop.permute.xlu0 %1023
    %1025 = vrot.lane.b32.xlu0 %v870, 8
    %v1026 = vpop.permute.xlu0 %1025
    %1027 = vrot.lane.b32.xlu0 %v871, 8
    %v1028 = vpop.permute.xlu0 %1027
    %1029 = vrot.lane.b32.xlu0 %v872, 8
    %v1030 = vpop.permute.xlu0 %1029
    %1031 = vrot.lane.b32.xlu0 %v873, 8
    %v1032 = vpop.permute.xlu0 %1031
    %1033 = vrot.lane.b32.xlu0 %v874, 8
    %v1034 = vpop.permute.xlu0 %1033
    %1035 = vrot.lane.b32.xlu0 %v875, 8
    %v1036 = vpop.permute.xlu0 %1035
    %1037 = vrot.lane.b32.xlu0 %v876, 8
    %v1038 = vpop.permute.xlu0 %1037
    %1039 = vrot.lane.b32.xlu0 %v877, 8
    %v1040 = vpop.permute.xlu0 %1039
    %1041 = vrot.lane.b32.xlu0 %v878, 8
    %v1042 = vpop.permute.xlu0 %1041
    %1043 = vrot.lane.b32.xlu0 %v879, 8
    %v1044 = vpop.permute.xlu0 %1043
    %1045 = vrot.lane.b32.xlu0 %v880, 8
    %v1046 = vpop.permute.xlu0 %1045
    %1047 = vrot.lane.b32.xlu0 %v881, 8
    %v1048 = vpop.permute.xlu0 %1047
    %1049 = vrot.lane.b32.xlu0 %v882, 8
    %v1050 = vpop.permute.xlu0 %1049
    %1051 = vrot.lane.b32.xlu0 %v883, 8
    %v1052 = vpop.permute.xlu0 %1051
    %1053 = vrot.lane.b32.xlu0 %v884, 8
    %v1054 = vpop.permute.xlu0 %1053
    %1055 = vrot.lane.b32.xlu0 %v885, 8
    %v1056 = vpop.permute.xlu0 %1055
    %1057 = vrot.lane.b32.xlu0 %v886, 8
    %v1058 = vpop.permute.xlu0 %1057
    %1059 = vrot.lane.b32.xlu0 %v887, 8
    %v1060 = vpop.permute.xlu0 %1059
    %1061 = vrot.lane.b32.xlu0 %v888, 8
    %v1062 = vpop.permute.xlu0 %1061
    %1063 = vrot.lane.b32.xlu0 %v889, 8
    %v1064 = vpop.permute.xlu0 %1063
    %1065 = vrot.lane.b32.xlu0 %v890, 8
    %v1066 = vpop.permute.xlu0 %1065
    %1067 = vrot.lane.b32.xlu0 %v891, 8
    %v1068 = vpop.permute.xlu0 %1067
    %1069 = vrot.lane.b32.xlu0 %v892, 8
    %v1070 = vpop.permute.xlu0 %1069
    %1071 = vrot.lane.b32.xlu0 %v893, 8
    %v1072 = vpop.permute.xlu0 %1071
    %1073 = vrot.lane.b32.xlu0 %v894, 8
    %v1074 = vpop.permute.xlu0 %1073
    %1075 = vrot.lane.b32.xlu0 %v895, 8
    %v1076 = vpop.permute.xlu0 %1075
    %1077 = vrot.lane.b32.xlu0 %v896, 8
    %v1078 = vpop.permute.xlu0 %1077
    %1079 = vrot.lane.b32.xlu0 %v897, 8
    %v1080 = vpop.permute.xlu0 %1079
    %1081 = vrot.lane.b32.xlu0 %v898, 8
    %v1082 = vpop.permute.xlu0 %1081
    %1083 = vrot.lane.b32.xlu0 %v899, 8
    %v1084 = vpop.permute.xlu0 %1083
    %1085 = vrot.lane.b32.xlu0 %v900, 8
    %v1086 = vpop.permute.xlu0 %1085
    %1087 = vrot.lane.b32.xlu0 %v901, 8
    %v1088 = vpop.permute.xlu0 %1087
    %1089 = vrot.lane.b32.xlu0 %v902, 8
    %v1090 = vpop.permute.xlu0 %1089
    %1091 = vrot.lane.b32.xlu0 %v903, 8
    %v1092 = vpop.permute.xlu0 %1091
    %1093 = vrot.lane.b32.xlu0 %v904, 8
    %v1094 = vpop.permute.xlu0 %1093
    %1095 = vrot.lane.b32.xlu0 %v905, 8
    %v1096 = vpop.permute.xlu0 %1095
    %1097 = vrot.lane.b32.xlu0 %v906, 8
    %v1098 = vpop.permute.xlu0 %1097
    %vm1163 = vcmask 97344
    %1164 = vst.msk [vmem:[#allocation3] sm:$0xff] %vm1163, %v972
    %1165 = vst.msk [vmem:[#allocation3 + $0x8] sm:$0xff] %vm1163, %v974
    %1166 = vst.msk [vmem:[#allocation3 + $0x10] sm:$0xff] %vm1163, %v976
    %1167 = vst.msk [vmem:[#allocation3 + $0x18] sm:$0xff] %vm1163, %v978
    %1168 = vst.msk [vmem:[#allocation3 + $0x20] sm:$0xff] %vm1163, %v980
    %1169 = vst.msk [vmem:[#allocation3 + $0x28] sm:$0xff] %vm1163, %v982
    %1170 = vst.msk [vmem:[#allocation3 + $0x30] sm:$0xff] %vm1163, %v984
    %1171 = vst.msk [vmem:[#allocation3 + $0x38] sm:$0xff] %vm1163, %v986
    %1172 = vst.msk [vmem:[#allocation3 + $0x40] sm:$0xff] %vm1163, %v988
    %1173 = vst.msk [vmem:[#allocation3 + $0x48] sm:$0xff] %vm1163, %v990
    %1174 = vst.msk [vmem:[#allocation3 + $0x50] sm:$0xff] %vm1163, %v992
    %1175 = vst.msk [vmem:[#allocation3 + $0x58] sm:$0xff] %vm1163, %v994
    %1176 = vst.msk [vmem:[#allocation3 + $0x60] sm:$0xff] %vm1163, %v996
    %1177 = vst.msk [vmem:[#allocation3 + $0x68] sm:$0xff] %vm1163, %v998
    %1178 = vst.msk [vmem:[#allocation3 + $0x70] sm:$0xff] %vm1163, %v1000
    %1179 = vst.msk [vmem:[#allocation3 + $0x78] sm:$0xff] %vm1163, %v1002
    %1180 = vst.msk [vmem:[#allocation3 + $0x80] sm:$0xff] %vm1163, %v1004
    %1181 = vst.msk [vmem:[#allocation3 + $0x88] sm:$0xff] %vm1163, %v1006
    %1182 = vst.msk [vmem:[#allocation3 + $0x90] sm:$0xff] %vm1163, %v1008
    %1183 = vst.msk [vmem:[#allocation3 + $0x98] sm:$0xff] %vm1163, %v1010
    %1184 = vst.msk [vmem:[#allocation3 + $0xa0] sm:$0xff] %vm1163, %v1012
    %1185 = vst.msk [vmem:[#allocation3 + $0xa8] sm:$0xff] %vm1163, %v1014
    %1186 = vst.msk [vmem:[#allocation3 + $0xb0] sm:$0xff] %vm1163, %v1016
    %1187 = vst.msk [vmem:[#allocation3 + $0xb8] sm:$0xff] %vm1163, %v1018
    %1188 = vst.msk [vmem:[#allocation3 + $0xc0] sm:$0xff] %vm1163, %v1020
    %1189 = vst.msk [vmem:[#allocation3 + $0xc8] sm:$0xff] %vm1163, %v1022
    %1190 = vst.msk [vmem:[#allocation3 + $0xd0] sm:$0xff] %vm1163, %v1024
    %1191 = vst.msk [vmem:[#allocation3 + $0xd8] sm:$0xff] %vm1163, %v1026
    %1192 = vst.msk [vmem:[#allocation3 + $0xe0] sm:$0xff] %vm1163, %v1028
    %1193 = vst.msk [vmem:[#allocation3 + $0xe8] sm:$0xff] %vm1163, %v1030
    %1194 = vst.msk [vmem:[#allocation3 + $0xf0] sm:$0xff] %vm1163, %v1032
    %1195 = vst.msk [vmem:[#allocation3 + $0xf8] sm:$0xff] %vm1163, %v1034
    %1196 = vst.msk [vmem:[#allocation3 + $0x100] sm:$0xff] %vm1163, %v1036
    %1197 = vst.msk [vmem:[#allocation3 + $0x108] sm:$0xff] %vm1163, %v1038
    %1198 = vst.msk [vmem:[#allocation3 + $0x110] sm:$0xff] %vm1163, %v1040
    %1199 = vst.msk [vmem:[#allocation3 + $0x118] sm:$0xff] %vm1163, %v1042
    %1200 = vst.msk [vmem:[#allocation3 + $0x120] sm:$0xff] %vm1163, %v1044
    %1201 = vst.msk [vmem:[#allocation3 + $0x128] sm:$0xff] %vm1163, %v1046
    %1202 = vst.msk [vmem:[#allocation3 + $0x130] sm:$0xff] %vm1163, %v1048
    %1203 = vst.msk [vmem:[#allocation3 + $0x138] sm:$0xff] %vm1163, %v1050
    %1204 = vst.msk [vmem:[#allocation3 + $0x140] sm:$0xff] %vm1163, %v1052
    %1205 = vst.msk [vmem:[#allocation3 + $0x148] sm:$0xff] %vm1163, %v1054
    %1206 = vst.msk [vmem:[#allocation3 + $0x150] sm:$0xff] %vm1163, %v1056
    %1207 = vst.msk [vmem:[#allocation3 + $0x158] sm:$0xff] %vm1163, %v1058
    %1208 = vst.msk [vmem:[#allocation3 + $0x160] sm:$0xff] %vm1163, %v1060
    %1209 = vst.msk [vmem:[#allocation3 + $0x168] sm:$0xff] %vm1163, %v1062
    %1210 = vst.msk [vmem:[#allocation3 + $0x170] sm:$0xff] %vm1163, %v1064
    %1211 = vst.msk [vmem:[#allocation3 + $0x178] sm:$0xff] %vm1163, %v1066
    %1212 = vst.msk [vmem:[#allocation3 + $0x180] sm:$0xff] %vm1163, %v1068
    %1213 = vst.msk [vmem:[#allocation3 + $0x188] sm:$0xff] %vm1163, %v1070
    %1214 = vst.msk [vmem:[#allocation3 + $0x190] sm:$0xff] %vm1163, %v1072
    %1215 = vst.msk [vmem:[#allocation3 + $0x198] sm:$0xff] %vm1163, %v1074
    %1216 = vst.msk [vmem:[#allocation3 + $0x1a0] sm:$0xff] %vm1163, %v1076
    %1217 = vst.msk [vmem:[#allocation3 + $0x1a8] sm:$0xff] %vm1163, %v1078
    %1218 = vst.msk [vmem:[#allocation3 + $0x1b0] sm:$0xff] %vm1163, %v1080
    %1219 = vst.msk [vmem:[#allocation3 + $0x1b8] sm:$0xff] %vm1163, %v1082
    %1220 = vst.msk [vmem:[#allocation3 + $0x1c0] sm:$0xff] %vm1163, %v1084
    %1221 = vst.msk [vmem:[#allocation3 + $0x1c8] sm:$0xff] %vm1163, %v1086
    %1222 = vst.msk [vmem:[#allocation3 + $0x1d0] sm:$0xff] %vm1163, %v1088
    %1223 = vst.msk [vmem:[#allocation3 + $0x1d8] sm:$0xff] %vm1163, %v1090
    %1224 = vst.msk [vmem:[#allocation3 + $0x1e0] sm:$0xff] %vm1163, %v1092
    %1225 = vst.msk [vmem:[#allocation3 + $0x1e8] sm:$0xff] %vm1163, %v1094
    %1226 = vst.msk [vmem:[#allocation3 + $0x1f0] sm:$0xff] %vm1163, %v1096
    %1227 = vst.msk [vmem:[#allocation3 + $0x1f8] sm:$0xff] %vm1163, %v1098
    %v1228 = vld [vmem:[%s265] sm:$0xff]
    %v1229 = vld [vmem:[%s265 + $0x8] sm:$0xff]
    %v1230 = vld [vmem:[%s265 + $0x18] sm:$0xff]
    %v1231 = vld [vmem:[%s265 + $0x20] sm:$0xff]
    %v1232 = vld [vmem:[%s265 + $0x30] sm:$0xff]
    %v1233 = vld [vmem:[%s265 + $0x38] sm:$0xff]
    %v1234 = vld [vmem:[%s265 + $0x48] sm:$0xff]
    %v1235 = vld [vmem:[%s265 + $0x50] sm:$0xff]
    %v1236 = vld [vmem:[%s265 + $0x60] sm:$0xff]
    %v1237 = vld [vmem:[%s265 + $0x68] sm:$0xff]
    %v1238 = vld [vmem:[%s265 + $0x78] sm:$0xff]
    %v1239 = vld [vmem:[%s265 + $0x80] sm:$0xff]
    %v1240 = vld [vmem:[%s265 + $0x90] sm:$0xff]
    %v1241 = vld [vmem:[%s265 + $0x98] sm:$0xff]
    %v1242 = vld [vmem:[%s265 + $0xa8] sm:$0xff]
    %v1243 = vld [vmem:[%s265 + $0xb0] sm:$0xff]
    %v1244 = vld [vmem:[%s265 + $0xc0] sm:$0xff]
    %v1245 = vld [vmem:[%s265 + $0xc8] sm:$0xff]
    %v1246 = vld [vmem:[%s265 + $0xd8] sm:$0xff]
    %v1247 = vld [vmem:[%s265 + $0xe0] sm:$0xff]
    %v1248 = vld [vmem:[%s265 + $0xf0] sm:$0xff]
    %v1249 = vld [vmem:[%s265 + $0xf8] sm:$0xff]
    %v1250 = vld [vmem:[%s265 + $0x108] sm:$0xff]
    %v1251 = vld [vmem:[%s265 + $0x110] sm:$0xff]
    %v1252 = vld [vmem:[%s265 + $0x120] sm:$0xff]
    %v1253 = vld [vmem:[%s265 + $0x128] sm:$0xff]
    %v1254 = vld [vmem:[%s265 + $0x138] sm:$0xff]
    %v1255 = vld [vmem:[%s265 + $0x140] sm:$0xff]
    %v1256 = vld [vmem:[%s265 + $0x150] sm:$0xff]
    %v1257 = vld [vmem:[%s265 + $0x158] sm:$0xff]
    %v1258 = vld [vmem:[%s265 + $0x168] sm:$0xff]
    %v1259 = vld [vmem:[%s265 + $0x170] sm:$0xff]
    %v1260 = vld [vmem:[%s265 + $0x1b0] sm:$0xff]
    %v1261 = vld [vmem:[%s265 + $0x1b8] sm:$0xff]
    %v1262 = vld [vmem:[%s265 + $0x1c8] sm:$0xff]
    %v1263 = vld [vmem:[%s265 + $0x1d0] sm:$0xff]
    %v1264 = vld [vmem:[%s265 + $0x1e0] sm:$0xff]
    %v1265 = vld [vmem:[%s265 + $0x1e8] sm:$0xff]
    %v1266 = vld [vmem:[%s265 + $0x1f8] sm:$0xff]
    %v1267 = vld [vmem:[%s265 + $0x200] sm:$0xff]
    %v1268 = vld [vmem:[%s265 + $0x210] sm:$0xff]
    %v1269 = vld [vmem:[%s265 + $0x218] sm:$0xff]
    %v1270 = vld [vmem:[%s265 + $0x228] sm:$0xff]
    %v1271 = vld [vmem:[%s265 + $0x230] sm:$0xff]
    %v1272 = vld [vmem:[%s265 + $0x240] sm:$0xff]
    %v1273 = vld [vmem:[%s265 + $0x248] sm:$0xff]
    %v1274 = vld [vmem:[%s265 + $0x258] sm:$0xff]
    %v1275 = vld [vmem:[%s265 + $0x260] sm:$0xff]
    %v1276 = vld [vmem:[%s265 + $0x270] sm:$0xff]
    %v1277 = vld [vmem:[%s265 + $0x278] sm:$0xff]
    %v1278 = vld [vmem:[%s265 + $0x288] sm:$0xff]
    %v1279 = vld [vmem:[%s265 + $0x290] sm:$0xff]
    %v1280 = vld [vmem:[%s265 + $0x2a0] sm:$0xff]
    %v1281 = vld [vmem:[%s265 + $0x2a8] sm:$0xff]
    %v1282 = vld [vmem:[%s265 + $0x2b8] sm:$0xff]
    %v1283 = vld [vmem:[%s265 + $0x2c0] sm:$0xff]
    %v1284 = vld [vmem:[%s265 + $0x2d0] sm:$0xff]
    %v1285 = vld [vmem:[%s265 + $0x2d8] sm:$0xff]
    %v1286 = vld [vmem:[%s265 + $0x2e8] sm:$0xff]
    %v1287 = vld [vmem:[%s265 + $0x2f0] sm:$0xff]
    %v1288 = vld [vmem:[%s265 + $0x300] sm:$0xff]
    %v1289 = vld [vmem:[%s265 + $0x308] sm:$0xff]
    %v1290 = vld [vmem:[%s265 + $0x318] sm:$0xff]
    %v1291 = vld [vmem:[%s265 + $0x320] sm:$0xff]
    %1356 = vrot.lane.b32.xlu0 %v1228, 12
    %v1357 = vpop.permute.xlu0 %1356
    %1358 = vrot.lane.b32.xlu0 %v1229, 12
    %v1359 = vpop.permute.xlu0 %1358
    %1360 = vrot.lane.b32.xlu0 %v1230, 12
    %v1361 = vpop.permute.xlu0 %1360
    %1362 = vrot.lane.b32.xlu0 %v1231, 12
    %v1363 = vpop.permute.xlu0 %1362
    %1364 = vrot.lane.b32.xlu0 %v1232, 12
    %v1365 = vpop.permute.xlu0 %1364
    %1366 = vrot.lane.b32.xlu0 %v1233, 12
    %v1367 = vpop.permute.xlu0 %1366
    %1368 = vrot.lane.b32.xlu0 %v1234, 12
    %v1369 = vpop.permute.xlu0 %1368
    %1370 = vrot.lane.b32.xlu0 %v1235, 12
    %v1371 = vpop.permute.xlu0 %1370
    %1372 = vrot.lane.b32.xlu0 %v1236, 12
    %v1373 = vpop.permute.xlu0 %1372
    %1374 = vrot.lane.b32.xlu0 %v1237, 12
    %v1375 = vpop.permute.xlu0 %1374
    %1376 = vrot.lane.b32.xlu0 %v1238, 12
    %v1377 = vpop.permute.xlu0 %1376
    %1378 = vrot.lane.b32.xlu0 %v1239, 12
    %v1379 = vpop.permute.xlu0 %1378
    %1380 = vrot.lane.b32.xlu0 %v1240, 12
    %v1381 = vpop.permute.xlu0 %1380
    %1382 = vrot.lane.b32.xlu0 %v1241, 12
    %v1383 = vpop.permute.xlu0 %1382
    %1384 = vrot.lane.b32.xlu0 %v1242, 12
    %v1385 = vpop.permute.xlu0 %1384
    %1386 = vrot.lane.b32.xlu0 %v1243, 12
    %v1387 = vpop.permute.xlu0 %1386
    %1388 = vrot.lane.b32.xlu0 %v1244, 12
    %v1389 = vpop.permute.xlu0 %1388
    %1390 = vrot.lane.b32.xlu0 %v1245, 12
    %v1391 = vpop.permute.xlu0 %1390
    %1392 = vrot.lane.b32.xlu0 %v1246, 12
    %v1393 = vpop.permute.xlu0 %1392
    %1394 = vrot.lane.b32.xlu0 %v1247, 12
    %v1395 = vpop.permute.xlu0 %1394
    %1396 = vrot.lane.b32.xlu0 %v1248, 12
    %v1397 = vpop.permute.xlu0 %1396
    %1398 = vrot.lane.b32.xlu0 %v1249, 12
    %v1399 = vpop.permute.xlu0 %1398
    %1400 = vrot.lane.b32.xlu0 %v1250, 12
    %v1401 = vpop.permute.xlu0 %1400
    %1402 = vrot.lane.b32.xlu0 %v1251, 12
    %v1403 = vpop.permute.xlu0 %1402
    %1404 = vrot.lane.b32.xlu0 %v1252, 12
    %v1405 = vpop.permute.xlu0 %1404
    %1406 = vrot.lane.b32.xlu0 %v1253, 12
    %v1407 = vpop.permute.xlu0 %1406
    %1408 = vrot.lane.b32.xlu0 %v1254, 12
    %v1409 = vpop.permute.xlu0 %1408
    %1410 = vrot.lane.b32.xlu0 %v1255, 12
    %v1411 = vpop.permute.xlu0 %1410
    %1412 = vrot.lane.b32.xlu0 %v1256, 12
    %v1413 = vpop.permute.xlu0 %1412
    %1414 = vrot.lane.b32.xlu0 %v1257, 12
    %v1415 = vpop.permute.xlu0 %1414
    %1416 = vrot.lane.b32.xlu0 %v1258, 12
    %v1417 = vpop.permute.xlu0 %1416
    %1418 = vrot.lane.b32.xlu0 %v1259, 12
    %v1419 = vpop.permute.xlu0 %1418
    %1420 = vrot.lane.b32.xlu0 %v1260, 12
    %v1421 = vpop.permute.xlu0 %1420
    %1422 = vrot.lane.b32.xlu0 %v1261, 12
    %v1423 = vpop.permute.xlu0 %1422
    %1424 = vrot.lane.b32.xlu0 %v1262, 12
    %v1425 = vpop.permute.xlu0 %1424
    %1426 = vrot.lane.b32.xlu0 %v1263, 12
    %v1427 = vpop.permute.xlu0 %1426
    %1428 = vrot.lane.b32.xlu0 %v1264, 12
    %v1429 = vpop.permute.xlu0 %1428
    %1430 = vrot.lane.b32.xlu0 %v1265, 12
    %v1431 = vpop.permute.xlu0 %1430
    %1432 = vrot.lane.b32.xlu0 %v1266, 12
    %v1433 = vpop.permute.xlu0 %1432
    %1434 = vrot.lane.b32.xlu0 %v1267, 12
    %v1435 = vpop.permute.xlu0 %1434
    %1436 = vrot.lane.b32.xlu0 %v1268, 12
    %v1437 = vpop.permute.xlu0 %1436
    %1438 = vrot.lane.b32.xlu0 %v1269, 12
    %v1439 = vpop.permute.xlu0 %1438
    %1440 = vrot.lane.b32.xlu0 %v1270, 12
    %v1441 = vpop.permute.xlu0 %1440
    %1442 = vrot.lane.b32.xlu0 %v1271, 12
    %v1443 = vpop.permute.xlu0 %1442
    %1444 = vrot.lane.b32.xlu0 %v1272, 12
    %v1445 = vpop.permute.xlu0 %1444
    %1446 = vrot.lane.b32.xlu0 %v1273, 12
    %v1447 = vpop.permute.xlu0 %1446
    %1448 = vrot.lane.b32.xlu0 %v1274, 12
    %v1449 = vpop.permute.xlu0 %1448
    %1450 = vrot.lane.b32.xlu0 %v1275, 12
    %v1451 = vpop.permute.xlu0 %1450
    %1452 = vrot.lane.b32.xlu0 %v1276, 12
    %v1453 = vpop.permute.xlu0 %1452
    %1454 = vrot.lane.b32.xlu0 %v1277, 12
    %v1455 = vpop.permute.xlu0 %1454
    %1456 = vrot.lane.b32.xlu0 %v1278, 12
    %v1457 = vpop.permute.xlu0 %1456
    %1458 = vrot.lane.b32.xlu0 %v1279, 12
    %v1459 = vpop.permute.xlu0 %1458
    %1460 = vrot.lane.b32.xlu0 %v1280, 12
    %v1461 = vpop.permute.xlu0 %1460
    %1462 = vrot.lane.b32.xlu0 %v1281, 12
    %v1463 = vpop.permute.xlu0 %1462
    %1464 = vrot.lane.b32.xlu0 %v1282, 12
    %v1465 = vpop.permute.xlu0 %1464
    %1466 = vrot.lane.b32.xlu0 %v1283, 12
    %v1467 = vpop.permute.xlu0 %1466
    %1468 = vrot.lane.b32.xlu0 %v1284, 12
    %v1469 = vpop.permute.xlu0 %1468
    %1470 = vrot.lane.b32.xlu0 %v1285, 12
    %v1471 = vpop.permute.xlu0 %1470
    %1472 = vrot.lane.b32.xlu0 %v1286, 12
    %v1473 = vpop.permute.xlu0 %1472
    %1474 = vrot.lane.b32.xlu0 %v1287, 12
    %v1475 = vpop.permute.xlu0 %1474
    %1476 = vrot.lane.b32.xlu0 %v1288, 12
    %v1477 = vpop.permute.xlu0 %1476
    %1478 = vrot.lane.b32.xlu0 %v1289, 12
    %v1479 = vpop.permute.xlu0 %1478
    %1480 = vrot.lane.b32.xlu0 %v1290, 12
    %v1481 = vpop.permute.xlu0 %1480
    %1482 = vrot.lane.b32.xlu0 %v1291, 12
    %v1483 = vpop.permute.xlu0 %1482
    %vm1548 = vcmask 130144
    %1549 = vst.msk [vmem:[#allocation3] sm:$0xff] %vm1548, %v1357
    %1550 = vst.msk [vmem:[#allocation3 + $0x8] sm:$0xff] %vm1548, %v1359
    %1551 = vst.msk [vmem:[#allocation3 + $0x10] sm:$0xff] %vm1548, %v1361
    %1552 = vst.msk [vmem:[#allocation3 + $0x18] sm:$0xff] %vm1548, %v1363
    %1553 = vst.msk [vmem:[#allocation3 + $0x20] sm:$0xff] %vm1548, %v1365
    %1554 = vst.msk [vmem:[#allocation3 + $0x28] sm:$0xff] %vm1548, %v1367
    %1555 = vst.msk [vmem:[#allocation3 + $0x30] sm:$0xff] %vm1548, %v1369
    %1556 = vst.msk [vmem:[#allocation3 + $0x38] sm:$0xff] %vm1548, %v1371
    %1557 = vst.msk [vmem:[#allocation3 + $0x40] sm:$0xff] %vm1548, %v1373
    %1558 = vst.msk [vmem:[#allocation3 + $0x48] sm:$0xff] %vm1548, %v1375
    %1559 = vst.msk [vmem:[#allocation3 + $0x50] sm:$0xff] %vm1548, %v1377
    %1560 = vst.msk [vmem:[#allocation3 + $0x58] sm:$0xff] %vm1548, %v1379
    %1561 = vst.msk [vmem:[#allocation3 + $0x60] sm:$0xff] %vm1548, %v1381
    %1562 = vst.msk [vmem:[#allocation3 + $0x68] sm:$0xff] %vm1548, %v1383
    %1563 = vst.msk [vmem:[#allocation3 + $0x70] sm:$0xff] %vm1548, %v1385
    %1564 = vst.msk [vmem:[#allocation3 + $0x78] sm:$0xff] %vm1548, %v1387
    %1565 = vst.msk [vmem:[#allocation3 + $0x80] sm:$0xff] %vm1548, %v1389
    %1566 = vst.msk [vmem:[#allocation3 + $0x88] sm:$0xff] %vm1548, %v1391
    %1567 = vst.msk [vmem:[#allocation3 + $0x90] sm:$0xff] %vm1548, %v1393
    %1568 = vst.msk [vmem:[#allocation3 + $0x98] sm:$0xff] %vm1548, %v1395
    %1569 = vst.msk [vmem:[#allocation3 + $0xa0] sm:$0xff] %vm1548, %v1397
    %1570 = vst.msk [vmem:[#allocation3 + $0xa8] sm:$0xff] %vm1548, %v1399
    %1571 = vst.msk [vmem:[#allocation3 + $0xb0] sm:$0xff] %vm1548, %v1401
    %1572 = vst.msk [vmem:[#allocation3 + $0xb8] sm:$0xff] %vm1548, %v1403
    %1573 = vst.msk [vmem:[#allocation3 + $0xc0] sm:$0xff] %vm1548, %v1405
    %1574 = vst.msk [vmem:[#allocation3 + $0xc8] sm:$0xff] %vm1548, %v1407
    %1575 = vst.msk [vmem:[#allocation3 + $0xd0] sm:$0xff] %vm1548, %v1409
    %1576 = vst.msk [vmem:[#allocation3 + $0xd8] sm:$0xff] %vm1548, %v1411
    %1577 = vst.msk [vmem:[#allocation3 + $0xe0] sm:$0xff] %vm1548, %v1413
    %1578 = vst.msk [vmem:[#allocation3 + $0xe8] sm:$0xff] %vm1548, %v1415
    %1579 = vst.msk [vmem:[#allocation3 + $0xf0] sm:$0xff] %vm1548, %v1417
    %1580 = vst.msk [vmem:[#allocation3 + $0xf8] sm:$0xff] %vm1548, %v1419
    %1581 = vst.msk [vmem:[#allocation3 + $0x100] sm:$0xff] %vm1548, %v1421
    %1582 = vst.msk [vmem:[#allocation3 + $0x108] sm:$0xff] %vm1548, %v1423
    %1583 = vst.msk [vmem:[#allocation3 + $0x110] sm:$0xff] %vm1548, %v1425
    %1584 = vst.msk [vmem:[#allocation3 + $0x118] sm:$0xff] %vm1548, %v1427
    %1585 = vst.msk [vmem:[#allocation3 + $0x120] sm:$0xff] %vm1548, %v1429
    %1586 = vst.msk [vmem:[#allocation3 + $0x128] sm:$0xff] %vm1548, %v1431
    %1587 = vst.msk [vmem:[#allocation3 + $0x130] sm:$0xff] %vm1548, %v1433
    %1588 = vst.msk [vmem:[#allocation3 + $0x138] sm:$0xff] %vm1548, %v1435
    %1589 = vst.msk [vmem:[#allocation3 + $0x140] sm:$0xff] %vm1548, %v1437
    %1590 = vst.msk [vmem:[#allocation3 + $0x148] sm:$0xff] %vm1548, %v1439
    %1591 = vst.msk [vmem:[#allocation3 + $0x150] sm:$0xff] %vm1548, %v1441
    %1592 = vst.msk [vmem:[#allocation3 + $0x158] sm:$0xff] %vm1548, %v1443
    %1593 = vst.msk [vmem:[#allocation3 + $0x160] sm:$0xff] %vm1548, %v1445
    %1594 = vst.msk [vmem:[#allocation3 + $0x168] sm:$0xff] %vm1548, %v1447
    %1595 = vst.msk [vmem:[#allocation3 + $0x170] sm:$0xff] %vm1548, %v1449
    %1596 = vst.msk [vmem:[#allocation3 + $0x178] sm:$0xff] %vm1548, %v1451
    %1597 = vst.msk [vmem:[#allocation3 + $0x180] sm:$0xff] %vm1548, %v1453
    %1598 = vst.msk [vmem:[#allocation3 + $0x188] sm:$0xff] %vm1548, %v1455
    %1599 = vst.msk [vmem:[#allocation3 + $0x190] sm:$0xff] %vm1548, %v1457
    %1600 = vst.msk [vmem:[#allocation3 + $0x198] sm:$0xff] %vm1548, %v1459
    %1601 = vst.msk [vmem:[#allocation3 + $0x1a0] sm:$0xff] %vm1548, %v1461
    %1602 = vst.msk [vmem:[#allocation3 + $0x1a8] sm:$0xff] %vm1548, %v1463
    %1603 = vst.msk [vmem:[#allocation3 + $0x1b0] sm:$0xff] %vm1548, %v1465
    %1604 = vst.msk [vmem:[#allocation3 + $0x1b8] sm:$0xff] %vm1548, %v1467
    %1605 = vst.msk [vmem:[#allocation3 + $0x1c0] sm:$0xff] %vm1548, %v1469
    %1606 = vst.msk [vmem:[#allocation3 + $0x1c8] sm:$0xff] %vm1548, %v1471
    %1607 = vst.msk [vmem:[#allocation3 + $0x1d0] sm:$0xff] %vm1548, %v1473
    %1608 = vst.msk [vmem:[#allocation3 + $0x1d8] sm:$0xff] %vm1548, %v1475
    %1609 = vst.msk [vmem:[#allocation3 + $0x1e0] sm:$0xff] %vm1548, %v1477
    %1610 = vst.msk [vmem:[#allocation3 + $0x1e8] sm:$0xff] %vm1548, %v1479
    %1611 = vst.msk [vmem:[#allocation3 + $0x1f0] sm:$0xff] %vm1548, %v1481
    %1612 = vst.msk [vmem:[#allocation3 + $0x1f8] sm:$0xff] %vm1548, %v1483
    %v1613 = vld [vmem:[%s265 + $0x1] sm:$0xff]
    %v1614 = vld [vmem:[%s265 + $0x9] sm:$0xff]
    %v1615 = vld [vmem:[%s265 + $0x19] sm:$0xff]
    %v1616 = vld [vmem:[%s265 + $0x21] sm:$0xff]
    %v1617 = vld [vmem:[%s265 + $0x31] sm:$0xff]
    %v1618 = vld [vmem:[%s265 + $0x39] sm:$0xff]
    %v1619 = vld [vmem:[%s265 + $0x49] sm:$0xff]
    %v1620 = vld [vmem:[%s265 + $0x51] sm:$0xff]
    %v1621 = vld [vmem:[%s265 + $0x61] sm:$0xff]
    %v1622 = vld [vmem:[%s265 + $0x69] sm:$0xff]
    %v1623 = vld [vmem:[%s265 + $0x79] sm:$0xff]
    %v1624 = vld [vmem:[%s265 + $0x81] sm:$0xff]
    %v1625 = vld [vmem:[%s265 + $0x91] sm:$0xff]
    %v1626 = vld [vmem:[%s265 + $0x99] sm:$0xff]
    %v1627 = vld [vmem:[%s265 + $0xa9] sm:$0xff]
    %v1628 = vld [vmem:[%s265 + $0xb1] sm:$0xff]
    %v1629 = vld [vmem:[%s265 + $0xc1] sm:$0xff]
    %v1630 = vld [vmem:[%s265 + $0xc9] sm:$0xff]
    %v1631 = vld [vmem:[%s265 + $0xd9] sm:$0xff]
    %v1632 = vld [vmem:[%s265 + $0xe1] sm:$0xff]
    %v1633 = vld [vmem:[%s265 + $0xf1] sm:$0xff]
    %v1634 = vld [vmem:[%s265 + $0xf9] sm:$0xff]
    %v1635 = vld [vmem:[%s265 + $0x109] sm:$0xff]
    %v1636 = vld [vmem:[%s265 + $0x111] sm:$0xff]
    %v1637 = vld [vmem:[%s265 + $0x121] sm:$0xff]
    %v1638 = vld [vmem:[%s265 + $0x129] sm:$0xff]
    %v1639 = vld [vmem:[%s265 + $0x139] sm:$0xff]
    %v1640 = vld [vmem:[%s265 + $0x141] sm:$0xff]
    %v1641 = vld [vmem:[%s265 + $0x151] sm:$0xff]
    %v1642 = vld [vmem:[%s265 + $0x159] sm:$0xff]
    %v1643 = vld [vmem:[%s265 + $0x169] sm:$0xff]
    %v1644 = vld [vmem:[%s265 + $0x171] sm:$0xff]
    %v1645 = vld [vmem:[%s265 + $0x1b1] sm:$0xff]
    %v1646 = vld [vmem:[%s265 + $0x1b9] sm:$0xff]
    %v1647 = vld [vmem:[%s265 + $0x1c9] sm:$0xff]
    %v1648 = vld [vmem:[%s265 + $0x1d1] sm:$0xff]
    %v1649 = vld [vmem:[%s265 + $0x1e1] sm:$0xff]
    %v1650 = vld [vmem:[%s265 + $0x1e9] sm:$0xff]
    %v1651 = vld [vmem:[%s265 + $0x1f9] sm:$0xff]
    %v1652 = vld [vmem:[%s265 + $0x201] sm:$0xff]
    %v1653 = vld [vmem:[%s265 + $0x211] sm:$0xff]
    %v1654 = vld [vmem:[%s265 + $0x219] sm:$0xff]
    %v1655 = vld [vmem:[%s265 + $0x229] sm:$0xff]
    %v1656 = vld [vmem:[%s265 + $0x231] sm:$0xff]
    %v1657 = vld [vmem:[%s265 + $0x241] sm:$0xff]
    %v1658 = vld [vmem:[%s265 + $0x249] sm:$0xff]
    %v1659 = vld [vmem:[%s265 + $0x259] sm:$0xff]
    %v1660 = vld [vmem:[%s265 + $0x261] sm:$0xff]
    %v1661 = vld [vmem:[%s265 + $0x271] sm:$0xff]
    %v1662 = vld [vmem:[%s265 + $0x279] sm:$0xff]
    %v1663 = vld [vmem:[%s265 + $0x289] sm:$0xff]
    %v1664 = vld [vmem:[%s265 + $0x291] sm:$0xff]
    %v1665 = vld [vmem:[%s265 + $0x2a1] sm:$0xff]
    %v1666 = vld [vmem:[%s265 + $0x2a9] sm:$0xff]
    %v1667 = vld [vmem:[%s265 + $0x2b9] sm:$0xff]
    %v1668 = vld [vmem:[%s265 + $0x2c1] sm:$0xff]
    %v1669 = vld [vmem:[%s265 + $0x2d1] sm:$0xff]
    %v1670 = vld [vmem:[%s265 + $0x2d9] sm:$0xff]
    %v1671 = vld [vmem:[%s265 + $0x2e9] sm:$0xff]
    %v1672 = vld [vmem:[%s265 + $0x2f1] sm:$0xff]
    %v1673 = vld [vmem:[%s265 + $0x301] sm:$0xff]
    %v1674 = vld [vmem:[%s265 + $0x309] sm:$0xff]
    %v1675 = vld [vmem:[%s265 + $0x319] sm:$0xff]
    %v1676 = vld [vmem:[%s265 + $0x321] sm:$0xff]
    %1741 = vrot.lane.b32.xlu0 %v1613, 16
    %v1742 = vpop.permute.xlu0 %1741
    %1743 = vrot.lane.b32.xlu0 %v1614, 16
    %v1744 = vpop.permute.xlu0 %1743
    %1745 = vrot.lane.b32.xlu0 %v1615, 16
    %v1746 = vpop.permute.xlu0 %1745
    %1747 = vrot.lane.b32.xlu0 %v1616, 16
    %v1748 = vpop.permute.xlu0 %1747
    %1749 = vrot.lane.b32.xlu0 %v1617, 16
    %v1750 = vpop.permute.xlu0 %1749
    %1751 = vrot.lane.b32.xlu0 %v1618, 16
    %v1752 = vpop.permute.xlu0 %1751
    %1753 = vrot.lane.b32.xlu0 %v1619, 16
    %v1754 = vpop.permute.xlu0 %1753
    %1755 = vrot.lane.b32.xlu0 %v1620, 16
    %v1756 = vpop.permute.xlu0 %1755
    %1757 = vrot.lane.b32.xlu0 %v1621, 16
    %v1758 = vpop.permute.xlu0 %1757
    %1759 = vrot.lane.b32.xlu0 %v1622, 16
    %v1760 = vpop.permute.xlu0 %1759
    %1761 = vrot.lane.b32.xlu0 %v1623, 16
    %v1762 = vpop.permute.xlu0 %1761
    %1763 = vrot.lane.b32.xlu0 %v1624, 16
    %v1764 = vpop.permute.xlu0 %1763
    %1765 = vrot.lane.b32.xlu0 %v1625, 16
    %v1766 = vpop.permute.xlu0 %1765
    %1767 = vrot.lane.b32.xlu0 %v1626, 16
    %v1768 = vpop.permute.xlu0 %1767
    %1769 = vrot.lane.b32.xlu0 %v1627, 16
    %v1770 = vpop.permute.xlu0 %1769
    %1771 = vrot.lane.b32.xlu0 %v1628, 16
    %v1772 = vpop.permute.xlu0 %1771
    %1773 = vrot.lane.b32.xlu0 %v1629, 16
    %v1774 = vpop.permute.xlu0 %1773
    %1775 = vrot.lane.b32.xlu0 %v1630, 16
    %v1776 = vpop.permute.xlu0 %1775
    %1777 = vrot.lane.b32.xlu0 %v1631, 16
    %v1778 = vpop.permute.xlu0 %1777
    %1779 = vrot.lane.b32.xlu0 %v1632, 16
    %v1780 = vpop.permute.xlu0 %1779
    %1781 = vrot.lane.b32.xlu0 %v1633, 16
    %v1782 = vpop.permute.xlu0 %1781
    %1783 = vrot.lane.b32.xlu0 %v1634, 16
    %v1784 = vpop.permute.xlu0 %1783
    %1785 = vrot.lane.b32.xlu0 %v1635, 16
    %v1786 = vpop.permute.xlu0 %1785
    %1787 = vrot.lane.b32.xlu0 %v1636, 16
    %v1788 = vpop.permute.xlu0 %1787
    %1789 = vrot.lane.b32.xlu0 %v1637, 16
    %v1790 = vpop.permute.xlu0 %1789
    %1791 = vrot.lane.b32.xlu0 %v1638, 16
    %v1792 = vpop.permute.xlu0 %1791
    %1793 = vrot.lane.b32.xlu0 %v1639, 16
    %v1794 = vpop.permute.xlu0 %1793
    %1795 = vrot.lane.b32.xlu0 %v1640, 16
    %v1796 = vpop.permute.xlu0 %1795
    %1797 = vrot.lane.b32.xlu0 %v1641, 16
    %v1798 = vpop.permute.xlu0 %1797
    %1799 = vrot.lane.b32.xlu0 %v1642, 16
    %v1800 = vpop.permute.xlu0 %1799
    %1801 = vrot.lane.b32.xlu0 %v1643, 16
    %v1802 = vpop.permute.xlu0 %1801
    %1803 = vrot.lane.b32.xlu0 %v1644, 16
    %v1804 = vpop.permute.xlu0 %1803
    %1805 = vrot.lane.b32.xlu0 %v1645, 16
    %v1806 = vpop.permute.xlu0 %1805
    %1807 = vrot.lane.b32.xlu0 %v1646, 16
    %v1808 = vpop.permute.xlu0 %1807
    %1809 = vrot.lane.b32.xlu0 %v1647, 16
    %v1810 = vpop.permute.xlu0 %1809
    %1811 = vrot.lane.b32.xlu0 %v1648, 16
    %v1812 = vpop.permute.xlu0 %1811
    %1813 = vrot.lane.b32.xlu0 %v1649, 16
    %v1814 = vpop.permute.xlu0 %1813
    %1815 = vrot.lane.b32.xlu0 %v1650, 16
    %v1816 = vpop.permute.xlu0 %1815
    %1817 = vrot.lane.b32.xlu0 %v1651, 16
    %v1818 = vpop.permute.xlu0 %1817
    %1819 = vrot.lane.b32.xlu0 %v1652, 16
    %v1820 = vpop.permute.xlu0 %1819
    %1821 = vrot.lane.b32.xlu0 %v1653, 16
    %v1822 = vpop.permute.xlu0 %1821
    %1823 = vrot.lane.b32.xlu0 %v1654, 16
    %v1824 = vpop.permute.xlu0 %1823
    %1825 = vrot.lane.b32.xlu0 %v1655, 16
    %v1826 = vpop.permute.xlu0 %1825
    %1827 = vrot.lane.b32.xlu0 %v1656, 16
    %v1828 = vpop.permute.xlu0 %1827
    %1829 = vrot.lane.b32.xlu0 %v1657, 16
    %v1830 = vpop.permute.xlu0 %1829
    %1831 = vrot.lane.b32.xlu0 %v1658, 16
    %v1832 = vpop.permute.xlu0 %1831
    %1833 = vrot.lane.b32.xlu0 %v1659, 16
    %v1834 = vpop.permute.xlu0 %1833
    %1835 = vrot.lane.b32.xlu0 %v1660, 16
    %v1836 = vpop.permute.xlu0 %1835
    %1837 = vrot.lane.b32.xlu0 %v1661, 16
    %v1838 = vpop.permute.xlu0 %1837
    %1839 = vrot.lane.b32.xlu0 %v1662, 16
    %v1840 = vpop.permute.xlu0 %1839
    %1841 = vrot.lane.b32.xlu0 %v1663, 16
    %v1842 = vpop.permute.xlu0 %1841
    %1843 = vrot.lane.b32.xlu0 %v1664, 16
    %v1844 = vpop.permute.xlu0 %1843
    %1845 = vrot.lane.b32.xlu0 %v1665, 16
    %v1846 = vpop.permute.xlu0 %1845
    %1847 = vrot.lane.b32.xlu0 %v1666, 16
    %v1848 = vpop.permute.xlu0 %1847
    %1849 = vrot.lane.b32.xlu0 %v1667, 16
    %v1850 = vpop.permute.xlu0 %1849
    %1851 = vrot.lane.b32.xlu0 %v1668, 16
    %v1852 = vpop.permute.xlu0 %1851
    %1853 = vrot.lane.b32.xlu0 %v1669, 16
    %v1854 = vpop.permute.xlu0 %1853
    %1855 = vrot.lane.b32.xlu0 %v1670, 16
    %v1856 = vpop.permute.xlu0 %1855
    %1857 = vrot.lane.b32.xlu0 %v1671, 16
    %v1858 = vpop.permute.xlu0 %1857
    %1859 = vrot.lane.b32.xlu0 %v1672, 16
    %v1860 = vpop.permute.xlu0 %1859
    %1861 = vrot.lane.b32.xlu0 %v1673, 16
    %v1862 = vpop.permute.xlu0 %1861
    %1863 = vrot.lane.b32.xlu0 %v1674, 16
    %v1864 = vpop.permute.xlu0 %1863
    %1865 = vrot.lane.b32.xlu0 %v1675, 16
    %v1866 = vpop.permute.xlu0 %1865
    %1867 = vrot.lane.b32.xlu0 %v1676, 16
    %v1868 = vpop.permute.xlu0 %1867
    %vm1933 = vcmask 162944
    %1934 = vst.msk [vmem:[#allocation3] sm:$0xff] %vm1933, %v1742
    %1935 = vst.msk [vmem:[#allocation3 + $0x8] sm:$0xff] %vm1933, %v1744
    %1936 = vst.msk [vmem:[#allocation3 + $0x10] sm:$0xff] %vm1933, %v1746
    %1937 = vst.msk [vmem:[#allocation3 + $0x18] sm:$0xff] %vm1933, %v1748
    %1938 = vst.msk [vmem:[#allocation3 + $0x20] sm:$0xff] %vm1933, %v1750
    %1939 = vst.msk [vmem:[#allocation3 + $0x28] sm:$0xff] %vm1933, %v1752
    %1940 = vst.msk [vmem:[#allocation3 + $0x30] sm:$0xff] %vm1933, %v1754
    %1941 = vst.msk [vmem:[#allocation3 + $0x38] sm:$0xff] %vm1933, %v1756
    %1942 = vst.msk [vmem:[#allocation3 + $0x40] sm:$0xff] %vm1933, %v1758
    %1943 = vst.msk [vmem:[#allocation3 + $0x48] sm:$0xff] %vm1933, %v1760
    %1944 = vst.msk [vmem:[#allocation3 + $0x50] sm:$0xff] %vm1933, %v1762
    %1945 = vst.msk [vmem:[#allocation3 + $0x58] sm:$0xff] %vm1933, %v1764
    %1946 = vst.msk [vmem:[#allocation3 + $0x60] sm:$0xff] %vm1933, %v1766
    %1947 = vst.msk [vmem:[#allocation3 + $0x68] sm:$0xff] %vm1933, %v1768
    %1948 = vst.msk [vmem:[#allocation3 + $0x70] sm:$0xff] %vm1933, %v1770
    %1949 = vst.msk [vmem:[#allocation3 + $0x78] sm:$0xff] %vm1933, %v1772
    %1950 = vst.msk [vmem:[#allocation3 + $0x80] sm:$0xff] %vm1933, %v1774
    %1951 = vst.msk [vmem:[#allocation3 + $0x88] sm:$0xff] %vm1933, %v1776
    %1952 = vst.msk [vmem:[#allocation3 + $0x90] sm:$0xff] %vm1933, %v1778
    %1953 = vst.msk [vmem:[#allocation3 + $0x98] sm:$0xff] %vm1933, %v1780
    %1954 = vst.msk [vmem:[#allocation3 + $0xa0] sm:$0xff] %vm1933, %v1782
    %1955 = vst.msk [vmem:[#allocation3 + $0xa8] sm:$0xff] %vm1933, %v1784
    %1956 = vst.msk [vmem:[#allocation3 + $0xb0] sm:$0xff] %vm1933, %v1786
    %1957 = vst.msk [vmem:[#allocation3 + $0xb8] sm:$0xff] %vm1933, %v1788
    %1958 = vst.msk [vmem:[#allocation3 + $0xc0] sm:$0xff] %vm1933, %v1790
    %1959 = vst.msk [vmem:[#allocation3 + $0xc8] sm:$0xff] %vm1933, %v1792
    %1960 = vst.msk [vmem:[#allocation3 + $0xd0] sm:$0xff] %vm1933, %v1794
    %1961 = vst.msk [vmem:[#allocation3 + $0xd8] sm:$0xff] %vm1933, %v1796
    %1962 = vst.msk [vmem:[#allocation3 + $0xe0] sm:$0xff] %vm1933, %v1798
    %1963 = vst.msk [vmem:[#allocation3 + $0xe8] sm:$0xff] %vm1933, %v1800
    %1964 = vst.msk [vmem:[#allocation3 + $0xf0] sm:$0xff] %vm1933, %v1802
    %1965 = vst.msk [vmem:[#allocation3 + $0xf8] sm:$0xff] %vm1933, %v1804
    %1966 = vst.msk [vmem:[#allocation3 + $0x100] sm:$0xff] %vm1933, %v1806
    %1967 = vst.msk [vmem:[#allocation3 + $0x108] sm:$0xff] %vm1933, %v1808
    %1968 = vst.msk [vmem:[#allocation3 + $0x110] sm:$0xff] %vm1933, %v1810
    %1969 = vst.msk [vmem:[#allocation3 + $0x118] sm:$0xff] %vm1933, %v1812
    %1970 = vst.msk [vmem:[#allocation3 + $0x120] sm:$0xff] %vm1933, %v1814
    %1971 = vst.msk [vmem:[#allocation3 + $0x128] sm:$0xff] %vm1933, %v1816
    %1972 = vst.msk [vmem:[#allocation3 + $0x130] sm:$0xff] %vm1933, %v1818
    %1973 = vst.msk [vmem:[#allocation3 + $0x138] sm:$0xff] %vm1933, %v1820
    %1974 = vst.msk [vmem:[#allocation3 + $0x140] sm:$0xff] %vm1933, %v1822
    %1975 = vst.msk [vmem:[#allocation3 + $0x148] sm:$0xff] %vm1933, %v1824
    %1976 = vst.msk [vmem:[#allocation3 + $0x150] sm:$0xff] %vm1933, %v1826
    %1977 = vst.msk [vmem:[#allocation3 + $0x158] sm:$0xff] %vm1933, %v1828
    %1978 = vst.msk [vmem:[#allocation3 + $0x160] sm:$0xff] %vm1933, %v1830
    %1979 = vst.msk [vmem:[#allocation3 + $0x168] sm:$0xff] %vm1933, %v1832
    %1980 = vst.msk [vmem:[#allocation3 + $0x170] sm:$0xff] %vm1933, %v1834
    %1981 = vst.msk [vmem:[#allocation3 + $0x178] sm:$0xff] %vm1933, %v1836
    %1982 = vst.msk [vmem:[#allocation3 + $0x180] sm:$0xff] %vm1933, %v1838
    %1983 = vst.msk [vmem:[#allocation3 + $0x188] sm:$0xff] %vm1933, %v1840
    %1984 = vst.msk [vmem:[#allocation3 + $0x190] sm:$0xff] %vm1933, %v1842
    %1985 = vst.msk [vmem:[#allocation3 + $0x198] sm:$0xff] %vm1933, %v1844
    %1986 = vst.msk [vmem:[#allocation3 + $0x1a0] sm:$0xff] %vm1933, %v1846
    %1987 = vst.msk [vmem:[#allocation3 + $0x1a8] sm:$0xff] %vm1933, %v1848
    %1988 = vst.msk [vmem:[#allocation3 + $0x1b0] sm:$0xff] %vm1933, %v1850
    %1989 = vst.msk [vmem:[#allocation3 + $0x1b8] sm:$0xff] %vm1933, %v1852
    %1990 = vst.msk [vmem:[#allocation3 + $0x1c0] sm:$0xff] %vm1933, %v1854
    %1991 = vst.msk [vmem:[#allocation3 + $0x1c8] sm:$0xff] %vm1933, %v1856
    %1992 = vst.msk [vmem:[#allocation3 + $0x1d0] sm:$0xff] %vm1933, %v1858
    %1993 = vst.msk [vmem:[#allocation3 + $0x1d8] sm:$0xff] %vm1933, %v1860
    %1994 = vst.msk [vmem:[#allocation3 + $0x1e0] sm:$0xff] %vm1933, %v1862
    %1995 = vst.msk [vmem:[#allocation3 + $0x1e8] sm:$0xff] %vm1933, %v1864
    %1996 = vst.msk [vmem:[#allocation3 + $0x1f0] sm:$0xff] %vm1933, %v1866
    %1997 = vst.msk [vmem:[#allocation3 + $0x1f8] sm:$0xff] %vm1933, %v1868
    %v1998 = vld [vmem:[%s265 + $0x2] sm:$0xff]
    %v1999 = vld [vmem:[%s265 + $0xa] sm:$0xff]
    %v2000 = vld [vmem:[%s265 + $0x1a] sm:$0xff]
    %v2001 = vld [vmem:[%s265 + $0x22] sm:$0xff]
    %v2002 = vld [vmem:[%s265 + $0x32] sm:$0xff]
    %v2003 = vld [vmem:[%s265 + $0x3a] sm:$0xff]
    %v2004 = vld [vmem:[%s265 + $0x4a] sm:$0xff]
    %v2005 = vld [vmem:[%s265 + $0x52] sm:$0xff]
    %v2006 = vld [vmem:[%s265 + $0x62] sm:$0xff]
    %v2007 = vld [vmem:[%s265 + $0x6a] sm:$0xff]
    %v2008 = vld [vmem:[%s265 + $0x7a] sm:$0xff]
    %v2009 = vld [vmem:[%s265 + $0x82] sm:$0xff]
    %v2010 = vld [vmem:[%s265 + $0x92] sm:$0xff]
    %v2011 = vld [vmem:[%s265 + $0x9a] sm:$0xff]
    %v2012 = vld [vmem:[%s265 + $0xaa] sm:$0xff]
    %v2013 = vld [vmem:[%s265 + $0xb2] sm:$0xff]
    %v2014 = vld [vmem:[%s265 + $0xc2] sm:$0xff]
    %v2015 = vld [vmem:[%s265 + $0xca] sm:$0xff]
    %v2016 = vld [vmem:[%s265 + $0xda] sm:$0xff]
    %v2017 = vld [vmem:[%s265 + $0xe2] sm:$0xff]
    %v2018 = vld [vmem:[%s265 + $0xf2] sm:$0xff]
    %v2019 = vld [vmem:[%s265 + $0xfa] sm:$0xff]
    %v2020 = vld [vmem:[%s265 + $0x10a] sm:$0xff]
    %v2021 = vld [vmem:[%s265 + $0x112] sm:$0xff]
    %v2022 = vld [vmem:[%s265 + $0x122] sm:$0xff]
    %v2023 = vld [vmem:[%s265 + $0x12a] sm:$0xff]
    %v2024 = vld [vmem:[%s265 + $0x13a] sm:$0xff]
    %v2025 = vld [vmem:[%s265 + $0x142] sm:$0xff]
    %v2026 = vld [vmem:[%s265 + $0x152] sm:$0xff]
    %v2027 = vld [vmem:[%s265 + $0x15a] sm:$0xff]
    %v2028 = vld [vmem:[%s265 + $0x16a] sm:$0xff]
    %v2029 = vld [vmem:[%s265 + $0x172] sm:$0xff]
    %v2030 = vld [vmem:[%s265 + $0x1b2] sm:$0xff]
    %v2031 = vld [vmem:[%s265 + $0x1ba] sm:$0xff]
    %v2032 = vld [vmem:[%s265 + $0x1ca] sm:$0xff]
    %v2033 = vld [vmem:[%s265 + $0x1d2] sm:$0xff]
    %v2034 = vld [vmem:[%s265 + $0x1e2] sm:$0xff]
    %v2035 = vld [vmem:[%s265 + $0x1ea] sm:$0xff]
    %v2036 = vld [vmem:[%s265 + $0x1fa] sm:$0xff]
    %v2037 = vld [vmem:[%s265 + $0x202] sm:$0xff]
    %v2038 = vld [vmem:[%s265 + $0x212] sm:$0xff]
    %v2039 = vld [vmem:[%s265 + $0x21a] sm:$0xff]
    %v2040 = vld [vmem:[%s265 + $0x22a] sm:$0xff]
    %v2041 = vld [vmem:[%s265 + $0x232] sm:$0xff]
    %v2042 = vld [vmem:[%s265 + $0x242] sm:$0xff]
    %v2043 = vld [vmem:[%s265 + $0x24a] sm:$0xff]
    %v2044 = vld [vmem:[%s265 + $0x25a] sm:$0xff]
    %v2045 = vld [vmem:[%s265 + $0x262] sm:$0xff]
    %v2046 = vld [vmem:[%s265 + $0x272] sm:$0xff]
    %v2047 = vld [vmem:[%s265 + $0x27a] sm:$0xff]
    %v2048 = vld [vmem:[%s265 + $0x28a] sm:$0xff]
    %v2049 = vld [vmem:[%s265 + $0x292] sm:$0xff]
    %v2050 = vld [vmem:[%s265 + $0x2a2] sm:$0xff]
    %v2051 = vld [vmem:[%s265 + $0x2aa] sm:$0xff]
    %v2052 = vld [vmem:[%s265 + $0x2ba] sm:$0xff]
    %v2053 = vld [vmem:[%s265 + $0x2c2] sm:$0xff]
    %v2054 = vld [vmem:[%s265 + $0x2d2] sm:$0xff]
    %v2055 = vld [vmem:[%s265 + $0x2da] sm:$0xff]
    %v2056 = vld [vmem:[%s265 + $0x2ea] sm:$0xff]
    %v2057 = vld [vmem:[%s265 + $0x2f2] sm:$0xff]
    %v2058 = vld [vmem:[%s265 + $0x302] sm:$0xff]
    %v2059 = vld [vmem:[%s265 + $0x30a] sm:$0xff]
    %v2060 = vld [vmem:[%s265 + $0x31a] sm:$0xff]
    %v2061 = vld [vmem:[%s265 + $0x322] sm:$0xff]
    %2126 = vrot.lane.b32.xlu0 %v1998, 20
    %v2127 = vpop.permute.xlu0 %2126
    %2128 = vrot.lane.b32.xlu0 %v1999, 20
    %v2129 = vpop.permute.xlu0 %2128
    %2130 = vrot.lane.b32.xlu0 %v2000, 20
    %v2131 = vpop.permute.xlu0 %2130
    %2132 = vrot.lane.b32.xlu0 %v2001, 20
    %v2133 = vpop.permute.xlu0 %2132
    %2134 = vrot.lane.b32.xlu0 %v2002, 20
    %v2135 = vpop.permute.xlu0 %2134
    %2136 = vrot.lane.b32.xlu0 %v2003, 20
    %v2137 = vpop.permute.xlu0 %2136
    %2138 = vrot.lane.b32.xlu0 %v2004, 20
    %v2139 = vpop.permute.xlu0 %2138
    %2140 = vrot.lane.b32.xlu0 %v2005, 20
    %v2141 = vpop.permute.xlu0 %2140
    %2142 = vrot.lane.b32.xlu0 %v2006, 20
    %v2143 = vpop.permute.xlu0 %2142
    %2144 = vrot.lane.b32.xlu0 %v2007, 20
    %v2145 = vpop.permute.xlu0 %2144
    %2146 = vrot.lane.b32.xlu0 %v2008, 20
    %v2147 = vpop.permute.xlu0 %2146
    %2148 = vrot.lane.b32.xlu0 %v2009, 20
    %v2149 = vpop.permute.xlu0 %2148
    %2150 = vrot.lane.b32.xlu0 %v2010, 20
    %v2151 = vpop.permute.xlu0 %2150
    %2152 = vrot.lane.b32.xlu0 %v2011, 20
    %v2153 = vpop.permute.xlu0 %2152
    %2154 = vrot.lane.b32.xlu0 %v2012, 20
    %v2155 = vpop.permute.xlu0 %2154
    %2156 = vrot.lane.b32.xlu0 %v2013, 20
    %v2157 = vpop.permute.xlu0 %2156
    %2158 = vrot.lane.b32.xlu0 %v2014, 20
    %v2159 = vpop.permute.xlu0 %2158
    %2160 = vrot.lane.b32.xlu0 %v2015, 20
    %v2161 = vpop.permute.xlu0 %2160
    %2162 = vrot.lane.b32.xlu0 %v2016, 20
    %v2163 = vpop.permute.xlu0 %2162
    %2164 = vrot.lane.b32.xlu0 %v2017, 20
    %v2165 = vpop.permute.xlu0 %2164
    %2166 = vrot.lane.b32.xlu0 %v2018, 20
    %v2167 = vpop.permute.xlu0 %2166
    %2168 = vrot.lane.b32.xlu0 %v2019, 20
    %v2169 = vpop.permute.xlu0 %2168
    %2170 = vrot.lane.b32.xlu0 %v2020, 20
    %v2171 = vpop.permute.xlu0 %2170
    %2172 = vrot.lane.b32.xlu0 %v2021, 20
    %v2173 = vpop.permute.xlu0 %2172
    %2174 = vrot.lane.b32.xlu0 %v2022, 20
    %v2175 = vpop.permute.xlu0 %2174
    %2176 = vrot.lane.b32.xlu0 %v2023, 20
    %v2177 = vpop.permute.xlu0 %2176
    %2178 = vrot.lane.b32.xlu0 %v2024, 20
    %v2179 = vpop.permute.xlu0 %2178
    %2180 = vrot.lane.b32.xlu0 %v2025, 20
    %v2181 = vpop.permute.xlu0 %2180
    %2182 = vrot.lane.b32.xlu0 %v2026, 20
    %v2183 = vpop.permute.xlu0 %2182
    %2184 = vrot.lane.b32.xlu0 %v2027, 20
    %v2185 = vpop.permute.xlu0 %2184
    %2186 = vrot.lane.b32.xlu0 %v2028, 20
    %v2187 = vpop.permute.xlu0 %2186
    %2188 = vrot.lane.b32.xlu0 %v2029, 20
    %v2189 = vpop.permute.xlu0 %2188
    %2190 = vrot.lane.b32.xlu0 %v2030, 20
    %v2191 = vpop.permute.xlu0 %2190
    %2192 = vrot.lane.b32.xlu0 %v2031, 20
    %v2193 = vpop.permute.xlu0 %2192
    %2194 = vrot.lane.b32.xlu0 %v2032, 20
    %v2195 = vpop.permute.xlu0 %2194
    %2196 = vrot.lane.b32.xlu0 %v2033, 20
    %v2197 = vpop.permute.xlu0 %2196
    %2198 = vrot.lane.b32.xlu0 %v2034, 20
    %v2199 = vpop.permute.xlu0 %2198
    %2200 = vrot.lane.b32.xlu0 %v2035, 20
    %v2201 = vpop.permute.xlu0 %2200
    %2202 = vrot.lane.b32.xlu0 %v2036, 20
    %v2203 = vpop.permute.xlu0 %2202
    %2204 = vrot.lane.b32.xlu0 %v2037, 20
    %v2205 = vpop.permute.xlu0 %2204
    %2206 = vrot.lane.b32.xlu0 %v2038, 20
    %v2207 = vpop.permute.xlu0 %2206
    %2208 = vrot.lane.b32.xlu0 %v2039, 20
    %v2209 = vpop.permute.xlu0 %2208
    %2210 = vrot.lane.b32.xlu0 %v2040, 20
    %v2211 = vpop.permute.xlu0 %2210
    %2212 = vrot.lane.b32.xlu0 %v2041, 20
    %v2213 = vpop.permute.xlu0 %2212
    %2214 = vrot.lane.b32.xlu0 %v2042, 20
    %v2215 = vpop.permute.xlu0 %2214
    %2216 = vrot.lane.b32.xlu0 %v2043, 20
    %v2217 = vpop.permute.xlu0 %2216
    %2218 = vrot.lane.b32.xlu0 %v2044, 20
    %v2219 = vpop.permute.xlu0 %2218
    %2220 = vrot.lane.b32.xlu0 %v2045, 20
    %v2221 = vpop.permute.xlu0 %2220
    %2222 = vrot.lane.b32.xlu0 %v2046, 20
    %v2223 = vpop.permute.xlu0 %2222
    %2224 = vrot.lane.b32.xlu0 %v2047, 20
    %v2225 = vpop.permute.xlu0 %2224
    %2226 = vrot.lane.b32.xlu0 %v2048, 20
    %v2227 = vpop.permute.xlu0 %2226
    %2228 = vrot.lane.b32.xlu0 %v2049, 20
    %v2229 = vpop.permute.xlu0 %2228
    %2230 = vrot.lane.b32.xlu0 %v2050, 20
    %v2231 = vpop.permute.xlu0 %2230
    %2232 = vrot.lane.b32.xlu0 %v2051, 20
    %v2233 = vpop.permute.xlu0 %2232
    %2234 = vrot.lane.b32.xlu0 %v2052, 20
    %v2235 = vpop.permute.xlu0 %2234
    %2236 = vrot.lane.b32.xlu0 %v2053, 20
    %v2237 = vpop.permute.xlu0 %2236
    %2238 = vrot.lane.b32.xlu0 %v2054, 20
    %v2239 = vpop.permute.xlu0 %2238
    %2240 = vrot.lane.b32.xlu0 %v2055, 20
    %v2241 = vpop.permute.xlu0 %2240
    %2242 = vrot.lane.b32.xlu0 %v2056, 20
    %v2243 = vpop.permute.xlu0 %2242
    %2244 = vrot.lane.b32.xlu0 %v2057, 20
    %v2245 = vpop.permute.xlu0 %2244
    %2246 = vrot.lane.b32.xlu0 %v2058, 20
    %v2247 = vpop.permute.xlu0 %2246
    %2248 = vrot.lane.b32.xlu0 %v2059, 20
    %v2249 = vpop.permute.xlu0 %2248
    %2250 = vrot.lane.b32.xlu0 %v2060, 20
    %v2251 = vpop.permute.xlu0 %2250
    %2252 = vrot.lane.b32.xlu0 %v2061, 20
    %v2253 = vpop.permute.xlu0 %2252
    %vm2318 = vcmask 195744
    %2319 = vst.msk [vmem:[#allocation3] sm:$0xff] %vm2318, %v2127
    %2320 = vst.msk [vmem:[#allocation3 + $0x8] sm:$0xff] %vm2318, %v2129
    %2321 = vst.msk [vmem:[#allocation3 + $0x10] sm:$0xff] %vm2318, %v2131
    %2322 = vst.msk [vmem:[#allocation3 + $0x18] sm:$0xff] %vm2318, %v2133
    %2323 = vst.msk [vmem:[#allocation3 + $0x20] sm:$0xff] %vm2318, %v2135
    %2324 = vst.msk [vmem:[#allocation3 + $0x28] sm:$0xff] %vm2318, %v2137
    %2325 = vst.msk [vmem:[#allocation3 + $0x30] sm:$0xff] %vm2318, %v2139
    %2326 = vst.msk [vmem:[#allocation3 + $0x38] sm:$0xff] %vm2318, %v2141
    %2327 = vst.msk [vmem:[#allocation3 + $0x40] sm:$0xff] %vm2318, %v2143
    %2328 = vst.msk [vmem:[#allocation3 + $0x48] sm:$0xff] %vm2318, %v2145
    %2329 = vst.msk [vmem:[#allocation3 + $0x50] sm:$0xff] %vm2318, %v2147
    %2330 = vst.msk [vmem:[#allocation3 + $0x58] sm:$0xff] %vm2318, %v2149
    %2331 = vst.msk [vmem:[#allocation3 + $0x60] sm:$0xff] %vm2318, %v2151
    %2332 = vst.msk [vmem:[#allocation3 + $0x68] sm:$0xff] %vm2318, %v2153
    %2333 = vst.msk [vmem:[#allocation3 + $0x70] sm:$0xff] %vm2318, %v2155
    %2334 = vst.msk [vmem:[#allocation3 + $0x78] sm:$0xff] %vm2318, %v2157
    %2335 = vst.msk [vmem:[#allocation3 + $0x80] sm:$0xff] %vm2318, %v2159
    %2336 = vst.msk [vmem:[#allocation3 + $0x88] sm:$0xff] %vm2318, %v2161
    %2337 = vst.msk [vmem:[#allocation3 + $0x90] sm:$0xff] %vm2318, %v2163
    %2338 = vst.msk [vmem:[#allocation3 + $0x98] sm:$0xff] %vm2318, %v2165
    %2339 = vst.msk [vmem:[#allocation3 + $0xa0] sm:$0xff] %vm2318, %v2167
    %2340 = vst.msk [vmem:[#allocation3 + $0xa8] sm:$0xff] %vm2318, %v2169
    %2341 = vst.msk [vmem:[#allocation3 + $0xb0] sm:$0xff] %vm2318, %v2171
    %2342 = vst.msk [vmem:[#allocation3 + $0xb8] sm:$0xff] %vm2318, %v2173
    %2343 = vst.msk [vmem:[#allocation3 + $0xc0] sm:$0xff] %vm2318, %v2175
    %2344 = vst.msk [vmem:[#allocation3 + $0xc8] sm:$0xff] %vm2318, %v2177
    %2345 = vst.msk [vmem:[#allocation3 + $0xd0] sm:$0xff] %vm2318, %v2179
    %2346 = vst.msk [vmem:[#allocation3 + $0xd8] sm:$0xff] %vm2318, %v2181
    %2347 = vst.msk [vmem:[#allocation3 + $0xe0] sm:$0xff] %vm2318, %v2183
    %2348 = vst.msk [vmem:[#allocation3 + $0xe8] sm:$0xff] %vm2318, %v2185
    %2349 = vst.msk [vmem:[#allocation3 + $0xf0] sm:$0xff] %vm2318, %v2187
    %2350 = vst.msk [vmem:[#allocation3 + $0xf8] sm:$0xff] %vm2318, %v2189
    %2351 = vst.msk [vmem:[#allocation3 + $0x100] sm:$0xff] %vm2318, %v2191
    %2352 = vst.msk [vmem:[#allocation3 + $0x108] sm:$0xff] %vm2318, %v2193
    %2353 = vst.msk [vmem:[#allocation3 + $0x110] sm:$0xff] %vm2318, %v2195
    %2354 = vst.msk [vmem:[#allocation3 + $0x118] sm:$0xff] %vm2318, %v2197
    %2355 = vst.msk [vmem:[#allocation3 + $0x120] sm:$0xff] %vm2318, %v2199
    %2356 = vst.msk [vmem:[#allocation3 + $0x128] sm:$0xff] %vm2318, %v2201
    %2357 = vst.msk [vmem:[#allocation3 + $0x130] sm:$0xff] %vm2318, %v2203
    %2358 = vst.msk [vmem:[#allocation3 + $0x138] sm:$0xff] %vm2318, %v2205
    %2359 = vst.msk [vmem:[#allocation3 + $0x140] sm:$0xff] %vm2318, %v2207
    %2360 = vst.msk [vmem:[#allocation3 + $0x148] sm:$0xff] %vm2318, %v2209
    %2361 = vst.msk [vmem:[#allocation3 + $0x150] sm:$0xff] %vm2318, %v2211
    %2362 = vst.msk [vmem:[#allocation3 + $0x158] sm:$0xff] %vm2318, %v2213
    %2363 = vst.msk [vmem:[#allocation3 + $0x160] sm:$0xff] %vm2318, %v2215
    %2364 = vst.msk [vmem:[#allocation3 + $0x168] sm:$0xff] %vm2318, %v2217
    %2365 = vst.msk [vmem:[#allocation3 + $0x170] sm:$0xff] %vm2318, %v2219
    %2366 = vst.msk [vmem:[#allocation3 + $0x178] sm:$0xff] %vm2318, %v2221
    %2367 = vst.msk [vmem:[#allocation3 + $0x180] sm:$0xff] %vm2318, %v2223
    %2368 = vst.msk [vmem:[#allocation3 + $0x188] sm:$0xff] %vm2318, %v2225
    %2369 = vst.msk [vmem:[#allocation3 + $0x190] sm:$0xff] %vm2318, %v2227
    %2370 = vst.msk [vmem:[#allocation3 + $0x198] sm:$0xff] %vm2318, %v2229
    %2371 = vst.msk [vmem:[#allocation3 + $0x1a0] sm:$0xff] %vm2318, %v2231
    %2372 = vst.msk [vmem:[#allocation3 + $0x1a8] sm:$0xff] %vm2318, %v2233
    %2373 = vst.msk [vmem:[#allocation3 + $0x1b0] sm:$0xff] %vm2318, %v2235
    %2374 = vst.msk [vmem:[#allocation3 + $0x1b8] sm:$0xff] %vm2318, %v2237
    %2375 = vst.msk [vmem:[#allocation3 + $0x1c0] sm:$0xff] %vm2318, %v2239
    %2376 = vst.msk [vmem:[#allocation3 + $0x1c8] sm:$0xff] %vm2318, %v2241
    %2377 = vst.msk [vmem:[#allocation3 + $0x1d0] sm:$0xff] %vm2318, %v2243
    %2378 = vst.msk [vmem:[#allocation3 + $0x1d8] sm:$0xff] %vm2318, %v2245
    %2379 = vst.msk [vmem:[#allocation3 + $0x1e0] sm:$0xff] %vm2318, %v2247
    %2380 = vst.msk [vmem:[#allocation3 + $0x1e8] sm:$0xff] %vm2318, %v2249
    %2381 = vst.msk [vmem:[#allocation3 + $0x1f0] sm:$0xff] %vm2318, %v2251
    %2382 = vst.msk [vmem:[#allocation3 + $0x1f8] sm:$0xff] %vm2318, %v2253
    %s2383 = scalar_lea.vmem [#allocation2], 48
    %v2384 = vld [vmem:[%s2383] sm:$0xff]
    %v2385 = vld [vmem:[%s2383 + $0x8] sm:$0xff]
    %v2386 = vld [vmem:[%s2383 + $0x18] sm:$0xff]
    %v2387 = vld [vmem:[%s2383 + $0x20] sm:$0xff]
    %v2388 = vld [vmem:[%s2383 + $0x30] sm:$0xff]
    %v2389 = vld [vmem:[%s2383 + $0x38] sm:$0xff]
    %v2390 = vld [vmem:[%s2383 + $0x48] sm:$0xff]
    %v2391 = vld [vmem:[%s2383 + $0x50] sm:$0xff]
    %v2392 = vld [vmem:[%s2383 + $0x60] sm:$0xff]
    %v2393 = vld [vmem:[%s2383 + $0x68] sm:$0xff]
    %v2394 = vld [vmem:[%s2383 + $0x78] sm:$0xff]
    %v2395 = vld [vmem:[%s2383 + $0x80] sm:$0xff]
    %v2396 = vld [vmem:[%s2383 + $0x90] sm:$0xff]
    %v2397 = vld [vmem:[%s2383 + $0x98] sm:$0xff]
    %v2398 = vld [vmem:[%s2383 + $0xa8] sm:$0xff]
    %v2399 = vld [vmem:[%s2383 + $0xb0] sm:$0xff]
    %v2400 = vld [vmem:[%s2383 + $0xc0] sm:$0xff]
    %v2401 = vld [vmem:[%s2383 + $0xc8] sm:$0xff]
    %v2402 = vld [vmem:[%s2383 + $0xd8] sm:$0xff]
    %v2403 = vld [vmem:[%s2383 + $0xe0] sm:$0xff]
    %v2404 = vld [vmem:[%s2383 + $0xf0] sm:$0xff]
    %v2405 = vld [vmem:[%s2383 + $0xf8] sm:$0xff]
    %v2406 = vld [vmem:[%s2383 + $0x108] sm:$0xff]
    %v2407 = vld [vmem:[%s2383 + $0x110] sm:$0xff]
    %v2408 = vld [vmem:[%s2383 + $0x120] sm:$0xff]
    %v2409 = vld [vmem:[%s2383 + $0x128] sm:$0xff]
    %v2410 = vld [vmem:[%s2383 + $0x138] sm:$0xff]
    %v2411 = vld [vmem:[%s2383 + $0x140] sm:$0xff]
    %v2412 = vld [vmem:[%s2383 + $0x150] sm:$0xff]
    %v2413 = vld [vmem:[%s2383 + $0x158] sm:$0xff]
    %v2414 = vld [vmem:[%s2383 + $0x168] sm:$0xff]
    %v2415 = vld [vmem:[%s2383 + $0x170] sm:$0xff]
    %v2416 = vld [vmem:[%s2383 + $0x1b0] sm:$0xff]
    %v2417 = vld [vmem:[%s2383 + $0x1b8] sm:$0xff]
    %v2418 = vld [vmem:[%s2383 + $0x1c8] sm:$0xff]
    %v2419 = vld [vmem:[%s2383 + $0x1d0] sm:$0xff]
    %v2420 = vld [vmem:[%s2383 + $0x1e0] sm:$0xff]
    %v2421 = vld [vmem:[%s2383 + $0x1e8] sm:$0xff]
    %v2422 = vld [vmem:[%s2383 + $0x1f8] sm:$0xff]
    %v2423 = vld [vmem:[%s2383 + $0x200] sm:$0xff]
    %v2424 = vld [vmem:[%s2383 + $0x210] sm:$0xff]
    %v2425 = vld [vmem:[%s2383 + $0x218] sm:$0xff]
    %v2426 = vld [vmem:[%s2383 + $0x228] sm:$0xff]
    %v2427 = vld [vmem:[%s2383 + $0x230] sm:$0xff]
    %v2428 = vld [vmem:[%s2383 + $0x240] sm:$0xff]
    %v2429 = vld [vmem:[%s2383 + $0x248] sm:$0xff]
    %v2430 = vld [vmem:[%s2383 + $0x258] sm:$0xff]
    %v2431 = vld [vmem:[%s2383 + $0x260] sm:$0xff]
    %v2432 = vld [vmem:[%s2383 + $0x270] sm:$0xff]
    %v2433 = vld [vmem:[%s2383 + $0x278] sm:$0xff]
    %v2434 = vld [vmem:[%s2383 + $0x288] sm:$0xff]
    %v2435 = vld [vmem:[%s2383 + $0x290] sm:$0xff]
    %v2436 = vld [vmem:[%s2383 + $0x2a0] sm:$0xff]
    %v2437 = vld [vmem:[%s2383 + $0x2a8] sm:$0xff]
    %v2438 = vld [vmem:[%s2383 + $0x2b8] sm:$0xff]
    %v2439 = vld [vmem:[%s2383 + $0x2c0] sm:$0xff]
    %v2440 = vld [vmem:[%s2383 + $0x2d0] sm:$0xff]
    %v2441 = vld [vmem:[%s2383 + $0x2d8] sm:$0xff]
    %v2442 = vld [vmem:[%s2383 + $0x2e8] sm:$0xff]
    %v2443 = vld [vmem:[%s2383 + $0x2f0] sm:$0xff]
    %v2444 = vld [vmem:[%s2383 + $0x300] sm:$0xff]
    %v2445 = vld [vmem:[%s2383 + $0x308] sm:$0xff]
    %v2446 = vld [vmem:[%s2383 + $0x318] sm:$0xff]
    %v2447 = vld [vmem:[%s2383 + $0x320] sm:$0xff]
    %2512 = vrot.lane.b32.xlu0 %v2384, 24
    %v2513 = vpop.permute.xlu0 %2512
    %2514 = vrot.lane.b32.xlu0 %v2385, 24
    %v2515 = vpop.permute.xlu0 %2514
    %2516 = vrot.lane.b32.xlu0 %v2386, 24
    %v2517 = vpop.permute.xlu0 %2516
    %2518 = vrot.lane.b32.xlu0 %v2387, 24
    %v2519 = vpop.permute.xlu0 %2518
    %2520 = vrot.lane.b32.xlu0 %v2388, 24
    %v2521 = vpop.permute.xlu0 %2520
    %2522 = vrot.lane.b32.xlu0 %v2389, 24
    %v2523 = vpop.permute.xlu0 %2522
    %2524 = vrot.lane.b32.xlu0 %v2390, 24
    %v2525 = vpop.permute.xlu0 %2524
    %2526 = vrot.lane.b32.xlu0 %v2391, 24
    %v2527 = vpop.permute.xlu0 %2526
    %2528 = vrot.lane.b32.xlu0 %v2392, 24
    %v2529 = vpop.permute.xlu0 %2528
    %2530 = vrot.lane.b32.xlu0 %v2393, 24
    %v2531 = vpop.permute.xlu0 %2530
    %2532 = vrot.lane.b32.xlu0 %v2394, 24
    %v2533 = vpop.permute.xlu0 %2532
    %2534 = vrot.lane.b32.xlu0 %v2395, 24
    %v2535 = vpop.permute.xlu0 %2534
    %2536 = vrot.lane.b32.xlu0 %v2396, 24
    %v2537 = vpop.permute.xlu0 %2536
    %2538 = vrot.lane.b32.xlu0 %v2397, 24
    %v2539 = vpop.permute.xlu0 %2538
    %2540 = vrot.lane.b32.xlu0 %v2398, 24
    %v2541 = vpop.permute.xlu0 %2540
    %2542 = vrot.lane.b32.xlu0 %v2399, 24
    %v2543 = vpop.permute.xlu0 %2542
    %2544 = vrot.lane.b32.xlu0 %v2400, 24
    %v2545 = vpop.permute.xlu0 %2544
    %2546 = vrot.lane.b32.xlu0 %v2401, 24
    %v2547 = vpop.permute.xlu0 %2546
    %2548 = vrot.lane.b32.xlu0 %v2402, 24
    %v2549 = vpop.permute.xlu0 %2548
    %2550 = vrot.lane.b32.xlu0 %v2403, 24
    %v2551 = vpop.permute.xlu0 %2550
    %2552 = vrot.lane.b32.xlu0 %v2404, 24
    %v2553 = vpop.permute.xlu0 %2552
    %2554 = vrot.lane.b32.xlu0 %v2405, 24
    %v2555 = vpop.permute.xlu0 %2554
    %2556 = vrot.lane.b32.xlu0 %v2406, 24
    %v2557 = vpop.permute.xlu0 %2556
    %2558 = vrot.lane.b32.xlu0 %v2407, 24
    %v2559 = vpop.permute.xlu0 %2558
    %2560 = vrot.lane.b32.xlu0 %v2408, 24
    %v2561 = vpop.permute.xlu0 %2560
    %2562 = vrot.lane.b32.xlu0 %v2409, 24
    %v2563 = vpop.permute.xlu0 %2562
    %2564 = vrot.lane.b32.xlu0 %v2410, 24
    %v2565 = vpop.permute.xlu0 %2564
    %2566 = vrot.lane.b32.xlu0 %v2411, 24
    %v2567 = vpop.permute.xlu0 %2566
    %2568 = vrot.lane.b32.xlu0 %v2412, 24
    %v2569 = vpop.permute.xlu0 %2568
    %2570 = vrot.lane.b32.xlu0 %v2413, 24
    %v2571 = vpop.permute.xlu0 %2570
    %2572 = vrot.lane.b32.xlu0 %v2414, 24
    %v2573 = vpop.permute.xlu0 %2572
    %2574 = vrot.lane.b32.xlu0 %v2415, 24
    %v2575 = vpop.permute.xlu0 %2574
    %2576 = vrot.lane.b32.xlu0 %v2416, 24
    %v2577 = vpop.permute.xlu0 %2576
    %2578 = vrot.lane.b32.xlu0 %v2417, 24
    %v2579 = vpop.permute.xlu0 %2578
    %2580 = vrot.lane.b32.xlu0 %v2418, 24
    %v2581 = vpop.permute.xlu0 %2580
    %2582 = vrot.lane.b32.xlu0 %v2419, 24
    %v2583 = vpop.permute.xlu0 %2582
    %2584 = vrot.lane.b32.xlu0 %v2420, 24
    %v2585 = vpop.permute.xlu0 %2584
    %2586 = vrot.lane.b32.xlu0 %v2421, 24
    %v2587 = vpop.permute.xlu0 %2586
    %2588 = vrot.lane.b32.xlu0 %v2422, 24
    %v2589 = vpop.permute.xlu0 %2588
    %2590 = vrot.lane.b32.xlu0 %v2423, 24
    %v2591 = vpop.permute.xlu0 %2590
    %2592 = vrot.lane.b32.xlu0 %v2424, 24
    %v2593 = vpop.permute.xlu0 %2592
    %2594 = vrot.lane.b32.xlu0 %v2425, 24
    %v2595 = vpop.permute.xlu0 %2594
    %2596 = vrot.lane.b32.xlu0 %v2426, 24
    %v2597 = vpop.permute.xlu0 %2596
    %2598 = vrot.lane.b32.xlu0 %v2427, 24
    %v2599 = vpop.permute.xlu0 %2598
    %2600 = vrot.lane.b32.xlu0 %v2428, 24
    %v2601 = vpop.permute.xlu0 %2600
    %2602 = vrot.lane.b32.xlu0 %v2429, 24
    %v2603 = vpop.permute.xlu0 %2602
    %2604 = vrot.lane.b32.xlu0 %v2430, 24
    %v2605 = vpop.permute.xlu0 %2604
    %2606 = vrot.lane.b32.xlu0 %v2431, 24
    %v2607 = vpop.permute.xlu0 %2606
    %2608 = vrot.lane.b32.xlu0 %v2432, 24
    %v2609 = vpop.permute.xlu0 %2608
    %2610 = vrot.lane.b32.xlu0 %v2433, 24
    %v2611 = vpop.permute.xlu0 %2610
    %2612 = vrot.lane.b32.xlu0 %v2434, 24
    %v2613 = vpop.permute.xlu0 %2612
    %2614 = vrot.lane.b32.xlu0 %v2435, 24
    %v2615 = vpop.permute.xlu0 %2614
    %2616 = vrot.lane.b32.xlu0 %v2436, 24
    %v2617 = vpop.permute.xlu0 %2616
    %2618 = vrot.lane.b32.xlu0 %v2437, 24
    %v2619 = vpop.permute.xlu0 %2618
    %2620 = vrot.lane.b32.xlu0 %v2438, 24
    %v2621 = vpop.permute.xlu0 %2620
    %2622 = vrot.lane.b32.xlu0 %v2439, 24
    %v2623 = vpop.permute.xlu0 %2622
    %2624 = vrot.lane.b32.xlu0 %v2440, 24
    %v2625 = vpop.permute.xlu0 %2624
    %2626 = vrot.lane.b32.xlu0 %v2441, 24
    %v2627 = vpop.permute.xlu0 %2626
    %2628 = vrot.lane.b32.xlu0 %v2442, 24
    %v2629 = vpop.permute.xlu0 %2628
    %2630 = vrot.lane.b32.xlu0 %v2443, 24
    %v2631 = vpop.permute.xlu0 %2630
    %2632 = vrot.lane.b32.xlu0 %v2444, 24
    %v2633 = vpop.permute.xlu0 %2632
    %2634 = vrot.lane.b32.xlu0 %v2445, 24
    %v2635 = vpop.permute.xlu0 %2634
    %2636 = vrot.lane.b32.xlu0 %v2446, 24
    %v2637 = vpop.permute.xlu0 %2636
    %2638 = vrot.lane.b32.xlu0 %v2447, 24
    %v2639 = vpop.permute.xlu0 %2638
    %vm2704 = vcmask 228544
    %2705 = vst.msk [vmem:[#allocation3] sm:$0xff] %vm2704, %v2513
    %2706 = vst.msk [vmem:[#allocation3 + $0x8] sm:$0xff] %vm2704, %v2515
    %2707 = vst.msk [vmem:[#allocation3 + $0x10] sm:$0xff] %vm2704, %v2517
    %2708 = vst.msk [vmem:[#allocation3 + $0x18] sm:$0xff] %vm2704, %v2519
    %2709 = vst.msk [vmem:[#allocation3 + $0x20] sm:$0xff] %vm2704, %v2521
    %2710 = vst.msk [vmem:[#allocation3 + $0x28] sm:$0xff] %vm2704, %v2523
    %2711 = vst.msk [vmem:[#allocation3 + $0x30] sm:$0xff] %vm2704, %v2525
    %2712 = vst.msk [vmem:[#allocation3 + $0x38] sm:$0xff] %vm2704, %v2527
    %2713 = vst.msk [vmem:[#allocation3 + $0x40] sm:$0xff] %vm2704, %v2529
    %2714 = vst.msk [vmem:[#allocation3 + $0x48] sm:$0xff] %vm2704, %v2531
    %2715 = vst.msk [vmem:[#allocation3 + $0x50] sm:$0xff] %vm2704, %v2533
    %2716 = vst.msk [vmem:[#allocation3 + $0x58] sm:$0xff] %vm2704, %v2535
    %2717 = vst.msk [vmem:[#allocation3 + $0x60] sm:$0xff] %vm2704, %v2537
    %2718 = vst.msk [vmem:[#allocation3 + $0x68] sm:$0xff] %vm2704, %v2539
    %2719 = vst.msk [vmem:[#allocation3 + $0x70] sm:$0xff] %vm2704, %v2541
    %2720 = vst.msk [vmem:[#allocation3 + $0x78] sm:$0xff] %vm2704, %v2543
    %2721 = vst.msk [vmem:[#allocation3 + $0x80] sm:$0xff] %vm2704, %v2545
    %2722 = vst.msk [vmem:[#allocation3 + $0x88] sm:$0xff] %vm2704, %v2547
    %2723 = vst.msk [vmem:[#allocation3 + $0x90] sm:$0xff] %vm2704, %v2549
    %2724 = vst.msk [vmem:[#allocation3 + $0x98] sm:$0xff] %vm2704, %v2551
    %2725 = vst.msk [vmem:[#allocation3 + $0xa0] sm:$0xff] %vm2704, %v2553
    %2726 = vst.msk [vmem:[#allocation3 + $0xa8] sm:$0xff] %vm2704, %v2555
    %2727 = vst.msk [vmem:[#allocation3 + $0xb0] sm:$0xff] %vm2704, %v2557
    %2728 = vst.msk [vmem:[#allocation3 + $0xb8] sm:$0xff] %vm2704, %v2559
    %2729 = vst.msk [vmem:[#allocation3 + $0xc0] sm:$0xff] %vm2704, %v2561
    %2730 = vst.msk [vmem:[#allocation3 + $0xc8] sm:$0xff] %vm2704, %v2563
    %2731 = vst.msk [vmem:[#allocation3 + $0xd0] sm:$0xff] %vm2704, %v2565
    %2732 = vst.msk [vmem:[#allocation3 + $0xd8] sm:$0xff] %vm2704, %v2567
    %2733 = vst.msk [vmem:[#allocation3 + $0xe0] sm:$0xff] %vm2704, %v2569
    %2734 = vst.msk [vmem:[#allocation3 + $0xe8] sm:$0xff] %vm2704, %v2571
    %2735 = vst.msk [vmem:[#allocation3 + $0xf0] sm:$0xff] %vm2704, %v2573
    %2736 = vst.msk [vmem:[#allocation3 + $0xf8] sm:$0xff] %vm2704, %v2575
    %2737 = vst.msk [vmem:[#allocation3 + $0x100] sm:$0xff] %vm2704, %v2577
    %2738 = vst.msk [vmem:[#allocation3 + $0x108] sm:$0xff] %vm2704, %v2579
    %2739 = vst.msk [vmem:[#allocation3 + $0x110] sm:$0xff] %vm2704, %v2581
    %2740 = vst.msk [vmem:[#allocation3 + $0x118] sm:$0xff] %vm2704, %v2583
    %2741 = vst.msk [vmem:[#allocation3 + $0x120] sm:$0xff] %vm2704, %v2585
    %2742 = vst.msk [vmem:[#allocation3 + $0x128] sm:$0xff] %vm2704, %v2587
    %2743 = vst.msk [vmem:[#allocation3 + $0x130] sm:$0xff] %vm2704, %v2589
    %2744 = vst.msk [vmem:[#allocation3 + $0x138] sm:$0xff] %vm2704, %v2591
    %2745 = vst.msk [vmem:[#allocation3 + $0x140] sm:$0xff] %vm2704, %v2593
    %2746 = vst.msk [vmem:[#allocation3 + $0x148] sm:$0xff] %vm2704, %v2595
    %2747 = vst.msk [vmem:[#allocation3 + $0x150] sm:$0xff] %vm2704, %v2597
    %2748 = vst.msk [vmem:[#allocation3 + $0x158] sm:$0xff] %vm2704, %v2599
    %2749 = vst.msk [vmem:[#allocation3 + $0x160] sm:$0xff] %vm2704, %v2601
    %2750 = vst.msk [vmem:[#allocation3 + $0x168] sm:$0xff] %vm2704, %v2603
    %2751 = vst.msk [vmem:[#allocation3 + $0x170] sm:$0xff] %vm2704, %v2605
    %2752 = vst.msk [vmem:[#allocation3 + $0x178] sm:$0xff] %vm2704, %v2607
    %2753 = vst.msk [vmem:[#allocation3 + $0x180] sm:$0xff] %vm2704, %v2609
    %2754 = vst.msk [vmem:[#allocation3 + $0x188] sm:$0xff] %vm2704, %v2611
    %2755 = vst.msk [vmem:[#allocation3 + $0x190] sm:$0xff] %vm2704, %v2613
    %2756 = vst.msk [vmem:[#allocation3 + $0x198] sm:$0xff] %vm2704, %v2615
    %2757 = vst.msk [vmem:[#allocation3 + $0x1a0] sm:$0xff] %vm2704, %v2617
    %2758 = vst.msk [vmem:[#allocation3 + $0x1a8] sm:$0xff] %vm2704, %v2619
    %2759 = vst.msk [vmem:[#allocation3 + $0x1b0] sm:$0xff] %vm2704, %v2621
    %2760 = vst.msk [vmem:[#allocation3 + $0x1b8] sm:$0xff] %vm2704, %v2623
    %2761 = vst.msk [vmem:[#allocation3 + $0x1c0] sm:$0xff] %vm2704, %v2625
    %2762 = vst.msk [vmem:[#allocation3 + $0x1c8] sm:$0xff] %vm2704, %v2627
    %2763 = vst.msk [vmem:[#allocation3 + $0x1d0] sm:$0xff] %vm2704, %v2629
    %2764 = vst.msk [vmem:[#allocation3 + $0x1d8] sm:$0xff] %vm2704, %v2631
    %2765 = vst.msk [vmem:[#allocation3 + $0x1e0] sm:$0xff] %vm2704, %v2633
    %2766 = vst.msk [vmem:[#allocation3 + $0x1e8] sm:$0xff] %vm2704, %v2635
    %2767 = vst.msk [vmem:[#allocation3 + $0x1f0] sm:$0xff] %vm2704, %v2637
    %2768 = vst.msk [vmem:[#allocation3 + $0x1f8] sm:$0xff] %vm2704, %v2639
    %v2769 = vld [vmem:[%s2383 + $0x1] sm:$0xff]
    %v2770 = vld [vmem:[%s2383 + $0x9] sm:$0xff]
    %v2771 = vld [vmem:[%s2383 + $0x19] sm:$0xff]
    %v2772 = vld [vmem:[%s2383 + $0x21] sm:$0xff]
    %v2773 = vld [vmem:[%s2383 + $0x31] sm:$0xff]
    %v2774 = vld [vmem:[%s2383 + $0x39] sm:$0xff]
    %v2775 = vld [vmem:[%s2383 + $0x49] sm:$0xff]
    %v2776 = vld [vmem:[%s2383 + $0x51] sm:$0xff]
    %v2777 = vld [vmem:[%s2383 + $0x61] sm:$0xff]
    %v2778 = vld [vmem:[%s2383 + $0x69] sm:$0xff]
    %v2779 = vld [vmem:[%s2383 + $0x79] sm:$0xff]
    %v2780 = vld [vmem:[%s2383 + $0x81] sm:$0xff]
    %v2781 = vld [vmem:[%s2383 + $0x91] sm:$0xff]
    %v2782 = vld [vmem:[%s2383 + $0x99] sm:$0xff]
    %v2783 = vld [vmem:[%s2383 + $0xa9] sm:$0xff]
    %v2784 = vld [vmem:[%s2383 + $0xb1] sm:$0xff]
    %v2785 = vld [vmem:[%s2383 + $0xc1] sm:$0xff]
    %v2786 = vld [vmem:[%s2383 + $0xc9] sm:$0xff]
    %v2787 = vld [vmem:[%s2383 + $0xd9] sm:$0xff]
    %v2788 = vld [vmem:[%s2383 + $0xe1] sm:$0xff]
    %v2789 = vld [vmem:[%s2383 + $0xf1] sm:$0xff]
    %v2790 = vld [vmem:[%s2383 + $0xf9] sm:$0xff]
    %v2791 = vld [vmem:[%s2383 + $0x109] sm:$0xff]
    %v2792 = vld [vmem:[%s2383 + $0x111] sm:$0xff]
    %v2793 = vld [vmem:[%s2383 + $0x121] sm:$0xff]
    %v2794 = vld [vmem:[%s2383 + $0x129] sm:$0xff]
    %v2795 = vld [vmem:[%s2383 + $0x139] sm:$0xff]
    %v2796 = vld [vmem:[%s2383 + $0x141] sm:$0xff]
    %v2797 = vld [vmem:[%s2383 + $0x151] sm:$0xff]
    %v2798 = vld [vmem:[%s2383 + $0x159] sm:$0xff]
    %v2799 = vld [vmem:[%s2383 + $0x169] sm:$0xff]
    %v2800 = vld [vmem:[%s2383 + $0x171] sm:$0xff]
    %v2801 = vld [vmem:[%s2383 + $0x1b1] sm:$0xff]
    %v2802 = vld [vmem:[%s2383 + $0x1b9] sm:$0xff]
    %v2803 = vld [vmem:[%s2383 + $0x1c9] sm:$0xff]
    %v2804 = vld [vmem:[%s2383 + $0x1d1] sm:$0xff]
    %v2805 = vld [vmem:[%s2383 + $0x1e1] sm:$0xff]
    %v2806 = vld [vmem:[%s2383 + $0x1e9] sm:$0xff]
    %v2807 = vld [vmem:[%s2383 + $0x1f9] sm:$0xff]
    %v2808 = vld [vmem:[%s2383 + $0x201] sm:$0xff]
    %v2809 = vld [vmem:[%s2383 + $0x211] sm:$0xff]
    %v2810 = vld [vmem:[%s2383 + $0x219] sm:$0xff]
    %v2811 = vld [vmem:[%s2383 + $0x229] sm:$0xff]
    %v2812 = vld [vmem:[%s2383 + $0x231] sm:$0xff]
    %v2813 = vld [vmem:[%s2383 + $0x241] sm:$0xff]
    %v2814 = vld [vmem:[%s2383 + $0x249] sm:$0xff]
    %v2815 = vld [vmem:[%s2383 + $0x259] sm:$0xff]
    %v2816 = vld [vmem:[%s2383 + $0x261] sm:$0xff]
    %v2817 = vld [vmem:[%s2383 + $0x271] sm:$0xff]
    %v2818 = vld [vmem:[%s2383 + $0x279] sm:$0xff]
    %v2819 = vld [vmem:[%s2383 + $0x289] sm:$0xff]
    %v2820 = vld [vmem:[%s2383 + $0x291] sm:$0xff]
    %v2821 = vld [vmem:[%s2383 + $0x2a1] sm:$0xff]
    %v2822 = vld [vmem:[%s2383 + $0x2a9] sm:$0xff]
    %v2823 = vld [vmem:[%s2383 + $0x2b9] sm:$0xff]
    %v2824 = vld [vmem:[%s2383 + $0x2c1] sm:$0xff]
    %v2825 = vld [vmem:[%s2383 + $0x2d1] sm:$0xff]
    %v2826 = vld [vmem:[%s2383 + $0x2d9] sm:$0xff]
    %v2827 = vld [vmem:[%s2383 + $0x2e9] sm:$0xff]
    %v2828 = vld [vmem:[%s2383 + $0x2f1] sm:$0xff]
    %v2829 = vld [vmem:[%s2383 + $0x301] sm:$0xff]
    %v2830 = vld [vmem:[%s2383 + $0x309] sm:$0xff]
    %v2831 = vld [vmem:[%s2383 + $0x319] sm:$0xff]
    %v2832 = vld [vmem:[%s2383 + $0x321] sm:$0xff]
    %2897 = vrot.lane.b32.xlu0 %v2769, 28
    %v2898 = vpop.permute.xlu0 %2897
    %2899 = vrot.lane.b32.xlu0 %v2770, 28
    %v2900 = vpop.permute.xlu0 %2899
    %2901 = vrot.lane.b32.xlu0 %v2771, 28
    %v2902 = vpop.permute.xlu0 %2901
    %2903 = vrot.lane.b32.xlu0 %v2772, 28
    %v2904 = vpop.permute.xlu0 %2903
    %2905 = vrot.lane.b32.xlu0 %v2773, 28
    %v2906 = vpop.permute.xlu0 %2905
    %2907 = vrot.lane.b32.xlu0 %v2774, 28
    %v2908 = vpop.permute.xlu0 %2907
    %2909 = vrot.lane.b32.xlu0 %v2775, 28
    %v2910 = vpop.permute.xlu0 %2909
    %2911 = vrot.lane.b32.xlu0 %v2776, 28
    %v2912 = vpop.permute.xlu0 %2911
    %2913 = vrot.lane.b32.xlu0 %v2777, 28
    %v2914 = vpop.permute.xlu0 %2913
    %2915 = vrot.lane.b32.xlu0 %v2778, 28
    %v2916 = vpop.permute.xlu0 %2915
    %2917 = vrot.lane.b32.xlu0 %v2779, 28
    %v2918 = vpop.permute.xlu0 %2917
    %2919 = vrot.lane.b32.xlu0 %v2780, 28
    %v2920 = vpop.permute.xlu0 %2919
    %2921 = vrot.lane.b32.xlu0 %v2781, 28
    %v2922 = vpop.permute.xlu0 %2921
    %2923 = vrot.lane.b32.xlu0 %v2782, 28
    %v2924 = vpop.permute.xlu0 %2923
    %2925 = vrot.lane.b32.xlu0 %v2783, 28
    %v2926 = vpop.permute.xlu0 %2925
    %2927 = vrot.lane.b32.xlu0 %v2784, 28
    %v2928 = vpop.permute.xlu0 %2927
    %2929 = vrot.lane.b32.xlu0 %v2785, 28
    %v2930 = vpop.permute.xlu0 %2929
    %2931 = vrot.lane.b32.xlu0 %v2786, 28
    %v2932 = vpop.permute.xlu0 %2931
    %2933 = vrot.lane.b32.xlu0 %v2787, 28
    %v2934 = vpop.permute.xlu0 %2933
    %2935 = vrot.lane.b32.xlu0 %v2788, 28
    %v2936 = vpop.permute.xlu0 %2935
    %2937 = vrot.lane.b32.xlu0 %v2789, 28
    %v2938 = vpop.permute.xlu0 %2937
    %2939 = vrot.lane.b32.xlu0 %v2790, 28
    %v2940 = vpop.permute.xlu0 %2939
    %2941 = vrot.lane.b32.xlu0 %v2791, 28
    %v2942 = vpop.permute.xlu0 %2941
    %2943 = vrot.lane.b32.xlu0 %v2792, 28
    %v2944 = vpop.permute.xlu0 %2943
    %2945 = vrot.lane.b32.xlu0 %v2793, 28
    %v2946 = vpop.permute.xlu0 %2945
    %2947 = vrot.lane.b32.xlu0 %v2794, 28
    %v2948 = vpop.permute.xlu0 %2947
    %2949 = vrot.lane.b32.xlu0 %v2795, 28
    %v2950 = vpop.permute.xlu0 %2949
    %2951 = vrot.lane.b32.xlu0 %v2796, 28
    %v2952 = vpop.permute.xlu0 %2951
    %2953 = vrot.lane.b32.xlu0 %v2797, 28
    %v2954 = vpop.permute.xlu0 %2953
    %2955 = vrot.lane.b32.xlu0 %v2798, 28
    %v2956 = vpop.permute.xlu0 %2955
    %2957 = vrot.lane.b32.xlu0 %v2799, 28
    %v2958 = vpop.permute.xlu0 %2957
    %2959 = vrot.lane.b32.xlu0 %v2800, 28
    %v2960 = vpop.permute.xlu0 %2959
    %2961 = vrot.lane.b32.xlu0 %v2801, 28
    %v2962 = vpop.permute.xlu0 %2961
    %2963 = vrot.lane.b32.xlu0 %v2802, 28
    %v2964 = vpop.permute.xlu0 %2963
    %2965 = vrot.lane.b32.xlu0 %v2803, 28
    %v2966 = vpop.permute.xlu0 %2965
    %2967 = vrot.lane.b32.xlu0 %v2804, 28
    %v2968 = vpop.permute.xlu0 %2967
    %2969 = vrot.lane.b32.xlu0 %v2805, 28
    %v2970 = vpop.permute.xlu0 %2969
    %2971 = vrot.lane.b32.xlu0 %v2806, 28
    %v2972 = vpop.permute.xlu0 %2971
    %2973 = vrot.lane.b32.xlu0 %v2807, 28
    %v2974 = vpop.permute.xlu0 %2973
    %2975 = vrot.lane.b32.xlu0 %v2808, 28
    %v2976 = vpop.permute.xlu0 %2975
    %2977 = vrot.lane.b32.xlu0 %v2809, 28
    %v2978 = vpop.permute.xlu0 %2977
    %2979 = vrot.lane.b32.xlu0 %v2810, 28
    %v2980 = vpop.permute.xlu0 %2979
    %2981 = vrot.lane.b32.xlu0 %v2811, 28
    %v2982 = vpop.permute.xlu0 %2981
    %2983 = vrot.lane.b32.xlu0 %v2812, 28
    %v2984 = vpop.permute.xlu0 %2983
    %2985 = vrot.lane.b32.xlu0 %v2813, 28
    %v2986 = vpop.permute.xlu0 %2985
    %2987 = vrot.lane.b32.xlu0 %v2814, 28
    %v2988 = vpop.permute.xlu0 %2987
    %2989 = vrot.lane.b32.xlu0 %v2815, 28
    %v2990 = vpop.permute.xlu0 %2989
    %2991 = vrot.lane.b32.xlu0 %v2816, 28
    %v2992 = vpop.permute.xlu0 %2991
    %2993 = vrot.lane.b32.xlu0 %v2817, 28
    %v2994 = vpop.permute.xlu0 %2993
    %2995 = vrot.lane.b32.xlu0 %v2818, 28
    %v2996 = vpop.permute.xlu0 %2995
    %2997 = vrot.lane.b32.xlu0 %v2819, 28
    %v2998 = vpop.permute.xlu0 %2997
    %2999 = vrot.lane.b32.xlu0 %v2820, 28
    %v3000 = vpop.permute.xlu0 %2999
    %3001 = vrot.lane.b32.xlu0 %v2821, 28
    %v3002 = vpop.permute.xlu0 %3001
    %3003 = vrot.lane.b32.xlu0 %v2822, 28
    %v3004 = vpop.permute.xlu0 %3003
    %3005 = vrot.lane.b32.xlu0 %v2823, 28
    %v3006 = vpop.permute.xlu0 %3005
    %3007 = vrot.lane.b32.xlu0 %v2824, 28
    %v3008 = vpop.permute.xlu0 %3007
    %3009 = vrot.lane.b32.xlu0 %v2825, 28
    %v3010 = vpop.permute.xlu0 %3009
    %3011 = vrot.lane.b32.xlu0 %v2826, 28
    %v3012 = vpop.permute.xlu0 %3011
    %3013 = vrot.lane.b32.xlu0 %v2827, 28
    %v3014 = vpop.permute.xlu0 %3013
    %3015 = vrot.lane.b32.xlu0 %v2828, 28
    %v3016 = vpop.permute.xlu0 %3015
    %3017 = vrot.lane.b32.xlu0 %v2829, 28
    %v3018 = vpop.permute.xlu0 %3017
    %3019 = vrot.lane.b32.xlu0 %v2830, 28
    %v3020 = vpop.permute.xlu0 %3019
    %3021 = vrot.lane.b32.xlu0 %v2831, 28
    %v3022 = vpop.permute.xlu0 %3021
    %3023 = vrot.lane.b32.xlu0 %v2832, 28
    %v3024 = vpop.permute.xlu0 %3023
    %vm3089 = vcmask 261344
    %3090 = vst.msk [vmem:[#allocation3] sm:$0xff] %vm3089, %v2898
    %3091 = vst.msk [vmem:[#allocation3 + $0x8] sm:$0xff] %vm3089, %v2900
    %3092 = vst.msk [vmem:[#allocation3 + $0x10] sm:$0xff] %vm3089, %v2902
    %3093 = vst.msk [vmem:[#allocation3 + $0x18] sm:$0xff] %vm3089, %v2904
    %3094 = vst.msk [vmem:[#allocation3 + $0x20] sm:$0xff] %vm3089, %v2906
    %3095 = vst.msk [vmem:[#allocation3 + $0x28] sm:$0xff] %vm3089, %v2908
    %3096 = vst.msk [vmem:[#allocation3 + $0x30] sm:$0xff] %vm3089, %v2910
    %3097 = vst.msk [vmem:[#allocation3 + $0x38] sm:$0xff] %vm3089, %v2912
    %3098 = vst.msk [vmem:[#allocation3 + $0x40] sm:$0xff] %vm3089, %v2914
    %3099 = vst.msk [vmem:[#allocation3 + $0x48] sm:$0xff] %vm3089, %v2916
    %3100 = vst.msk [vmem:[#allocation3 + $0x50] sm:$0xff] %vm3089, %v2918
    %3101 = vst.msk [vmem:[#allocation3 + $0x58] sm:$0xff] %vm3089, %v2920
    %3102 = vst.msk [vmem:[#allocation3 + $0x60] sm:$0xff] %vm3089, %v2922
    %3103 = vst.msk [vmem:[#allocation3 + $0x68] sm:$0xff] %vm3089, %v2924
    %3104 = vst.msk [vmem:[#allocation3 + $0x70] sm:$0xff] %vm3089, %v2926
    %3105 = vst.msk [vmem:[#allocation3 + $0x78] sm:$0xff] %vm3089, %v2928
    %3106 = vst.msk [vmem:[#allocation3 + $0x80] sm:$0xff] %vm3089, %v2930
    %3107 = vst.msk [vmem:[#allocation3 + $0x88] sm:$0xff] %vm3089, %v2932
    %3108 = vst.msk [vmem:[#allocation3 + $0x90] sm:$0xff] %vm3089, %v2934
    %3109 = vst.msk [vmem:[#allocation3 + $0x98] sm:$0xff] %vm3089, %v2936
    %3110 = vst.msk [vmem:[#allocation3 + $0xa0] sm:$0xff] %vm3089, %v2938
    %3111 = vst.msk [vmem:[#allocation3 + $0xa8] sm:$0xff] %vm3089, %v2940
    %3112 = vst.msk [vmem:[#allocation3 + $0xb0] sm:$0xff] %vm3089, %v2942
    %3113 = vst.msk [vmem:[#allocation3 + $0xb8] sm:$0xff] %vm3089, %v2944
    %3114 = vst.msk [vmem:[#allocation3 + $0xc0] sm:$0xff] %vm3089, %v2946
    %3115 = vst.msk [vmem:[#allocation3 + $0xc8] sm:$0xff] %vm3089, %v2948
    %3116 = vst.msk [vmem:[#allocation3 + $0xd0] sm:$0xff] %vm3089, %v2950
    %3117 = vst.msk [vmem:[#allocation3 + $0xd8] sm:$0xff] %vm3089, %v2952
    %3118 = vst.msk [vmem:[#allocation3 + $0xe0] sm:$0xff] %vm3089, %v2954
    %3119 = vst.msk [vmem:[#allocation3 + $0xe8] sm:$0xff] %vm3089, %v2956
    %3120 = vst.msk [vmem:[#allocation3 + $0xf0] sm:$0xff] %vm3089, %v2958
    %3121 = vst.msk [vmem:[#allocation3 + $0xf8] sm:$0xff] %vm3089, %v2960
    %3122 = vst.msk [vmem:[#allocation3 + $0x100] sm:$0xff] %vm3089, %v2962
    %3123 = vst.msk [vmem:[#allocation3 + $0x108] sm:$0xff] %vm3089, %v2964
    %3124 = vst.msk [vmem:[#allocation3 + $0x110] sm:$0xff] %vm3089, %v2966
    %3125 = vst.msk [vmem:[#allocation3 + $0x118] sm:$0xff] %vm3089, %v2968
    %3126 = vst.msk [vmem:[#allocation3 + $0x120] sm:$0xff] %vm3089, %v2970
    %3127 = vst.msk [vmem:[#allocation3 + $0x128] sm:$0xff] %vm3089, %v2972
    %3128 = vst.msk [vmem:[#allocation3 + $0x130] sm:$0xff] %vm3089, %v2974
    %3129 = vst.msk [vmem:[#allocation3 + $0x138] sm:$0xff] %vm3089, %v2976
    %3130 = vst.msk [vmem:[#allocation3 + $0x140] sm:$0xff] %vm3089, %v2978
    %3131 = vst.msk [vmem:[#allocation3 + $0x148] sm:$0xff] %vm3089, %v2980
    %3132 = vst.msk [vmem:[#allocation3 + $0x150] sm:$0xff] %vm3089, %v2982
    %3133 = vst.msk [vmem:[#allocation3 + $0x158] sm:$0xff] %vm3089, %v2984
    %3134 = vst.msk [vmem:[#allocation3 + $0x160] sm:$0xff] %vm3089, %v2986
    %3135 = vst.msk [vmem:[#allocation3 + $0x168] sm:$0xff] %vm3089, %v2988
    %3136 = vst.msk [vmem:[#allocation3 + $0x170] sm:$0xff] %vm3089, %v2990
    %3137 = vst.msk [vmem:[#allocation3 + $0x178] sm:$0xff] %vm3089, %v2992
    %3138 = vst.msk [vmem:[#allocation3 + $0x180] sm:$0xff] %vm3089, %v2994
    %3139 = vst.msk [vmem:[#allocation3 + $0x188] sm:$0xff] %vm3089, %v2996
    %3140 = vst.msk [vmem:[#allocation3 + $0x190] sm:$0xff] %vm3089, %v2998
    %3141 = vst.msk [vmem:[#allocation3 + $0x198] sm:$0xff] %vm3089, %v3000
    %3142 = vst.msk [vmem:[#allocation3 + $0x1a0] sm:$0xff] %vm3089, %v3002
    %3143 = vst.msk [vmem:[#allocation3 + $0x1a8] sm:$0xff] %vm3089, %v3004
    %3144 = vst.msk [vmem:[#allocation3 + $0x1b0] sm:$0xff] %vm3089, %v3006
    %3145 = vst.msk [vmem:[#allocation3 + $0x1b8] sm:$0xff] %vm3089, %v3008
    %3146 = vst.msk [vmem:[#allocation3 + $0x1c0] sm:$0xff] %vm3089, %v3010
    %3147 = vst.msk [vmem:[#allocation3 + $0x1c8] sm:$0xff] %vm3089, %v3012
    %3148 = vst.msk [vmem:[#allocation3 + $0x1d0] sm:$0xff] %vm3089, %v3014
    %3149 = vst.msk [vmem:[#allocation3 + $0x1d8] sm:$0xff] %vm3089, %v3016
    %3150 = vst.msk [vmem:[#allocation3 + $0x1e0] sm:$0xff] %vm3089, %v3018
    %3151 = vst.msk [vmem:[#allocation3 + $0x1e8] sm:$0xff] %vm3089, %v3020
    %3152 = vst.msk [vmem:[#allocation3 + $0x1f0] sm:$0xff] %vm3089, %v3022
    %3153 = vst.msk [vmem:[#allocation3 + $0x1f8] sm:$0xff] %vm3089, %v3024
    %v3154 = vld [vmem:[%s2383 + $0x2] sm:$0xff]
    %v3155 = vld [vmem:[%s2383 + $0xa] sm:$0xff]
    %v3156 = vld [vmem:[%s2383 + $0x1a] sm:$0xff]
    %v3157 = vld [vmem:[%s2383 + $0x22] sm:$0xff]
    %v3158 = vld [vmem:[%s2383 + $0x32] sm:$0xff]
    %v3159 = vld [vmem:[%s2383 + $0x3a] sm:$0xff]
    %v3160 = vld [vmem:[%s2383 + $0x4a] sm:$0xff]
    %v3161 = vld [vmem:[%s2383 + $0x52] sm:$0xff]
    %v3162 = vld [vmem:[%s2383 + $0x62] sm:$0xff]
    %v3163 = vld [vmem:[%s2383 + $0x6a] sm:$0xff]
    %v3164 = vld [vmem:[%s2383 + $0x7a] sm:$0xff]
    %v3165 = vld [vmem:[%s2383 + $0x82] sm:$0xff]
    %v3166 = vld [vmem:[%s2383 + $0x92] sm:$0xff]
    %v3167 = vld [vmem:[%s2383 + $0x9a] sm:$0xff]
    %v3168 = vld [vmem:[%s2383 + $0xaa] sm:$0xff]
    %v3169 = vld [vmem:[%s2383 + $0xb2] sm:$0xff]
    %v3170 = vld [vmem:[%s2383 + $0xc2] sm:$0xff]
    %v3171 = vld [vmem:[%s2383 + $0xca] sm:$0xff]
    %v3172 = vld [vmem:[%s2383 + $0xda] sm:$0xff]
    %v3173 = vld [vmem:[%s2383 + $0xe2] sm:$0xff]
    %v3174 = vld [vmem:[%s2383 + $0xf2] sm:$0xff]
    %v3175 = vld [vmem:[%s2383 + $0xfa] sm:$0xff]
    %v3176 = vld [vmem:[%s2383 + $0x10a] sm:$0xff]
    %v3177 = vld [vmem:[%s2383 + $0x112] sm:$0xff]
    %v3178 = vld [vmem:[%s2383 + $0x122] sm:$0xff]
    %v3179 = vld [vmem:[%s2383 + $0x12a] sm:$0xff]
    %v3180 = vld [vmem:[%s2383 + $0x13a] sm:$0xff]
    %v3181 = vld [vmem:[%s2383 + $0x142] sm:$0xff]
    %v3182 = vld [vmem:[%s2383 + $0x152] sm:$0xff]
    %v3183 = vld [vmem:[%s2383 + $0x15a] sm:$0xff]
    %v3184 = vld [vmem:[%s2383 + $0x16a] sm:$0xff]
    %v3185 = vld [vmem:[%s2383 + $0x172] sm:$0xff]
    %v3186 = vld [vmem:[%s2383 + $0x1b2] sm:$0xff]
    %v3187 = vld [vmem:[%s2383 + $0x1ba] sm:$0xff]
    %v3188 = vld [vmem:[%s2383 + $0x1ca] sm:$0xff]
    %v3189 = vld [vmem:[%s2383 + $0x1d2] sm:$0xff]
    %v3190 = vld [vmem:[%s2383 + $0x1e2] sm:$0xff]
    %v3191 = vld [vmem:[%s2383 + $0x1ea] sm:$0xff]
    %v3192 = vld [vmem:[%s2383 + $0x1fa] sm:$0xff]
    %v3193 = vld [vmem:[%s2383 + $0x202] sm:$0xff]
    %v3194 = vld [vmem:[%s2383 + $0x212] sm:$0xff]
    %v3195 = vld [vmem:[%s2383 + $0x21a] sm:$0xff]
    %v3196 = vld [vmem:[%s2383 + $0x22a] sm:$0xff]
    %v3197 = vld [vmem:[%s2383 + $0x232] sm:$0xff]
    %v3198 = vld [vmem:[%s2383 + $0x242] sm:$0xff]
    %v3199 = vld [vmem:[%s2383 + $0x24a] sm:$0xff]
    %v3200 = vld [vmem:[%s2383 + $0x25a] sm:$0xff]
    %v3201 = vld [vmem:[%s2383 + $0x262] sm:$0xff]
    %v3202 = vld [vmem:[%s2383 + $0x272] sm:$0xff]
    %v3203 = vld [vmem:[%s2383 + $0x27a] sm:$0xff]
    %v3204 = vld [vmem:[%s2383 + $0x28a] sm:$0xff]
    %v3205 = vld [vmem:[%s2383 + $0x292] sm:$0xff]
    %v3206 = vld [vmem:[%s2383 + $0x2a2] sm:$0xff]
    %v3207 = vld [vmem:[%s2383 + $0x2aa] sm:$0xff]
    %v3208 = vld [vmem:[%s2383 + $0x2ba] sm:$0xff]
    %v3209 = vld [vmem:[%s2383 + $0x2c2] sm:$0xff]
    %v3210 = vld [vmem:[%s2383 + $0x2d2] sm:$0xff]
    %v3211 = vld [vmem:[%s2383 + $0x2da] sm:$0xff]
    %v3212 = vld [vmem:[%s2383 + $0x2ea] sm:$0xff]
    %v3213 = vld [vmem:[%s2383 + $0x2f2] sm:$0xff]
    %v3214 = vld [vmem:[%s2383 + $0x302] sm:$0xff]
    %v3215 = vld [vmem:[%s2383 + $0x30a] sm:$0xff]
    %v3216 = vld [vmem:[%s2383 + $0x31a] sm:$0xff]
    %v3217 = vld [vmem:[%s2383 + $0x322] sm:$0xff]
    %3282 = vrot.lane.b32.xlu0 %v3154, 32
    %v3283 = vpop.permute.xlu0 %3282
    %3284 = vrot.lane.b32.xlu0 %v3155, 32
    %v3285 = vpop.permute.xlu0 %3284
    %3286 = vrot.lane.b32.xlu0 %v3156, 32
    %v3287 = vpop.permute.xlu0 %3286
    %3288 = vrot.lane.b32.xlu0 %v3157, 32
    %v3289 = vpop.permute.xlu0 %3288
    %3290 = vrot.lane.b32.xlu0 %v3158, 32
    %v3291 = vpop.permute.xlu0 %3290
    %3292 = vrot.lane.b32.xlu0 %v3159, 32
    %v3293 = vpop.permute.xlu0 %3292
    %3294 = vrot.lane.b32.xlu0 %v3160, 32
    %v3295 = vpop.permute.xlu0 %3294
    %3296 = vrot.lane.b32.xlu0 %v3161, 32
    %v3297 = vpop.permute.xlu0 %3296
    %3298 = vrot.lane.b32.xlu0 %v3162, 32
    %v3299 = vpop.permute.xlu0 %3298
    %3300 = vrot.lane.b32.xlu0 %v3163, 32
    %v3301 = vpop.permute.xlu0 %3300
    %3302 = vrot.lane.b32.xlu0 %v3164, 32
    %v3303 = vpop.permute.xlu0 %3302
    %3304 = vrot.lane.b32.xlu0 %v3165, 32
    %v3305 = vpop.permute.xlu0 %3304
    %3306 = vrot.lane.b32.xlu0 %v3166, 32
    %v3307 = vpop.permute.xlu0 %3306
    %3308 = vrot.lane.b32.xlu0 %v3167, 32
    %v3309 = vpop.permute.xlu0 %3308
    %3310 = vrot.lane.b32.xlu0 %v3168, 32
    %v3311 = vpop.permute.xlu0 %3310
    %3312 = vrot.lane.b32.xlu0 %v3169, 32
    %v3313 = vpop.permute.xlu0 %3312
    %3314 = vrot.lane.b32.xlu0 %v3170, 32
    %v3315 = vpop.permute.xlu0 %3314
    %3316 = vrot.lane.b32.xlu0 %v3171, 32
    %v3317 = vpop.permute.xlu0 %3316
    %3318 = vrot.lane.b32.xlu0 %v3172, 32
    %v3319 = vpop.permute.xlu0 %3318
    %3320 = vrot.lane.b32.xlu0 %v3173, 32
    %v3321 = vpop.permute.xlu0 %3320
    %3322 = vrot.lane.b32.xlu0 %v3174, 32
    %v3323 = vpop.permute.xlu0 %3322
    %3324 = vrot.lane.b32.xlu0 %v3175, 32
    %v3325 = vpop.permute.xlu0 %3324
    %3326 = vrot.lane.b32.xlu0 %v3176, 32
    %v3327 = vpop.permute.xlu0 %3326
    %3328 = vrot.lane.b32.xlu0 %v3177, 32
    %v3329 = vpop.permute.xlu0 %3328
    %3330 = vrot.lane.b32.xlu0 %v3178, 32
    %v3331 = vpop.permute.xlu0 %3330
    %3332 = vrot.lane.b32.xlu0 %v3179, 32
    %v3333 = vpop.permute.xlu0 %3332
    %3334 = vrot.lane.b32.xlu0 %v3180, 32
    %v3335 = vpop.permute.xlu0 %3334
    %3336 = vrot.lane.b32.xlu0 %v3181, 32
    %v3337 = vpop.permute.xlu0 %3336
    %3338 = vrot.lane.b32.xlu0 %v3182, 32
    %v3339 = vpop.permute.xlu0 %3338
    %3340 = vrot.lane.b32.xlu0 %v3183, 32
    %v3341 = vpop.permute.xlu0 %3340
    %3342 = vrot.lane.b32.xlu0 %v3184, 32
    %v3343 = vpop.permute.xlu0 %3342
    %3344 = vrot.lane.b32.xlu0 %v3185, 32
    %v3345 = vpop.permute.xlu0 %3344
    %3346 = vrot.lane.b32.xlu0 %v3186, 32
    %v3347 = vpop.permute.xlu0 %3346
    %3348 = vrot.lane.b32.xlu0 %v3187, 32
    %v3349 = vpop.permute.xlu0 %3348
    %3350 = vrot.lane.b32.xlu0 %v3188, 32
    %v3351 = vpop.permute.xlu0 %3350
    %3352 = vrot.lane.b32.xlu0 %v3189, 32
    %v3353 = vpop.permute.xlu0 %3352
    %3354 = vrot.lane.b32.xlu0 %v3190, 32
    %v3355 = vpop.permute.xlu0 %3354
    %3356 = vrot.lane.b32.xlu0 %v3191, 32
    %v3357 = vpop.permute.xlu0 %3356
    %3358 = vrot.lane.b32.xlu0 %v3192, 32
    %v3359 = vpop.permute.xlu0 %3358
    %3360 = vrot.lane.b32.xlu0 %v3193, 32
    %v3361 = vpop.permute.xlu0 %3360
    %3362 = vrot.lane.b32.xlu0 %v3194, 32
    %v3363 = vpop.permute.xlu0 %3362
    %3364 = vrot.lane.b32.xlu0 %v3195, 32
    %v3365 = vpop.permute.xlu0 %3364
    %3366 = vrot.lane.b32.xlu0 %v3196, 32
    %v3367 = vpop.permute.xlu0 %3366
    %3368 = vrot.lane.b32.xlu0 %v3197, 32
    %v3369 = vpop.permute.xlu0 %3368
    %3370 = vrot.lane.b32.xlu0 %v3198, 32
    %v3371 = vpop.permute.xlu0 %3370
    %3372 = vrot.lane.b32.xlu0 %v3199, 32
    %v3373 = vpop.permute.xlu0 %3372
    %3374 = vrot.lane.b32.xlu0 %v3200, 32
    %v3375 = vpop.permute.xlu0 %3374
    %3376 = vrot.lane.b32.xlu0 %v3201, 32
    %v3377 = vpop.permute.xlu0 %3376
    %3378 = vrot.lane.b32.xlu0 %v3202, 32
    %v3379 = vpop.permute.xlu0 %3378
    %3380 = vrot.lane.b32.xlu0 %v3203, 32
    %v3381 = vpop.permute.xlu0 %3380
    %3382 = vrot.lane.b32.xlu0 %v3204, 32
    %v3383 = vpop.permute.xlu0 %3382
    %3384 = vrot.lane.b32.xlu0 %v3205, 32
    %v3385 = vpop.permute.xlu0 %3384
    %3386 = vrot.lane.b32.xlu0 %v3206, 32
    %v3387 = vpop.permute.xlu0 %3386
    %3388 = vrot.lane.b32.xlu0 %v3207, 32
    %v3389 = vpop.permute.xlu0 %3388
    %3390 = vrot.lane.b32.xlu0 %v3208, 32
    %v3391 = vpop.permute.xlu0 %3390
    %3392 = vrot.lane.b32.xlu0 %v3209, 32
    %v3393 = vpop.permute.xlu0 %3392
    %3394 = vrot.lane.b32.xlu0 %v3210, 32
    %v3395 = vpop.permute.xlu0 %3394
    %3396 = vrot.lane.b32.xlu0 %v3211, 32
    %v3397 = vpop.permute.xlu0 %3396
    %3398 = vrot.lane.b32.xlu0 %v3212, 32
    %v3399 = vpop.permute.xlu0 %3398
    %3400 = vrot.lane.b32.xlu0 %v3213, 32
    %v3401 = vpop.permute.xlu0 %3400
    %3402 = vrot.lane.b32.xlu0 %v3214, 32
    %v3403 = vpop.permute.xlu0 %3402
    %3404 = vrot.lane.b32.xlu0 %v3215, 32
    %v3405 = vpop.permute.xlu0 %3404
    %3406 = vrot.lane.b32.xlu0 %v3216, 32
    %v3407 = vpop.permute.xlu0 %3406
    %3408 = vrot.lane.b32.xlu0 %v3217, 32
    %v3409 = vpop.permute.xlu0 %3408
    %vm3474 = vcmask 294144
    %3475 = vst.msk [vmem:[#allocation3] sm:$0xff] %vm3474, %v3283
    %3476 = vst.msk [vmem:[#allocation3 + $0x8] sm:$0xff] %vm3474, %v3285
    %3477 = vst.msk [vmem:[#allocation3 + $0x10] sm:$0xff] %vm3474, %v3287
    %3478 = vst.msk [vmem:[#allocation3 + $0x18] sm:$0xff] %vm3474, %v3289
    %3479 = vst.msk [vmem:[#allocation3 + $0x20] sm:$0xff] %vm3474, %v3291
    %3480 = vst.msk [vmem:[#allocation3 + $0x28] sm:$0xff] %vm3474, %v3293
    %3481 = vst.msk [vmem:[#allocation3 + $0x30] sm:$0xff] %vm3474, %v3295
    %3482 = vst.msk [vmem:[#allocation3 + $0x38] sm:$0xff] %vm3474, %v3297
    %3483 = vst.msk [vmem:[#allocation3 + $0x40] sm:$0xff] %vm3474, %v3299
    %3484 = vst.msk [vmem:[#allocation3 + $0x48] sm:$0xff] %vm3474, %v3301
    %3485 = vst.msk [vmem:[#allocation3 + $0x50] sm:$0xff] %vm3474, %v3303
    %3486 = vst.msk [vmem:[#allocation3 + $0x58] sm:$0xff] %vm3474, %v3305
    %3487 = vst.msk [vmem:[#allocation3 + $0x60] sm:$0xff] %vm3474, %v3307
    %3488 = vst.msk [vmem:[#allocation3 + $0x68] sm:$0xff] %vm3474, %v3309
    %3489 = vst.msk [vmem:[#allocation3 + $0x70] sm:$0xff] %vm3474, %v3311
    %3490 = vst.msk [vmem:[#allocation3 + $0x78] sm:$0xff] %vm3474, %v3313
    %3491 = vst.msk [vmem:[#allocation3 + $0x80] sm:$0xff] %vm3474, %v3315
    %3492 = vst.msk [vmem:[#allocation3 + $0x88] sm:$0xff] %vm3474, %v3317
    %3493 = vst.msk [vmem:[#allocation3 + $0x90] sm:$0xff] %vm3474, %v3319
    %3494 = vst.msk [vmem:[#allocation3 + $0x98] sm:$0xff] %vm3474, %v3321
    %3495 = vst.msk [vmem:[#allocation3 + $0xa0] sm:$0xff] %vm3474, %v3323
    %3496 = vst.msk [vmem:[#allocation3 + $0xa8] sm:$0xff] %vm3474, %v3325
    %3497 = vst.msk [vmem:[#allocation3 + $0xb0] sm:$0xff] %vm3474, %v3327
    %3498 = vst.msk [vmem:[#allocation3 + $0xb8] sm:$0xff] %vm3474, %v3329
    %3499 = vst.msk [vmem:[#allocation3 + $0xc0] sm:$0xff] %vm3474, %v3331
    %3500 = vst.msk [vmem:[#allocation3 + $0xc8] sm:$0xff] %vm3474, %v3333
    %3501 = vst.msk [vmem:[#allocation3 + $0xd0] sm:$0xff] %vm3474, %v3335
    %3502 = vst.msk [vmem:[#allocation3 + $0xd8] sm:$0xff] %vm3474, %v3337
    %3503 = vst.msk [vmem:[#allocation3 + $0xe0] sm:$0xff] %vm3474, %v3339
    %3504 = vst.msk [vmem:[#allocation3 + $0xe8] sm:$0xff] %vm3474, %v3341
    %3505 = vst.msk [vmem:[#allocation3 + $0xf0] sm:$0xff] %vm3474, %v3343
    %3506 = vst.msk [vmem:[#allocation3 + $0xf8] sm:$0xff] %vm3474, %v3345
    %3507 = vst.msk [vmem:[#allocation3 + $0x100] sm:$0xff] %vm3474, %v3347
    %3508 = vst.msk [vmem:[#allocation3 + $0x108] sm:$0xff] %vm3474, %v3349
    %3509 = vst.msk [vmem:[#allocation3 + $0x110] sm:$0xff] %vm3474, %v3351
    %3510 = vst.msk [vmem:[#allocation3 + $0x118] sm:$0xff] %vm3474, %v3353
    %3511 = vst.msk [vmem:[#allocation3 + $0x120] sm:$0xff] %vm3474, %v3355
    %3512 = vst.msk [vmem:[#allocation3 + $0x128] sm:$0xff] %vm3474, %v3357
    %3513 = vst.msk [vmem:[#allocation3 + $0x130] sm:$0xff] %vm3474, %v3359
    %3514 = vst.msk [vmem:[#allocation3 + $0x138] sm:$0xff] %vm3474, %v3361
    %3515 = vst.msk [vmem:[#allocation3 + $0x140] sm:$0xff] %vm3474, %v3363
    %3516 = vst.msk [vmem:[#allocation3 + $0x148] sm:$0xff] %vm3474, %v3365
    %3517 = vst.msk [vmem:[#allocation3 + $0x150] sm:$0xff] %vm3474, %v3367
    %3518 = vst.msk [vmem:[#allocation3 + $0x158] sm:$0xff] %vm3474, %v3369
    %3519 = vst.msk [vmem:[#allocation3 + $0x160] sm:$0xff] %vm3474, %v3371
    %3520 = vst.msk [vmem:[#allocation3 + $0x168] sm:$0xff] %vm3474, %v3373
    %3521 = vst.msk [vmem:[#allocation3 + $0x170] sm:$0xff] %vm3474, %v3375
    %3522 = vst.msk [vmem:[#allocation3 + $0x178] sm:$0xff] %vm3474, %v3377
    %3523 = vst.msk [vmem:[#allocation3 + $0x180] sm:$0xff] %vm3474, %v3379
    %3524 = vst.msk [vmem:[#allocation3 + $0x188] sm:$0xff] %vm3474, %v3381
    %3525 = vst.msk [vmem:[#allocation3 + $0x190] sm:$0xff] %vm3474, %v3383
    %3526 = vst.msk [vmem:[#allocation3 + $0x198] sm:$0xff] %vm3474, %v3385
    %3527 = vst.msk [vmem:[#allocation3 + $0x1a0] sm:$0xff] %vm3474, %v3387
    %3528 = vst.msk [vmem:[#allocation3 + $0x1a8] sm:$0xff] %vm3474, %v3389
    %3529 = vst.msk [vmem:[#allocation3 + $0x1b0] sm:$0xff] %vm3474, %v3391
    %3530 = vst.msk [vmem:[#allocation3 + $0x1b8] sm:$0xff] %vm3474, %v3393
    %3531 = vst.msk [vmem:[#allocation3 + $0x1c0] sm:$0xff] %vm3474, %v3395
    %3532 = vst.msk [vmem:[#allocation3 + $0x1c8] sm:$0xff] %vm3474, %v3397
    %3533 = vst.msk [vmem:[#allocation3 + $0x1d0] sm:$0xff] %vm3474, %v3399
    %3534 = vst.msk [vmem:[#allocation3 + $0x1d8] sm:$0xff] %vm3474, %v3401
    %3535 = vst.msk [vmem:[#allocation3 + $0x1e0] sm:$0xff] %vm3474, %v3403
    %3536 = vst.msk [vmem:[#allocation3 + $0x1e8] sm:$0xff] %vm3474, %v3405
    %3537 = vst.msk [vmem:[#allocation3 + $0x1f0] sm:$0xff] %vm3474, %v3407
    %3538 = vst.msk [vmem:[#allocation3 + $0x1f8] sm:$0xff] %vm3474, %v3409
    %v3539 = vld [vmem:[#allocation3] sm:$0xff]
    %v3540 = vld [vmem:[#allocation3 + $0x8] sm:$0xff]
    %v3541 = vld [vmem:[#allocation3 + $0x10] sm:$0xff]
    %v3542 = vld [vmem:[#allocation3 + $0x18] sm:$0xff]
    %v3543 = vld [vmem:[#allocation3 + $0x20] sm:$0xff]
    %v3544 = vld [vmem:[#allocation3 + $0x28] sm:$0xff]
    %v3545 = vld [vmem:[#allocation3 + $0x30] sm:$0xff]
    %v3546 = vld [vmem:[#allocation3 + $0x38] sm:$0xff]
    %v3547 = vld [vmem:[#allocation3 + $0x40] sm:$0xff]
    %v3548 = vld [vmem:[#allocation3 + $0x48] sm:$0xff]
    %v3549 = vld [vmem:[#allocation3 + $0x50] sm:$0xff]
    %v3550 = vld [vmem:[#allocation3 + $0x58] sm:$0xff]
    %v3551 = vld [vmem:[#allocation3 + $0x60] sm:$0xff]
    %v3552 = vld [vmem:[#allocation3 + $0x68] sm:$0xff]
    %v3553 = vld [vmem:[#allocation3 + $0x70] sm:$0xff]
    %v3554 = vld [vmem:[#allocation3 + $0x78] sm:$0xff]
    %v3555 = vld [vmem:[#allocation3 + $0x80] sm:$0xff]
    %v3556 = vld [vmem:[#allocation3 + $0x88] sm:$0xff]
    %v3557 = vld [vmem:[#allocation3 + $0x90] sm:$0xff]
    %v3558 = vld [vmem:[#allocation3 + $0x98] sm:$0xff]
    %v3559 = vld [vmem:[#allocation3 + $0xa0] sm:$0xff]
    %v3560 = vld [vmem:[#allocation3 + $0xa8] sm:$0xff]
    %v3561 = vld [vmem:[#allocation3 + $0xb0] sm:$0xff]
    %v3562 = vld [vmem:[#allocation3 + $0xb8] sm:$0xff]
    %v3563 = vld [vmem:[#allocation3 + $0xc0] sm:$0xff]
    %v3564 = vld [vmem:[#allocation3 + $0xc8] sm:$0xff]
    %v3565 = vld [vmem:[#allocation3 + $0xd0] sm:$0xff]
    %v3566 = vld [vmem:[#allocation3 + $0xd8] sm:$0xff]
    %v3567 = vld [vmem:[#allocation3 + $0xe0] sm:$0xff]
    %v3568 = vld [vmem:[#allocation3 + $0xe8] sm:$0xff]
    %v3569 = vld [vmem:[#allocation3 + $0xf0] sm:$0xff]
    %v3570 = vld [vmem:[#allocation3 + $0xf8] sm:$0xff]
    %v3571 = vld [vmem:[#allocation3 + $0x100] sm:$0xff]
    %v3572 = vld [vmem:[#allocation3 + $0x108] sm:$0xff]
    %v3573 = vld [vmem:[#allocation3 + $0x110] sm:$0xff]
    %v3574 = vld [vmem:[#allocation3 + $0x118] sm:$0xff]
    %v3575 = vld [vmem:[#allocation3 + $0x120] sm:$0xff]
    %v3576 = vld [vmem:[#allocation3 + $0x128] sm:$0xff]
    %v3577 = vld [vmem:[#allocation3 + $0x130] sm:$0xff]
    %v3578 = vld [vmem:[#allocation3 + $0x138] sm:$0xff]
    %v3579 = vld [vmem:[#allocation3 + $0x140] sm:$0xff]
    %v3580 = vld [vmem:[#allocation3 + $0x148] sm:$0xff]
    %v3581 = vld [vmem:[#allocation3 + $0x150] sm:$0xff]
    %v3582 = vld [vmem:[#allocation3 + $0x158] sm:$0xff]
    %v3583 = vld [vmem:[#allocation3 + $0x160] sm:$0xff]
    %v3584 = vld [vmem:[#allocation3 + $0x168] sm:$0xff]
    %v3585 = vld [vmem:[#allocation3 + $0x170] sm:$0xff]
    %v3586 = vld [vmem:[#allocation3 + $0x178] sm:$0xff]
    %v3587 = vld [vmem:[#allocation3 + $0x180] sm:$0xff]
    %v3588 = vld [vmem:[#allocation3 + $0x188] sm:$0xff]
    %v3589 = vld [vmem:[#allocation3 + $0x190] sm:$0xff]
    %v3590 = vld [vmem:[#allocation3 + $0x198] sm:$0xff]
    %v3591 = vld [vmem:[#allocation3 + $0x1a0] sm:$0xff]
    %v3592 = vld [vmem:[#allocation3 + $0x1a8] sm:$0xff]
    %v3593 = vld [vmem:[#allocation3 + $0x1b0] sm:$0xff]
    %v3594 = vld [vmem:[#allocation3 + $0x1b8] sm:$0xff]
    %v3595 = vld [vmem:[#allocation3 + $0x1c0] sm:$0xff]
    %v3596 = vld [vmem:[#allocation3 + $0x1c8] sm:$0xff]
    %v3597 = vld [vmem:[#allocation3 + $0x1d0] sm:$0xff]
    %v3598 = vld [vmem:[#allocation3 + $0x1d8] sm:$0xff]
    %v3599 = vld [vmem:[#allocation3 + $0x1e0] sm:$0xff]
    %v3600 = vld [vmem:[#allocation3 + $0x1e8] sm:$0xff]
    %v3601 = vld [vmem:[#allocation3 + $0x1f0] sm:$0xff]
    %v3602 = vld [vmem:[#allocation3 + $0x1f8] sm:$0xff]
    %v3603 = vpack.c.bf16 %v3540, %v3539
    %v3604 = vpack.c.bf16 %v3542, %v3541
    %v3605 = vpack.c.bf16 %v3544, %v3543
    %v3606 = vpack.c.bf16 %v3546, %v3545
    %v3607 = vpack.c.bf16 %v3548, %v3547
    %v3608 = vpack.c.bf16 %v3550, %v3549
    %v3609 = vpack.c.bf16 %v3552, %v3551
    %v3610 = vpack.c.bf16 %v3554, %v3553
    %v3611 = vpack.c.bf16 %v3556, %v3555
    %v3612 = vpack.c.bf16 %v3558, %v3557
    %v3613 = vpack.c.bf16 %v3560, %v3559
    %v3614 = vpack.c.bf16 %v3562, %v3561
    %v3615 = vpack.c.bf16 %v3564, %v3563
    %v3616 = vpack.c.bf16 %v3566, %v3565
    %v3617 = vpack.c.bf16 %v3568, %v3567
    %v3618 = vpack.c.bf16 %v3570, %v3569
    %v3619 = vpack.c.bf16 %v3572, %v3571
    %v3620 = vpack.c.bf16 %v3574, %v3573
    %v3621 = vpack.c.bf16 %v3576, %v3575
    %v3622 = vpack.c.bf16 %v3578, %v3577
    %v3623 = vpack.c.bf16 %v3580, %v3579
    %v3624 = vpack.c.bf16 %v3582, %v3581
    %v3625 = vpack.c.bf16 %v3584, %v3583
    %v3626 = vpack.c.bf16 %v3586, %v3585
    %v3627 = vpack.c.bf16 %v3588, %v3587
    %v3628 = vpack.c.bf16 %v3590, %v3589
    %v3629 = vpack.c.bf16 %v3592, %v3591
    %v3630 = vpack.c.bf16 %v3594, %v3593
    %v3631 = vpack.c.bf16 %v3596, %v3595
    %v3632 = vpack.c.bf16 %v3598, %v3597
    %v3633 = vpack.c.bf16 %v3600, %v3599
    %v3634 = vpack.c.bf16 %v3602, %v3601
    %v3635 = vld [vmem:[%s1] sm:$0xf]
    %v3636 = vld [vmem:[%s1 + $0x4] sm:$0xf]
    %v3637 = vld [vmem:[%s1 + $0x8] sm:$0xf]
    %v3638 = vld [vmem:[%s1 + $0xc] sm:$0xf]
    %v3639 = vld [vmem:[%s1 + $0x10] sm:$0xf]
    %v3640 = vld [vmem:[%s1 + $0x14] sm:$0xf]
    %v3641 = vld [vmem:[%s1 + $0x18] sm:$0xf]
    %v3642 = vld [vmem:[%s1 + $0x1c] sm:$0xf]
    %v3643 = vld [vmem:[%s1 + $0x20] sm:$0xf]
    %v3644 = vld [vmem:[%s1 + $0x24] sm:$0xf]
    %v3645 = vld [vmem:[%s1 + $0x28] sm:$0xf]
    %v3646 = vld [vmem:[%s1 + $0x2c] sm:$0xf]
    %v3647 = vld [vmem:[%s1 + $0x30] sm:$0xf]
    %v3648 = vld [vmem:[%s1 + $0x34] sm:$0xf]
    %v3649 = vld [vmem:[%s1 + $0x38] sm:$0xf]
    %v3650 = vld [vmem:[%s1 + $0x3c] sm:$0xf]
    %v3667 = vunpack.c.l.b16 %v3635
    %v3668 = vunpack.c.l.b16 %v3636
    %v3669 = vunpack.c.l.b16 %v3637
    %v3670 = vunpack.c.l.b16 %v3638
    %v3671 = vunpack.c.l.b16 %v3639
    %v3672 = vunpack.c.l.b16 %v3640
    %v3673 = vunpack.c.l.b16 %v3641
    %v3674 = vunpack.c.l.b16 %v3642
    %v3675 = vunpack.c.l.b16 %v3643
    %v3676 = vunpack.c.l.b16 %v3644
    %v3677 = vunpack.c.l.b16 %v3645
    %v3678 = vunpack.c.l.b16 %v3646
    %v3679 = vunpack.c.l.b16 %v3647
    %v3680 = vunpack.c.l.b16 %v3648
    %v3681 = vunpack.c.l.b16 %v3649
    %v3682 = vunpack.c.l.b16 %v3650
    %v3683 = vpack.c.b16 %v3668, %v3667
    %v3684 = vpack.c.b16 %v3670, %v3669
    %v3685 = vpack.c.b16 %v3672, %v3671
    %v3686 = vpack.c.b16 %v3674, %v3673
    %v3687 = vpack.c.b16 %v3676, %v3675
    %v3688 = vpack.c.b16 %v3678, %v3677
    %v3689 = vpack.c.b16 %v3680, %v3679
    %v3690 = vpack.c.b16 %v3682, %v3681
    %3699 = vmatpush.bf16.msra.mxu0 %v3690
    %3700 = vmatpush.bf16.msra.mxu0 %v3689
    %3701 = vmatpush.bf16.msra.mxu0 %v3688
    %3702 = vmatpush.bf16.msra.mxu0 %v3687
    %3703 = vmatpush.bf16.msra.mxu0 %v3686
    %3704 = vmatpush.bf16.msra.mxu0 %v3685
    %3705 = vmatpush.bf16.msra.mxu0 %v3684
    %3706 = vmatpush.bf16.msra.mxu0 %v3683
    %3707 = vmatmul.bf16.gmra.mxu0 %v3603
    %v3708 = vpop.f32.mrf.mxu0
    %v3709 = vadd.f32 0.0, %v3708
    %v3710 = vpop.f32.mrf.mxu0
    %v3711 = vadd.f32 0.0, %v3710
    %3712 = vmatmul.bf16.gmra.mxu0 %v3604
    %v3713 = vpop.f32.mrf.mxu0
    %v3714 = vadd.f32 0.0, %v3713
    %v3715 = vpop.f32.mrf.mxu0
    %v3716 = vadd.f32 0.0, %v3715
    %3717 = vmatmul.bf16.gmra.mxu0 %v3605
    %v3718 = vpop.f32.mrf.mxu0
    %v3719 = vadd.f32 0.0, %v3718
    %v3720 = vpop.f32.mrf.mxu0
    %v3721 = vadd.f32 0.0, %v3720
    %3722 = vmatmul.bf16.gmra.mxu0 %v3606
    %v3723 = vpop.f32.mrf.mxu0
    %v3724 = vadd.f32 0.0, %v3723
    %v3725 = vpop.f32.mrf.mxu0
    %v3726 = vadd.f32 0.0, %v3725
    %3727 = vmatmul.bf16.gmra.mxu0 %v3607
    %v3728 = vpop.f32.mrf.mxu0
    %v3729 = vadd.f32 0.0, %v3728
    %v3730 = vpop.f32.mrf.mxu0
    %v3731 = vadd.f32 0.0, %v3730
    %3732 = vmatmul.bf16.gmra.mxu0 %v3608
    %v3733 = vpop.f32.mrf.mxu0
    %v3734 = vadd.f32 0.0, %v3733
    %v3735 = vpop.f32.mrf.mxu0
    %v3736 = vadd.f32 0.0, %v3735
    %3737 = vmatmul.bf16.gmra.mxu0 %v3609
    %v3738 = vpop.f32.mrf.mxu0
    %v3739 = vadd.f32 0.0, %v3738
    %v3740 = vpop.f32.mrf.mxu0
    %v3741 = vadd.f32 0.0, %v3740
    %3742 = vmatmul.bf16.gmra.mxu0 %v3610
    %v3743 = vpop.f32.mrf.mxu0
    %v3744 = vadd.f32 0.0, %v3743
    %v3745 = vpop.f32.mrf.mxu0
    %v3746 = vadd.f32 0.0, %v3745
    %3747 = vmatmul.bf16.gmra.mxu0 %v3611
    %v3748 = vpop.f32.mrf.mxu0
    %v3749 = vadd.f32 0.0, %v3748
    %v3750 = vpop.f32.mrf.mxu0
    %v3751 = vadd.f32 0.0, %v3750
    %3752 = vmatmul.bf16.gmra.mxu0 %v3612
    %v3753 = vpop.f32.mrf.mxu0
    %v3754 = vadd.f32 0.0, %v3753
    %v3755 = vpop.f32.mrf.mxu0
    %v3756 = vadd.f32 0.0, %v3755
    %3757 = vmatmul.bf16.gmra.mxu0 %v3613
    %v3758 = vpop.f32.mrf.mxu0
    %v3759 = vadd.f32 0.0, %v3758
    %v3760 = vpop.f32.mrf.mxu0
    %v3761 = vadd.f32 0.0, %v3760
    %3762 = vmatmul.bf16.gmra.mxu0 %v3614
    %v3763 = vpop.f32.mrf.mxu0
    %v3764 = vadd.f32 0.0, %v3763
    %v3765 = vpop.f32.mrf.mxu0
    %v3766 = vadd.f32 0.0, %v3765
    %3767 = vmatmul.bf16.gmra.mxu0 %v3615
    %v3768 = vpop.f32.mrf.mxu0
    %v3769 = vadd.f32 0.0, %v3768
    %v3770 = vpop.f32.mrf.mxu0
    %v3771 = vadd.f32 0.0, %v3770
    %3772 = vmatmul.bf16.gmra.mxu0 %v3616
    %v3773 = vpop.f32.mrf.mxu0
    %v3774 = vadd.f32 0.0, %v3773
    %v3775 = vpop.f32.mrf.mxu0
    %v3776 = vadd.f32 0.0, %v3775
    %3777 = vmatmul.bf16.gmra.mxu0 %v3617
    %v3778 = vpop.f32.mrf.mxu0
    %v3779 = vadd.f32 0.0, %v3778
    %v3780 = vpop.f32.mrf.mxu0
    %v3781 = vadd.f32 0.0, %v3780
    %3782 = vmatmul.bf16.gmra.mxu0 %v3618
    %v3783 = vpop.f32.mrf.mxu0
    %v3784 = vadd.f32 0.0, %v3783
    %v3785 = vpop.f32.mrf.mxu0
    %v3786 = vadd.f32 0.0, %v3785
    %3787 = vmatmul.bf16.gmra.mxu0 %v3619
    %v3788 = vpop.f32.mrf.mxu0
    %v3789 = vadd.f32 0.0, %v3788
    %v3790 = vpop.f32.mrf.mxu0
    %v3791 = vadd.f32 0.0, %v3790
    %3792 = vmatmul.bf16.gmra.mxu0 %v3620
    %v3793 = vpop.f32.mrf.mxu0
    %v3794 = vadd.f32 0.0, %v3793
    %v3795 = vpop.f32.mrf.mxu0
    %v3796 = vadd.f32 0.0, %v3795
    %3797 = vmatmul.bf16.gmra.mxu0 %v3621
    %v3798 = vpop.f32.mrf.mxu0
    %v3799 = vadd.f32 0.0, %v3798
    %v3800 = vpop.f32.mrf.mxu0
    %v3801 = vadd.f32 0.0, %v3800
    %3802 = vmatmul.bf16.gmra.mxu0 %v3622
    %v3803 = vpop.f32.mrf.mxu0
    %v3804 = vadd.f32 0.0, %v3803
    %v3805 = vpop.f32.mrf.mxu0
    %v3806 = vadd.f32 0.0, %v3805
    %3807 = vmatmul.bf16.gmra.mxu0 %v3623
    %v3808 = vpop.f32.mrf.mxu0
    %v3809 = vadd.f32 0.0, %v3808
    %v3810 = vpop.f32.mrf.mxu0
    %v3811 = vadd.f32 0.0, %v3810
    %3812 = vmatmul.bf16.gmra.mxu0 %v3624
    %v3813 = vpop.f32.mrf.mxu0
    %v3814 = vadd.f32 0.0, %v3813
    %v3815 = vpop.f32.mrf.mxu0
    %v3816 = vadd.f32 0.0, %v3815
    %3817 = vmatmul.bf16.gmra.mxu0 %v3625
    %v3818 = vpop.f32.mrf.mxu0
    %v3819 = vadd.f32 0.0, %v3818
    %v3820 = vpop.f32.mrf.mxu0
    %v3821 = vadd.f32 0.0, %v3820
    %3822 = vmatmul.bf16.gmra.mxu0 %v3626
    %v3823 = vpop.f32.mrf.mxu0
    %v3824 = vadd.f32 0.0, %v3823
    %v3825 = vpop.f32.mrf.mxu0
    %v3826 = vadd.f32 0.0, %v3825
    %3827 = vmatmul.bf16.gmra.mxu0 %v3627
    %v3828 = vpop.f32.mrf.mxu0
    %v3829 = vadd.f32 0.0, %v3828
    %v3830 = vpop.f32.mrf.mxu0
    %v3831 = vadd.f32 0.0, %v3830
    %3832 = vmatmul.bf16.gmra.mxu0 %v3628
    %v3833 = vpop.f32.mrf.mxu0
    %v3834 = vadd.f32 0.0, %v3833
    %v3835 = vpop.f32.mrf.mxu0
    %v3836 = vadd.f32 0.0, %v3835
    %3837 = vmatmul.bf16.gmra.mxu0 %v3629
    %v3838 = vpop.f32.mrf.mxu0
    %v3839 = vadd.f32 0.0, %v3838
    %v3840 = vpop.f32.mrf.mxu0
    %v3841 = vadd.f32 0.0, %v3840
    %3842 = vmatmul.bf16.gmra.mxu0 %v3630
    %v3843 = vpop.f32.mrf.mxu0
    %v3844 = vadd.f32 0.0, %v3843
    %v3845 = vpop.f32.mrf.mxu0
    %v3846 = vadd.f32 0.0, %v3845
    %3847 = vmatmul.bf16.gmra.mxu0 %v3631
    %v3848 = vpop.f32.mrf.mxu0
    %v3849 = vadd.f32 0.0, %v3848
    %v3850 = vpop.f32.mrf.mxu0
    %v3851 = vadd.f32 0.0, %v3850
    %3852 = vmatmul.bf16.gmra.mxu0 %v3632
    %v3853 = vpop.f32.mrf.mxu0
    %v3854 = vadd.f32 0.0, %v3853
    %v3855 = vpop.f32.mrf.mxu0
    %v3856 = vadd.f32 0.0, %v3855
    %3857 = vmatmul.bf16.gmra.mxu0 %v3633
    %v3858 = vpop.f32.mrf.mxu0
    %v3859 = vadd.f32 0.0, %v3858
    %v3860 = vpop.f32.mrf.mxu0
    %v3861 = vadd.f32 0.0, %v3860
    %3862 = vmatmul.bf16.gmra.mxu0 %v3634
    %v3863 = vpop.f32.mrf.mxu0
    %v3864 = vadd.f32 0.0, %v3863
    %v3865 = vpop.f32.mrf.mxu0
    %v3866 = vadd.f32 0.0, %v3865
    %3867 = vdwg.mxu0
    %v3868 = vadd.f32 %v3709, %v3711
    %v3869 = vadd.f32 %v3868, %v3714
    %v3870 = vadd.f32 %v3869, %v3716
    %v3871 = vadd.f32 %v3870, %v3719
    %v3872 = vadd.f32 %v3871, %v3721
    %v3873 = vadd.f32 %v3872, %v3724
    %v3874 = vadd.f32 %v3873, %v3726
    %v3875 = vadd.f32 %v3874, %v3729
    %v3876 = vadd.f32 %v3875, %v3731
    %v3877 = vadd.f32 %v3876, %v3734
    %v3878 = vadd.f32 %v3877, %v3736
    %v3879 = vadd.f32 %v3878, %v3739
    %v3880 = vadd.f32 %v3879, %v3741
    %v3881 = vadd.f32 %v3880, %v3744
    %v3882 = vadd.f32 %v3881, %v3746
    %v3883 = vadd.f32 %v3882, %v3749
    %v3884 = vadd.f32 %v3883, %v3751
    %v3885 = vadd.f32 %v3884, %v3754
    %v3886 = vadd.f32 %v3885, %v3756
    %v3887 = vadd.f32 %v3886, %v3759
    %v3888 = vadd.f32 %v3887, %v3761
    %v3889 = vadd.f32 %v3888, %v3764
    %v3890 = vadd.f32 %v3889, %v3766
    %v3891 = vadd.f32 %v3890, %v3769
    %v3892 = vadd.f32 %v3891, %v3771
    %v3893 = vadd.f32 %v3892, %v3774
    %v3894 = vadd.f32 %v3893, %v3776
    %v3895 = vadd.f32 %v3894, %v3779
    %v3896 = vadd.f32 %v3895, %v3781
    %v3897 = vadd.f32 %v3896, %v3784
    %v3898 = vadd.f32 %v3897, %v3786
    %v3899 = vadd.f32 %v3898, %v3789
    %v3900 = vadd.f32 %v3899, %v3791
    %v3901 = vadd.f32 %v3900, %v3794
    %v3902 = vadd.f32 %v3901, %v3796
    %v3903 = vadd.f32 %v3902, %v3799
    %v3904 = vadd.f32 %v3903, %v3801
    %v3905 = vadd.f32 %v3904, %v3804
    %v3906 = vadd.f32 %v3905, %v3806
    %v3907 = vadd.f32 %v3906, %v3809
    %v3908 = vadd.f32 %v3907, %v3811
    %v3909 = vadd.f32 %v3908, %v3814
    %v3910 = vadd.f32 %v3909, %v3816
    %v3911 = vadd.f32 %v3910, %v3819
    %v3912 = vadd.f32 %v3911, %v3821
    %v3913 = vadd.f32 %v3912, %v3824
    %v3914 = vadd.f32 %v3913, %v3826
    %v3915 = vadd.f32 %v3914, %v3829
    %v3916 = vadd.f32 %v3915, %v3831
    %v3917 = vadd.f32 %v3916, %v3834
    %v3918 = vadd.f32 %v3917, %v3836
    %v3919 = vadd.f32 %v3918, %v3839
    %v3920 = vadd.f32 %v3919, %v3841
    %v3921 = vadd.f32 %v3920, %v3844
    %v3922 = vadd.f32 %v3921, %v3846
    %v3923 = vadd.f32 %v3922, %v3849
    %v3924 = vadd.f32 %v3923, %v3851
    %v3925 = vadd.f32 %v3924, %v3854
    %v3926 = vadd.f32 %v3925, %v3856
    %v3927 = vadd.f32 %v3926, %v3859
    %v3928 = vadd.f32 %v3927, %v3861
    %v3929 = vadd.f32 %v3928, %v3864
    %v3930 = vadd.f32 %v3929, %v3866
    %v3931 = vrot.slane %v3930, 4
    %v3932 = vadd.f32 %v3930, %v3931
    %v3933 = vrot.slane %v3932, 2
    %v3934 = vadd.f32 %v3932, %v3933
    %v3935 = vrot.slane %v3934, 1
    %v3936 = vadd.f32 %v3934, %v3935
    %v3937 = vmul.f32 %v3709, %v3709
    %v3938 = vmul.f32 %v3711, %v3711
    %v3939 = vmul.f32 %v3714, %v3714
    %v3940 = vmul.f32 %v3716, %v3716
    %v3941 = vmul.f32 %v3719, %v3719
    %v3942 = vmul.f32 %v3721, %v3721
    %v3943 = vmul.f32 %v3724, %v3724
    %v3944 = vmul.f32 %v3726, %v3726
    %v3945 = vmul.f32 %v3729, %v3729
    %v3946 = vmul.f32 %v3731, %v3731
    %v3947 = vmul.f32 %v3734, %v3734
    %v3948 = vmul.f32 %v3736, %v3736
    %v3949 = vmul.f32 %v3739, %v3739
    %v3950 = vmul.f32 %v3741, %v3741
    %v3951 = vmul.f32 %v3744, %v3744
    %v3952 = vmul.f32 %v3746, %v3746
    %v3953 = vmul.f32 %v3749, %v3749
    %v3954 = vmul.f32 %v3751, %v3751
    %v3955 = vmul.f32 %v3754, %v3754
    %v3956 = vmul.f32 %v3756, %v3756
    %v3957 = vmul.f32 %v3759, %v3759
    %v3958 = vmul.f32 %v3761, %v3761
    %v3959 = vmul.f32 %v3764, %v3764
    %v3960 = vmul.f32 %v3766, %v3766
    %v3961 = vmul.f32 %v3769, %v3769
    %v3962 = vmul.f32 %v3771, %v3771
    %v3963 = vmul.f32 %v3774, %v3774
    %v3964 = vmul.f32 %v3776, %v3776
    %v3965 = vmul.f32 %v3779, %v3779
    %v3966 = vmul.f32 %v3781, %v3781
    %v3967 = vmul.f32 %v3784, %v3784
    %v3968 = vmul.f32 %v3786, %v3786
    %v3969 = vmul.f32 %v3789, %v3789
    %v3970 = vmul.f32 %v3791, %v3791
    %v3971 = vmul.f32 %v3794, %v3794
    %v3972 = vmul.f32 %v3796, %v3796
    %v3973 = vmul.f32 %v3799, %v3799
    %v3974 = vmul.f32 %v3801, %v3801
    %v3975 = vmul.f32 %v3804, %v3804
    %v3976 = vmul.f32 %v3806, %v3806
    %v3977 = vmul.f32 %v3809, %v3809
    %v3978 = vmul.f32 %v3811, %v3811
    %v3979 = vmul.f32 %v3814, %v3814
    %v3980 = vmul.f32 %v3816, %v3816
    %v3981 = vmul.f32 %v3819, %v3819
    %v3982 = vmul.f32 %v3821, %v3821
    %v3983 = vmul.f32 %v3824, %v3824
    %v3984 = vmul.f32 %v3826, %v3826
    %v3985 = vmul.f32 %v3829, %v3829
    %v3986 = vmul.f32 %v3831, %v3831
    %v3987 = vmul.f32 %v3834, %v3834
    %v3988 = vmul.f32 %v3836, %v3836
    %v3989 = vmul.f32 %v3839, %v3839
    %v3990 = vmul.f32 %v3841, %v3841
    %v3991 = vmul.f32 %v3844, %v3844
    %v3992 = vmul.f32 %v3846, %v3846
    %v3993 = vmul.f32 %v3849, %v3849
    %v3994 = vmul.f32 %v3851, %v3851
    %v3995 = vmul.f32 %v3854, %v3854
    %v3996 = vmul.f32 %v3856, %v3856
    %v3997 = vmul.f32 %v3859, %v3859
    %v3998 = vmul.f32 %v3861, %v3861
    %v3999 = vmul.f32 %v3864, %v3864
    %v4000 = vmul.f32 %v3866, %v3866
    %v4001 = vadd.f32 %v3937, %v3938
    %v4002 = vadd.f32 %v4001, %v3939
    %v4003 = vadd.f32 %v4002, %v3940
    %v4004 = vadd.f32 %v4003, %v3941
    %v4005 = vadd.f32 %v4004, %v3942
    %v4006 = vadd.f32 %v4005, %v3943
    %v4007 = vadd.f32 %v4006, %v3944
    %v4008 = vadd.f32 %v4007, %v3945
    %v4009 = vadd.f32 %v4008, %v3946
    %v4010 = vadd.f32 %v4009, %v3947
    %v4011 = vadd.f32 %v4010, %v3948
    %v4012 = vadd.f32 %v4011, %v3949
    %v4013 = vadd.f32 %v4012, %v3950
    %v4014 = vadd.f32 %v4013, %v3951
    %v4015 = vadd.f32 %v4014, %v3952
    %v4016 = vadd.f32 %v4015, %v3953
    %v4017 = vadd.f32 %v4016, %v3954
    %v4018 = vadd.f32 %v4017, %v3955
    %v4019 = vadd.f32 %v4018, %v3956
    %v4020 = vadd.f32 %v4019, %v3957
    %v4021 = vadd.f32 %v4020, %v3958
    %v4022 = vadd.f32 %v4021, %v3959
    %v4023 = vadd.f32 %v4022, %v3960
    %v4024 = vadd.f32 %v4023, %v3961
    %v4025 = vadd.f32 %v4024, %v3962
    %v4026 = vadd.f32 %v4025, %v3963
    %v4027 = vadd.f32 %v4026, %v3964
    %v4028 = vadd.f32 %v4027, %v3965
    %v4029 = vadd.f32 %v4028, %v3966
    %v4030 = vadd.f32 %v4029, %v3967
    %v4031 = vadd.f32 %v4030, %v3968
    %v4032 = vadd.f32 %v4031, %v3969
    %v4033 = vadd.f32 %v4032, %v3970
    %v4034 = vadd.f32 %v4033, %v3971
    %v4035 = vadd.f32 %v4034, %v3972
    %v4036 = vadd.f32 %v4035, %v3973
    %v4037 = vadd.f32 %v4036, %v3974
    %v4038 = vadd.f32 %v4037, %v3975
    %v4039 = vadd.f32 %v4038, %v3976
    %v4040 = vadd.f32 %v4039, %v3977
    %v4041 = vadd.f32 %v4040, %v3978
    %v4042 = vadd.f32 %v4041, %v3979
    %v4043 = vadd.f32 %v4042, %v3980
    %v4044 = vadd.f32 %v4043, %v3981
    %v4045 = vadd.f32 %v4044, %v3982
    %v4046 = vadd.f32 %v4045, %v3983
    %v4047 = vadd.f32 %v4046, %v3984
    %v4048 = vadd.f32 %v4047, %v3985
    %v4049 = vadd.f32 %v4048, %v3986
    %v4050 = vadd.f32 %v4049, %v3987
    %v4051 = vadd.f32 %v4050, %v3988
    %v4052 = vadd.f32 %v4051, %v3989
    %v4053 = vadd.f32 %v4052, %v3990
    %v4054 = vadd.f32 %v4053, %v3991
    %v4055 = vadd.f32 %v4054, %v3992
    %v4056 = vadd.f32 %v4055, %v3993
    %v4057 = vadd.f32 %v4056, %v3994
    %v4058 = vadd.f32 %v4057, %v3995
    %v4059 = vadd.f32 %v4058, %v3996
    %v4060 = vadd.f32 %v4059, %v3997
    %v4061 = vadd.f32 %v4060, %v3998
    %v4062 = vadd.f32 %v4061, %v3999
    %v4063 = vadd.f32 %v4062, %v4000
    %v4064 = vrot.slane %v4063, 4
    %v4065 = vadd.f32 %v4063, %v4064
    %v4066 = vrot.slane %v4065, 2
    %v4067 = vadd.f32 %v4065, %v4066
    %v4068 = vrot.slane %v4067, 1
    %v4069 = vadd.f32 %v4067, %v4068
    %v4070 = vmul.f32 %v3936, 0.001953125
    %v4071 = vmul.f32 %v4069, 0.001953125
    %v4072 = vmul.f32 %v4070, %v4070
    %v4073 = vsub.f32 %v4071, %v4072
    %v4074 = vmax.f32 %v4073, 0.0
    %v4075 = vadd.f32 %v4074, 1e-05
    %v4076 = vrsqrt.pop %v4075
    %v4077 = vmul.f32 %v4076, %v4075
    %v4078 = vmul.f32 %v4077, %v4076
    %v4079 = vmul.f32 0.5, %v4078
    %v4080 = vsub.f32 1.5, %v4079
    %v4081 = vmul.f32 %v4076, %v4080
    %vm4082 = vweird.f32 %v4075
    %vm4083 = vweird.f32 %v4076
    %vm4084 = vmor %vm4082, %vm4083
    %v4085 = vsel %vm4084, %v4076, %v4081
    %v4086 = vld [vmem:[%s2] sm:$0x1]
    %v4087 = vmul.f32 %v4085, %v4086
    %v4088 = vsub.f32 %v3709, %v4070
    %v4089 = vsub.f32 %v3711, %v4070
    %v4090 = vsub.f32 %v3714, %v4070
    %v4091 = vsub.f32 %v3716, %v4070
    %v4092 = vsub.f32 %v3719, %v4070
    %v4093 = vsub.f32 %v3721, %v4070
    %v4094 = vsub.f32 %v3724, %v4070
    %v4095 = vsub.f32 %v3726, %v4070
    %v4096 = vsub.f32 %v3729, %v4070
    %v4097 = vsub.f32 %v3731, %v4070
    %v4098 = vsub.f32 %v3734, %v4070
    %v4099 = vsub.f32 %v3736, %v4070
    %v4100 = vsub.f32 %v3739, %v4070
    %v4101 = vsub.f32 %v3741, %v4070
    %v4102 = vsub.f32 %v3744, %v4070
    %v4103 = vsub.f32 %v3746, %v4070
    %v4104 = vsub.f32 %v3749, %v4070
    %v4105 = vsub.f32 %v3751, %v4070
    %v4106 = vsub.f32 %v3754, %v4070
    %v4107 = vsub.f32 %v3756, %v4070
    %v4108 = vsub.f32 %v3759, %v4070
    %v4109 = vsub.f32 %v3761, %v4070
    %v4110 = vsub.f32 %v3764, %v4070
    %v4111 = vsub.f32 %v3766, %v4070
    %v4112 = vsub.f32 %v3769, %v4070
    %v4113 = vsub.f32 %v3771, %v4070
    %v4114 = vsub.f32 %v3774, %v4070
    %v4115 = vsub.f32 %v3776, %v4070
    %v4116 = vsub.f32 %v3779, %v4070
    %v4117 = vsub.f32 %v3781, %v4070
    %v4118 = vsub.f32 %v3784, %v4070
    %v4119 = vsub.f32 %v3786, %v4070
    %v4120 = vsub.f32 %v3789, %v4070
    %v4121 = vsub.f32 %v3791, %v4070
    %v4122 = vsub.f32 %v3794, %v4070
    %v4123 = vsub.f32 %v3796, %v4070
    %v4124 = vsub.f32 %v3799, %v4070
    %v4125 = vsub.f32 %v3801, %v4070
    %v4126 = vsub.f32 %v3804, %v4070
    %v4127 = vsub.f32 %v3806, %v4070
    %v4128 = vsub.f32 %v3809, %v4070
    %v4129 = vsub.f32 %v3811, %v4070
    %v4130 = vsub.f32 %v3814, %v4070
    %v4131 = vsub.f32 %v3816, %v4070
    %v4132 = vsub.f32 %v3819, %v4070
    %v4133 = vsub.f32 %v3821, %v4070
    %v4134 = vsub.f32 %v3824, %v4070
    %v4135 = vsub.f32 %v3826, %v4070
    %v4136 = vsub.f32 %v3829, %v4070
    %v4137 = vsub.f32 %v3831, %v4070
    %v4138 = vsub.f32 %v3834, %v4070
    %v4139 = vsub.f32 %v3836, %v4070
    %v4140 = vsub.f32 %v3839, %v4070
    %v4141 = vsub.f32 %v3841, %v4070
    %v4142 = vsub.f32 %v3844, %v4070
    %v4143 = vsub.f32 %v3846, %v4070
    %v4144 = vsub.f32 %v3849, %v4070
    %v4145 = vsub.f32 %v3851, %v4070
    %v4146 = vsub.f32 %v3854, %v4070
    %v4147 = vsub.f32 %v3856, %v4070
    %v4148 = vsub.f32 %v3859, %v4070
    %v4149 = vsub.f32 %v3861, %v4070
    %v4150 = vsub.f32 %v3864, %v4070
    %v4151 = vsub.f32 %v3866, %v4070
    %v4152 = vperm.slane %v4087, 0
    %v4153 = vmul.f32 %v4088, %v4152
    %v4154 = vmul.f32 %v4089, %v4152
    %v4155 = vmul.f32 %v4090, %v4152
    %v4156 = vmul.f32 %v4091, %v4152
    %v4157 = vmul.f32 %v4092, %v4152
    %v4158 = vmul.f32 %v4093, %v4152
    %v4159 = vmul.f32 %v4094, %v4152
    %v4160 = vmul.f32 %v4095, %v4152
    %v4161 = vmul.f32 %v4096, %v4152
    %v4162 = vmul.f32 %v4097, %v4152
    %v4163 = vmul.f32 %v4098, %v4152
    %v4164 = vmul.f32 %v4099, %v4152
    %v4165 = vmul.f32 %v4100, %v4152
    %v4166 = vmul.f32 %v4101, %v4152
    %v4167 = vmul.f32 %v4102, %v4152
    %v4168 = vmul.f32 %v4103, %v4152
    %v4169 = vmul.f32 %v4104, %v4152
    %v4170 = vmul.f32 %v4105, %v4152
    %v4171 = vmul.f32 %v4106, %v4152
    %v4172 = vmul.f32 %v4107, %v4152
    %v4173 = vmul.f32 %v4108, %v4152
    %v4174 = vmul.f32 %v4109, %v4152
    %v4175 = vmul.f32 %v4110, %v4152
    %v4176 = vmul.f32 %v4111, %v4152
    %v4177 = vmul.f32 %v4112, %v4152
    %v4178 = vmul.f32 %v4113, %v4152
    %v4179 = vmul.f32 %v4114, %v4152
    %v4180 = vmul.f32 %v4115, %v4152
    %v4181 = vmul.f32 %v4116, %v4152
    %v4182 = vmul.f32 %v4117, %v4152
    %v4183 = vmul.f32 %v4118, %v4152
    %v4184 = vmul.f32 %v4119, %v4152
    %v4185 = vmul.f32 %v4120, %v4152
    %v4186 = vmul.f32 %v4121, %v4152
    %v4187 = vmul.f32 %v4122, %v4152
    %v4188 = vmul.f32 %v4123, %v4152
    %v4189 = vmul.f32 %v4124, %v4152
    %v4190 = vmul.f32 %v4125, %v4152
    %v4191 = vmul.f32 %v4126, %v4152
    %v4192 = vmul.f32 %v4127, %v4152
    %v4193 = vmul.f32 %v4128, %v4152
    %v4194 = vmul.f32 %v4129, %v4152
    %v4195 = vmul.f32 %v4130, %v4152
    %v4196 = vmul.f32 %v4131, %v4152
    %v4197 = vmul.f32 %v4132, %v4152
    %v4198 = vmul.f32 %v4133, %v4152
    %v4199 = vmul.f32 %v4134, %v4152
    %v4200 = vmul.f32 %v4135, %v4152
    %v4201 = vmul.f32 %v4136, %v4152
    %v4202 = vmul.f32 %v4137, %v4152
    %v4203 = vmul.f32 %v4138, %v4152
    %v4204 = vmul.f32 %v4139, %v4152
    %v4205 = vmul.f32 %v4140, %v4152
    %v4206 = vmul.f32 %v4141, %v4152
    %v4207 = vmul.f32 %v4142, %v4152
    %v4208 = vmul.f32 %v4143, %v4152
    %v4209 = vmul.f32 %v4144, %v4152
    %v4210 = vmul.f32 %v4145, %v4152
    %v4211 = vmul.f32 %v4146, %v4152
    %v4212 = vmul.f32 %v4147, %v4152
    %v4213 = vmul.f32 %v4148, %v4152
    %v4214 = vmul.f32 %v4149, %v4152
    %v4215 = vmul.f32 %v4150, %v4152
    %v4216 = vmul.f32 %v4151, %v4152
    %v4217 = vld [vmem:[%s3] sm:$0x1]
    %v4219 = vperm.slane %v4217, 0
    %v4221 = vadd.f32 %v4153, %v4219
    %v4222 = vadd.f32 %v4154, %v4219
    %v4223 = vadd.f32 %v4155, %v4219
    %v4224 = vadd.f32 %v4156, %v4219
    %v4225 = vadd.f32 %v4157, %v4219
    %v4226 = vadd.f32 %v4158, %v4219
    %v4227 = vadd.f32 %v4159, %v4219
    %v4228 = vadd.f32 %v4160, %v4219
    %v4229 = vadd.f32 %v4161, %v4219
    %v4230 = vadd.f32 %v4162, %v4219
    %v4231 = vadd.f32 %v4163, %v4219
    %v4232 = vadd.f32 %v4164, %v4219
    %v4233 = vadd.f32 %v4165, %v4219
    %v4234 = vadd.f32 %v4166, %v4219
    %v4235 = vadd.f32 %v4167, %v4219
    %v4236 = vadd.f32 %v4168, %v4219
    %v4237 = vadd.f32 %v4169, %v4219
    %v4238 = vadd.f32 %v4170, %v4219
    %v4239 = vadd.f32 %v4171, %v4219
    %v4240 = vadd.f32 %v4172, %v4219
    %v4241 = vadd.f32 %v4173, %v4219
    %v4242 = vadd.f32 %v4174, %v4219
    %v4243 = vadd.f32 %v4175, %v4219
    %v4244 = vadd.f32 %v4176, %v4219
    %v4245 = vadd.f32 %v4177, %v4219
    %v4246 = vadd.f32 %v4178, %v4219
    %v4247 = vadd.f32 %v4179, %v4219
    %v4248 = vadd.f32 %v4180, %v4219
    %v4249 = vadd.f32 %v4181, %v4219
    %v4250 = vadd.f32 %v4182, %v4219
    %v4251 = vadd.f32 %v4183, %v4219
    %v4252 = vadd.f32 %v4184, %v4219
    %v4253 = vadd.f32 %v4185, %v4219
    %v4254 = vadd.f32 %v4186, %v4219
    %v4255 = vadd.f32 %v4187, %v4219
    %v4256 = vadd.f32 %v4188, %v4219
    %v4257 = vadd.f32 %v4189, %v4219
    %v4258 = vadd.f32 %v4190, %v4219
    %v4259 = vadd.f32 %v4191, %v4219
    %v4260 = vadd.f32 %v4192, %v4219
    %v4261 = vadd.f32 %v4193, %v4219
    %v4262 = vadd.f32 %v4194, %v4219
    %v4263 = vadd.f32 %v4195, %v4219
    %v4264 = vadd.f32 %v4196, %v4219
    %v4265 = vadd.f32 %v4197, %v4219
    %v4266 = vadd.f32 %v4198, %v4219
    %v4267 = vadd.f32 %v4199, %v4219
    %v4268 = vadd.f32 %v4200, %v4219
    %v4269 = vadd.f32 %v4201, %v4219
    %v4270 = vadd.f32 %v4202, %v4219
    %v4271 = vadd.f32 %v4203, %v4219
    %v4272 = vadd.f32 %v4204, %v4219
    %v4273 = vadd.f32 %v4205, %v4219
    %v4274 = vadd.f32 %v4206, %v4219
    %v4275 = vadd.f32 %v4207, %v4219
    %v4276 = vadd.f32 %v4208, %v4219
    %v4277 = vadd.f32 %v4209, %v4219
    %v4278 = vadd.f32 %v4210, %v4219
    %v4279 = vadd.f32 %v4211, %v4219
    %v4280 = vadd.f32 %v4212, %v4219
    %v4281 = vadd.f32 %v4213, %v4219
    %v4282 = vadd.f32 %v4214, %v4219
    %v4283 = vadd.f32 %v4215, %v4219
    %v4284 = vadd.f32 %v4216, %v4219
    %v4285 = vmax.f32 %v4221, 0.0
    %v4286 = vmax.f32 %v4222, 0.0
    %v4287 = vmax.f32 %v4223, 0.0
    %v4288 = vmax.f32 %v4224, 0.0
    %v4289 = vmax.f32 %v4225, 0.0
    %v4290 = vmax.f32 %v4226, 0.0
    %v4291 = vmax.f32 %v4227, 0.0
    %v4292 = vmax.f32 %v4228, 0.0
    %v4293 = vmax.f32 %v4229, 0.0
    %v4294 = vmax.f32 %v4230, 0.0
    %v4295 = vmax.f32 %v4231, 0.0
    %v4296 = vmax.f32 %v4232, 0.0
    %v4297 = vmax.f32 %v4233, 0.0
    %v4298 = vmax.f32 %v4234, 0.0
    %v4299 = vmax.f32 %v4235, 0.0
    %v4300 = vmax.f32 %v4236, 0.0
    %v4301 = vmax.f32 %v4237, 0.0
    %v4302 = vmax.f32 %v4238, 0.0
    %v4303 = vmax.f32 %v4239, 0.0
    %v4304 = vmax.f32 %v4240, 0.0
    %v4305 = vmax.f32 %v4241, 0.0
    %v4306 = vmax.f32 %v4242, 0.0
    %v4307 = vmax.f32 %v4243, 0.0
    %v4308 = vmax.f32 %v4244, 0.0
    %v4309 = vmax.f32 %v4245, 0.0
    %v4310 = vmax.f32 %v4246, 0.0
    %v4311 = vmax.f32 %v4247, 0.0
    %v4312 = vmax.f32 %v4248, 0.0
    %v4313 = vmax.f32 %v4249, 0.0
    %v4314 = vmax.f32 %v4250, 0.0
    %v4315 = vmax.f32 %v4251, 0.0
    %v4316 = vmax.f32 %v4252, 0.0
    %v4317 = vmax.f32 %v4253, 0.0
    %v4318 = vmax.f32 %v4254, 0.0
    %v4319 = vmax.f32 %v4255, 0.0
    %v4320 = vmax.f32 %v4256, 0.0
    %v4321 = vmax.f32 %v4257, 0.0
    %v4322 = vmax.f32 %v4258, 0.0
    %v4323 = vmax.f32 %v4259, 0.0
    %v4324 = vmax.f32 %v4260, 0.0
    %v4325 = vmax.f32 %v4261, 0.0
    %v4326 = vmax.f32 %v4262, 0.0
    %v4327 = vmax.f32 %v4263, 0.0
    %v4328 = vmax.f32 %v4264, 0.0
    %v4329 = vmax.f32 %v4265, 0.0
    %v4330 = vmax.f32 %v4266, 0.0
    %v4331 = vmax.f32 %v4267, 0.0
    %v4332 = vmax.f32 %v4268, 0.0
    %v4333 = vmax.f32 %v4269, 0.0
    %v4334 = vmax.f32 %v4270, 0.0
    %v4335 = vmax.f32 %v4271, 0.0
    %v4336 = vmax.f32 %v4272, 0.0
    %v4337 = vmax.f32 %v4273, 0.0
    %v4338 = vmax.f32 %v4274, 0.0
    %v4339 = vmax.f32 %v4275, 0.0
    %v4340 = vmax.f32 %v4276, 0.0
    %v4341 = vmax.f32 %v4277, 0.0
    %v4342 = vmax.f32 %v4278, 0.0
    %v4343 = vmax.f32 %v4279, 0.0
    %v4344 = vmax.f32 %v4280, 0.0
    %v4345 = vmax.f32 %v4281, 0.0
    %v4346 = vmax.f32 %v4282, 0.0
    %v4347 = vmax.f32 %v4283, 0.0
    %v4348 = vmax.f32 %v4284, 0.0
    %4349 = vst.msk [vmem:[%s265 + $0x1] sm:$0xff] %vm27, %v4285
    %4350 = vst.msk [vmem:[%s265 + $0x9] sm:$0xff] %vm27, %v4286
    %4351 = vst.msk [vmem:[%s265 + $0x19] sm:$0xff] %vm27, %v4287
    %4352 = vst.msk [vmem:[%s265 + $0x21] sm:$0xff] %vm27, %v4288
    %4353 = vst.msk [vmem:[%s265 + $0x31] sm:$0xff] %vm27, %v4289
    %4354 = vst.msk [vmem:[%s265 + $0x39] sm:$0xff] %vm27, %v4290
    %4355 = vst.msk [vmem:[%s265 + $0x49] sm:$0xff] %vm27, %v4291
    %4356 = vst.msk [vmem:[%s265 + $0x51] sm:$0xff] %vm27, %v4292
    %4357 = vst.msk [vmem:[%s265 + $0x61] sm:$0xff] %vm27, %v4293
    %4358 = vst.msk [vmem:[%s265 + $0x69] sm:$0xff] %vm27, %v4294
    %4359 = vst.msk [vmem:[%s265 + $0x79] sm:$0xff] %vm27, %v4295
    %4360 = vst.msk [vmem:[%s265 + $0x81] sm:$0xff] %vm27, %v4296
    %4361 = vst.msk [vmem:[%s265 + $0x91] sm:$0xff] %vm27, %v4297
    %4362 = vst.msk [vmem:[%s265 + $0x99] sm:$0xff] %vm27, %v4298
    %4363 = vst.msk [vmem:[%s265 + $0xa9] sm:$0xff] %vm27, %v4299
    %4364 = vst.msk [vmem:[%s265 + $0xb1] sm:$0xff] %vm27, %v4300
    %4365 = vst.msk [vmem:[%s265 + $0xc1] sm:$0xff] %vm27, %v4301
    %4366 = vst.msk [vmem:[%s265 + $0xc9] sm:$0xff] %vm27, %v4302
    %4367 = vst.msk [vmem:[%s265 + $0xd9] sm:$0xff] %vm27, %v4303
    %4368 = vst.msk [vmem:[%s265 + $0xe1] sm:$0xff] %vm27, %v4304
    %4369 = vst.msk [vmem:[%s265 + $0xf1] sm:$0xff] %vm27, %v4305
    %4370 = vst.msk [vmem:[%s265 + $0xf9] sm:$0xff] %vm27, %v4306
    %4371 = vst.msk [vmem:[%s265 + $0x109] sm:$0xff] %vm27, %v4307
    %4372 = vst.msk [vmem:[%s265 + $0x111] sm:$0xff] %vm27, %v4308
    %4373 = vst.msk [vmem:[%s265 + $0x121] sm:$0xff] %vm27, %v4309
    %4374 = vst.msk [vmem:[%s265 + $0x129] sm:$0xff] %vm27, %v4310
    %4375 = vst.msk [vmem:[%s265 + $0x139] sm:$0xff] %vm27, %v4311
    %4376 = vst.msk [vmem:[%s265 + $0x141] sm:$0xff] %vm27, %v4312
    %4377 = vst.msk [vmem:[%s265 + $0x151] sm:$0xff] %vm27, %v4313
    %4378 = vst.msk [vmem:[%s265 + $0x159] sm:$0xff] %vm27, %v4314
    %4379 = vst.msk [vmem:[%s265 + $0x169] sm:$0xff] %vm27, %v4315
    %4380 = vst.msk [vmem:[%s265 + $0x171] sm:$0xff] %vm27, %v4316
    %4381 = vst.msk [vmem:[%s265 + $0x1b1] sm:$0xff] %vm27, %v4317
    %4382 = vst.msk [vmem:[%s265 + $0x1b9] sm:$0xff] %vm27, %v4318
    %4383 = vst.msk [vmem:[%s265 + $0x1c9] sm:$0xff] %vm27, %v4319
    %4384 = vst.msk [vmem:[%s265 + $0x1d1] sm:$0xff] %vm27, %v4320
    %4385 = vst.msk [vmem:[%s265 + $0x1e1] sm:$0xff] %vm27, %v4321
    %4386 = vst.msk [vmem:[%s265 + $0x1e9] sm:$0xff] %vm27, %v4322
    %4387 = vst.msk [vmem:[%s265 + $0x1f9] sm:$0xff] %vm27, %v4323
    %4388 = vst.msk [vmem:[%s265 + $0x201] sm:$0xff] %vm27, %v4324
    %4389 = vst.msk [vmem:[%s265 + $0x211] sm:$0xff] %vm27, %v4325
    %4390 = vst.msk [vmem:[%s265 + $0x219] sm:$0xff] %vm27, %v4326
    %4391 = vst.msk [vmem:[%s265 + $0x229] sm:$0xff] %vm27, %v4327
    %4392 = vst.msk [vmem:[%s265 + $0x231] sm:$0xff] %vm27, %v4328
    %4393 = vst.msk [vmem:[%s265 + $0x241] sm:$0xff] %vm27, %v4329
    %4394 = vst.msk [vmem:[%s265 + $0x249] sm:$0xff] %vm27, %v4330
    %4395 = vst.msk [vmem:[%s265 + $0x259] sm:$0xff] %vm27, %v4331
    %4396 = vst.msk [vmem:[%s265 + $0x261] sm:$0xff] %vm27, %v4332
    %4397 = vst.msk [vmem:[%s265 + $0x271] sm:$0xff] %vm27, %v4333
    %4398 = vst.msk [vmem:[%s265 + $0x279] sm:$0xff] %vm27, %v4334
    %4399 = vst.msk [vmem:[%s265 + $0x289] sm:$0xff] %vm27, %v4335
    %4400 = vst.msk [vmem:[%s265 + $0x291] sm:$0xff] %vm27, %v4336
    %4401 = vst.msk [vmem:[%s265 + $0x2a1] sm:$0xff] %vm27, %v4337
    %4402 = vst.msk [vmem:[%s265 + $0x2a9] sm:$0xff] %vm27, %v4338
    %4403 = vst.msk [vmem:[%s265 + $0x2b9] sm:$0xff] %vm27, %v4339
    %4404 = vst.msk [vmem:[%s265 + $0x2c1] sm:$0xff] %vm27, %v4340
    %4405 = vst.msk [vmem:[%s265 + $0x2d1] sm:$0xff] %vm27, %v4341
    %4406 = vst.msk [vmem:[%s265 + $0x2d9] sm:$0xff] %vm27, %v4342
    %4407 = vst.msk [vmem:[%s265 + $0x2e9] sm:$0xff] %vm27, %v4343
    %4408 = vst.msk [vmem:[%s265 + $0x2f1] sm:$0xff] %vm27, %v4344
    %4409 = vst.msk [vmem:[%s265 + $0x301] sm:$0xff] %vm27, %v4345
    %4410 = vst.msk [vmem:[%s265 + $0x309] sm:$0xff] %vm27, %v4346
    %4411 = vst.msk [vmem:[%s265 + $0x319] sm:$0xff] %vm27, %v4347
    %4412 = vst.msk [vmem:[%s265 + $0x321] sm:$0xff] %vm27, %v4348
    %v4413 = vld [vmem:[#allocation2] sm:$0xff]
    %v4414 = vld [vmem:[#allocation2 + $0x8] sm:$0xff]
    %v4415 = vld [vmem:[#allocation2 + $0x18] sm:$0xff]
    %v4416 = vld [vmem:[#allocation2 + $0x20] sm:$0xff]
    %v4417 = vld [vmem:[#allocation2 + $0x30] sm:$0xff]
    %v4418 = vld [vmem:[#allocation2 + $0x38] sm:$0xff]
    %v4419 = vld [vmem:[#allocation2 + $0x48] sm:$0xff]
    %v4420 = vld [vmem:[#allocation2 + $0x50] sm:$0xff]
    %v4421 = vld [vmem:[#allocation2 + $0x60] sm:$0xff]
    %v4422 = vld [vmem:[#allocation2 + $0x68] sm:$0xff]
    %v4423 = vld [vmem:[#allocation2 + $0x78] sm:$0xff]
    %v4424 = vld [vmem:[#allocation2 + $0x80] sm:$0xff]
    %v4425 = vld [vmem:[#allocation2 + $0x90] sm:$0xff]
    %v4426 = vld [vmem:[#allocation2 + $0x98] sm:$0xff]
    %v4427 = vld [vmem:[#allocation2 + $0xa8] sm:$0xff]
    %v4428 = vld [vmem:[#allocation2 + $0xb0] sm:$0xff]
    %v4429 = vld [vmem:[#allocation2 + $0xc0] sm:$0xff]
    %v4430 = vld [vmem:[#allocation2 + $0xc8] sm:$0xff]
    %v4431 = vld [vmem:[#allocation2 + $0xd8] sm:$0xff]
    %v4432 = vld [vmem:[#allocation2 + $0xe0] sm:$0xff]
    %v4433 = vld [vmem:[#allocation2 + $0xf0] sm:$0xff]
    %v4434 = vld [vmem:[#allocation2 + $0xf8] sm:$0xff]
    %v4435 = vld [vmem:[#allocation2 + $0x108] sm:$0xff]
    %v4436 = vld [vmem:[#allocation2 + $0x110] sm:$0xff]
    %v4437 = vld [vmem:[#allocation2 + $0x120] sm:$0xff]
    %v4438 = vld [vmem:[#allocation2 + $0x128] sm:$0xff]
    %v4439 = vld [vmem:[#allocation2 + $0x138] sm:$0xff]
    %v4440 = vld [vmem:[#allocation2 + $0x140] sm:$0xff]
    %v4441 = vld [vmem:[#allocation2 + $0x150] sm:$0xff]
    %v4442 = vld [vmem:[#allocation2 + $0x158] sm:$0xff]
    %v4443 = vld [vmem:[#allocation2 + $0x168] sm:$0xff]
    %v4444 = vld [vmem:[#allocation2 + $0x170] sm:$0xff]
    %v4445 = vld [vmem:[#allocation2 + $0x1b0] sm:$0xff]
    %v4446 = vld [vmem:[#allocation2 + $0x1b8] sm:$0xff]
    %v4447 = vld [vmem:[#allocation2 + $0x1c8] sm:$0xff]
    %v4448 = vld [vmem:[#allocation2 + $0x1d0] sm:$0xff]
    %v4449 = vld [vmem:[#allocation2 + $0x1e0] sm:$0xff]
    %v4450 = vld [vmem:[#allocation2 + $0x1e8] sm:$0xff]
    %v4451 = vld [vmem:[#allocation2 + $0x1f8] sm:$0xff]
    %v4452 = vld [vmem:[#allocation2 + $0x200] sm:$0xff]
    %v4453 = vld [vmem:[#allocation2 + $0x210] sm:$0xff]
    %v4454 = vld [vmem:[#allocation2 + $0x218] sm:$0xff]
    %v4455 = vld [vmem:[#allocation2 + $0x228] sm:$0xff]
    %v4456 = vld [vmem:[#allocation2 + $0x230] sm:$0xff]
    %v4457 = vld [vmem:[#allocation2 + $0x240] sm:$0xff]
    %v4458 = vld [vmem:[#allocation2 + $0x248] sm:$0xff]
    %v4459 = vld [vmem:[#allocation2 + $0x258] sm:$0xff]
    %v4460 = vld [vmem:[#allocation2 + $0x260] sm:$0xff]
    %v4461 = vld [vmem:[#allocation2 + $0x270] sm:$0xff]
    %v4462 = vld [vmem:[#allocation2 + $0x278] sm:$0xff]
    %v4463 = vld [vmem:[#allocation2 + $0x288] sm:$0xff]
    %v4464 = vld [vmem:[#allocation2 + $0x290] sm:$0xff]
    %v4465 = vld [vmem:[#allocation2 + $0x2a0] sm:$0xff]
    %v4466 = vld [vmem:[#allocation2 + $0x2a8] sm:$0xff]
    %v4467 = vld [vmem:[#allocation2 + $0x2b8] sm:$0xff]
    %v4468 = vld [vmem:[#allocation2 + $0x2c0] sm:$0xff]
    %v4469 = vld [vmem:[#allocation2 + $0x2d0] sm:$0xff]
    %v4470 = vld [vmem:[#allocation2 + $0x2d8] sm:$0xff]
    %v4471 = vld [vmem:[#allocation2 + $0x2e8] sm:$0xff]
    %v4472 = vld [vmem:[#allocation2 + $0x2f0] sm:$0xff]
    %v4473 = vld [vmem:[#allocation2 + $0x300] sm:$0xff]
    %v4474 = vld [vmem:[#allocation2 + $0x308] sm:$0xff]
    %v4475 = vld [vmem:[#allocation2 + $0x318] sm:$0xff]
    %v4476 = vld [vmem:[#allocation2 + $0x320] sm:$0xff]
    %4477 = vst.msk [vmem:[#allocation3] sm:$0xff] %vm27, %v4413
    %4478 = vst.msk [vmem:[#allocation3 + $0x8] sm:$0xff] %vm27, %v4414
    %4479 = vst.msk [vmem:[#allocation3 + $0x10] sm:$0xff] %vm27, %v4415
    %4480 = vst.msk [vmem:[#allocation3 + $0x18] sm:$0xff] %vm27, %v4416
    %4481 = vst.msk [vmem:[#allocation3 + $0x20] sm:$0xff] %vm27, %v4417
    %4482 = vst.msk [vmem:[#allocation3 + $0x28] sm:$0xff] %vm27, %v4418
    %4483 = vst.msk [vmem:[#allocation3 + $0x30] sm:$0xff] %vm27, %v4419
    %4484 = vst.msk [vmem:[#allocation3 + $0x38] sm:$0xff] %vm27, %v4420
    %4485 = vst.msk [vmem:[#allocation3 + $0x40] sm:$0xff] %vm27, %v4421
    %4486 = vst.msk [vmem:[#allocation3 + $0x48] sm:$0xff] %vm27, %v4422
    %4487 = vst.msk [vmem:[#allocation3 + $0x50] sm:$0xff] %vm27, %v4423
    %4488 = vst.msk [vmem:[#allocation3 + $0x58] sm:$0xff] %vm27, %v4424
    %4489 = vst.msk [vmem:[#allocation3 + $0x60] sm:$0xff] %vm27, %v4425
    %4490 = vst.msk [vmem:[#allocation3 + $0x68] sm:$0xff] %vm27, %v4426
    %4491 = vst.msk [vmem:[#allocation3 + $0x70] sm:$0xff] %vm27, %v4427
    %4492 = vst.msk [vmem:[#allocation3 + $0x78] sm:$0xff] %vm27, %v4428
    %4493 = vst.msk [vmem:[#allocation3 + $0x80] sm:$0xff] %vm27, %v4429
    %4494 = vst.msk [vmem:[#allocation3 + $0x88] sm:$0xff] %vm27, %v4430
    %4495 = vst.msk [vmem:[#allocation3 + $0x90] sm:$0xff] %vm27, %v4431
    %4496 = vst.msk [vmem:[#allocation3 + $0x98] sm:$0xff] %vm27, %v4432
    %4497 = vst.msk [vmem:[#allocation3 + $0xa0] sm:$0xff] %vm27, %v4433
    %4498 = vst.msk [vmem:[#allocation3 + $0xa8] sm:$0xff] %vm27, %v4434
    %4499 = vst.msk [vmem:[#allocation3 + $0xb0] sm:$0xff] %vm27, %v4435
    %4500 = vst.msk [vmem:[#allocation3 + $0xb8] sm:$0xff] %vm27, %v4436
    %4501 = vst.msk [vmem:[#allocation3 + $0xc0] sm:$0xff] %vm27, %v4437
    %4502 = vst.msk [vmem:[#allocation3 + $0xc8] sm:$0xff] %vm27, %v4438
    %4503 = vst.msk [vmem:[#allocation3 + $0xd0] sm:$0xff] %vm27, %v4439
    %4504 = vst.msk [vmem:[#allocation3 + $0xd8] sm:$0xff] %vm27, %v4440
    %4505 = vst.msk [vmem:[#allocation3 + $0xe0] sm:$0xff] %vm27, %v4441
    %4506 = vst.msk [vmem:[#allocation3 + $0xe8] sm:$0xff] %vm27, %v4442
    %4507 = vst.msk [vmem:[#allocation3 + $0xf0] sm:$0xff] %vm27, %v4443
    %4508 = vst.msk [vmem:[#allocation3 + $0xf8] sm:$0xff] %vm27, %v4444
    %4509 = vst.msk [vmem:[#allocation3 + $0x100] sm:$0xff] %vm27, %v4445
    %4510 = vst.msk [vmem:[#allocation3 + $0x108] sm:$0xff] %vm27, %v4446
    %4511 = vst.msk [vmem:[#allocation3 + $0x110] sm:$0xff] %vm27, %v4447
    %4512 = vst.msk [vmem:[#allocation3 + $0x118] sm:$0xff] %vm27, %v4448
    %4513 = vst.msk [vmem:[#allocation3 + $0x120] sm:$0xff] %vm27, %v4449
    %4514 = vst.msk [vmem:[#allocation3 + $0x128] sm:$0xff] %vm27, %v4450
    %4515 = vst.msk [vmem:[#allocation3 + $0x130] sm:$0xff] %vm27, %v4451
    %4516 = vst.msk [vmem:[#allocation3 + $0x138] sm:$0xff] %vm27, %v4452
    %4517 = vst.msk [vmem:[#allocation3 + $0x140] sm:$0xff] %vm27, %v4453
    %4518 = vst.msk [vmem:[#allocation3 + $0x148] sm:$0xff] %vm27, %v4454
    %4519 = vst.msk [vmem:[#allocation3 + $0x150] sm:$0xff] %vm27, %v4455
    %4520 = vst.msk [vmem:[#allocation3 + $0x158] sm:$0xff] %vm27, %v4456
    %4521 = vst.msk [vmem:[#allocation3 + $0x160] sm:$0xff] %vm27, %v4457
    %4522 = vst.msk [vmem:[#allocation3 + $0x168] sm:$0xff] %vm27, %v4458
    %4523 = vst.msk [vmem:[#allocation3 + $0x170] sm:$0xff] %vm27, %v4459
    %4524 = vst.msk [vmem:[#allocation3 + $0x178] sm:$0xff] %vm27, %v4460
    %4525 = vst.msk [vmem:[#allocation3 + $0x180] sm:$0xff] %vm27, %v4461
    %4526 = vst.msk [vmem:[#allocation3 + $0x188] sm:$0xff] %vm27, %v4462
    %4527 = vst.msk [vmem:[#allocation3 + $0x190] sm:$0xff] %vm27, %v4463
    %4528 = vst.msk [vmem:[#allocation3 + $0x198] sm:$0xff] %vm27, %v4464
    %4529 = vst.msk [vmem:[#allocation3 + $0x1a0] sm:$0xff] %vm27, %v4465
    %4530 = vst.msk [vmem:[#allocation3 + $0x1a8] sm:$0xff] %vm27, %v4466
    %4531 = vst.msk [vmem:[#allocation3 + $0x1b0] sm:$0xff] %vm27, %v4467
    %4532 = vst.msk [vmem:[#allocation3 + $0x1b8] sm:$0xff] %vm27, %v4468
    %4533 = vst.msk [vmem:[#allocation3 + $0x1c0] sm:$0xff] %vm27, %v4469
    %4534 = vst.msk [vmem:[#allocation3 + $0x1c8] sm:$0xff] %vm27, %v4470
    %4535 = vst.msk [vmem:[#allocation3 + $0x1d0] sm:$0xff] %vm27, %v4471
    %4536 = vst.msk [vmem:[#allocation3 + $0x1d8] sm:$0xff] %vm27, %v4472
    %4537 = vst.msk [vmem:[#allocation3 + $0x1e0] sm:$0xff] %vm27, %v4473
    %4538 = vst.msk [vmem:[#allocation3 + $0x1e8] sm:$0xff] %vm27, %v4474
    %4539 = vst.msk [vmem:[#allocation3 + $0x1f0] sm:$0xff] %vm27, %v4475
    %4540 = vst.msk [vmem:[#allocation3 + $0x1f8] sm:$0xff] %vm27, %v4476
    %v4541 = vld [vmem:[#allocation2 + $0x1] sm:$0xff]
    %v4542 = vld [vmem:[#allocation2 + $0x9] sm:$0xff]
    %v4543 = vld [vmem:[#allocation2 + $0x19] sm:$0xff]
    %v4544 = vld [vmem:[#allocation2 + $0x21] sm:$0xff]
    %v4545 = vld [vmem:[#allocation2 + $0x31] sm:$0xff]
    %v4546 = vld [vmem:[#allocation2 + $0x39] sm:$0xff]
    %v4547 = vld [vmem:[#allocation2 + $0x49] sm:$0xff]
    %v4548 = vld [vmem:[#allocation2 + $0x51] sm:$0xff]
    %v4549 = vld [vmem:[#allocation2 + $0x61] sm:$0xff]
    %v4550 = vld [vmem:[#allocation2 + $0x69] sm:$0xff]
    %v4551 = vld [vmem:[#allocation2 + $0x79] sm:$0xff]
    %v4552 = vld [vmem:[#allocation2 + $0x81] sm:$0xff]
    %v4553 = vld [vmem:[#allocation2 + $0x91] sm:$0xff]
    %v4554 = vld [vmem:[#allocation2 + $0x99] sm:$0xff]
    %v4555 = vld [vmem:[#allocation2 + $0xa9] sm:$0xff]
    %v4556 = vld [vmem:[#allocation2 + $0xb1] sm:$0xff]
    %v4557 = vld [vmem:[#allocation2 + $0xc1] sm:$0xff]
    %v4558 = vld [vmem:[#allocation2 + $0xc9] sm:$0xff]
    %v4559 = vld [vmem:[#allocation2 + $0xd9] sm:$0xff]
    %v4560 = vld [vmem:[#allocation2 + $0xe1] sm:$0xff]
    %v4561 = vld [vmem:[#allocation2 + $0xf1] sm:$0xff]
    %v4562 = vld [vmem:[#allocation2 + $0xf9] sm:$0xff]
    %v4563 = vld [vmem:[#allocation2 + $0x109] sm:$0xff]
    %v4564 = vld [vmem:[#allocation2 + $0x111] sm:$0xff]
    %v4565 = vld [vmem:[#allocation2 + $0x121] sm:$0xff]
    %v4566 = vld [vmem:[#allocation2 + $0x129] sm:$0xff]
    %v4567 = vld [vmem:[#allocation2 + $0x139] sm:$0xff]
    %v4568 = vld [vmem:[#allocation2 + $0x141] sm:$0xff]
    %v4569 = vld [vmem:[#allocation2 + $0x151] sm:$0xff]
    %v4570 = vld [vmem:[#allocation2 + $0x159] sm:$0xff]
    %v4571 = vld [vmem:[#allocation2 + $0x169] sm:$0xff]
    %v4572 = vld [vmem:[#allocation2 + $0x171] sm:$0xff]
    %v4573 = vld [vmem:[#allocation2 + $0x1b1] sm:$0xff]
    %v4574 = vld [vmem:[#allocation2 + $0x1b9] sm:$0xff]
    %v4575 = vld [vmem:[#allocation2 + $0x1c9] sm:$0xff]
    %v4576 = vld [vmem:[#allocation2 + $0x1d1] sm:$0xff]
    %v4577 = vld [vmem:[#allocation2 + $0x1e1] sm:$0xff]
    %v4578 = vld [vmem:[#allocation2 + $0x1e9] sm:$0xff]
    %v4579 = vld [vmem:[#allocation2 + $0x1f9] sm:$0xff]
    %v4580 = vld [vmem:[#allocation2 + $0x201] sm:$0xff]
    %v4581 = vld [vmem:[#allocation2 + $0x211] sm:$0xff]
    %v4582 = vld [vmem:[#allocation2 + $0x219] sm:$0xff]
    %v4583 = vld [vmem:[#allocation2 + $0x229] sm:$0xff]
    %v4584 = vld [vmem:[#allocation2 + $0x231] sm:$0xff]
    %v4585 = vld [vmem:[#allocation2 + $0x241] sm:$0xff]
    %v4586 = vld [vmem:[#allocation2 + $0x249] sm:$0xff]
    %v4587 = vld [vmem:[#allocation2 + $0x259] sm:$0xff]
    %v4588 = vld [vmem:[#allocation2 + $0x261] sm:$0xff]
    %v4589 = vld [vmem:[#allocation2 + $0x271] sm:$0xff]
    %v4590 = vld [vmem:[#allocation2 + $0x279] sm:$0xff]
    %v4591 = vld [vmem:[#allocation2 + $0x289] sm:$0xff]
    %v4592 = vld [vmem:[#allocation2 + $0x291] sm:$0xff]
    %v4593 = vld [vmem:[#allocation2 + $0x2a1] sm:$0xff]
    %v4594 = vld [vmem:[#allocation2 + $0x2a9] sm:$0xff]
    %v4595 = vld [vmem:[#allocation2 + $0x2b9] sm:$0xff]
    %v4596 = vld [vmem:[#allocation2 + $0x2c1] sm:$0xff]
    %v4597 = vld [vmem:[#allocation2 + $0x2d1] sm:$0xff]
    %v4598 = vld [vmem:[#allocation2 + $0x2d9] sm:$0xff]
    %v4599 = vld [vmem:[#allocation2 + $0x2e9] sm:$0xff]
    %v4600 = vld [vmem:[#allocation2 + $0x2f1] sm:$0xff]
    %v4601 = vld [vmem:[#allocation2 + $0x301] sm:$0xff]
    %v4602 = vld [vmem:[#allocation2 + $0x309] sm:$0xff]
    %v4603 = vld [vmem:[#allocation2 + $0x319] sm:$0xff]
    %v4604 = vld [vmem:[#allocation2 + $0x321] sm:$0xff]
    %4669 = vrot.lane.b32.xlu0 %v4541, 4
    %v4670 = vpop.permute.xlu0 %4669
    %4671 = vrot.lane.b32.xlu0 %v4542, 4
    %v4672 = vpop.permute.xlu0 %4671
    %4673 = vrot.lane.b32.xlu0 %v4543, 4
    %v4674 = vpop.permute.xlu0 %4673
    %4675 = vrot.lane.b32.xlu0 %v4544, 4
    %v4676 = vpop.permute.xlu0 %4675
    %4677 = vrot.lane.b32.xlu0 %v4545, 4
    %v4678 = vpop.permute.xlu0 %4677
    %4679 = vrot.lane.b32.xlu0 %v4546, 4
    %v4680 = vpop.permute.xlu0 %4679
    %4681 = vrot.lane.b32.xlu0 %v4547, 4
    %v4682 = vpop.permute.xlu0 %4681
    %4683 = vrot.lane.b32.xlu0 %v4548, 4
    %v4684 = vpop.permute.xlu0 %4683
    %4685 = vrot.lane.b32.xlu0 %v4549, 4
    %v4686 = vpop.permute.xlu0 %4685
    %4687 = vrot.lane.b32.xlu0 %v4550, 4
    %v4688 = vpop.permute.xlu0 %4687
    %4689 = vrot.lane.b32.xlu0 %v4551, 4
    %v4690 = vpop.permute.xlu0 %4689
    %4691 = vrot.lane.b32.xlu0 %v4552, 4
    %v4692 = vpop.permute.xlu0 %4691
    %4693 = vrot.lane.b32.xlu0 %v4553, 4
    %v4694 = vpop.permute.xlu0 %4693
    %4695 = vrot.lane.b32.xlu0 %v4554, 4
    %v4696 = vpop.permute.xlu0 %4695
    %4697 = vrot.lane.b32.xlu0 %v4555, 4
    %v4698 = vpop.permute.xlu0 %4697
    %4699 = vrot.lane.b32.xlu0 %v4556, 4
    %v4700 = vpop.permute.xlu0 %4699
    %4701 = vrot.lane.b32.xlu0 %v4557, 4
    %v4702 = vpop.permute.xlu0 %4701
    %4703 = vrot.lane.b32.xlu0 %v4558, 4
    %v4704 = vpop.permute.xlu0 %4703
    %4705 = vrot.lane.b32.xlu0 %v4559, 4
    %v4706 = vpop.permute.xlu0 %4705
    %4707 = vrot.lane.b32.xlu0 %v4560, 4
    %v4708 = vpop.permute.xlu0 %4707
    %4709 = vrot.lane.b32.xlu0 %v4561, 4
    %v4710 = vpop.permute.xlu0 %4709
    %4711 = vrot.lane.b32.xlu0 %v4562, 4
    %v4712 = vpop.permute.xlu0 %4711
    %4713 = vrot.lane.b32.xlu0 %v4563, 4
    %v4714 = vpop.permute.xlu0 %4713
    %4715 = vrot.lane.b32.xlu0 %v4564, 4
    %v4716 = vpop.permute.xlu0 %4715
    %4717 = vrot.lane.b32.xlu0 %v4565, 4
    %v4718 = vpop.permute.xlu0 %4717
    %4719 = vrot.lane.b32.xlu0 %v4566, 4
    %v4720 = vpop.permute.xlu0 %4719
    %4721 = vrot.lane.b32.xlu0 %v4567, 4
    %v4722 = vpop.permute.xlu0 %4721
    %4723 = vrot.lane.b32.xlu0 %v4568, 4
    %v4724 = vpop.permute.xlu0 %4723
    %4725 = vrot.lane.b32.xlu0 %v4569, 4
    %v4726 = vpop.permute.xlu0 %4725
    %4727 = vrot.lane.b32.xlu0 %v4570, 4
    %v4728 = vpop.permute.xlu0 %4727
    %4729 = vrot.lane.b32.xlu0 %v4571, 4
    %v4730 = vpop.permute.xlu0 %4729
    %4731 = vrot.lane.b32.xlu0 %v4572, 4
    %v4732 = vpop.permute.xlu0 %4731
    %4733 = vrot.lane.b32.xlu0 %v4573, 4
    %v4734 = vpop.permute.xlu0 %4733
    %4735 = vrot.lane.b32.xlu0 %v4574, 4
    %v4736 = vpop.permute.xlu0 %4735
    %4737 = vrot.lane.b32.xlu0 %v4575, 4
    %v4738 = vpop.permute.xlu0 %4737
    %4739 = vrot.lane.b32.xlu0 %v4576, 4
    %v4740 = vpop.permute.xlu0 %4739
    %4741 = vrot.lane.b32.xlu0 %v4577, 4
    %v4742 = vpop.permute.xlu0 %4741
    %4743 = vrot.lane.b32.xlu0 %v4578, 4
    %v4744 = vpop.permute.xlu0 %4743
    %4745 = vrot.lane.b32.xlu0 %v4579, 4
    %v4746 = vpop.permute.xlu0 %4745
    %4747 = vrot.lane.b32.xlu0 %v4580, 4
    %v4748 = vpop.permute.xlu0 %4747
    %4749 = vrot.lane.b32.xlu0 %v4581, 4
    %v4750 = vpop.permute.xlu0 %4749
    %4751 = vrot.lane.b32.xlu0 %v4582, 4
    %v4752 = vpop.permute.xlu0 %4751
    %4753 = vrot.lane.b32.xlu0 %v4583, 4
    %v4754 = vpop.permute.xlu0 %4753
    %4755 = vrot.lane.b32.xlu0 %v4584, 4
    %v4756 = vpop.permute.xlu0 %4755
    %4757 = vrot.lane.b32.xlu0 %v4585, 4
    %v4758 = vpop.permute.xlu0 %4757
    %4759 = vrot.lane.b32.xlu0 %v4586, 4
    %v4760 = vpop.permute.xlu0 %4759
    %4761 = vrot.lane.b32.xlu0 %v4587, 4
    %v4762 = vpop.permute.xlu0 %4761
    %4763 = vrot.lane.b32.xlu0 %v4588, 4
    %v4764 = vpop.permute.xlu0 %4763
    %4765 = vrot.lane.b32.xlu0 %v4589, 4
    %v4766 = vpop.permute.xlu0 %4765
    %4767 = vrot.lane.b32.xlu0 %v4590, 4
    %v4768 = vpop.permute.xlu0 %4767
    %4769 = vrot.lane.b32.xlu0 %v4591, 4
    %v4770 = vpop.permute.xlu0 %4769
    %4771 = vrot.lane.b32.xlu0 %v4592, 4
    %v4772 = vpop.permute.xlu0 %4771
    %4773 = vrot.lane.b32.xlu0 %v4593, 4
    %v4774 = vpop.permute.xlu0 %4773
    %4775 = vrot.lane.b32.xlu0 %v4594, 4
    %v4776 = vpop.permute.xlu0 %4775
    %4777 = vrot.lane.b32.xlu0 %v4595, 4
    %v4778 = vpop.permute.xlu0 %4777
    %4779 = vrot.lane.b32.xlu0 %v4596, 4
    %v4780 = vpop.permute.xlu0 %4779
    %4781 = vrot.lane.b32.xlu0 %v4597, 4
    %v4782 = vpop.permute.xlu0 %4781
    %4783 = vrot.lane.b32.xlu0 %v4598, 4
    %v4784 = vpop.permute.xlu0 %4783
    %4785 = vrot.lane.b32.xlu0 %v4599, 4
    %v4786 = vpop.permute.xlu0 %4785
    %4787 = vrot.lane.b32.xlu0 %v4600, 4
    %v4788 = vpop.permute.xlu0 %4787
    %4789 = vrot.lane.b32.xlu0 %v4601, 4
    %v4790 = vpop.permute.xlu0 %4789
    %4791 = vrot.lane.b32.xlu0 %v4602, 4
    %v4792 = vpop.permute.xlu0 %4791
    %4793 = vrot.lane.b32.xlu0 %v4603, 4
    %v4794 = vpop.permute.xlu0 %4793
    %4795 = vrot.lane.b32.xlu0 %v4604, 4
    %v4796 = vpop.permute.xlu0 %4795
    %4861 = vst.msk [vmem:[#allocation3] sm:$0xff] %vm778, %v4670
    %4862 = vst.msk [vmem:[#allocation3 + $0x8] sm:$0xff] %vm778, %v4672
    %4863 = vst.msk [vmem:[#allocation3 + $0x10] sm:$0xff] %vm778, %v4674
    %4864 = vst.msk [vmem:[#allocation3 + $0x18] sm:$0xff] %vm778, %v4676
    %4865 = vst.msk [vmem:[#allocation3 + $0x20] sm:$0xff] %vm778, %v4678
    %4866 = vst.msk [vmem:[#allocation3 + $0x28] sm:$0xff] %vm778, %v4680
    %4867 = vst.msk [vmem:[#allocation3 + $0x30] sm:$0xff] %vm778, %v4682
    %4868 = vst.msk [vmem:[#allocation3 + $0x38] sm:$0xff] %vm778, %v4684
    %4869 = vst.msk [vmem:[#allocation3 + $0x40] sm:$0xff] %vm778, %v4686
    %4870 = vst.msk [vmem:[#allocation3 + $0x48] sm:$0xff] %vm778, %v4688
    %4871 = vst.msk [vmem:[#allocation3 + $0x50] sm:$0xff] %vm778, %v4690
    %4872 = vst.msk [vmem:[#allocation3 + $0x58] sm:$0xff] %vm778, %v4692
    %4873 = vst.msk [vmem:[#allocation3 + $0x60] sm:$0xff] %vm778, %v4694
    %4874 = vst.msk [vmem:[#allocation3 + $0x68] sm:$0xff] %vm778, %v4696
    %4875 = vst.msk [vmem:[#allocation3 + $0x70] sm:$0xff] %vm778, %v4698
    %4876 = vst.msk [vmem:[#allocation3 + $0x78] sm:$0xff] %vm778, %v4700
    %4877 = vst.msk [vmem:[#allocation3 + $0x80] sm:$0xff] %vm778, %v4702
    %4878 = vst.msk [vmem:[#allocation3 + $0x88] sm:$0xff] %vm778, %v4704
    %4879 = vst.msk [vmem:[#allocation3 + $0x90] sm:$0xff] %vm778, %v4706
    %4880 = vst.msk [vmem:[#allocation3 + $0x98] sm:$0xff] %vm778, %v4708
    %4881 = vst.msk [vmem:[#allocation3 + $0xa0] sm:$0xff] %vm778, %v4710
    %4882 = vst.msk [vmem:[#allocation3 + $0xa8] sm:$0xff] %vm778, %v4712
    %4883 = vst.msk [vmem:[#allocation3 + $0xb0] sm:$0xff] %vm778, %v4714
    %4884 = vst.msk [vmem:[#allocation3 + $0xb8] sm:$0xff] %vm778, %v4716
    %4885 = vst.msk [vmem:[#allocation3 + $0xc0] sm:$0xff] %vm778, %v4718
    %4886 = vst.msk [vmem:[#allocation3 + $0xc8] sm:$0xff] %vm778, %v4720
    %4887 = vst.msk [vmem:[#allocation3 + $0xd0] sm:$0xff] %vm778, %v4722
    %4888 = vst.msk [vmem:[#allocation3 + $0xd8] sm:$0xff] %vm778, %v4724
    %4889 = vst.msk [vmem:[#allocation3 + $0xe0] sm:$0xff] %vm778, %v4726
    %4890 = vst.msk [vmem:[#allocation3 + $0xe8] sm:$0xff] %vm778, %v4728
    %4891 = vst.msk [vmem:[#allocation3 + $0xf0] sm:$0xff] %vm778, %v4730
    %4892 = vst.msk [vmem:[#allocation3 + $0xf8] sm:$0xff] %vm778, %v4732
    %4893 = vst.msk [vmem:[#allocation3 + $0x100] sm:$0xff] %vm778, %v4734
    %4894 = vst.msk [vmem:[#allocation3 + $0x108] sm:$0xff] %vm778, %v4736
    %4895 = vst.msk [vmem:[#allocation3 + $0x110] sm:$0xff] %vm778, %v4738
    %4896 = vst.msk [vmem:[#allocation3 + $0x118] sm:$0xff] %vm778, %v4740
    %4897 = vst.msk [vmem:[#allocation3 + $0x120] sm:$0xff] %vm778, %v4742
    %4898 = vst.msk [vmem:[#allocation3 + $0x128] sm:$0xff] %vm778, %v4744
    %4899 = vst.msk [vmem:[#allocation3 + $0x130] sm:$0xff] %vm778, %v4746
    %4900 = vst.msk [vmem:[#allocation3 + $0x138] sm:$0xff] %vm778, %v4748
    %4901 = vst.msk [vmem:[#allocation3 + $0x140] sm:$0xff] %vm778, %v4750
    %4902 = vst.msk [vmem:[#allocation3 + $0x148] sm:$0xff] %vm778, %v4752
    %4903 = vst.msk [vmem:[#allocation3 + $0x150] sm:$0xff] %vm778, %v4754
    %4904 = vst.msk [vmem:[#allocation3 + $0x158] sm:$0xff] %vm778, %v4756
    %4905 = vst.msk [vmem:[#allocation3 + $0x160] sm:$0xff] %vm778, %v4758
    %4906 = vst.msk [vmem:[#allocation3 + $0x168] sm:$0xff] %vm778, %v4760
    %4907 = vst.msk [vmem:[#allocation3 + $0x170] sm:$0xff] %vm778, %v4762
    %4908 = vst.msk [vmem:[#allocation3 + $0x178] sm:$0xff] %vm778, %v4764
    %4909 = vst.msk [vmem:[#allocation3 + $0x180] sm:$0xff] %vm778, %v4766
    %4910 = vst.msk [vmem:[#allocation3 + $0x188] sm:$0xff] %vm778, %v4768
    %4911 = vst.msk [vmem:[#allocation3 + $0x190] sm:$0xff] %vm778, %v4770
    %4912 = vst.msk [vmem:[#allocation3 + $0x198] sm:$0xff] %vm778, %v4772
    %4913 = vst.msk [vmem:[#allocation3 + $0x1a0] sm:$0xff] %vm778, %v4774
    %4914 = vst.msk [vmem:[#allocation3 + $0x1a8] sm:$0xff] %vm778, %v4776
    %4915 = vst.msk [vmem:[#allocation3 + $0x1b0] sm:$0xff] %vm778, %v4778
    %4916 = vst.msk [vmem:[#allocation3 + $0x1b8] sm:$0xff] %vm778, %v4780
    %4917 = vst.msk [vmem:[#allocation3 + $0x1c0] sm:$0xff] %vm778, %v4782
    %4918 = vst.msk [vmem:[#allocation3 + $0x1c8] sm:$0xff] %vm778, %v4784
    %4919 = vst.msk [vmem:[#allocation3 + $0x1d0] sm:$0xff] %vm778, %v4786
    %4920 = vst.msk [vmem:[#allocation3 + $0x1d8] sm:$0xff] %vm778, %v4788
    %4921 = vst.msk [vmem:[#allocation3 + $0x1e0] sm:$0xff] %vm778, %v4790
    %4922 = vst.msk [vmem:[#allocation3 + $0x1e8] sm:$0xff] %vm778, %v4792
    %4923 = vst.msk [vmem:[#allocation3 + $0x1f0] sm:$0xff] %vm778, %v4794
    %4924 = vst.msk [vmem:[#allocation3 + $0x1f8] sm:$0xff] %vm778, %v4796
    %v4925 = vld [vmem:[#allocation2 + $0x2] sm:$0xff]
    %v4926 = vld [vmem:[#allocation2 + $0xa] sm:$0xff]
    %v4927 = vld [vmem:[#allocation2 + $0x1a] sm:$0xff]
    %v4928 = vld [vmem:[#allocation2 + $0x22] sm:$0xff]
    %v4929 = vld [vmem:[#allocation2 + $0x32] sm:$0xff]
    %v4930 = vld [vmem:[#allocation2 + $0x3a] sm:$0xff]
    %v4931 = vld [vmem:[#allocation2 + $0x4a] sm:$0xff]
    %v4932 = vld [vmem:[#allocation2 + $0x52] sm:$0xff]
    %v4933 = vld [vmem:[#allocation2 + $0x62] sm:$0xff]
    %v4934 = vld [vmem:[#allocation2 + $0x6a] sm:$0xff]
    %v4935 = vld [vmem:[#allocation2 + $0x7a] sm:$0xff]
    %v4936 = vld [vmem:[#allocation2 + $0x82] sm:$0xff]
    %v4937 = vld [vmem:[#allocation2 + $0x92] sm:$0xff]
    %v4938 = vld [vmem:[#allocation2 + $0x9a] sm:$0xff]
    %v4939 = vld [vmem:[#allocation2 + $0xaa] sm:$0xff]
    %v4940 = vld [vmem:[#allocation2 + $0xb2] sm:$0xff]
    %v4941 = vld [vmem:[#allocation2 + $0xc2] sm:$0xff]
    %v4942 = vld [vmem:[#allocation2 + $0xca] sm:$0xff]
    %v4943 = vld [vmem:[#allocation2 + $0xda] sm:$0xff]
    %v4944 = vld [vmem:[#allocation2 + $0xe2] sm:$0xff]
    %v4945 = vld [vmem:[#allocation2 + $0xf2] sm:$0xff]
    %v4946 = vld [vmem:[#allocation2 + $0xfa] sm:$0xff]
    %v4947 = vld [vmem:[#allocation2 + $0x10a] sm:$0xff]
    %v4948 = vld [vmem:[#allocation2 + $0x112] sm:$0xff]
    %v4949 = vld [vmem:[#allocation2 + $0x122] sm:$0xff]
    %v4950 = vld [vmem:[#allocation2 + $0x12a] sm:$0xff]
    %v4951 = vld [vmem:[#allocation2 + $0x13a] sm:$0xff]
    %v4952 = vld [vmem:[#allocation2 + $0x142] sm:$0xff]
    %v4953 = vld [vmem:[#allocation2 + $0x152] sm:$0xff]
    %v4954 = vld [vmem:[#allocation2 + $0x15a] sm:$0xff]
    %v4955 = vld [vmem:[#allocation2 + $0x16a] sm:$0xff]
    %v4956 = vld [vmem:[#allocation2 + $0x172] sm:$0xff]
    %v4957 = vld [vmem:[#allocation2 + $0x1b2] sm:$0xff]
    %v4958 = vld [vmem:[#allocation2 + $0x1ba] sm:$0xff]
    %v4959 = vld [vmem:[#allocation2 + $0x1ca] sm:$0xff]
    %v4960 = vld [vmem:[#allocation2 + $0x1d2] sm:$0xff]
    %v4961 = vld [vmem:[#allocation2 + $0x1e2] sm:$0xff]
    %v4962 = vld [vmem:[#allocation2 + $0x1ea] sm:$0xff]
    %v4963 = vld [vmem:[#allocation2 + $0x1fa] sm:$0xff]
    %v4964 = vld [vmem:[#allocation2 + $0x202] sm:$0xff]
    %v4965 = vld [vmem:[#allocation2 + $0x212] sm:$0xff]
    %v4966 = vld [vmem:[#allocation2 + $0x21a] sm:$0xff]
    %v4967 = vld [vmem:[#allocation2 + $0x22a] sm:$0xff]
    %v4968 = vld [vmem:[#allocation2 + $0x232] sm:$0xff]
    %v4969 = vld [vmem:[#allocation2 + $0x242] sm:$0xff]
    %v4970 = vld [vmem:[#allocation2 + $0x24a] sm:$0xff]
    %v4971 = vld [vmem:[#allocation2 + $0x25a] sm:$0xff]
    %v4972 = vld [vmem:[#allocation2 + $0x262] sm:$0xff]
    %v4973 = vld [vmem:[#allocation2 + $0x272] sm:$0xff]
    %v4974 = vld [vmem:[#allocation2 + $0x27a] sm:$0xff]
    %v4975 = vld [vmem:[#allocation2 + $0x28a] sm:$0xff]
    %v4976 = vld [vmem:[#allocation2 + $0x292] sm:$0xff]
    %v4977 = vld [vmem:[#allocation2 + $0x2a2] sm:$0xff]
    %v4978 = vld [vmem:[#allocation2 + $0x2aa] sm:$0xff]
    %v4979 = vld [vmem:[#allocation2 + $0x2ba] sm:$0xff]
    %v4980 = vld [vmem:[#allocation2 + $0x2c2] sm:$0xff]
    %v4981 = vld [vmem:[#allocation2 + $0x2d2] sm:$0xff]
    %v4982 = vld [vmem:[#allocation2 + $0x2da] sm:$0xff]
    %v4983 = vld [vmem:[#allocation2 + $0x2ea] sm:$0xff]
    %v4984 = vld [vmem:[#allocation2 + $0x2f2] sm:$0xff]
    %v4985 = vld [vmem:[#allocation2 + $0x302] sm:$0xff]
    %v4986 = vld [vmem:[#allocation2 + $0x30a] sm:$0xff]
    %v4987 = vld [vmem:[#allocation2 + $0x31a] sm:$0xff]
    %v4988 = vld [vmem:[#allocation2 + $0x322] sm:$0xff]
    %5053 = vrot.lane.b32.xlu0 %v4925, 8
    %v5054 = vpop.permute.xlu0 %5053
    %5055 = vrot.lane.b32.xlu0 %v4926, 8
    %v5056 = vpop.permute.xlu0 %5055
    %5057 = vrot.lane.b32.xlu0 %v4927, 8
    %v5058 = vpop.permute.xlu0 %5057
    %5059 = vrot.lane.b32.xlu0 %v4928, 8
    %v5060 = vpop.permute.xlu0 %5059
    %5061 = vrot.lane.b32.xlu0 %v4929, 8
    %v5062 = vpop.permute.xlu0 %5061
    %5063 = vrot.lane.b32.xlu0 %v4930, 8
    %v5064 = vpop.permute.xlu0 %5063
    %5065 = vrot.lane.b32.xlu0 %v4931, 8
    %v5066 = vpop.permute.xlu0 %5065
    %5067 = vrot.lane.b32.xlu0 %v4932, 8
    %v5068 = vpop.permute.xlu0 %5067
    %5069 = vrot.lane.b32.xlu0 %v4933, 8
    %v5070 = vpop.permute.xlu0 %5069
    %5071 = vrot.lane.b32.xlu0 %v4934, 8
    %v5072 = vpop.permute.xlu0 %5071
    %5073 = vrot.lane.b32.xlu0 %v4935, 8
    %v5074 = vpop.permute.xlu0 %5073
    %5075 = vrot.lane.b32.xlu0 %v4936, 8
    %v5076 = vpop.permute.xlu0 %5075
    %5077 = vrot.lane.b32.xlu0 %v4937, 8
    %v5078 = vpop.permute.xlu0 %5077
    %5079 = vrot.lane.b32.xlu0 %v4938, 8
    %v5080 = vpop.permute.xlu0 %5079
    %5081 = vrot.lane.b32.xlu0 %v4939, 8
    %v5082 = vpop.permute.xlu0 %5081
    %5083 = vrot.lane.b32.xlu0 %v4940, 8
    %v5084 = vpop.permute.xlu0 %5083
    %5085 = vrot.lane.b32.xlu0 %v4941, 8
    %v5086 = vpop.permute.xlu0 %5085
    %5087 = vrot.lane.b32.xlu0 %v4942, 8
    %v5088 = vpop.permute.xlu0 %5087
    %5089 = vrot.lane.b32.xlu0 %v4943, 8
    %v5090 = vpop.permute.xlu0 %5089
    %5091 = vrot.lane.b32.xlu0 %v4944, 8
    %v5092 = vpop.permute.xlu0 %5091
    %5093 = vrot.lane.b32.xlu0 %v4945, 8
    %v5094 = vpop.permute.xlu0 %5093
    %5095 = vrot.lane.b32.xlu0 %v4946, 8
    %v5096 = vpop.permute.xlu0 %5095
    %5097 = vrot.lane.b32.xlu0 %v4947, 8
    %v5098 = vpop.permute.xlu0 %5097
    %5099 = vrot.lane.b32.xlu0 %v4948, 8
    %v5100 = vpop.permute.xlu0 %5099
    %5101 = vrot.lane.b32.xlu0 %v4949, 8
    %v5102 = vpop.permute.xlu0 %5101
    %5103 = vrot.lane.b32.xlu0 %v4950, 8
    %v5104 = vpop.permute.xlu0 %5103
    %5105 = vrot.lane.b32.xlu0 %v4951, 8
    %v5106 = vpop.permute.xlu0 %5105
    %5107 = vrot.lane.b32.xlu0 %v4952, 8
    %v5108 = vpop.permute.xlu0 %5107
    %5109 = vrot.lane.b32.xlu0 %v4953, 8
    %v5110 = vpop.permute.xlu0 %5109
    %5111 = vrot.lane.b32.xlu0 %v4954, 8
    %v5112 = vpop.permute.xlu0 %5111
    %5113 = vrot.lane.b32.xlu0 %v4955, 8
    %v5114 = vpop.permute.xlu0 %5113
    %5115 = vrot.lane.b32.xlu0 %v4956, 8
    %v5116 = vpop.permute.xlu0 %5115
    %5117 = vrot.lane.b32.xlu0 %v4957, 8
    %v5118 = vpop.permute.xlu0 %5117
    %5119 = vrot.lane.b32.xlu0 %v4958, 8
    %v5120 = vpop.permute.xlu0 %5119
    %5121 = vrot.lane.b32.xlu0 %v4959, 8
    %v5122 = vpop.permute.xlu0 %5121
    %5123 = vrot.lane.b32.xlu0 %v4960, 8
    %v5124 = vpop.permute.xlu0 %5123
    %5125 = vrot.lane.b32.xlu0 %v4961, 8
    %v5126 = vpop.permute.xlu0 %5125
    %5127 = vrot.lane.b32.xlu0 %v4962, 8
    %v5128 = vpop.permute.xlu0 %5127
    %5129 = vrot.lane.b32.xlu0 %v4963, 8
    %v5130 = vpop.permute.xlu0 %5129
    %5131 = vrot.lane.b32.xlu0 %v4964, 8
    %v5132 = vpop.permute.xlu0 %5131
    %5133 = vrot.lane.b32.xlu0 %v4965, 8
    %v5134 = vpop.permute.xlu0 %5133
    %5135 = vrot.lane.b32.xlu0 %v4966, 8
    %v5136 = vpop.permute.xlu0 %5135
    %5137 = vrot.lane.b32.xlu0 %v4967, 8
    %v5138 = vpop.permute.xlu0 %5137
    %5139 = vrot.lane.b32.xlu0 %v4968, 8
    %v5140 = vpop.permute.xlu0 %5139
    %5141 = vrot.lane.b32.xlu0 %v4969, 8
    %v5142 = vpop.permute.xlu0 %5141
    %5143 = vrot.lane.b32.xlu0 %v4970, 8
    %v5144 = vpop.permute.xlu0 %5143
    %5145 = vrot.lane.b32.xlu0 %v4971, 8
    %v5146 = vpop.permute.xlu0 %5145
    %5147 = vrot.lane.b32.xlu0 %v4972, 8
    %v5148 = vpop.permute.xlu0 %5147
    %5149 = vrot.lane.b32.xlu0 %v4973, 8
    %v5150 = vpop.permute.xlu0 %5149
    %5151 = vrot.lane.b32.xlu0 %v4974, 8
    %v5152 = vpop.permute.xlu0 %5151
    %5153 = vrot.lane.b32.xlu0 %v4975, 8
    %v5154 = vpop.permute.xlu0 %5153
    %5155 = vrot.lane.b32.xlu0 %v4976, 8
    %v5156 = vpop.permute.xlu0 %5155
    %5157 = vrot.lane.b32.xlu0 %v4977, 8
    %v5158 = vpop.permute.xlu0 %5157
    %5159 = vrot.lane.b32.xlu0 %v4978, 8
    %v5160 = vpop.permute.xlu0 %5159
    %5161 = vrot.lane.b32.xlu0 %v4979, 8
    %v5162 = vpop.permute.xlu0 %5161
    %5163 = vrot.lane.b32.xlu0 %v4980, 8
    %v5164 = vpop.permute.xlu0 %5163
    %5165 = vrot.lane.b32.xlu0 %v4981, 8
    %v5166 = vpop.permute.xlu0 %5165
    %5167 = vrot.lane.b32.xlu0 %v4982, 8
    %v5168 = vpop.permute.xlu0 %5167
    %5169 = vrot.lane.b32.xlu0 %v4983, 8
    %v5170 = vpop.permute.xlu0 %5169
    %5171 = vrot.lane.b32.xlu0 %v4984, 8
    %v5172 = vpop.permute.xlu0 %5171
    %5173 = vrot.lane.b32.xlu0 %v4985, 8
    %v5174 = vpop.permute.xlu0 %5173
    %5175 = vrot.lane.b32.xlu0 %v4986, 8
    %v5176 = vpop.permute.xlu0 %5175
    %5177 = vrot.lane.b32.xlu0 %v4987, 8
    %v5178 = vpop.permute.xlu0 %5177
    %5179 = vrot.lane.b32.xlu0 %v4988, 8
    %v5180 = vpop.permute.xlu0 %5179
    %5245 = vst.msk [vmem:[#allocation3] sm:$0xff] %vm1163, %v5054
    %5246 = vst.msk [vmem:[#allocation3 + $0x8] sm:$0xff] %vm1163, %v5056
    %5247 = vst.msk [vmem:[#allocation3 + $0x10] sm:$0xff] %vm1163, %v5058
    %5248 = vst.msk [vmem:[#allocation3 + $0x18] sm:$0xff] %vm1163, %v5060
    %5249 = vst.msk [vmem:[#allocation3 + $0x20] sm:$0xff] %vm1163, %v5062
    %5250 = vst.msk [vmem:[#allocation3 + $0x28] sm:$0xff] %vm1163, %v5064
    %5251 = vst.msk [vmem:[#allocation3 + $0x30] sm:$0xff] %vm1163, %v5066
    %5252 = vst.msk [vmem:[#allocation3 + $0x38] sm:$0xff] %vm1163, %v5068
    %5253 = vst.msk [vmem:[#allocation3 + $0x40] sm:$0xff] %vm1163, %v5070
    %5254 = vst.msk [vmem:[#allocation3 + $0x48] sm:$0xff] %vm1163, %v5072
    %5255 = vst.msk [vmem:[#allocation3 + $0x50] sm:$0xff] %vm1163, %v5074
    %5256 = vst.msk [vmem:[#allocation3 + $0x58] sm:$0xff] %vm1163, %v5076
    %5257 = vst.msk [vmem:[#allocation3 + $0x60] sm:$0xff] %vm1163, %v5078
    %5258 = vst.msk [vmem:[#allocation3 + $0x68] sm:$0xff] %vm1163, %v5080
    %5259 = vst.msk [vmem:[#allocation3 + $0x70] sm:$0xff] %vm1163, %v5082
    %5260 = vst.msk [vmem:[#allocation3 + $0x78] sm:$0xff] %vm1163, %v5084
    %5261 = vst.msk [vmem:[#allocation3 + $0x80] sm:$0xff] %vm1163, %v5086
    %5262 = vst.msk [vmem:[#allocation3 + $0x88] sm:$0xff] %vm1163, %v5088
    %5263 = vst.msk [vmem:[#allocation3 + $0x90] sm:$0xff] %vm1163, %v5090
    %5264 = vst.msk [vmem:[#allocation3 + $0x98] sm:$0xff] %vm1163, %v5092
    %5265 = vst.msk [vmem:[#allocation3 + $0xa0] sm:$0xff] %vm1163, %v5094
    %5266 = vst.msk [vmem:[#allocation3 + $0xa8] sm:$0xff] %vm1163, %v5096
    %5267 = vst.msk [vmem:[#allocation3 + $0xb0] sm:$0xff] %vm1163, %v5098
    %5268 = vst.msk [vmem:[#allocation3 + $0xb8] sm:$0xff] %vm1163, %v5100
    %5269 = vst.msk [vmem:[#allocation3 + $0xc0] sm:$0xff] %vm1163, %v5102
    %5270 = vst.msk [vmem:[#allocation3 + $0xc8] sm:$0xff] %vm1163, %v5104
    %5271 = vst.msk [vmem:[#allocation3 + $0xd0] sm:$0xff] %vm1163, %v5106
    %5272 = vst.msk [vmem:[#allocation3 + $0xd8] sm:$0xff] %vm1163, %v5108
    %5273 = vst.msk [vmem:[#allocation3 + $0xe0] sm:$0xff] %vm1163, %v5110
    %5274 = vst.msk [vmem:[#allocation3 + $0xe8] sm:$0xff] %vm1163, %v5112
    %5275 = vst.msk [vmem:[#allocation3 + $0xf0] sm:$0xff] %vm1163, %v5114
    %5276 = vst.msk [vmem:[#allocation3 + $0xf8] sm:$0xff] %vm1163, %v5116
    %5277 = vst.msk [vmem:[#allocation3 + $0x100] sm:$0xff] %vm1163, %v5118
    %5278 = vst.msk [vmem:[#allocation3 + $0x108] sm:$0xff] %vm1163, %v5120
    %5279 = vst.msk [vmem:[#allocation3 + $0x110] sm:$0xff] %vm1163, %v5122
    %5280 = vst.msk [vmem:[#allocation3 + $0x118] sm:$0xff] %vm1163, %v5124
    %5281 = vst.msk [vmem:[#allocation3 + $0x120] sm:$0xff] %vm1163, %v5126
    %5282 = vst.msk [vmem:[#allocation3 + $0x128] sm:$0xff] %vm1163, %v5128
    %5283 = vst.msk [vmem:[#allocation3 + $0x130] sm:$0xff] %vm1163, %v5130
    %5284 = vst.msk [vmem:[#allocation3 + $0x138] sm:$0xff] %vm1163, %v5132
    %5285 = vst.msk [vmem:[#allocation3 + $0x140] sm:$0xff] %vm1163, %v5134
    %5286 = vst.msk [vmem:[#allocation3 + $0x148] sm:$0xff] %vm1163, %v5136
    %5287 = vst.msk [vmem:[#allocation3 + $0x150] sm:$0xff] %vm1163, %v5138
    %5288 = vst.msk [vmem:[#allocation3 + $0x158] sm:$0xff] %vm1163, %v5140
    %5289 = vst.msk [vmem:[#allocation3 + $0x160] sm:$0xff] %vm1163, %v5142
    %5290 = vst.msk [vmem:[#allocation3 + $0x168] sm:$0xff] %vm1163, %v5144
    %5291 = vst.msk [vmem:[#allocation3 + $0x170] sm:$0xff] %vm1163, %v5146
    %5292 = vst.msk [vmem:[#allocation3 + $0x178] sm:$0xff] %vm1163, %v5148
    %5293 = vst.msk [vmem:[#allocation3 + $0x180] sm:$0xff] %vm1163, %v5150
    %5294 = vst.msk [vmem:[#allocation3 + $0x188] sm:$0xff] %vm1163, %v5152
    %5295 = vst.msk [vmem:[#allocation3 + $0x190] sm:$0xff] %vm1163, %v5154
    %5296 = vst.msk [vmem:[#allocation3 + $0x198] sm:$0xff] %vm1163, %v5156
    %5297 = vst.msk [vmem:[#allocation3 + $0x1a0] sm:$0xff] %vm1163, %v5158
    %5298 = vst.msk [vmem:[#allocation3 + $0x1a8] sm:$0xff] %vm1163, %v5160
    %5299 = vst.msk [vmem:[#allocation3 + $0x1b0] sm:$0xff] %vm1163, %v5162
    %5300 = vst.msk [vmem:[#allocation3 + $0x1b8] sm:$0xff] %vm1163, %v5164
    %5301 = vst.msk [vmem:[#allocation3 + $0x1c0] sm:$0xff] %vm1163, %v5166
    %5302 = vst.msk [vmem:[#allocation3 + $0x1c8] sm:$0xff] %vm1163, %v5168
    %5303 = vst.msk [vmem:[#allocation3 + $0x1d0] sm:$0xff] %vm1163, %v5170
    %5304 = vst.msk [vmem:[#allocation3 + $0x1d8] sm:$0xff] %vm1163, %v5172
    %5305 = vst.msk [vmem:[#allocation3 + $0x1e0] sm:$0xff] %vm1163, %v5174
    %5306 = vst.msk [vmem:[#allocation3 + $0x1e8] sm:$0xff] %vm1163, %v5176
    %5307 = vst.msk [vmem:[#allocation3 + $0x1f0] sm:$0xff] %vm1163, %v5178
    %5308 = vst.msk [vmem:[#allocation3 + $0x1f8] sm:$0xff] %vm1163, %v5180
    %v5309 = vld [vmem:[%s265] sm:$0xff]
    %v5310 = vld [vmem:[%s265 + $0x8] sm:$0xff]
    %v5311 = vld [vmem:[%s265 + $0x18] sm:$0xff]
    %v5312 = vld [vmem:[%s265 + $0x20] sm:$0xff]
    %v5313 = vld [vmem:[%s265 + $0x30] sm:$0xff]
    %v5314 = vld [vmem:[%s265 + $0x38] sm:$0xff]
    %v5315 = vld [vmem:[%s265 + $0x48] sm:$0xff]
    %v5316 = vld [vmem:[%s265 + $0x50] sm:$0xff]
    %v5317 = vld [vmem:[%s265 + $0x60] sm:$0xff]
    %v5318 = vld [vmem:[%s265 + $0x68] sm:$0xff]
    %v5319 = vld [vmem:[%s265 + $0x78] sm:$0xff]
    %v5320 = vld [vmem:[%s265 + $0x80] sm:$0xff]
    %v5321 = vld [vmem:[%s265 + $0x90] sm:$0xff]
    %v5322 = vld [vmem:[%s265 + $0x98] sm:$0xff]
    %v5323 = vld [vmem:[%s265 + $0xa8] sm:$0xff]
    %v5324 = vld [vmem:[%s265 + $0xb0] sm:$0xff]
    %v5325 = vld [vmem:[%s265 + $0xc0] sm:$0xff]
    %v5326 = vld [vmem:[%s265 + $0xc8] sm:$0xff]
    %v5327 = vld [vmem:[%s265 + $0xd8] sm:$0xff]
    %v5328 = vld [vmem:[%s265 + $0xe0] sm:$0xff]
    %v5329 = vld [vmem:[%s265 + $0xf0] sm:$0xff]
    %v5330 = vld [vmem:[%s265 + $0xf8] sm:$0xff]
    %v5331 = vld [vmem:[%s265 + $0x108] sm:$0xff]
    %v5332 = vld [vmem:[%s265 + $0x110] sm:$0xff]
    %v5333 = vld [vmem:[%s265 + $0x120] sm:$0xff]
    %v5334 = vld [vmem:[%s265 + $0x128] sm:$0xff]
    %v5335 = vld [vmem:[%s265 + $0x138] sm:$0xff]
    %v5336 = vld [vmem:[%s265 + $0x140] sm:$0xff]
    %v5337 = vld [vmem:[%s265 + $0x150] sm:$0xff]
    %v5338 = vld [vmem:[%s265 + $0x158] sm:$0xff]
    %v5339 = vld [vmem:[%s265 + $0x168] sm:$0xff]
    %v5340 = vld [vmem:[%s265 + $0x170] sm:$0xff]
    %v5341 = vld [vmem:[%s265 + $0x1b0] sm:$0xff]
    %v5342 = vld [vmem:[%s265 + $0x1b8] sm:$0xff]
    %v5343 = vld [vmem:[%s265 + $0x1c8] sm:$0xff]
    %v5344 = vld [vmem:[%s265 + $0x1d0] sm:$0xff]
    %v5345 = vld [vmem:[%s265 + $0x1e0] sm:$0xff]
    %v5346 = vld [vmem:[%s265 + $0x1e8] sm:$0xff]
    %v5347 = vld [vmem:[%s265 + $0x1f8] sm:$0xff]
    %v5348 = vld [vmem:[%s265 + $0x200] sm:$0xff]
    %v5349 = vld [vmem:[%s265 + $0x210] sm:$0xff]
    %v5350 = vld [vmem:[%s265 + $0x218] sm:$0xff]
    %v5351 = vld [vmem:[%s265 + $0x228] sm:$0xff]
    %v5352 = vld [vmem:[%s265 + $0x230] sm:$0xff]
    %v5353 = vld [vmem:[%s265 + $0x240] sm:$0xff]
    %v5354 = vld [vmem:[%s265 + $0x248] sm:$0xff]
    %v5355 = vld [vmem:[%s265 + $0x258] sm:$0xff]
    %v5356 = vld [vmem:[%s265 + $0x260] sm:$0xff]
    %v5357 = vld [vmem:[%s265 + $0x270] sm:$0xff]
    %v5358 = vld [vmem:[%s265 + $0x278] sm:$0xff]
    %v5359 = vld [vmem:[%s265 + $0x288] sm:$0xff]
    %v5360 = vld [vmem:[%s265 + $0x290] sm:$0xff]
    %v5361 = vld [vmem:[%s265 + $0x2a0] sm:$0xff]
    %v5362 = vld [vmem:[%s265 + $0x2a8] sm:$0xff]
    %v5363 = vld [vmem:[%s265 + $0x2b8] sm:$0xff]
    %v5364 = vld [vmem:[%s265 + $0x2c0] sm:$0xff]
    %v5365 = vld [vmem:[%s265 + $0x2d0] sm:$0xff]
    %v5366 = vld [vmem:[%s265 + $0x2d8] sm:$0xff]
    %v5367 = vld [vmem:[%s265 + $0x2e8] sm:$0xff]
    %v5368 = vld [vmem:[%s265 + $0x2f0] sm:$0xff]
    %v5369 = vld [vmem:[%s265 + $0x300] sm:$0xff]
    %v5370 = vld [vmem:[%s265 + $0x308] sm:$0xff]
    %v5371 = vld [vmem:[%s265 + $0x318] sm:$0xff]
    %v5372 = vld [vmem:[%s265 + $0x320] sm:$0xff]
    %5437 = vrot.lane.b32.xlu0 %v5309, 12
    %v5438 = vpop.permute.xlu0 %5437
    %5439 = vrot.lane.b32.xlu0 %v5310, 12
    %v5440 = vpop.permute.xlu0 %5439
    %5441 = vrot.lane.b32.xlu0 %v5311, 12
    %v5442 = vpop.permute.xlu0 %5441
    %5443 = vrot.lane.b32.xlu0 %v5312, 12
    %v5444 = vpop.permute.xlu0 %5443
    %5445 = vrot.lane.b32.xlu0 %v5313, 12
    %v5446 = vpop.permute.xlu0 %5445
    %5447 = vrot.lane.b32.xlu0 %v5314, 12
    %v5448 = vpop.permute.xlu0 %5447
    %5449 = vrot.lane.b32.xlu0 %v5315, 12
    %v5450 = vpop.permute.xlu0 %5449
    %5451 = vrot.lane.b32.xlu0 %v5316, 12
    %v5452 = vpop.permute.xlu0 %5451
    %5453 = vrot.lane.b32.xlu0 %v5317, 12
    %v5454 = vpop.permute.xlu0 %5453
    %5455 = vrot.lane.b32.xlu0 %v5318, 12
    %v5456 = vpop.permute.xlu0 %5455
    %5457 = vrot.lane.b32.xlu0 %v5319, 12
    %v5458 = vpop.permute.xlu0 %5457
    %5459 = vrot.lane.b32.xlu0 %v5320, 12
    %v5460 = vpop.permute.xlu0 %5459
    %5461 = vrot.lane.b32.xlu0 %v5321, 12
    %v5462 = vpop.permute.xlu0 %5461
    %5463 = vrot.lane.b32.xlu0 %v5322, 12
    %v5464 = vpop.permute.xlu0 %5463
    %5465 = vrot.lane.b32.xlu0 %v5323, 12
    %v5466 = vpop.permute.xlu0 %5465
    %5467 = vrot.lane.b32.xlu0 %v5324, 12
    %v5468 = vpop.permute.xlu0 %5467
    %5469 = vrot.lane.b32.xlu0 %v5325, 12
    %v5470 = vpop.permute.xlu0 %5469
    %5471 = vrot.lane.b32.xlu0 %v5326, 12
    %v5472 = vpop.permute.xlu0 %5471
    %5473 = vrot.lane.b32.xlu0 %v5327, 12
    %v5474 = vpop.permute.xlu0 %5473
    %5475 = vrot.lane.b32.xlu0 %v5328, 12
    %v5476 = vpop.permute.xlu0 %5475
    %5477 = vrot.lane.b32.xlu0 %v5329, 12
    %v5478 = vpop.permute.xlu0 %5477
    %5479 = vrot.lane.b32.xlu0 %v5330, 12
    %v5480 = vpop.permute.xlu0 %5479
    %5481 = vrot.lane.b32.xlu0 %v5331, 12
    %v5482 = vpop.permute.xlu0 %5481
    %5483 = vrot.lane.b32.xlu0 %v5332, 12
    %v5484 = vpop.permute.xlu0 %5483
    %5485 = vrot.lane.b32.xlu0 %v5333, 12
    %v5486 = vpop.permute.xlu0 %5485
    %5487 = vrot.lane.b32.xlu0 %v5334, 12
    %v5488 = vpop.permute.xlu0 %5487
    %5489 = vrot.lane.b32.xlu0 %v5335, 12
    %v5490 = vpop.permute.xlu0 %5489
    %5491 = vrot.lane.b32.xlu0 %v5336, 12
    %v5492 = vpop.permute.xlu0 %5491
    %5493 = vrot.lane.b32.xlu0 %v5337, 12
    %v5494 = vpop.permute.xlu0 %5493
    %5495 = vrot.lane.b32.xlu0 %v5338, 12
    %v5496 = vpop.permute.xlu0 %5495
    %5497 = vrot.lane.b32.xlu0 %v5339, 12
    %v5498 = vpop.permute.xlu0 %5497
    %5499 = vrot.lane.b32.xlu0 %v5340, 12
    %v5500 = vpop.permute.xlu0 %5499
    %5501 = vrot.lane.b32.xlu0 %v5341, 12
    %v5502 = vpop.permute.xlu0 %5501
    %5503 = vrot.lane.b32.xlu0 %v5342, 12
    %v5504 = vpop.permute.xlu0 %5503
    %5505 = vrot.lane.b32.xlu0 %v5343, 12
    %v5506 = vpop.permute.xlu0 %5505
    %5507 = vrot.lane.b32.xlu0 %v5344, 12
    %v5508 = vpop.permute.xlu0 %5507
    %5509 = vrot.lane.b32.xlu0 %v5345, 12
    %v5510 = vpop.permute.xlu0 %5509
    %5511 = vrot.lane.b32.xlu0 %v5346, 12
    %v5512 = vpop.permute.xlu0 %5511
    %5513 = vrot.lane.b32.xlu0 %v5347, 12
    %v5514 = vpop.permute.xlu0 %5513
    %5515 = vrot.lane.b32.xlu0 %v5348, 12
    %v5516 = vpop.permute.xlu0 %5515
    %5517 = vrot.lane.b32.xlu0 %v5349, 12
    %v5518 = vpop.permute.xlu0 %5517
    %5519 = vrot.lane.b32.xlu0 %v5350, 12
    %v5520 = vpop.permute.xlu0 %5519
    %5521 = vrot.lane.b32.xlu0 %v5351, 12
    %v5522 = vpop.permute.xlu0 %5521
    %5523 = vrot.lane.b32.xlu0 %v5352, 12
    %v5524 = vpop.permute.xlu0 %5523
    %5525 = vrot.lane.b32.xlu0 %v5353, 12
    %v5526 = vpop.permute.xlu0 %5525
    %5527 = vrot.lane.b32.xlu0 %v5354, 12
    %v5528 = vpop.permute.xlu0 %5527
    %5529 = vrot.lane.b32.xlu0 %v5355, 12
    %v5530 = vpop.permute.xlu0 %5529
    %5531 = vrot.lane.b32.xlu0 %v5356, 12
    %v5532 = vpop.permute.xlu0 %5531
    %5533 = vrot.lane.b32.xlu0 %v5357, 12
    %v5534 = vpop.permute.xlu0 %5533
    %5535 = vrot.lane.b32.xlu0 %v5358, 12
    %v5536 = vpop.permute.xlu0 %5535
    %5537 = vrot.lane.b32.xlu0 %v5359, 12
    %v5538 = vpop.permute.xlu0 %5537
    %5539 = vrot.lane.b32.xlu0 %v5360, 12
    %v5540 = vpop.permute.xlu0 %5539
    %5541 = vrot.lane.b32.xlu0 %v5361, 12
    %v5542 = vpop.permute.xlu0 %5541
    %5543 = vrot.lane.b32.xlu0 %v5362, 12
    %v5544 = vpop.permute.xlu0 %5543
    %5545 = vrot.lane.b32.xlu0 %v5363, 12
    %v5546 = vpop.permute.xlu0 %5545
    %5547 = vrot.lane.b32.xlu0 %v5364, 12
    %v5548 = vpop.permute.xlu0 %5547
    %5549 = vrot.lane.b32.xlu0 %v5365, 12
    %v5550 = vpop.permute.xlu0 %5549
    %5551 = vrot.lane.b32.xlu0 %v5366, 12
    %v5552 = vpop.permute.xlu0 %5551
    %5553 = vrot.lane.b32.xlu0 %v5367, 12
    %v5554 = vpop.permute.xlu0 %5553
    %5555 = vrot.lane.b32.xlu0 %v5368, 12
    %v5556 = vpop.permute.xlu0 %5555
    %5557 = vrot.lane.b32.xlu0 %v5369, 12
    %v5558 = vpop.permute.xlu0 %5557
    %5559 = vrot.lane.b32.xlu0 %v5370, 12
    %v5560 = vpop.permute.xlu0 %5559
    %5561 = vrot.lane.b32.xlu0 %v5371, 12
    %v5562 = vpop.permute.xlu0 %5561
    %5563 = vrot.lane.b32.xlu0 %v5372, 12
    %v5564 = vpop.permute.xlu0 %5563
    %5629 = vst.msk [vmem:[#allocation3] sm:$0xff] %vm1548, %v5438
    %5630 = vst.msk [vmem:[#allocation3 + $0x8] sm:$0xff] %vm1548, %v5440
    %5631 = vst.msk [vmem:[#allocation3 + $0x10] sm:$0xff] %vm1548, %v5442
    %5632 = vst.msk [vmem:[#allocation3 + $0x18] sm:$0xff] %vm1548, %v5444
    %5633 = vst.msk [vmem:[#allocation3 + $0x20] sm:$0xff] %vm1548, %v5446
    %5634 = vst.msk [vmem:[#allocation3 + $0x28] sm:$0xff] %vm1548, %v5448
    %5635 = vst.msk [vmem:[#allocation3 + $0x30] sm:$0xff] %vm1548, %v5450
    %5636 = vst.msk [vmem:[#allocation3 + $0x38] sm:$0xff] %vm1548, %v5452
    %5637 = vst.msk [vmem:[#allocation3 + $0x40] sm:$0xff] %vm1548, %v5454
    %5638 = vst.msk [vmem:[#allocation3 + $0x48] sm:$0xff] %vm1548, %v5456
    %5639 = vst.msk [vmem:[#allocation3 + $0x50] sm:$0xff] %vm1548, %v5458
    %5640 = vst.msk [vmem:[#allocation3 + $0x58] sm:$0xff] %vm1548, %v5460
    %5641 = vst.msk [vmem:[#allocation3 + $0x60] sm:$0xff] %vm1548, %v5462
    %5642 = vst.msk [vmem:[#allocation3 + $0x68] sm:$0xff] %vm1548, %v5464
    %5643 = vst.msk [vmem:[#allocation3 + $0x70] sm:$0xff] %vm1548, %v5466
    %5644 = vst.msk [vmem:[#allocation3 + $0x78] sm:$0xff] %vm1548, %v5468
    %5645 = vst.msk [vmem:[#allocation3 + $0x80] sm:$0xff] %vm1548, %v5470
    %5646 = vst.msk [vmem:[#allocation3 + $0x88] sm:$0xff] %vm1548, %v5472
    %5647 = vst.msk [vmem:[#allocation3 + $0x90] sm:$0xff] %vm1548, %v5474
    %5648 = vst.msk [vmem:[#allocation3 + $0x98] sm:$0xff] %vm1548, %v5476
    %5649 = vst.msk [vmem:[#allocation3 + $0xa0] sm:$0xff] %vm1548, %v5478
    %5650 = vst.msk [vmem:[#allocation3 + $0xa8] sm:$0xff] %vm1548, %v5480
    %5651 = vst.msk [vmem:[#allocation3 + $0xb0] sm:$0xff] %vm1548, %v5482
    %5652 = vst.msk [vmem:[#allocation3 + $0xb8] sm:$0xff] %vm1548, %v5484
    %5653 = vst.msk [vmem:[#allocation3 + $0xc0] sm:$0xff] %vm1548, %v5486
    %5654 = vst.msk [vmem:[#allocation3 + $0xc8] sm:$0xff] %vm1548, %v5488
    %5655 = vst.msk [vmem:[#allocation3 + $0xd0] sm:$0xff] %vm1548, %v5490
    %5656 = vst.msk [vmem:[#allocation3 + $0xd8] sm:$0xff] %vm1548, %v5492
    %5657 = vst.msk [vmem:[#allocation3 + $0xe0] sm:$0xff] %vm1548, %v5494
    %5658 = vst.msk [vmem:[#allocation3 + $0xe8] sm:$0xff] %vm1548, %v5496
    %5659 = vst.msk [vmem:[#allocation3 + $0xf0] sm:$0xff] %vm1548, %v5498
    %5660 = vst.msk [vmem:[#allocation3 + $0xf8] sm:$0xff] %vm1548, %v5500
    %5661 = vst.msk [vmem:[#allocation3 + $0x100] sm:$0xff] %vm1548, %v5502
    %5662 = vst.msk [vmem:[#allocation3 + $0x108] sm:$0xff] %vm1548, %v5504
    %5663 = vst.msk [vmem:[#allocation3 + $0x110] sm:$0xff] %vm1548, %v5506
    %5664 = vst.msk [vmem:[#allocation3 + $0x118] sm:$0xff] %vm1548, %v5508
    %5665 = vst.msk [vmem:[#allocation3 + $0x120] sm:$0xff] %vm1548, %v5510
    %5666 = vst.msk [vmem:[#allocation3 + $0x128] sm:$0xff] %vm1548, %v5512
    %5667 = vst.msk [vmem:[#allocation3 + $0x130] sm:$0xff] %vm1548, %v5514
    %5668 = vst.msk [vmem:[#allocation3 + $0x138] sm:$0xff] %vm1548, %v5516
    %5669 = vst.msk [vmem:[#allocation3 + $0x140] sm:$0xff] %vm1548, %v5518
    %5670 = vst.msk [vmem:[#allocation3 + $0x148] sm:$0xff] %vm1548, %v5520
    %5671 = vst.msk [vmem:[#allocation3 + $0x150] sm:$0xff] %vm1548, %v5522
    %5672 = vst.msk [vmem:[#allocation3 + $0x158] sm:$0xff] %vm1548, %v5524
    %5673 = vst.msk [vmem:[#allocation3 + $0x160] sm:$0xff] %vm1548, %v5526
    %5674 = vst.msk [vmem:[#allocation3 + $0x168] sm:$0xff] %vm1548, %v5528
    %5675 = vst.msk [vmem:[#allocation3 + $0x170] sm:$0xff] %vm1548, %v5530
    %5676 = vst.msk [vmem:[#allocation3 + $0x178] sm:$0xff] %vm1548, %v5532
    %5677 = vst.msk [vmem:[#allocation3 + $0x180] sm:$0xff] %vm1548, %v5534
    %5678 = vst.msk [vmem:[#allocation3 + $0x188] sm:$0xff] %vm1548, %v5536
    %5679 = vst.msk [vmem:[#allocation3 + $0x190] sm:$0xff] %vm1548, %v5538
    %5680 = vst.msk [vmem:[#allocation3 + $0x198] sm:$0xff] %vm1548, %v5540
    %5681 = vst.msk [vmem:[#allocation3 + $0x1a0] sm:$0xff] %vm1548, %v5542
    %5682 = vst.msk [vmem:[#allocation3 + $0x1a8] sm:$0xff] %vm1548, %v5544
    %5683 = vst.msk [vmem:[#allocation3 + $0x1b0] sm:$0xff] %vm1548, %v5546
    %5684 = vst.msk [vmem:[#allocation3 + $0x1b8] sm:$0xff] %vm1548, %v5548
    %5685 = vst.msk [vmem:[#allocation3 + $0x1c0] sm:$0xff] %vm1548, %v5550
    %5686 = vst.msk [vmem:[#allocation3 + $0x1c8] sm:$0xff] %vm1548, %v5552
    %5687 = vst.msk [vmem:[#allocation3 + $0x1d0] sm:$0xff] %vm1548, %v5554
    %5688 = vst.msk [vmem:[#allocation3 + $0x1d8] sm:$0xff] %vm1548, %v5556
    %5689 = vst.msk [vmem:[#allocation3 + $0x1e0] sm:$0xff] %vm1548, %v5558
    %5690 = vst.msk [vmem:[#allocation3 + $0x1e8] sm:$0xff] %vm1548, %v5560
    %5691 = vst.msk [vmem:[#allocation3 + $0x1f0] sm:$0xff] %vm1548, %v5562
    %5692 = vst.msk [vmem:[#allocation3 + $0x1f8] sm:$0xff] %vm1548, %v5564
    %v5693 = vld [vmem:[%s265 + $0x1] sm:$0xff]
    %v5694 = vld [vmem:[%s265 + $0x9] sm:$0xff]
    %v5695 = vld [vmem:[%s265 + $0x19] sm:$0xff]
    %v5696 = vld [vmem:[%s265 + $0x21] sm:$0xff]
    %v5697 = vld [vmem:[%s265 + $0x31] sm:$0xff]
    %v5698 = vld [vmem:[%s265 + $0x39] sm:$0xff]
    %v5699 = vld [vmem:[%s265 + $0x49] sm:$0xff]
    %v5700 = vld [vmem:[%s265 + $0x51] sm:$0xff]
    %v5701 = vld [vmem:[%s265 + $0x61] sm:$0xff]
    %v5702 = vld [vmem:[%s265 + $0x69] sm:$0xff]
    %v5703 = vld [vmem:[%s265 + $0x79] sm:$0xff]
    %v5704 = vld [vmem:[%s265 + $0x81] sm:$0xff]
    %v5705 = vld [vmem:[%s265 + $0x91] sm:$0xff]
    %v5706 = vld [vmem:[%s265 + $0x99] sm:$0xff]
    %v5707 = vld [vmem:[%s265 + $0xa9] sm:$0xff]
    %v5708 = vld [vmem:[%s265 + $0xb1] sm:$0xff]
    %v5709 = vld [vmem:[%s265 + $0xc1] sm:$0xff]
    %v5710 = vld [vmem:[%s265 + $0xc9] sm:$0xff]
    %v5711 = vld [vmem:[%s265 + $0xd9] sm:$0xff]
    %v5712 = vld [vmem:[%s265 + $0xe1] sm:$0xff]
    %v5713 = vld [vmem:[%s265 + $0xf1] sm:$0xff]
    %v5714 = vld [vmem:[%s265 + $0xf9] sm:$0xff]
    %v5715 = vld [vmem:[%s265 + $0x109] sm:$0xff]
    %v5716 = vld [vmem:[%s265 + $0x111] sm:$0xff]
    %v5717 = vld [vmem:[%s265 + $0x121] sm:$0xff]
    %v5718 = vld [vmem:[%s265 + $0x129] sm:$0xff]
    %v5719 = vld [vmem:[%s265 + $0x139] sm:$0xff]
    %v5720 = vld [vmem:[%s265 + $0x141] sm:$0xff]
    %v5721 = vld [vmem:[%s265 + $0x151] sm:$0xff]
    %v5722 = vld [vmem:[%s265 + $0x159] sm:$0xff]
    %v5723 = vld [vmem:[%s265 + $0x169] sm:$0xff]
    %v5724 = vld [vmem:[%s265 + $0x171] sm:$0xff]
    %v5725 = vld [vmem:[%s265 + $0x1b1] sm:$0xff]
    %v5726 = vld [vmem:[%s265 + $0x1b9] sm:$0xff]
    %v5727 = vld [vmem:[%s265 + $0x1c9] sm:$0xff]
    %v5728 = vld [vmem:[%s265 + $0x1d1] sm:$0xff]
    %v5729 = vld [vmem:[%s265 + $0x1e1] sm:$0xff]
    %v5730 = vld [vmem:[%s265 + $0x1e9] sm:$0xff]
    %v5731 = vld [vmem:[%s265 + $0x1f9] sm:$0xff]
    %v5732 = vld [vmem:[%s265 + $0x201] sm:$0xff]
    %v5733 = vld [vmem:[%s265 + $0x211] sm:$0xff]
    %v5734 = vld [vmem:[%s265 + $0x219] sm:$0xff]
    %v5735 = vld [vmem:[%s265 + $0x229] sm:$0xff]
    %v5736 = vld [vmem:[%s265 + $0x231] sm:$0xff]
    %v5737 = vld [vmem:[%s265 + $0x241] sm:$0xff]
    %v5738 = vld [vmem:[%s265 + $0x249] sm:$0xff]
    %v5739 = vld [vmem:[%s265 + $0x259] sm:$0xff]
    %v5740 = vld [vmem:[%s265 + $0x261] sm:$0xff]
    %v5741 = vld [vmem:[%s265 + $0x271] sm:$0xff]
    %v5742 = vld [vmem:[%s265 + $0x279] sm:$0xff]
    %v5743 = vld [vmem:[%s265 + $0x289] sm:$0xff]
    %v5744 = vld [vmem:[%s265 + $0x291] sm:$0xff]
    %v5745 = vld [vmem:[%s265 + $0x2a1] sm:$0xff]
    %v5746 = vld [vmem:[%s265 + $0x2a9] sm:$0xff]
    %v5747 = vld [vmem:[%s265 + $0x2b9] sm:$0xff]
    %v5748 = vld [vmem:[%s265 + $0x2c1] sm:$0xff]
    %v5749 = vld [vmem:[%s265 + $0x2d1] sm:$0xff]
    %v5750 = vld [vmem:[%s265 + $0x2d9] sm:$0xff]
    %v5751 = vld [vmem:[%s265 + $0x2e9] sm:$0xff]
    %v5752 = vld [vmem:[%s265 + $0x2f1] sm:$0xff]
    %v5753 = vld [vmem:[%s265 + $0x301] sm:$0xff]
    %v5754 = vld [vmem:[%s265 + $0x309] sm:$0xff]
    %v5755 = vld [vmem:[%s265 + $0x319] sm:$0xff]
    %v5756 = vld [vmem:[%s265 + $0x321] sm:$0xff]
    %5821 = vrot.lane.b32.xlu0 %v5693, 16
    %v5822 = vpop.permute.xlu0 %5821
    %5823 = vrot.lane.b32.xlu0 %v5694, 16
    %v5824 = vpop.permute.xlu0 %5823
    %5825 = vrot.lane.b32.xlu0 %v5695, 16
    %v5826 = vpop.permute.xlu0 %5825
    %5827 = vrot.lane.b32.xlu0 %v5696, 16
    %v5828 = vpop.permute.xlu0 %5827
    %5829 = vrot.lane.b32.xlu0 %v5697, 16
    %v5830 = vpop.permute.xlu0 %5829
    %5831 = vrot.lane.b32.xlu0 %v5698, 16
    %v5832 = vpop.permute.xlu0 %5831
    %5833 = vrot.lane.b32.xlu0 %v5699, 16
    %v5834 = vpop.permute.xlu0 %5833
    %5835 = vrot.lane.b32.xlu0 %v5700, 16
    %v5836 = vpop.permute.xlu0 %5835
    %5837 = vrot.lane.b32.xlu0 %v5701, 16
    %v5838 = vpop.permute.xlu0 %5837
    %5839 = vrot.lane.b32.xlu0 %v5702, 16
    %v5840 = vpop.permute.xlu0 %5839
    %5841 = vrot.lane.b32.xlu0 %v5703, 16
    %v5842 = vpop.permute.xlu0 %5841
    %5843 = vrot.lane.b32.xlu0 %v5704, 16
    %v5844 = vpop.permute.xlu0 %5843
    %5845 = vrot.lane.b32.xlu0 %v5705, 16
    %v5846 = vpop.permute.xlu0 %5845
    %5847 = vrot.lane.b32.xlu0 %v5706, 16
    %v5848 = vpop.permute.xlu0 %5847
    %5849 = vrot.lane.b32.xlu0 %v5707, 16
    %v5850 = vpop.permute.xlu0 %5849
    %5851 = vrot.lane.b32.xlu0 %v5708, 16
    %v5852 = vpop.permute.xlu0 %5851
    %5853 = vrot.lane.b32.xlu0 %v5709, 16
    %v5854 = vpop.permute.xlu0 %5853
    %5855 = vrot.lane.b32.xlu0 %v5710, 16
    %v5856 = vpop.permute.xlu0 %5855
    %5857 = vrot.lane.b32.xlu0 %v5711, 16
    %v5858 = vpop.permute.xlu0 %5857
    %5859 = vrot.lane.b32.xlu0 %v5712, 16
    %v5860 = vpop.permute.xlu0 %5859
    %5861 = vrot.lane.b32.xlu0 %v5713, 16
    %v5862 = vpop.permute.xlu0 %5861
    %5863 = vrot.lane.b32.xlu0 %v5714, 16
    %v5864 = vpop.permute.xlu0 %5863
    %5865 = vrot.lane.b32.xlu0 %v5715, 16
    %v5866 = vpop.permute.xlu0 %5865
    %5867 = vrot.lane.b32.xlu0 %v5716, 16
    %v5868 = vpop.permute.xlu0 %5867
    %5869 = vrot.lane.b32.xlu0 %v5717, 16
    %v5870 = vpop.permute.xlu0 %5869
    %5871 = vrot.lane.b32.xlu0 %v5718, 16
    %v5872 = vpop.permute.xlu0 %5871
    %5873 = vrot.lane.b32.xlu0 %v5719, 16
    %v5874 = vpop.permute.xlu0 %5873
    %5875 = vrot.lane.b32.xlu0 %v5720, 16
    %v5876 = vpop.permute.xlu0 %5875
    %5877 = vrot.lane.b32.xlu0 %v5721, 16
    %v5878 = vpop.permute.xlu0 %5877
    %5879 = vrot.lane.b32.xlu0 %v5722, 16
    %v5880 = vpop.permute.xlu0 %5879
    %5881 = vrot.lane.b32.xlu0 %v5723, 16
    %v5882 = vpop.permute.xlu0 %5881
    %5883 = vrot.lane.b32.xlu0 %v5724, 16
    %v5884 = vpop.permute.xlu0 %5883
    %5885 = vrot.lane.b32.xlu0 %v5725, 16
    %v5886 = vpop.permute.xlu0 %5885
    %5887 = vrot.lane.b32.xlu0 %v5726, 16
    %v5888 = vpop.permute.xlu0 %5887
    %5889 = vrot.lane.b32.xlu0 %v5727, 16
    %v5890 = vpop.permute.xlu0 %5889
    %5891 = vrot.lane.b32.xlu0 %v5728, 16
    %v5892 = vpop.permute.xlu0 %5891
    %5893 = vrot.lane.b32.xlu0 %v5729, 16
    %v5894 = vpop.permute.xlu0 %5893
    %5895 = vrot.lane.b32.xlu0 %v5730, 16
    %v5896 = vpop.permute.xlu0 %5895
    %5897 = vrot.lane.b32.xlu0 %v5731, 16
    %v5898 = vpop.permute.xlu0 %5897
    %5899 = vrot.lane.b32.xlu0 %v5732, 16
    %v5900 = vpop.permute.xlu0 %5899
    %5901 = vrot.lane.b32.xlu0 %v5733, 16
    %v5902 = vpop.permute.xlu0 %5901
    %5903 = vrot.lane.b32.xlu0 %v5734, 16
    %v5904 = vpop.permute.xlu0 %5903
    %5905 = vrot.lane.b32.xlu0 %v5735, 16
    %v5906 = vpop.permute.xlu0 %5905
    %5907 = vrot.lane.b32.xlu0 %v5736, 16
    %v5908 = vpop.permute.xlu0 %5907
    %5909 = vrot.lane.b32.xlu0 %v5737, 16
    %v5910 = vpop.permute.xlu0 %5909
    %5911 = vrot.lane.b32.xlu0 %v5738, 16
    %v5912 = vpop.permute.xlu0 %5911
    %5913 = vrot.lane.b32.xlu0 %v5739, 16
    %v5914 = vpop.permute.xlu0 %5913
    %5915 = vrot.lane.b32.xlu0 %v5740, 16
    %v5916 = vpop.permute.xlu0 %5915
    %5917 = vrot.lane.b32.xlu0 %v5741, 16
    %v5918 = vpop.permute.xlu0 %5917
    %5919 = vrot.lane.b32.xlu0 %v5742, 16
    %v5920 = vpop.permute.xlu0 %5919
    %5921 = vrot.lane.b32.xlu0 %v5743, 16
    %v5922 = vpop.permute.xlu0 %5921
    %5923 = vrot.lane.b32.xlu0 %v5744, 16
    %v5924 = vpop.permute.xlu0 %5923
    %5925 = vrot.lane.b32.xlu0 %v5745, 16
    %v5926 = vpop.permute.xlu0 %5925
    %5927 = vrot.lane.b32.xlu0 %v5746, 16
    %v5928 = vpop.permute.xlu0 %5927
    %5929 = vrot.lane.b32.xlu0 %v5747, 16
    %v5930 = vpop.permute.xlu0 %5929
    %5931 = vrot.lane.b32.xlu0 %v5748, 16
    %v5932 = vpop.permute.xlu0 %5931
    %5933 = vrot.lane.b32.xlu0 %v5749, 16
    %v5934 = vpop.permute.xlu0 %5933
    %5935 = vrot.lane.b32.xlu0 %v5750, 16
    %v5936 = vpop.permute.xlu0 %5935
    %5937 = vrot.lane.b32.xlu0 %v5751, 16
    %v5938 = vpop.permute.xlu0 %5937
    %5939 = vrot.lane.b32.xlu0 %v5752, 16
    %v5940 = vpop.permute.xlu0 %5939
    %5941 = vrot.lane.b32.xlu0 %v5753, 16
    %v5942 = vpop.permute.xlu0 %5941
    %5943 = vrot.lane.b32.xlu0 %v5754, 16
    %v5944 = vpop.permute.xlu0 %5943
    %5945 = vrot.lane.b32.xlu0 %v5755, 16
    %v5946 = vpop.permute.xlu0 %5945
    %5947 = vrot.lane.b32.xlu0 %v5756, 16
    %v5948 = vpop.permute.xlu0 %5947
    %6013 = vst.msk [vmem:[#allocation3] sm:$0xff] %vm1933, %v5822
    %6014 = vst.msk [vmem:[#allocation3 + $0x8] sm:$0xff] %vm1933, %v5824
    %6015 = vst.msk [vmem:[#allocation3 + $0x10] sm:$0xff] %vm1933, %v5826
    %6016 = vst.msk [vmem:[#allocation3 + $0x18] sm:$0xff] %vm1933, %v5828
    %6017 = vst.msk [vmem:[#allocation3 + $0x20] sm:$0xff] %vm1933, %v5830
    %6018 = vst.msk [vmem:[#allocation3 + $0x28] sm:$0xff] %vm1933, %v5832
    %6019 = vst.msk [vmem:[#allocation3 + $0x30] sm:$0xff] %vm1933, %v5834
    %6020 = vst.msk [vmem:[#allocation3 + $0x38] sm:$0xff] %vm1933, %v5836
    %6021 = vst.msk [vmem:[#allocation3 + $0x40] sm:$0xff] %vm1933, %v5838
    %6022 = vst.msk [vmem:[#allocation3 + $0x48] sm:$0xff] %vm1933, %v5840
    %6023 = vst.msk [vmem:[#allocation3 + $0x50] sm:$0xff] %vm1933, %v5842
    %6024 = vst.msk [vmem:[#allocation3 + $0x58] sm:$0xff] %vm1933, %v5844
    %6025 = vst.msk [vmem:[#allocation3 + $0x60] sm:$0xff] %vm1933, %v5846
    %6026 = vst.msk [vmem:[#allocation3 + $0x68] sm:$0xff] %vm1933, %v5848
    %6027 = vst.msk [vmem:[#allocation3 + $0x70] sm:$0xff] %vm1933, %v5850
    %6028 = vst.msk [vmem:[#allocation3 + $0x78] sm:$0xff] %vm1933, %v5852
    %6029 = vst.msk [vmem:[#allocation3 + $0x80] sm:$0xff] %vm1933, %v5854
    %6030 = vst.msk [vmem:[#allocation3 + $0x88] sm:$0xff] %vm1933, %v5856
    %6031 = vst.msk [vmem:[#allocation3 + $0x90] sm:$0xff] %vm1933, %v5858
    %6032 = vst.msk [vmem:[#allocation3 + $0x98] sm:$0xff] %vm1933, %v5860
    %6033 = vst.msk [vmem:[#allocation3 + $0xa0] sm:$0xff] %vm1933, %v5862
    %6034 = vst.msk [vmem:[#allocation3 + $0xa8] sm:$0xff] %vm1933, %v5864
    %6035 = vst.msk [vmem:[#allocation3 + $0xb0] sm:$0xff] %vm1933, %v5866
    %6036 = vst.msk [vmem:[#allocation3 + $0xb8] sm:$0xff] %vm1933, %v5868
    %6037 = vst.msk [vmem:[#allocation3 + $0xc0] sm:$0xff] %vm1933, %v5870
    %6038 = vst.msk [vmem:[#allocation3 + $0xc8] sm:$0xff] %vm1933, %v5872
    %6039 = vst.msk [vmem:[#allocation3 + $0xd0] sm:$0xff] %vm1933, %v5874
    %6040 = vst.msk [vmem:[#allocation3 + $0xd8] sm:$0xff] %vm1933, %v5876
    %6041 = vst.msk [vmem:[#allocation3 + $0xe0] sm:$0xff] %vm1933, %v5878
    %6042 = vst.msk [vmem:[#allocation3 + $0xe8] sm:$0xff] %vm1933, %v5880
    %6043 = vst.msk [vmem:[#allocation3 + $0xf0] sm:$0xff] %vm1933, %v5882
    %6044 = vst.msk [vmem:[#allocation3 + $0xf8] sm:$0xff] %vm1933, %v5884
    %6045 = vst.msk [vmem:[#allocation3 + $0x100] sm:$0xff] %vm1933, %v5886
    %6046 = vst.msk [vmem:[#allocation3 + $0x108] sm:$0xff] %vm1933, %v5888
    %6047 = vst.msk [vmem:[#allocation3 + $0x110] sm:$0xff] %vm1933, %v5890
    %6048 = vst.msk [vmem:[#allocation3 + $0x118] sm:$0xff] %vm1933, %v5892
    %6049 = vst.msk [vmem:[#allocation3 + $0x120] sm:$0xff] %vm1933, %v5894
    %6050 = vst.msk [vmem:[#allocation3 + $0x128] sm:$0xff] %vm1933, %v5896
    %6051 = vst.msk [vmem:[#allocation3 + $0x130] sm:$0xff] %vm1933, %v5898
    %6052 = vst.msk [vmem:[#allocation3 + $0x138] sm:$0xff] %vm1933, %v5900
    %6053 = vst.msk [vmem:[#allocation3 + $0x140] sm:$0xff] %vm1933, %v5902
    %6054 = vst.msk [vmem:[#allocation3 + $0x148] sm:$0xff] %vm1933, %v5904
    %6055 = vst.msk [vmem:[#allocation3 + $0x150] sm:$0xff] %vm1933, %v5906
    %6056 = vst.msk [vmem:[#allocation3 + $0x158] sm:$0xff] %vm1933, %v5908
    %6057 = vst.msk [vmem:[#allocation3 + $0x160] sm:$0xff] %vm1933, %v5910
    %6058 = vst.msk [vmem:[#allocation3 + $0x168] sm:$0xff] %vm1933, %v5912
    %6059 = vst.msk [vmem:[#allocation3 + $0x170] sm:$0xff] %vm1933, %v5914
    %6060 = vst.msk [vmem:[#allocation3 + $0x178] sm:$0xff] %vm1933, %v5916
    %6061 = vst.msk [vmem:[#allocation3 + $0x180] sm:$0xff] %vm1933, %v5918
    %6062 = vst.msk [vmem:[#allocation3 + $0x188] sm:$0xff] %vm1933, %v5920
    %6063 = vst.msk [vmem:[#allocation3 + $0x190] sm:$0xff] %vm1933, %v5922
    %6064 = vst.msk [vmem:[#allocation3 + $0x198] sm:$0xff] %vm1933, %v5924
    %6065 = vst.msk [vmem:[#allocation3 + $0x1a0] sm:$0xff] %vm1933, %v5926
    %6066 = vst.msk [vmem:[#allocation3 + $0x1a8] sm:$0xff] %vm1933, %v5928
    %6067 = vst.msk [vmem:[#allocation3 + $0x1b0] sm:$0xff] %vm1933, %v5930
    %6068 = vst.msk [vmem:[#allocation3 + $0x1b8] sm:$0xff] %vm1933, %v5932
    %6069 = vst.msk [vmem:[#allocation3 + $0x1c0] sm:$0xff] %vm1933, %v5934
    %6070 = vst.msk [vmem:[#allocation3 + $0x1c8] sm:$0xff] %vm1933, %v5936
    %6071 = vst.msk [vmem:[#allocation3 + $0x1d0] sm:$0xff] %vm1933, %v5938
    %6072 = vst.msk [vmem:[#allocation3 + $0x1d8] sm:$0xff] %vm1933, %v5940
    %6073 = vst.msk [vmem:[#allocation3 + $0x1e0] sm:$0xff] %vm1933, %v5942
    %6074 = vst.msk [vmem:[#allocation3 + $0x1e8] sm:$0xff] %vm1933, %v5944
    %6075 = vst.msk [vmem:[#allocation3 + $0x1f0] sm:$0xff] %vm1933, %v5946
    %6076 = vst.msk [vmem:[#allocation3 + $0x1f8] sm:$0xff] %vm1933, %v5948
    %v6077 = vld [vmem:[%s265 + $0x2] sm:$0xff]
    %v6078 = vld [vmem:[%s265 + $0xa] sm:$0xff]
    %v6079 = vld [vmem:[%s265 + $0x1a] sm:$0xff]
    %v6080 = vld [vmem:[%s265 + $0x22] sm:$0xff]
    %v6081 = vld [vmem:[%s265 + $0x32] sm:$0xff]
    %v6082 = vld [vmem:[%s265 + $0x3a] sm:$0xff]
    %v6083 = vld [vmem:[%s265 + $0x4a] sm:$0xff]
    %v6084 = vld [vmem:[%s265 + $0x52] sm:$0xff]
    %v6085 = vld [vmem:[%s265 + $0x62] sm:$0xff]
    %v6086 = vld [vmem:[%s265 + $0x6a] sm:$0xff]
    %v6087 = vld [vmem:[%s265 + $0x7a] sm:$0xff]
    %v6088 = vld [vmem:[%s265 + $0x82] sm:$0xff]
    %v6089 = vld [vmem:[%s265 + $0x92] sm:$0xff]
    %v6090 = vld [vmem:[%s265 + $0x9a] sm:$0xff]
    %v6091 = vld [vmem:[%s265 + $0xaa] sm:$0xff]
    %v6092 = vld [vmem:[%s265 + $0xb2] sm:$0xff]
    %v6093 = vld [vmem:[%s265 + $0xc2] sm:$0xff]
    %v6094 = vld [vmem:[%s265 + $0xca] sm:$0xff]
    %v6095 = vld [vmem:[%s265 + $0xda] sm:$0xff]
    %v6096 = vld [vmem:[%s265 + $0xe2] sm:$0xff]
    %v6097 = vld [vmem:[%s265 + $0xf2] sm:$0xff]
    %v6098 = vld [vmem:[%s265 + $0xfa] sm:$0xff]
    %v6099 = vld [vmem:[%s265 + $0x10a] sm:$0xff]
    %v6100 = vld [vmem:[%s265 + $0x112] sm:$0xff]
    %v6101 = vld [vmem:[%s265 + $0x122] sm:$0xff]
    %v6102 = vld [vmem:[%s265 + $0x12a] sm:$0xff]
    %v6103 = vld [vmem:[%s265 + $0x13a] sm:$0xff]
    %v6104 = vld [vmem:[%s265 + $0x142] sm:$0xff]
    %v6105 = vld [vmem:[%s265 + $0x152] sm:$0xff]
    %v6106 = vld [vmem:[%s265 + $0x15a] sm:$0xff]
    %v6107 = vld [vmem:[%s265 + $0x16a] sm:$0xff]
    %v6108 = vld [vmem:[%s265 + $0x172] sm:$0xff]
    %v6109 = vld [vmem:[%s265 + $0x1b2] sm:$0xff]
    %v6110 = vld [vmem:[%s265 + $0x1ba] sm:$0xff]
    %v6111 = vld [vmem:[%s265 + $0x1ca] sm:$0xff]
    %v6112 = vld [vmem:[%s265 + $0x1d2] sm:$0xff]
    %v6113 = vld [vmem:[%s265 + $0x1e2] sm:$0xff]
    %v6114 = vld [vmem:[%s265 + $0x1ea] sm:$0xff]
    %v6115 = vld [vmem:[%s265 + $0x1fa] sm:$0xff]
    %v6116 = vld [vmem:[%s265 + $0x202] sm:$0xff]
    %v6117 = vld [vmem:[%s265 + $0x212] sm:$0xff]
    %v6118 = vld [vmem:[%s265 + $0x21a] sm:$0xff]
    %v6119 = vld [vmem:[%s265 + $0x22a] sm:$0xff]
    %v6120 = vld [vmem:[%s265 + $0x232] sm:$0xff]
    %v6121 = vld [vmem:[%s265 + $0x242] sm:$0xff]
    %v6122 = vld [vmem:[%s265 + $0x24a] sm:$0xff]
    %v6123 = vld [vmem:[%s265 + $0x25a] sm:$0xff]
    %v6124 = vld [vmem:[%s265 + $0x262] sm:$0xff]
    %v6125 = vld [vmem:[%s265 + $0x272] sm:$0xff]
    %v6126 = vld [vmem:[%s265 + $0x27a] sm:$0xff]
    %v6127 = vld [vmem:[%s265 + $0x28a] sm:$0xff]
    %v6128 = vld [vmem:[%s265 + $0x292] sm:$0xff]
    %v6129 = vld [vmem:[%s265 + $0x2a2] sm:$0xff]
    %v6130 = vld [vmem:[%s265 + $0x2aa] sm:$0xff]
    %v6131 = vld [vmem:[%s265 + $0x2ba] sm:$0xff]
    %v6132 = vld [vmem:[%s265 + $0x2c2] sm:$0xff]
    %v6133 = vld [vmem:[%s265 + $0x2d2] sm:$0xff]
    %v6134 = vld [vmem:[%s265 + $0x2da] sm:$0xff]
    %v6135 = vld [vmem:[%s265 + $0x2ea] sm:$0xff]
    %v6136 = vld [vmem:[%s265 + $0x2f2] sm:$0xff]
    %v6137 = vld [vmem:[%s265 + $0x302] sm:$0xff]
    %v6138 = vld [vmem:[%s265 + $0x30a] sm:$0xff]
    %v6139 = vld [vmem:[%s265 + $0x31a] sm:$0xff]
    %v6140 = vld [vmem:[%s265 + $0x322] sm:$0xff]
    %6205 = vrot.lane.b32.xlu0 %v6077, 20
    %v6206 = vpop.permute.xlu0 %6205
    %6207 = vrot.lane.b32.xlu0 %v6078, 20
    %v6208 = vpop.permute.xlu0 %6207
    %6209 = vrot.lane.b32.xlu0 %v6079, 20
    %v6210 = vpop.permute.xlu0 %6209
    %6211 = vrot.lane.b32.xlu0 %v6080, 20
    %v6212 = vpop.permute.xlu0 %6211
    %6213 = vrot.lane.b32.xlu0 %v6081, 20
    %v6214 = vpop.permute.xlu0 %6213
    %6215 = vrot.lane.b32.xlu0 %v6082, 20
    %v6216 = vpop.permute.xlu0 %6215
    %6217 = vrot.lane.b32.xlu0 %v6083, 20
    %v6218 = vpop.permute.xlu0 %6217
    %6219 = vrot.lane.b32.xlu0 %v6084, 20
    %v6220 = vpop.permute.xlu0 %6219
    %6221 = vrot.lane.b32.xlu0 %v6085, 20
    %v6222 = vpop.permute.xlu0 %6221
    %6223 = vrot.lane.b32.xlu0 %v6086, 20
    %v6224 = vpop.permute.xlu0 %6223
    %6225 = vrot.lane.b32.xlu0 %v6087, 20
    %v6226 = vpop.permute.xlu0 %6225
    %6227 = vrot.lane.b32.xlu0 %v6088, 20
    %v6228 = vpop.permute.xlu0 %6227
    %6229 = vrot.lane.b32.xlu0 %v6089, 20
    %v6230 = vpop.permute.xlu0 %6229
    %6231 = vrot.lane.b32.xlu0 %v6090, 20
    %v6232 = vpop.permute.xlu0 %6231
    %6233 = vrot.lane.b32.xlu0 %v6091, 20
    %v6234 = vpop.permute.xlu0 %6233
    %6235 = vrot.lane.b32.xlu0 %v6092, 20
    %v6236 = vpop.permute.xlu0 %6235
    %6237 = vrot.lane.b32.xlu0 %v6093, 20
    %v6238 = vpop.permute.xlu0 %6237
    %6239 = vrot.lane.b32.xlu0 %v6094, 20
    %v6240 = vpop.permute.xlu0 %6239
    %6241 = vrot.lane.b32.xlu0 %v6095, 20
    %v6242 = vpop.permute.xlu0 %6241
    %6243 = vrot.lane.b32.xlu0 %v6096, 20
    %v6244 = vpop.permute.xlu0 %6243
    %6245 = vrot.lane.b32.xlu0 %v6097, 20
    %v6246 = vpop.permute.xlu0 %6245
    %6247 = vrot.lane.b32.xlu0 %v6098, 20
    %v6248 = vpop.permute.xlu0 %6247
    %6249 = vrot.lane.b32.xlu0 %v6099, 20
    %v6250 = vpop.permute.xlu0 %6249
    %6251 = vrot.lane.b32.xlu0 %v6100, 20
    %v6252 = vpop.permute.xlu0 %6251
    %6253 = vrot.lane.b32.xlu0 %v6101, 20
    %v6254 = vpop.permute.xlu0 %6253
    %6255 = vrot.lane.b32.xlu0 %v6102, 20
    %v6256 = vpop.permute.xlu0 %6255
    %6257 = vrot.lane.b32.xlu0 %v6103, 20
    %v6258 = vpop.permute.xlu0 %6257
    %6259 = vrot.lane.b32.xlu0 %v6104, 20
    %v6260 = vpop.permute.xlu0 %6259
    %6261 = vrot.lane.b32.xlu0 %v6105, 20
    %v6262 = vpop.permute.xlu0 %6261
    %6263 = vrot.lane.b32.xlu0 %v6106, 20
    %v6264 = vpop.permute.xlu0 %6263
    %6265 = vrot.lane.b32.xlu0 %v6107, 20
    %v6266 = vpop.permute.xlu0 %6265
    %6267 = vrot.lane.b32.xlu0 %v6108, 20
    %v6268 = vpop.permute.xlu0 %6267
    %6269 = vrot.lane.b32.xlu0 %v6109, 20
    %v6270 = vpop.permute.xlu0 %6269
    %6271 = vrot.lane.b32.xlu0 %v6110, 20
    %v6272 = vpop.permute.xlu0 %6271
    %6273 = vrot.lane.b32.xlu0 %v6111, 20
    %v6274 = vpop.permute.xlu0 %6273
    %6275 = vrot.lane.b32.xlu0 %v6112, 20
    %v6276 = vpop.permute.xlu0 %6275
    %6277 = vrot.lane.b32.xlu0 %v6113, 20
    %v6278 = vpop.permute.xlu0 %6277
    %6279 = vrot.lane.b32.xlu0 %v6114, 20
    %v6280 = vpop.permute.xlu0 %6279
    %6281 = vrot.lane.b32.xlu0 %v6115, 20
    %v6282 = vpop.permute.xlu0 %6281
    %6283 = vrot.lane.b32.xlu0 %v6116, 20
    %v6284 = vpop.permute.xlu0 %6283
    %6285 = vrot.lane.b32.xlu0 %v6117, 20
    %v6286 = vpop.permute.xlu0 %6285
    %6287 = vrot.lane.b32.xlu0 %v6118, 20
    %v6288 = vpop.permute.xlu0 %6287
    %6289 = vrot.lane.b32.xlu0 %v6119, 20
    %v6290 = vpop.permute.xlu0 %6289
    %6291 = vrot.lane.b32.xlu0 %v6120, 20
    %v6292 = vpop.permute.xlu0 %6291
    %6293 = vrot.lane.b32.xlu0 %v6121, 20
    %v6294 = vpop.permute.xlu0 %6293
    %6295 = vrot.lane.b32.xlu0 %v6122, 20
    %v6296 = vpop.permute.xlu0 %6295
    %6297 = vrot.lane.b32.xlu0 %v6123, 20
    %v6298 = vpop.permute.xlu0 %6297
    %6299 = vrot.lane.b32.xlu0 %v6124, 20
    %v6300 = vpop.permute.xlu0 %6299
    %6301 = vrot.lane.b32.xlu0 %v6125, 20
    %v6302 = vpop.permute.xlu0 %6301
    %6303 = vrot.lane.b32.xlu0 %v6126, 20
    %v6304 = vpop.permute.xlu0 %6303
    %6305 = vrot.lane.b32.xlu0 %v6127, 20
    %v6306 = vpop.permute.xlu0 %6305
    %6307 = vrot.lane.b32.xlu0 %v6128, 20
    %v6308 = vpop.permute.xlu0 %6307
    %6309 = vrot.lane.b32.xlu0 %v6129, 20
    %v6310 = vpop.permute.xlu0 %6309
    %6311 = vrot.lane.b32.xlu0 %v6130, 20
    %v6312 = vpop.permute.xlu0 %6311
    %6313 = vrot.lane.b32.xlu0 %v6131, 20
    %v6314 = vpop.permute.xlu0 %6313
    %6315 = vrot.lane.b32.xlu0 %v6132, 20
    %v6316 = vpop.permute.xlu0 %6315
    %6317 = vrot.lane.b32.xlu0 %v6133, 20
    %v6318 = vpop.permute.xlu0 %6317
    %6319 = vrot.lane.b32.xlu0 %v6134, 20
    %v6320 = vpop.permute.xlu0 %6319
    %6321 = vrot.lane.b32.xlu0 %v6135, 20
    %v6322 = vpop.permute.xlu0 %6321
    %6323 = vrot.lane.b32.xlu0 %v6136, 20
    %v6324 = vpop.permute.xlu0 %6323
    %6325 = vrot.lane.b32.xlu0 %v6137, 20
    %v6326 = vpop.permute.xlu0 %6325
    %6327 = vrot.lane.b32.xlu0 %v6138, 20
    %v6328 = vpop.permute.xlu0 %6327
    %6329 = vrot.lane.b32.xlu0 %v6139, 20
    %v6330 = vpop.permute.xlu0 %6329
    %6331 = vrot.lane.b32.xlu0 %v6140, 20
    %v6332 = vpop.permute.xlu0 %6331
    %6397 = vst.msk [vmem:[#allocation3] sm:$0xff] %vm2318, %v6206
    %6398 = vst.msk [vmem:[#allocation3 + $0x8] sm:$0xff] %vm2318, %v6208
    %6399 = vst.msk [vmem:[#allocation3 + $0x10] sm:$0xff] %vm2318, %v6210
    %6400 = vst.msk [vmem:[#allocation3 + $0x18] sm:$0xff] %vm2318, %v6212
    %6401 = vst.msk [vmem:[#allocation3 + $0x20] sm:$0xff] %vm2318, %v6214
    %6402 = vst.msk [vmem:[#allocation3 + $0x28] sm:$0xff] %vm2318, %v6216
    %6403 = vst.msk [vmem:[#allocation3 + $0x30] sm:$0xff] %vm2318, %v6218
    %6404 = vst.msk [vmem:[#allocation3 + $0x38] sm:$0xff] %vm2318, %v6220
    %6405 = vst.msk [vmem:[#allocation3 + $0x40] sm:$0xff] %vm2318, %v6222
    %6406 = vst.msk [vmem:[#allocation3 + $0x48] sm:$0xff] %vm2318, %v6224
    %6407 = vst.msk [vmem:[#allocation3 + $0x50] sm:$0xff] %vm2318, %v6226
    %6408 = vst.msk [vmem:[#allocation3 + $0x58] sm:$0xff] %vm2318, %v6228
    %6409 = vst.msk [vmem:[#allocation3 + $0x60] sm:$0xff] %vm2318, %v6230
    %6410 = vst.msk [vmem:[#allocation3 + $0x68] sm:$0xff] %vm2318, %v6232
    %6411 = vst.msk [vmem:[#allocation3 + $0x70] sm:$0xff] %vm2318, %v6234
    %6412 = vst.msk [vmem:[#allocation3 + $0x78] sm:$0xff] %vm2318, %v6236
    %6413 = vst.msk [vmem:[#allocation3 + $0x80] sm:$0xff] %vm2318, %v6238
    %6414 = vst.msk [vmem:[#allocation3 + $0x88] sm:$0xff] %vm2318, %v6240
    %6415 = vst.msk [vmem:[#allocation3 + $0x90] sm:$0xff] %vm2318, %v6242
    %6416 = vst.msk [vmem:[#allocation3 + $0x98] sm:$0xff] %vm2318, %v6244
    %6417 = vst.msk [vmem:[#allocation3 + $0xa0] sm:$0xff] %vm2318, %v6246
    %6418 = vst.msk [vmem:[#allocation3 + $0xa8] sm:$0xff] %vm2318, %v6248
    %6419 = vst.msk [vmem:[#allocation3 + $0xb0] sm:$0xff] %vm2318, %v6250
    %6420 = vst.msk [vmem:[#allocation3 + $0xb8] sm:$0xff] %vm2318, %v6252
    %6421 = vst.msk [vmem:[#allocation3 + $0xc0] sm:$0xff] %vm2318, %v6254
    %6422 = vst.msk [vmem:[#allocation3 + $0xc8] sm:$0xff] %vm2318, %v6256
    %6423 = vst.msk [vmem:[#allocation3 + $0xd0] sm:$0xff] %vm2318, %v6258
    %6424 = vst.msk [vmem:[#allocation3 + $0xd8] sm:$0xff] %vm2318, %v6260
    %6425 = vst.msk [vmem:[#allocation3 + $0xe0] sm:$0xff] %vm2318, %v6262
    %6426 = vst.msk [vmem:[#allocation3 + $0xe8] sm:$0xff] %vm2318, %v6264
    %6427 = vst.msk [vmem:[#allocation3 + $0xf0] sm:$0xff] %vm2318, %v6266
    %6428 = vst.msk [vmem:[#allocation3 + $0xf8] sm:$0xff] %vm2318, %v6268
    %6429 = vst.msk [vmem:[#allocation3 + $0x100] sm:$0xff] %vm2318, %v6270
    %6430 = vst.msk [vmem:[#allocation3 + $0x108] sm:$0xff] %vm2318, %v6272
    %6431 = vst.msk [vmem:[#allocation3 + $0x110] sm:$0xff] %vm2318, %v6274
    %6432 = vst.msk [vmem:[#allocation3 + $0x118] sm:$0xff] %vm2318, %v6276
    %6433 = vst.msk [vmem:[#allocation3 + $0x120] sm:$0xff] %vm2318, %v6278
    %6434 = vst.msk [vmem:[#allocation3 + $0x128] sm:$0xff] %vm2318, %v6280
    %6435 = vst.msk [vmem:[#allocation3 + $0x130] sm:$0xff] %vm2318, %v6282
    %6436 = vst.msk [vmem:[#allocation3 + $0x138] sm:$0xff] %vm2318, %v6284
    %6437 = vst.msk [vmem:[#allocation3 + $0x140] sm:$0xff] %vm2318, %v6286
    %6438 = vst.msk [vmem:[#allocation3 + $0x148] sm:$0xff] %vm2318, %v6288
    %6439 = vst.msk [vmem:[#allocation3 + $0x150] sm:$0xff] %vm2318, %v6290
    %6440 = vst.msk [vmem:[#allocation3 + $0x158] sm:$0xff] %vm2318, %v6292
    %6441 = vst.msk [vmem:[#allocation3 + $0x160] sm:$0xff] %vm2318, %v6294
    %6442 = vst.msk [vmem:[#allocation3 + $0x168] sm:$0xff] %vm2318, %v6296
    %6443 = vst.msk [vmem:[#allocation3 + $0x170] sm:$0xff] %vm2318, %v6298
    %6444 = vst.msk [vmem:[#allocation3 + $0x178] sm:$0xff] %vm2318, %v6300
    %6445 = vst.msk [vmem:[#allocation3 + $0x180] sm:$0xff] %vm2318, %v6302
    %6446 = vst.msk [vmem:[#allocation3 + $0x188] sm:$0xff] %vm2318, %v6304
    %6447 = vst.msk [vmem:[#allocation3 + $0x190] sm:$0xff] %vm2318, %v6306
    %6448 = vst.msk [vmem:[#allocation3 + $0x198] sm:$0xff] %vm2318, %v6308
    %6449 = vst.msk [vmem:[#allocation3 + $0x1a0] sm:$0xff] %vm2318, %v6310
    %6450 = vst.msk [vmem:[#allocation3 + $0x1a8] sm:$0xff] %vm2318, %v6312
    %6451 = vst.msk [vmem:[#allocation3 + $0x1b0] sm:$0xff] %vm2318, %v6314
    %6452 = vst.msk [vmem:[#allocation3 + $0x1b8] sm:$0xff] %vm2318, %v6316
    %6453 = vst.msk [vmem:[#allocation3 + $0x1c0] sm:$0xff] %vm2318, %v6318
    %6454 = vst.msk [vmem:[#allocation3 + $0x1c8] sm:$0xff] %vm2318, %v6320
    %6455 = vst.msk [vmem:[#allocation3 + $0x1d0] sm:$0xff] %vm2318, %v6322
    %6456 = vst.msk [vmem:[#allocation3 + $0x1d8] sm:$0xff] %vm2318, %v6324
    %6457 = vst.msk [vmem:[#allocation3 + $0x1e0] sm:$0xff] %vm2318, %v6326
    %6458 = vst.msk [vmem:[#allocation3 + $0x1e8] sm:$0xff] %vm2318, %v6328
    %6459 = vst.msk [vmem:[#allocation3 + $0x1f0] sm:$0xff] %vm2318, %v6330
    %6460 = vst.msk [vmem:[#allocation3 + $0x1f8] sm:$0xff] %vm2318, %v6332
    %v6461 = vld [vmem:[%s2383] sm:$0xff]
    %v6462 = vld [vmem:[%s2383 + $0x8] sm:$0xff]
    %v6463 = vld [vmem:[%s2383 + $0x18] sm:$0xff]
    %v6464 = vld [vmem:[%s2383 + $0x20] sm:$0xff]
    %v6465 = vld [vmem:[%s2383 + $0x30] sm:$0xff]
    %v6466 = vld [vmem:[%s2383 + $0x38] sm:$0xff]
    %v6467 = vld [vmem:[%s2383 + $0x48] sm:$0xff]
    %v6468 = vld [vmem:[%s2383 + $0x50] sm:$0xff]
    %v6469 = vld [vmem:[%s2383 + $0x60] sm:$0xff]
    %v6470 = vld [vmem:[%s2383 + $0x68] sm:$0xff]
    %v6471 = vld [vmem:[%s2383 + $0x78] sm:$0xff]
    %v6472 = vld [vmem:[%s2383 + $0x80] sm:$0xff]
    %v6473 = vld [vmem:[%s2383 + $0x90] sm:$0xff]
    %v6474 = vld [vmem:[%s2383 + $0x98] sm:$0xff]
    %v6475 = vld [vmem:[%s2383 + $0xa8] sm:$0xff]
    %v6476 = vld [vmem:[%s2383 + $0xb0] sm:$0xff]
    %v6477 = vld [vmem:[%s2383 + $0xc0] sm:$0xff]
    %v6478 = vld [vmem:[%s2383 + $0xc8] sm:$0xff]
    %v6479 = vld [vmem:[%s2383 + $0xd8] sm:$0xff]
    %v6480 = vld [vmem:[%s2383 + $0xe0] sm:$0xff]
    %v6481 = vld [vmem:[%s2383 + $0xf0] sm:$0xff]
    %v6482 = vld [vmem:[%s2383 + $0xf8] sm:$0xff]
    %v6483 = vld [vmem:[%s2383 + $0x108] sm:$0xff]
    %v6484 = vld [vmem:[%s2383 + $0x110] sm:$0xff]
    %v6485 = vld [vmem:[%s2383 + $0x120] sm:$0xff]
    %v6486 = vld [vmem:[%s2383 + $0x128] sm:$0xff]
    %v6487 = vld [vmem:[%s2383 + $0x138] sm:$0xff]
    %v6488 = vld [vmem:[%s2383 + $0x140] sm:$0xff]
    %v6489 = vld [vmem:[%s2383 + $0x150] sm:$0xff]
    %v6490 = vld [vmem:[%s2383 + $0x158] sm:$0xff]
    %v6491 = vld [vmem:[%s2383 + $0x168] sm:$0xff]
    %v6492 = vld [vmem:[%s2383 + $0x170] sm:$0xff]
    %v6493 = vld [vmem:[%s2383 + $0x1b0] sm:$0xff]
    %v6494 = vld [vmem:[%s2383 + $0x1b8] sm:$0xff]
    %v6495 = vld [vmem:[%s2383 + $0x1c8] sm:$0xff]
    %v6496 = vld [vmem:[%s2383 + $0x1d0] sm:$0xff]
    %v6497 = vld [vmem:[%s2383 + $0x1e0] sm:$0xff]
    %v6498 = vld [vmem:[%s2383 + $0x1e8] sm:$0xff]
    %v6499 = vld [vmem:[%s2383 + $0x1f8] sm:$0xff]
    %v6500 = vld [vmem:[%s2383 + $0x200] sm:$0xff]
    %v6501 = vld [vmem:[%s2383 + $0x210] sm:$0xff]
    %v6502 = vld [vmem:[%s2383 + $0x218] sm:$0xff]
    %v6503 = vld [vmem:[%s2383 + $0x228] sm:$0xff]
    %v6504 = vld [vmem:[%s2383 + $0x230] sm:$0xff]
    %v6505 = vld [vmem:[%s2383 + $0x240] sm:$0xff]
    %v6506 = vld [vmem:[%s2383 + $0x248] sm:$0xff]
    %v6507 = vld [vmem:[%s2383 + $0x258] sm:$0xff]
    %v6508 = vld [vmem:[%s2383 + $0x260] sm:$0xff]
    %v6509 = vld [vmem:[%s2383 + $0x270] sm:$0xff]
    %v6510 = vld [vmem:[%s2383 + $0x278] sm:$0xff]
    %v6511 = vld [vmem:[%s2383 + $0x288] sm:$0xff]
    %v6512 = vld [vmem:[%s2383 + $0x290] sm:$0xff]
    %v6513 = vld [vmem:[%s2383 + $0x2a0] sm:$0xff]
    %v6514 = vld [vmem:[%s2383 + $0x2a8] sm:$0xff]
    %v6515 = vld [vmem:[%s2383 + $0x2b8] sm:$0xff]
    %v6516 = vld [vmem:[%s2383 + $0x2c0] sm:$0xff]
    %v6517 = vld [vmem:[%s2383 + $0x2d0] sm:$0xff]
    %v6518 = vld [vmem:[%s2383 + $0x2d8] sm:$0xff]
    %v6519 = vld [vmem:[%s2383 + $0x2e8] sm:$0xff]
    %v6520 = vld [vmem:[%s2383 + $0x2f0] sm:$0xff]
    %v6521 = vld [vmem:[%s2383 + $0x300] sm:$0xff]
    %v6522 = vld [vmem:[%s2383 + $0x308] sm:$0xff]
    %v6523 = vld [vmem:[%s2383 + $0x318] sm:$0xff]
    %v6524 = vld [vmem:[%s2383 + $0x320] sm:$0xff]
    %6589 = vrot.lane.b32.xlu0 %v6461, 24
    %v6590 = vpop.permute.xlu0 %6589
    %6591 = vrot.lane.b32.xlu0 %v6462, 24
    %v6592 = vpop.permute.xlu0 %6591
    %6593 = vrot.lane.b32.xlu0 %v6463, 24
    %v6594 = vpop.permute.xlu0 %6593
    %6595 = vrot.lane.b32.xlu0 %v6464, 24
    %v6596 = vpop.permute.xlu0 %6595
    %6597 = vrot.lane.b32.xlu0 %v6465, 24
    %v6598 = vpop.permute.xlu0 %6597
    %6599 = vrot.lane.b32.xlu0 %v6466, 24
    %v6600 = vpop.permute.xlu0 %6599
    %6601 = vrot.lane.b32.xlu0 %v6467, 24
    %v6602 = vpop.permute.xlu0 %6601
    %6603 = vrot.lane.b32.xlu0 %v6468, 24
    %v6604 = vpop.permute.xlu0 %6603
    %6605 = vrot.lane.b32.xlu0 %v6469, 24
    %v6606 = vpop.permute.xlu0 %6605
    %6607 = vrot.lane.b32.xlu0 %v6470, 24
    %v6608 = vpop.permute.xlu0 %6607
    %6609 = vrot.lane.b32.xlu0 %v6471, 24
    %v6610 = vpop.permute.xlu0 %6609
    %6611 = vrot.lane.b32.xlu0 %v6472, 24
    %v6612 = vpop.permute.xlu0 %6611
    %6613 = vrot.lane.b32.xlu0 %v6473, 24
    %v6614 = vpop.permute.xlu0 %6613
    %6615 = vrot.lane.b32.xlu0 %v6474, 24
    %v6616 = vpop.permute.xlu0 %6615
    %6617 = vrot.lane.b32.xlu0 %v6475, 24
    %v6618 = vpop.permute.xlu0 %6617
    %6619 = vrot.lane.b32.xlu0 %v6476, 24
    %v6620 = vpop.permute.xlu0 %6619
    %6621 = vrot.lane.b32.xlu0 %v6477, 24
    %v6622 = vpop.permute.xlu0 %6621
    %6623 = vrot.lane.b32.xlu0 %v6478, 24
    %v6624 = vpop.permute.xlu0 %6623
    %6625 = vrot.lane.b32.xlu0 %v6479, 24
    %v6626 = vpop.permute.xlu0 %6625
    %6627 = vrot.lane.b32.xlu0 %v6480, 24
    %v6628 = vpop.permute.xlu0 %6627
    %6629 = vrot.lane.b32.xlu0 %v6481, 24
    %v6630 = vpop.permute.xlu0 %6629
    %6631 = vrot.lane.b32.xlu0 %v6482, 24
    %v6632 = vpop.permute.xlu0 %6631
    %6633 = vrot.lane.b32.xlu0 %v6483, 24
    %v6634 = vpop.permute.xlu0 %6633
    %6635 = vrot.lane.b32.xlu0 %v6484, 24
    %v6636 = vpop.permute.xlu0 %6635
    %6637 = vrot.lane.b32.xlu0 %v6485, 24
    %v6638 = vpop.permute.xlu0 %6637
    %6639 = vrot.lane.b32.xlu0 %v6486, 24
    %v6640 = vpop.permute.xlu0 %6639
    %6641 = vrot.lane.b32.xlu0 %v6487, 24
    %v6642 = vpop.permute.xlu0 %6641
    %6643 = vrot.lane.b32.xlu0 %v6488, 24
    %v6644 = vpop.permute.xlu0 %6643
    %6645 = vrot.lane.b32.xlu0 %v6489, 24
    %v6646 = vpop.permute.xlu0 %6645
    %6647 = vrot.lane.b32.xlu0 %v6490, 24
    %v6648 = vpop.permute.xlu0 %6647
    %6649 = vrot.lane.b32.xlu0 %v6491, 24
    %v6650 = vpop.permute.xlu0 %6649
    %6651 = vrot.lane.b32.xlu0 %v6492, 24
    %v6652 = vpop.permute.xlu0 %6651
    %6653 = vrot.lane.b32.xlu0 %v6493, 24
    %v6654 = vpop.permute.xlu0 %6653
    %6655 = vrot.lane.b32.xlu0 %v6494, 24
    %v6656 = vpop.permute.xlu0 %6655
    %6657 = vrot.lane.b32.xlu0 %v6495, 24
    %v6658 = vpop.permute.xlu0 %6657
    %6659 = vrot.lane.b32.xlu0 %v6496, 24
    %v6660 = vpop.permute.xlu0 %6659
    %6661 = vrot.lane.b32.xlu0 %v6497, 24
    %v6662 = vpop.permute.xlu0 %6661
    %6663 = vrot.lane.b32.xlu0 %v6498, 24
    %v6664 = vpop.permute.xlu0 %6663
    %6665 = vrot.lane.b32.xlu0 %v6499, 24
    %v6666 = vpop.permute.xlu0 %6665
    %6667 = vrot.lane.b32.xlu0 %v6500, 24
    %v6668 = vpop.permute.xlu0 %6667
    %6669 = vrot.lane.b32.xlu0 %v6501, 24
    %v6670 = vpop.permute.xlu0 %6669
    %6671 = vrot.lane.b32.xlu0 %v6502, 24
    %v6672 = vpop.permute.xlu0 %6671
    %6673 = vrot.lane.b32.xlu0 %v6503, 24
    %v6674 = vpop.permute.xlu0 %6673
    %6675 = vrot.lane.b32.xlu0 %v6504, 24
    %v6676 = vpop.permute.xlu0 %6675
    %6677 = vrot.lane.b32.xlu0 %v6505, 24
    %v6678 = vpop.permute.xlu0 %6677
    %6679 = vrot.lane.b32.xlu0 %v6506, 24
    %v6680 = vpop.permute.xlu0 %6679
    %6681 = vrot.lane.b32.xlu0 %v6507, 24
    %v6682 = vpop.permute.xlu0 %6681
    %6683 = vrot.lane.b32.xlu0 %v6508, 24
    %v6684 = vpop.permute.xlu0 %6683
    %6685 = vrot.lane.b32.xlu0 %v6509, 24
    %v6686 = vpop.permute.xlu0 %6685
    %6687 = vrot.lane.b32.xlu0 %v6510, 24
    %v6688 = vpop.permute.xlu0 %6687
    %6689 = vrot.lane.b32.xlu0 %v6511, 24
    %v6690 = vpop.permute.xlu0 %6689
    %6691 = vrot.lane.b32.xlu0 %v6512, 24
    %v6692 = vpop.permute.xlu0 %6691
    %6693 = vrot.lane.b32.xlu0 %v6513, 24
    %v6694 = vpop.permute.xlu0 %6693
    %6695 = vrot.lane.b32.xlu0 %v6514, 24
    %v6696 = vpop.permute.xlu0 %6695
    %6697 = vrot.lane.b32.xlu0 %v6515, 24
    %v6698 = vpop.permute.xlu0 %6697
    %6699 = vrot.lane.b32.xlu0 %v6516, 24
    %v6700 = vpop.permute.xlu0 %6699
    %6701 = vrot.lane.b32.xlu0 %v6517, 24
    %v6702 = vpop.permute.xlu0 %6701
    %6703 = vrot.lane.b32.xlu0 %v6518, 24
    %v6704 = vpop.permute.xlu0 %6703
    %6705 = vrot.lane.b32.xlu0 %v6519, 24
    %v6706 = vpop.permute.xlu0 %6705
    %6707 = vrot.lane.b32.xlu0 %v6520, 24
    %v6708 = vpop.permute.xlu0 %6707
    %6709 = vrot.lane.b32.xlu0 %v6521, 24
    %v6710 = vpop.permute.xlu0 %6709
    %6711 = vrot.lane.b32.xlu0 %v6522, 24
    %v6712 = vpop.permute.xlu0 %6711
    %6713 = vrot.lane.b32.xlu0 %v6523, 24
    %v6714 = vpop.permute.xlu0 %6713
    %6715 = vrot.lane.b32.xlu0 %v6524, 24
    %v6716 = vpop.permute.xlu0 %6715
    %6781 = vst.msk [vmem:[#allocation3] sm:$0xff] %vm2704, %v6590
    %6782 = vst.msk [vmem:[#allocation3 + $0x8] sm:$0xff] %vm2704, %v6592
    %6783 = vst.msk [vmem:[#allocation3 + $0x10] sm:$0xff] %vm2704, %v6594
    %6784 = vst.msk [vmem:[#allocation3 + $0x18] sm:$0xff] %vm2704, %v6596
    %6785 = vst.msk [vmem:[#allocation3 + $0x20] sm:$0xff] %vm2704, %v6598
    %6786 = vst.msk [vmem:[#allocation3 + $0x28] sm:$0xff] %vm2704, %v6600
    %6787 = vst.msk [vmem:[#allocation3 + $0x30] sm:$0xff] %vm2704, %v6602
    %6788 = vst.msk [vmem:[#allocation3 + $0x38] sm:$0xff] %vm2704, %v6604
    %6789 = vst.msk [vmem:[#allocation3 + $0x40] sm:$0xff] %vm2704, %v6606
    %6790 = vst.msk [vmem:[#allocation3 + $0x48] sm:$0xff] %vm2704, %v6608
    %6791 = vst.msk [vmem:[#allocation3 + $0x50] sm:$0xff] %vm2704, %v6610
    %6792 = vst.msk [vmem:[#allocation3 + $0x58] sm:$0xff] %vm2704, %v6612
    %6793 = vst.msk [vmem:[#allocation3 + $0x60] sm:$0xff] %vm2704, %v6614
    %6794 = vst.msk [vmem:[#allocation3 + $0x68] sm:$0xff] %vm2704, %v6616
    %6795 = vst.msk [vmem:[#allocation3 + $0x70] sm:$0xff] %vm2704, %v6618
    %6796 = vst.msk [vmem:[#allocation3 + $0x78] sm:$0xff] %vm2704, %v6620
    %6797 = vst.msk [vmem:[#allocation3 + $0x80] sm:$0xff] %vm2704, %v6622
    %6798 = vst.msk [vmem:[#allocation3 + $0x88] sm:$0xff] %vm2704, %v6624
    %6799 = vst.msk [vmem:[#allocation3 + $0x90] sm:$0xff] %vm2704, %v6626
    %6800 = vst.msk [vmem:[#allocation3 + $0x98] sm:$0xff] %vm2704, %v6628
    %6801 = vst.msk [vmem:[#allocation3 + $0xa0] sm:$0xff] %vm2704, %v6630
    %6802 = vst.msk [vmem:[#allocation3 + $0xa8] sm:$0xff] %vm2704, %v6632
    %6803 = vst.msk [vmem:[#allocation3 + $0xb0] sm:$0xff] %vm2704, %v6634
    %6804 = vst.msk [vmem:[#allocation3 + $0xb8] sm:$0xff] %vm2704, %v6636
    %6805 = vst.msk [vmem:[#allocation3 + $0xc0] sm:$0xff] %vm2704, %v6638
    %6806 = vst.msk [vmem:[#allocation3 + $0xc8] sm:$0xff] %vm2704, %v6640
    %6807 = vst.msk [vmem:[#allocation3 + $0xd0] sm:$0xff] %vm2704, %v6642
    %6808 = vst.msk [vmem:[#allocation3 + $0xd8] sm:$0xff] %vm2704, %v6644
    %6809 = vst.msk [vmem:[#allocation3 + $0xe0] sm:$0xff] %vm2704, %v6646
    %6810 = vst.msk [vmem:[#allocation3 + $0xe8] sm:$0xff] %vm2704, %v6648
    %6811 = vst.msk [vmem:[#allocation3 + $0xf0] sm:$0xff] %vm2704, %v6650
    %6812 = vst.msk [vmem:[#allocation3 + $0xf8] sm:$0xff] %vm2704, %v6652
    %6813 = vst.msk [vmem:[#allocation3 + $0x100] sm:$0xff] %vm2704, %v6654
    %6814 = vst.msk [vmem:[#allocation3 + $0x108] sm:$0xff] %vm2704, %v6656
    %6815 = vst.msk [vmem:[#allocation3 + $0x110] sm:$0xff] %vm2704, %v6658
    %6816 = vst.msk [vmem:[#allocation3 + $0x118] sm:$0xff] %vm2704, %v6660
    %6817 = vst.msk [vmem:[#allocation3 + $0x120] sm:$0xff] %vm2704, %v6662
    %6818 = vst.msk [vmem:[#allocation3 + $0x128] sm:$0xff] %vm2704, %v6664
    %6819 = vst.msk [vmem:[#allocation3 + $0x130] sm:$0xff] %vm2704, %v6666
    %6820 = vst.msk [vmem:[#allocation3 + $0x138] sm:$0xff] %vm2704, %v6668
    %6821 = vst.msk [vmem:[#allocation3 + $0x140] sm:$0xff] %vm2704, %v6670
    %6822 = vst.msk [vmem:[#allocation3 + $0x148] sm:$0xff] %vm2704, %v6672
    %6823 = vst.msk [vmem:[#allocation3 + $0x150] sm:$0xff] %vm2704, %v6674
    %6824 = vst.msk [vmem:[#allocation3 + $0x158] sm:$0xff] %vm2704, %v6676
    %6825 = vst.msk [vmem:[#allocation3 + $0x160] sm:$0xff] %vm2704, %v6678
    %6826 = vst.msk [vmem:[#allocation3 + $0x168] sm:$0xff] %vm2704, %v6680
    %6827 = vst.msk [vmem:[#allocation3 + $0x170] sm:$0xff] %vm2704, %v6682
    %6828 = vst.msk [vmem:[#allocation3 + $0x178] sm:$0xff] %vm2704, %v6684
    %6829 = vst.msk [vmem:[#allocation3 + $0x180] sm:$0xff] %vm2704, %v6686
    %6830 = vst.msk [vmem:[#allocation3 + $0x188] sm:$0xff] %vm2704, %v6688
    %6831 = vst.msk [vmem:[#allocation3 + $0x190] sm:$0xff] %vm2704, %v6690
    %6832 = vst.msk [vmem:[#allocation3 + $0x198] sm:$0xff] %vm2704, %v6692
    %6833 = vst.msk [vmem:[#allocation3 + $0x1a0] sm:$0xff] %vm2704, %v6694
    %6834 = vst.msk [vmem:[#allocation3 + $0x1a8] sm:$0xff] %vm2704, %v6696
    %6835 = vst.msk [vmem:[#allocation3 + $0x1b0] sm:$0xff] %vm2704, %v6698
    %6836 = vst.msk [vmem:[#allocation3 + $0x1b8] sm:$0xff] %vm2704, %v6700
    %6837 = vst.msk [vmem:[#allocation3 + $0x1c0] sm:$0xff] %vm2704, %v6702
    %6838 = vst.msk [vmem:[#allocation3 + $0x1c8] sm:$0xff] %vm2704, %v6704
    %6839 = vst.msk [vmem:[#allocation3 + $0x1d0] sm:$0xff] %vm2704, %v6706
    %6840 = vst.msk [vmem:[#allocation3 + $0x1d8] sm:$0xff] %vm2704, %v6708
    %6841 = vst.msk [vmem:[#allocation3 + $0x1e0] sm:$0xff] %vm2704, %v6710
    %6842 = vst.msk [vmem:[#allocation3 + $0x1e8] sm:$0xff] %vm2704, %v6712
    %6843 = vst.msk [vmem:[#allocation3 + $0x1f0] sm:$0xff] %vm2704, %v6714
    %6844 = vst.msk [vmem:[#allocation3 + $0x1f8] sm:$0xff] %vm2704, %v6716
    %v6845 = vld [vmem:[%s2383 + $0x1] sm:$0xff]
    %v6846 = vld [vmem:[%s2383 + $0x9] sm:$0xff]
    %v6847 = vld [vmem:[%s2383 + $0x19] sm:$0xff]
    %v6848 = vld [vmem:[%s2383 + $0x21] sm:$0xff]
    %v6849 = vld [vmem:[%s2383 + $0x31] sm:$0xff]
    %v6850 = vld [vmem:[%s2383 + $0x39] sm:$0xff]
    %v6851 = vld [vmem:[%s2383 + $0x49] sm:$0xff]
    %v6852 = vld [vmem:[%s2383 + $0x51] sm:$0xff]
    %v6853 = vld [vmem:[%s2383 + $0x61] sm:$0xff]
    %v6854 = vld [vmem:[%s2383 + $0x69] sm:$0xff]
    %v6855 = vld [vmem:[%s2383 + $0x79] sm:$0xff]
    %v6856 = vld [vmem:[%s2383 + $0x81] sm:$0xff]
    %v6857 = vld [vmem:[%s2383 + $0x91] sm:$0xff]
    %v6858 = vld [vmem:[%s2383 + $0x99] sm:$0xff]
    %v6859 = vld [vmem:[%s2383 + $0xa9] sm:$0xff]
    %v6860 = vld [vmem:[%s2383 + $0xb1] sm:$0xff]
    %v6861 = vld [vmem:[%s2383 + $0xc1] sm:$0xff]
    %v6862 = vld [vmem:[%s2383 + $0xc9] sm:$0xff]
    %v6863 = vld [vmem:[%s2383 + $0xd9] sm:$0xff]
    %v6864 = vld [vmem:[%s2383 + $0xe1] sm:$0xff]
    %v6865 = vld [vmem:[%s2383 + $0xf1] sm:$0xff]
    %v6866 = vld [vmem:[%s2383 + $0xf9] sm:$0xff]
    %v6867 = vld [vmem:[%s2383 + $0x109] sm:$0xff]
    %v6868 = vld [vmem:[%s2383 + $0x111] sm:$0xff]
    %v6869 = vld [vmem:[%s2383 + $0x121] sm:$0xff]
    %v6870 = vld [vmem:[%s2383 + $0x129] sm:$0xff]
    %v6871 = vld [vmem:[%s2383 + $0x139] sm:$0xff]
    %v6872 = vld [vmem:[%s2383 + $0x141] sm:$0xff]
    %v6873 = vld [vmem:[%s2383 + $0x151] sm:$0xff]
    %v6874 = vld [vmem:[%s2383 + $0x159] sm:$0xff]
    %v6875 = vld [vmem:[%s2383 + $0x169] sm:$0xff]
    %v6876 = vld [vmem:[%s2383 + $0x171] sm:$0xff]
    %v6877 = vld [vmem:[%s2383 + $0x1b1] sm:$0xff]
    %v6878 = vld [vmem:[%s2383 + $0x1b9] sm:$0xff]
    %v6879 = vld [vmem:[%s2383 + $0x1c9] sm:$0xff]
    %v6880 = vld [vmem:[%s2383 + $0x1d1] sm:$0xff]
    %v6881 = vld [vmem:[%s2383 + $0x1e1] sm:$0xff]
    %v6882 = vld [vmem:[%s2383 + $0x1e9] sm:$0xff]
    %v6883 = vld [vmem:[%s2383 + $0x1f9] sm:$0xff]
    %v6884 = vld [vmem:[%s2383 + $0x201] sm:$0xff]
    %v6885 = vld [vmem:[%s2383 + $0x211] sm:$0xff]
    %v6886 = vld [vmem:[%s2383 + $0x219] sm:$0xff]
    %v6887 = vld [vmem:[%s2383 + $0x229] sm:$0xff]
    %v6888 = vld [vmem:[%s2383 + $0x231] sm:$0xff]
    %v6889 = vld [vmem:[%s2383 + $0x241] sm:$0xff]
    %v6890 = vld [vmem:[%s2383 + $0x249] sm:$0xff]
    %v6891 = vld [vmem:[%s2383 + $0x259] sm:$0xff]
    %v6892 = vld [vmem:[%s2383 + $0x261] sm:$0xff]
    %v6893 = vld [vmem:[%s2383 + $0x271] sm:$0xff]
    %v6894 = vld [vmem:[%s2383 + $0x279] sm:$0xff]
    %v6895 = vld [vmem:[%s2383 + $0x289] sm:$0xff]
    %v6896 = vld [vmem:[%s2383 + $0x291] sm:$0xff]
    %v6897 = vld [vmem:[%s2383 + $0x2a1] sm:$0xff]
    %v6898 = vld [vmem:[%s2383 + $0x2a9] sm:$0xff]
    %v6899 = vld [vmem:[%s2383 + $0x2b9] sm:$0xff]
    %v6900 = vld [vmem:[%s2383 + $0x2c1] sm:$0xff]
    %v6901 = vld [vmem:[%s2383 + $0x2d1] sm:$0xff]
    %v6902 = vld [vmem:[%s2383 + $0x2d9] sm:$0xff]
    %v6903 = vld [vmem:[%s2383 + $0x2e9] sm:$0xff]
    %v6904 = vld [vmem:[%s2383 + $0x2f1] sm:$0xff]
    %v6905 = vld [vmem:[%s2383 + $0x301] sm:$0xff]
    %v6906 = vld [vmem:[%s2383 + $0x309] sm:$0xff]
    %v6907 = vld [vmem:[%s2383 + $0x319] sm:$0xff]
    %v6908 = vld [vmem:[%s2383 + $0x321] sm:$0xff]
    %6973 = vrot.lane.b32.xlu0 %v6845, 28
    %v6974 = vpop.permute.xlu0 %6973
    %6975 = vrot.lane.b32.xlu0 %v6846, 28
    %v6976 = vpop.permute.xlu0 %6975
    %6977 = vrot.lane.b32.xlu0 %v6847, 28
    %v6978 = vpop.permute.xlu0 %6977
    %6979 = vrot.lane.b32.xlu0 %v6848, 28
    %v6980 = vpop.permute.xlu0 %6979
    %6981 = vrot.lane.b32.xlu0 %v6849, 28
    %v6982 = vpop.permute.xlu0 %6981
    %6983 = vrot.lane.b32.xlu0 %v6850, 28
    %v6984 = vpop.permute.xlu0 %6983
    %6985 = vrot.lane.b32.xlu0 %v6851, 28
    %v6986 = vpop.permute.xlu0 %6985
    %6987 = vrot.lane.b32.xlu0 %v6852, 28
    %v6988 = vpop.permute.xlu0 %6987
    %6989 = vrot.lane.b32.xlu0 %v6853, 28
    %v6990 = vpop.permute.xlu0 %6989
    %6991 = vrot.lane.b32.xlu0 %v6854, 28
    %v6992 = vpop.permute.xlu0 %6991
    %6993 = vrot.lane.b32.xlu0 %v6855, 28
    %v6994 = vpop.permute.xlu0 %6993
    %6995 = vrot.lane.b32.xlu0 %v6856, 28
    %v6996 = vpop.permute.xlu0 %6995
    %6997 = vrot.lane.b32.xlu0 %v6857, 28
    %v6998 = vpop.permute.xlu0 %6997
    %6999 = vrot.lane.b32.xlu0 %v6858, 28
    %v7000 = vpop.permute.xlu0 %6999
    %7001 = vrot.lane.b32.xlu0 %v6859, 28
    %v7002 = vpop.permute.xlu0 %7001
    %7003 = vrot.lane.b32.xlu0 %v6860, 28
    %v7004 = vpop.permute.xlu0 %7003
    %7005 = vrot.lane.b32.xlu0 %v6861, 28
    %v7006 = vpop.permute.xlu0 %7005
    %7007 = vrot.lane.b32.xlu0 %v6862, 28
    %v7008 = vpop.permute.xlu0 %7007
    %7009 = vrot.lane.b32.xlu0 %v6863, 28
    %v7010 = vpop.permute.xlu0 %7009
    %7011 = vrot.lane.b32.xlu0 %v6864, 28
    %v7012 = vpop.permute.xlu0 %7011
    %7013 = vrot.lane.b32.xlu0 %v6865, 28
    %v7014 = vpop.permute.xlu0 %7013
    %7015 = vrot.lane.b32.xlu0 %v6866, 28
    %v7016 = vpop.permute.xlu0 %7015
    %7017 = vrot.lane.b32.xlu0 %v6867, 28
    %v7018 = vpop.permute.xlu0 %7017
    %7019 = vrot.lane.b32.xlu0 %v6868, 28
    %v7020 = vpop.permute.xlu0 %7019
    %7021 = vrot.lane.b32.xlu0 %v6869, 28
    %v7022 = vpop.permute.xlu0 %7021
    %7023 = vrot.lane.b32.xlu0 %v6870, 28
    %v7024 = vpop.permute.xlu0 %7023
    %7025 = vrot.lane.b32.xlu0 %v6871, 28
    %v7026 = vpop.permute.xlu0 %7025
    %7027 = vrot.lane.b32.xlu0 %v6872, 28
    %v7028 = vpop.permute.xlu0 %7027
    %7029 = vrot.lane.b32.xlu0 %v6873, 28
    %v7030 = vpop.permute.xlu0 %7029
    %7031 = vrot.lane.b32.xlu0 %v6874, 28
    %v7032 = vpop.permute.xlu0 %7031
    %7033 = vrot.lane.b32.xlu0 %v6875, 28
    %v7034 = vpop.permute.xlu0 %7033
    %7035 = vrot.lane.b32.xlu0 %v6876, 28
    %v7036 = vpop.permute.xlu0 %7035
    %7037 = vrot.lane.b32.xlu0 %v6877, 28
    %v7038 = vpop.permute.xlu0 %7037
    %7039 = vrot.lane.b32.xlu0 %v6878, 28
    %v7040 = vpop.permute.xlu0 %7039
    %7041 = vrot.lane.b32.xlu0 %v6879, 28
    %v7042 = vpop.permute.xlu0 %7041
    %7043 = vrot.lane.b32.xlu0 %v6880, 28
    %v7044 = vpop.permute.xlu0 %7043
    %7045 = vrot.lane.b32.xlu0 %v6881, 28
    %v7046 = vpop.permute.xlu0 %7045
    %7047 = vrot.lane.b32.xlu0 %v6882, 28
    %v7048 = vpop.permute.xlu0 %7047
    %7049 = vrot.lane.b32.xlu0 %v6883, 28
    %v7050 = vpop.permute.xlu0 %7049
    %7051 = vrot.lane.b32.xlu0 %v6884, 28
    %v7052 = vpop.permute.xlu0 %7051
    %7053 = vrot.lane.b32.xlu0 %v6885, 28
    %v7054 = vpop.permute.xlu0 %7053
    %7055 = vrot.lane.b32.xlu0 %v6886, 28
    %v7056 = vpop.permute.xlu0 %7055
    %7057 = vrot.lane.b32.xlu0 %v6887, 28
    %v7058 = vpop.permute.xlu0 %7057
    %7059 = vrot.lane.b32.xlu0 %v6888, 28
    %v7060 = vpop.permute.xlu0 %7059
    %7061 = vrot.lane.b32.xlu0 %v6889, 28
    %v7062 = vpop.permute.xlu0 %7061
    %7063 = vrot.lane.b32.xlu0 %v6890, 28
    %v7064 = vpop.permute.xlu0 %7063
    %7065 = vrot.lane.b32.xlu0 %v6891, 28
    %v7066 = vpop.permute.xlu0 %7065
    %7067 = vrot.lane.b32.xlu0 %v6892, 28
    %v7068 = vpop.permute.xlu0 %7067
    %7069 = vrot.lane.b32.xlu0 %v6893, 28
    %v7070 = vpop.permute.xlu0 %7069
    %7071 = vrot.lane.b32.xlu0 %v6894, 28
    %v7072 = vpop.permute.xlu0 %7071
    %7073 = vrot.lane.b32.xlu0 %v6895, 28
    %v7074 = vpop.permute.xlu0 %7073
    %7075 = vrot.lane.b32.xlu0 %v6896, 28
    %v7076 = vpop.permute.xlu0 %7075
    %7077 = vrot.lane.b32.xlu0 %v6897, 28
    %v7078 = vpop.permute.xlu0 %7077
    %7079 = vrot.lane.b32.xlu0 %v6898, 28
    %v7080 = vpop.permute.xlu0 %7079
    %7081 = vrot.lane.b32.xlu0 %v6899, 28
    %v7082 = vpop.permute.xlu0 %7081
    %7083 = vrot.lane.b32.xlu0 %v6900, 28
    %v7084 = vpop.permute.xlu0 %7083
    %7085 = vrot.lane.b32.xlu0 %v6901, 28
    %v7086 = vpop.permute.xlu0 %7085
    %7087 = vrot.lane.b32.xlu0 %v6902, 28
    %v7088 = vpop.permute.xlu0 %7087
    %7089 = vrot.lane.b32.xlu0 %v6903, 28
    %v7090 = vpop.permute.xlu0 %7089
    %7091 = vrot.lane.b32.xlu0 %v6904, 28
    %v7092 = vpop.permute.xlu0 %7091
    %7093 = vrot.lane.b32.xlu0 %v6905, 28
    %v7094 = vpop.permute.xlu0 %7093
    %7095 = vrot.lane.b32.xlu0 %v6906, 28
    %v7096 = vpop.permute.xlu0 %7095
    %7097 = vrot.lane.b32.xlu0 %v6907, 28
    %v7098 = vpop.permute.xlu0 %7097
    %7099 = vrot.lane.b32.xlu0 %v6908, 28
    %v7100 = vpop.permute.xlu0 %7099
    %7165 = vst.msk [vmem:[#allocation3] sm:$0xff] %vm3089, %v6974
    %7166 = vst.msk [vmem:[#allocation3 + $0x8] sm:$0xff] %vm3089, %v6976
    %7167 = vst.msk [vmem:[#allocation3 + $0x10] sm:$0xff] %vm3089, %v6978
    %7168 = vst.msk [vmem:[#allocation3 + $0x18] sm:$0xff] %vm3089, %v6980
    %7169 = vst.msk [vmem:[#allocation3 + $0x20] sm:$0xff] %vm3089, %v6982
    %7170 = vst.msk [vmem:[#allocation3 + $0x28] sm:$0xff] %vm3089, %v6984
    %7171 = vst.msk [vmem:[#allocation3 + $0x30] sm:$0xff] %vm3089, %v6986
    %7172 = vst.msk [vmem:[#allocation3 + $0x38] sm:$0xff] %vm3089, %v6988
    %7173 = vst.msk [vmem:[#allocation3 + $0x40] sm:$0xff] %vm3089, %v6990
    %7174 = vst.msk [vmem:[#allocation3 + $0x48] sm:$0xff] %vm3089, %v6992
    %7175 = vst.msk [vmem:[#allocation3 + $0x50] sm:$0xff] %vm3089, %v6994
    %7176 = vst.msk [vmem:[#allocation3 + $0x58] sm:$0xff] %vm3089, %v6996
    %7177 = vst.msk [vmem:[#allocation3 + $0x60] sm:$0xff] %vm3089, %v6998
    %7178 = vst.msk [vmem:[#allocation3 + $0x68] sm:$0xff] %vm3089, %v7000
    %7179 = vst.msk [vmem:[#allocation3 + $0x70] sm:$0xff] %vm3089, %v7002
    %7180 = vst.msk [vmem:[#allocation3 + $0x78] sm:$0xff] %vm3089, %v7004
    %7181 = vst.msk [vmem:[#allocation3 + $0x80] sm:$0xff] %vm3089, %v7006
    %7182 = vst.msk [vmem:[#allocation3 + $0x88] sm:$0xff] %vm3089, %v7008
    %7183 = vst.msk [vmem:[#allocation3 + $0x90] sm:$0xff] %vm3089, %v7010
    %7184 = vst.msk [vmem:[#allocation3 + $0x98] sm:$0xff] %vm3089, %v7012
    %7185 = vst.msk [vmem:[#allocation3 + $0xa0] sm:$0xff] %vm3089, %v7014
    %7186 = vst.msk [vmem:[#allocation3 + $0xa8] sm:$0xff] %vm3089, %v7016
    %7187 = vst.msk [vmem:[#allocation3 + $0xb0] sm:$0xff] %vm3089, %v7018
    %7188 = vst.msk [vmem:[#allocation3 + $0xb8] sm:$0xff] %vm3089, %v7020
    %7189 = vst.msk [vmem:[#allocation3 + $0xc0] sm:$0xff] %vm3089, %v7022
    %7190 = vst.msk [vmem:[#allocation3 + $0xc8] sm:$0xff] %vm3089, %v7024
    %7191 = vst.msk [vmem:[#allocation3 + $0xd0] sm:$0xff] %vm3089, %v7026
    %7192 = vst.msk [vmem:[#allocation3 + $0xd8] sm:$0xff] %vm3089, %v7028
    %7193 = vst.msk [vmem:[#allocation3 + $0xe0] sm:$0xff] %vm3089, %v7030
    %7194 = vst.msk [vmem:[#allocation3 + $0xe8] sm:$0xff] %vm3089, %v7032
    %7195 = vst.msk [vmem:[#allocation3 + $0xf0] sm:$0xff] %vm3089, %v7034
    %7196 = vst.msk [vmem:[#allocation3 + $0xf8] sm:$0xff] %vm3089, %v7036
    %7197 = vst.msk [vmem:[#allocation3 + $0x100] sm:$0xff] %vm3089, %v7038
    %7198 = vst.msk [vmem:[#allocation3 + $0x108] sm:$0xff] %vm3089, %v7040
    %7199 = vst.msk [vmem:[#allocation3 + $0x110] sm:$0xff] %vm3089, %v7042
    %7200 = vst.msk [vmem:[#allocation3 + $0x118] sm:$0xff] %vm3089, %v7044
    %7201 = vst.msk [vmem:[#allocation3 + $0x120] sm:$0xff] %vm3089, %v7046
    %7202 = vst.msk [vmem:[#allocation3 + $0x128] sm:$0xff] %vm3089, %v7048
    %7203 = vst.msk [vmem:[#allocation3 + $0x130] sm:$0xff] %vm3089, %v7050
    %7204 = vst.msk [vmem:[#allocation3 + $0x138] sm:$0xff] %vm3089, %v7052
    %7205 = vst.msk [vmem:[#allocation3 + $0x140] sm:$0xff] %vm3089, %v7054
    %7206 = vst.msk [vmem:[#allocation3 + $0x148] sm:$0xff] %vm3089, %v7056
    %7207 = vst.msk [vmem:[#allocation3 + $0x150] sm:$0xff] %vm3089, %v7058
    %7208 = vst.msk [vmem:[#allocation3 + $0x158] sm:$0xff] %vm3089, %v7060
    %7209 = vst.msk [vmem:[#allocation3 + $0x160] sm:$0xff] %vm3089, %v7062
    %7210 = vst.msk [vmem:[#allocation3 + $0x168] sm:$0xff] %vm3089, %v7064
    %7211 = vst.msk [vmem:[#allocation3 + $0x170] sm:$0xff] %vm3089, %v7066
    %7212 = vst.msk [vmem:[#allocation3 + $0x178] sm:$0xff] %vm3089, %v7068
    %7213 = vst.msk [vmem:[#allocation3 + $0x180] sm:$0xff] %vm3089, %v7070
    %7214 = vst.msk [vmem:[#allocation3 + $0x188] sm:$0xff] %vm3089, %v7072
    %7215 = vst.msk [vmem:[#allocation3 + $0x190] sm:$0xff] %vm3089, %v7074
    %7216 = vst.msk [vmem:[#allocation3 + $0x198] sm:$0xff] %vm3089, %v7076
    %7217 = vst.msk [vmem:[#allocation3 + $0x1a0] sm:$0xff] %vm3089, %v7078
    %7218 = vst.msk [vmem:[#allocation3 + $0x1a8] sm:$0xff] %vm3089, %v7080
    %7219 = vst.msk [vmem:[#allocation3 + $0x1b0] sm:$0xff] %vm3089, %v7082
    %7220 = vst.msk [vmem:[#allocation3 + $0x1b8] sm:$0xff] %vm3089, %v7084
    %7221 = vst.msk [vmem:[#allocation3 + $0x1c0] sm:$0xff] %vm3089, %v7086
    %7222 = vst.msk [vmem:[#allocation3 + $0x1c8] sm:$0xff] %vm3089, %v7088
    %7223 = vst.msk [vmem:[#allocation3 + $0x1d0] sm:$0xff] %vm3089, %v7090
    %7224 = vst.msk [vmem:[#allocation3 + $0x1d8] sm:$0xff] %vm3089, %v7092
    %7225 = vst.msk [vmem:[#allocation3 + $0x1e0] sm:$0xff] %vm3089, %v7094
    %7226 = vst.msk [vmem:[#allocation3 + $0x1e8] sm:$0xff] %vm3089, %v7096
    %7227 = vst.msk [vmem:[#allocation3 + $0x1f0] sm:$0xff] %vm3089, %v7098
    %7228 = vst.msk [vmem:[#allocation3 + $0x1f8] sm:$0xff] %vm3089, %v7100
    %v7229 = vld [vmem:[%s2383 + $0x2] sm:$0xff]
    %v7230 = vld [vmem:[%s2383 + $0xa] sm:$0xff]
    %v7231 = vld [vmem:[%s2383 + $0x1a] sm:$0xff]
    %v7232 = vld [vmem:[%s2383 + $0x22] sm:$0xff]
    %v7233 = vld [vmem:[%s2383 + $0x32] sm:$0xff]
    %v7234 = vld [vmem:[%s2383 + $0x3a] sm:$0xff]
    %v7235 = vld [vmem:[%s2383 + $0x4a] sm:$0xff]
    %v7236 = vld [vmem:[%s2383 + $0x52] sm:$0xff]
    %v7237 = vld [vmem:[%s2383 + $0x62] sm:$0xff]
    %v7238 = vld [vmem:[%s2383 + $0x6a] sm:$0xff]
    %v7239 = vld [vmem:[%s2383 + $0x7a] sm:$0xff]
    %v7240 = vld [vmem:[%s2383 + $0x82] sm:$0xff]
    %v7241 = vld [vmem:[%s2383 + $0x92] sm:$0xff]
    %v7242 = vld [vmem:[%s2383 + $0x9a] sm:$0xff]
    %v7243 = vld [vmem:[%s2383 + $0xaa] sm:$0xff]
    %v7244 = vld [vmem:[%s2383 + $0xb2] sm:$0xff]
    %v7245 = vld [vmem:[%s2383 + $0xc2] sm:$0xff]
    %v7246 = vld [vmem:[%s2383 + $0xca] sm:$0xff]
    %v7247 = vld [vmem:[%s2383 + $0xda] sm:$0xff]
    %v7248 = vld [vmem:[%s2383 + $0xe2] sm:$0xff]
    %v7249 = vld [vmem:[%s2383 + $0xf2] sm:$0xff]
    %v7250 = vld [vmem:[%s2383 + $0xfa] sm:$0xff]
    %v7251 = vld [vmem:[%s2383 + $0x10a] sm:$0xff]
    %v7252 = vld [vmem:[%s2383 + $0x112] sm:$0xff]
    %v7253 = vld [vmem:[%s2383 + $0x122] sm:$0xff]
    %v7254 = vld [vmem:[%s2383 + $0x12a] sm:$0xff]
    %v7255 = vld [vmem:[%s2383 + $0x13a] sm:$0xff]
    %v7256 = vld [vmem:[%s2383 + $0x142] sm:$0xff]
    %v7257 = vld [vmem:[%s2383 + $0x152] sm:$0xff]
    %v7258 = vld [vmem:[%s2383 + $0x15a] sm:$0xff]
    %v7259 = vld [vmem:[%s2383 + $0x16a] sm:$0xff]
    %v7260 = vld [vmem:[%s2383 + $0x172] sm:$0xff]
    %v7261 = vld [vmem:[%s2383 + $0x1b2] sm:$0xff]
    %v7262 = vld [vmem:[%s2383 + $0x1ba] sm:$0xff]
    %v7263 = vld [vmem:[%s2383 + $0x1ca] sm:$0xff]
    %v7264 = vld [vmem:[%s2383 + $0x1d2] sm:$0xff]
    %v7265 = vld [vmem:[%s2383 + $0x1e2] sm:$0xff]
    %v7266 = vld [vmem:[%s2383 + $0x1ea] sm:$0xff]
    %v7267 = vld [vmem:[%s2383 + $0x1fa] sm:$0xff]
    %v7268 = vld [vmem:[%s2383 + $0x202] sm:$0xff]
    %v7269 = vld [vmem:[%s2383 + $0x212] sm:$0xff]
    %v7270 = vld [vmem:[%s2383 + $0x21a] sm:$0xff]
    %v7271 = vld [vmem:[%s2383 + $0x22a] sm:$0xff]
    %v7272 = vld [vmem:[%s2383 + $0x232] sm:$0xff]
    %v7273 = vld [vmem:[%s2383 + $0x242] sm:$0xff]
    %v7274 = vld [vmem:[%s2383 + $0x24a] sm:$0xff]
    %v7275 = vld [vmem:[%s2383 + $0x25a] sm:$0xff]
    %v7276 = vld [vmem:[%s2383 + $0x262] sm:$0xff]
    %v7277 = vld [vmem:[%s2383 + $0x272] sm:$0xff]
    %v7278 = vld [vmem:[%s2383 + $0x27a] sm:$0xff]
    %v7279 = vld [vmem:[%s2383 + $0x28a] sm:$0xff]
    %v7280 = vld [vmem:[%s2383 + $0x292] sm:$0xff]
    %v7281 = vld [vmem:[%s2383 + $0x2a2] sm:$0xff]
    %v7282 = vld [vmem:[%s2383 + $0x2aa] sm:$0xff]
    %v7283 = vld [vmem:[%s2383 + $0x2ba] sm:$0xff]
    %v7284 = vld [vmem:[%s2383 + $0x2c2] sm:$0xff]
    %v7285 = vld [vmem:[%s2383 + $0x2d2] sm:$0xff]
    %v7286 = vld [vmem:[%s2383 + $0x2da] sm:$0xff]
    %v7287 = vld [vmem:[%s2383 + $0x2ea] sm:$0xff]
    %v7288 = vld [vmem:[%s2383 + $0x2f2] sm:$0xff]
    %v7289 = vld [vmem:[%s2383 + $0x302] sm:$0xff]
    %v7290 = vld [vmem:[%s2383 + $0x30a] sm:$0xff]
    %v7291 = vld [vmem:[%s2383 + $0x31a] sm:$0xff]
    %v7292 = vld [vmem:[%s2383 + $0x322] sm:$0xff]
    %7357 = vrot.lane.b32.xlu0 %v7229, 32
    %v7358 = vpop.permute.xlu0 %7357
    %7359 = vrot.lane.b32.xlu0 %v7230, 32
    %v7360 = vpop.permute.xlu0 %7359
    %7361 = vrot.lane.b32.xlu0 %v7231, 32
    %v7362 = vpop.permute.xlu0 %7361
    %7363 = vrot.lane.b32.xlu0 %v7232, 32
    %v7364 = vpop.permute.xlu0 %7363
    %7365 = vrot.lane.b32.xlu0 %v7233, 32
    %v7366 = vpop.permute.xlu0 %7365
    %7367 = vrot.lane.b32.xlu0 %v7234, 32
    %v7368 = vpop.permute.xlu0 %7367
    %7369 = vrot.lane.b32.xlu0 %v7235, 32
    %v7370 = vpop.permute.xlu0 %7369
    %7371 = vrot.lane.b32.xlu0 %v7236, 32
    %v7372 = vpop.permute.xlu0 %7371
    %7373 = vrot.lane.b32.xlu0 %v7237, 32
    %v7374 = vpop.permute.xlu0 %7373
    %7375 = vrot.lane.b32.xlu0 %v7238, 32
    %v7376 = vpop.permute.xlu0 %7375
    %7377 = vrot.lane.b32.xlu0 %v7239, 32
    %v7378 = vpop.permute.xlu0 %7377
    %7379 = vrot.lane.b32.xlu0 %v7240, 32
    %v7380 = vpop.permute.xlu0 %7379
    %7381 = vrot.lane.b32.xlu0 %v7241, 32
    %v7382 = vpop.permute.xlu0 %7381
    %7383 = vrot.lane.b32.xlu0 %v7242, 32
    %v7384 = vpop.permute.xlu0 %7383
    %7385 = vrot.lane.b32.xlu0 %v7243, 32
    %v7386 = vpop.permute.xlu0 %7385
    %7387 = vrot.lane.b32.xlu0 %v7244, 32
    %v7388 = vpop.permute.xlu0 %7387
    %7389 = vrot.lane.b32.xlu0 %v7245, 32
    %v7390 = vpop.permute.xlu0 %7389
    %7391 = vrot.lane.b32.xlu0 %v7246, 32
    %v7392 = vpop.permute.xlu0 %7391
    %7393 = vrot.lane.b32.xlu0 %v7247, 32
    %v7394 = vpop.permute.xlu0 %7393
    %7395 = vrot.lane.b32.xlu0 %v7248, 32
    %v7396 = vpop.permute.xlu0 %7395
    %7397 = vrot.lane.b32.xlu0 %v7249, 32
    %v7398 = vpop.permute.xlu0 %7397
    %7399 = vrot.lane.b32.xlu0 %v7250, 32
    %v7400 = vpop.permute.xlu0 %7399
    %7401 = vrot.lane.b32.xlu0 %v7251, 32
    %v7402 = vpop.permute.xlu0 %7401
    %7403 = vrot.lane.b32.xlu0 %v7252, 32
    %v7404 = vpop.permute.xlu0 %7403
    %7405 = vrot.lane.b32.xlu0 %v7253, 32
    %v7406 = vpop.permute.xlu0 %7405
    %7407 = vrot.lane.b32.xlu0 %v7254, 32
    %v7408 = vpop.permute.xlu0 %7407
    %7409 = vrot.lane.b32.xlu0 %v7255, 32
    %v7410 = vpop.permute.xlu0 %7409
    %7411 = vrot.lane.b32.xlu0 %v7256, 32
    %v7412 = vpop.permute.xlu0 %7411
    %7413 = vrot.lane.b32.xlu0 %v7257, 32
    %v7414 = vpop.permute.xlu0 %7413
    %7415 = vrot.lane.b32.xlu0 %v7258, 32
    %v7416 = vpop.permute.xlu0 %7415
    %7417 = vrot.lane.b32.xlu0 %v7259, 32
    %v7418 = vpop.permute.xlu0 %7417
    %7419 = vrot.lane.b32.xlu0 %v7260, 32
    %v7420 = vpop.permute.xlu0 %7419
    %7421 = vrot.lane.b32.xlu0 %v7261, 32
    %v7422 = vpop.permute.xlu0 %7421
    %7423 = vrot.lane.b32.xlu0 %v7262, 32
    %v7424 = vpop.permute.xlu0 %7423
    %7425 = vrot.lane.b32.xlu0 %v7263, 32
    %v7426 = vpop.permute.xlu0 %7425
    %7427 = vrot.lane.b32.xlu0 %v7264, 32
    %v7428 = vpop.permute.xlu0 %7427
    %7429 = vrot.lane.b32.xlu0 %v7265, 32
    %v7430 = vpop.permute.xlu0 %7429
    %7431 = vrot.lane.b32.xlu0 %v7266, 32
    %v7432 = vpop.permute.xlu0 %7431
    %7433 = vrot.lane.b32.xlu0 %v7267, 32
    %v7434 = vpop.permute.xlu0 %7433
    %7435 = vrot.lane.b32.xlu0 %v7268, 32
    %v7436 = vpop.permute.xlu0 %7435
    %7437 = vrot.lane.b32.xlu0 %v7269, 32
    %v7438 = vpop.permute.xlu0 %7437
    %7439 = vrot.lane.b32.xlu0 %v7270, 32
    %v7440 = vpop.permute.xlu0 %7439
    %7441 = vrot.lane.b32.xlu0 %v7271, 32
    %v7442 = vpop.permute.xlu0 %7441
    %7443 = vrot.lane.b32.xlu0 %v7272, 32
    %v7444 = vpop.permute.xlu0 %7443
    %7445 = vrot.lane.b32.xlu0 %v7273, 32
    %v7446 = vpop.permute.xlu0 %7445
    %7447 = vrot.lane.b32.xlu0 %v7274, 32
    %v7448 = vpop.permute.xlu0 %7447
    %7449 = vrot.lane.b32.xlu0 %v7275, 32
    %v7450 = vpop.permute.xlu0 %7449
    %7451 = vrot.lane.b32.xlu0 %v7276, 32
    %v7452 = vpop.permute.xlu0 %7451
    %7453 = vrot.lane.b32.xlu0 %v7277, 32
    %v7454 = vpop.permute.xlu0 %7453
    %7455 = vrot.lane.b32.xlu0 %v7278, 32
    %v7456 = vpop.permute.xlu0 %7455
    %7457 = vrot.lane.b32.xlu0 %v7279, 32
    %v7458 = vpop.permute.xlu0 %7457
    %7459 = vrot.lane.b32.xlu0 %v7280, 32
    %v7460 = vpop.permute.xlu0 %7459
    %7461 = vrot.lane.b32.xlu0 %v7281, 32
    %v7462 = vpop.permute.xlu0 %7461
    %7463 = vrot.lane.b32.xlu0 %v7282, 32
    %v7464 = vpop.permute.xlu0 %7463
    %7465 = vrot.lane.b32.xlu0 %v7283, 32
    %v7466 = vpop.permute.xlu0 %7465
    %7467 = vrot.lane.b32.xlu0 %v7284, 32
    %v7468 = vpop.permute.xlu0 %7467
    %7469 = vrot.lane.b32.xlu0 %v7285, 32
    %v7470 = vpop.permute.xlu0 %7469
    %7471 = vrot.lane.b32.xlu0 %v7286, 32
    %v7472 = vpop.permute.xlu0 %7471
    %7473 = vrot.lane.b32.xlu0 %v7287, 32
    %v7474 = vpop.permute.xlu0 %7473
    %7475 = vrot.lane.b32.xlu0 %v7288, 32
    %v7476 = vpop.permute.xlu0 %7475
    %7477 = vrot.lane.b32.xlu0 %v7289, 32
    %v7478 = vpop.permute.xlu0 %7477
    %7479 = vrot.lane.b32.xlu0 %v7290, 32
    %v7480 = vpop.permute.xlu0 %7479
    %7481 = vrot.lane.b32.xlu0 %v7291, 32
    %v7482 = vpop.permute.xlu0 %7481
    %7483 = vrot.lane.b32.xlu0 %v7292, 32
    %v7484 = vpop.permute.xlu0 %7483
    %7549 = vst.msk [vmem:[#allocation3] sm:$0xff] %vm3474, %v7358
    %7550 = vst.msk [vmem:[#allocation3 + $0x8] sm:$0xff] %vm3474, %v7360
    %7551 = vst.msk [vmem:[#allocation3 + $0x10] sm:$0xff] %vm3474, %v7362
    %7552 = vst.msk [vmem:[#allocation3 + $0x18] sm:$0xff] %vm3474, %v7364
    %7553 = vst.msk [vmem:[#allocation3 + $0x20] sm:$0xff] %vm3474, %v7366
    %7554 = vst.msk [vmem:[#allocation3 + $0x28] sm:$0xff] %vm3474, %v7368
    %7555 = vst.msk [vmem:[#allocation3 + $0x30] sm:$0xff] %vm3474, %v7370
    %7556 = vst.msk [vmem:[#allocation3 + $0x38] sm:$0xff] %vm3474, %v7372
    %7557 = vst.msk [vmem:[#allocation3 + $0x40] sm:$0xff] %vm3474, %v7374
    %7558 = vst.msk [vmem:[#allocation3 + $0x48] sm:$0xff] %vm3474, %v7376
    %7559 = vst.msk [vmem:[#allocation3 + $0x50] sm:$0xff] %vm3474, %v7378
    %7560 = vst.msk [vmem:[#allocation3 + $0x58] sm:$0xff] %vm3474, %v7380
    %7561 = vst.msk [vmem:[#allocation3 + $0x60] sm:$0xff] %vm3474, %v7382
    %7562 = vst.msk [vmem:[#allocation3 + $0x68] sm:$0xff] %vm3474, %v7384
    %7563 = vst.msk [vmem:[#allocation3 + $0x70] sm:$0xff] %vm3474, %v7386
    %7564 = vst.msk [vmem:[#allocation3 + $0x78] sm:$0xff] %vm3474, %v7388
    %7565 = vst.msk [vmem:[#allocation3 + $0x80] sm:$0xff] %vm3474, %v7390
    %7566 = vst.msk [vmem:[#allocation3 + $0x88] sm:$0xff] %vm3474, %v7392
    %7567 = vst.msk [vmem:[#allocation3 + $0x90] sm:$0xff] %vm3474, %v7394
    %7568 = vst.msk [vmem:[#allocation3 + $0x98] sm:$0xff] %vm3474, %v7396
    %7569 = vst.msk [vmem:[#allocation3 + $0xa0] sm:$0xff] %vm3474, %v7398
    %7570 = vst.msk [vmem:[#allocation3 + $0xa8] sm:$0xff] %vm3474, %v7400
    %7571 = vst.msk [vmem:[#allocation3 + $0xb0] sm:$0xff] %vm3474, %v7402
    %7572 = vst.msk [vmem:[#allocation3 + $0xb8] sm:$0xff] %vm3474, %v7404
    %7573 = vst.msk [vmem:[#allocation3 + $0xc0] sm:$0xff] %vm3474, %v7406
    %7574 = vst.msk [vmem:[#allocation3 + $0xc8] sm:$0xff] %vm3474, %v7408
    %7575 = vst.msk [vmem:[#allocation3 + $0xd0] sm:$0xff] %vm3474, %v7410
    %7576 = vst.msk [vmem:[#allocation3 + $0xd8] sm:$0xff] %vm3474, %v7412
    %7577 = vst.msk [vmem:[#allocation3 + $0xe0] sm:$0xff] %vm3474, %v7414
    %7578 = vst.msk [vmem:[#allocation3 + $0xe8] sm:$0xff] %vm3474, %v7416
    %7579 = vst.msk [vmem:[#allocation3 + $0xf0] sm:$0xff] %vm3474, %v7418
    %7580 = vst.msk [vmem:[#allocation3 + $0xf8] sm:$0xff] %vm3474, %v7420
    %7581 = vst.msk [vmem:[#allocation3 + $0x100] sm:$0xff] %vm3474, %v7422
    %7582 = vst.msk [vmem:[#allocation3 + $0x108] sm:$0xff] %vm3474, %v7424
    %7583 = vst.msk [vmem:[#allocation3 + $0x110] sm:$0xff] %vm3474, %v7426
    %7584 = vst.msk [vmem:[#allocation3 + $0x118] sm:$0xff] %vm3474, %v7428
    %7585 = vst.msk [vmem:[#allocation3 + $0x120] sm:$0xff] %vm3474, %v7430
    %7586 = vst.msk [vmem:[#allocation3 + $0x128] sm:$0xff] %vm3474, %v7432
    %7587 = vst.msk [vmem:[#allocation3 + $0x130] sm:$0xff] %vm3474, %v7434
    %7588 = vst.msk [vmem:[#allocation3 + $0x138] sm:$0xff] %vm3474, %v7436
    %7589 = vst.msk [vmem:[#allocation3 + $0x140] sm:$0xff] %vm3474, %v7438
    %7590 = vst.msk [vmem:[#allocation3 + $0x148] sm:$0xff] %vm3474, %v7440
    %7591 = vst.msk [vmem:[#allocation3 + $0x150] sm:$0xff] %vm3474, %v7442
    %7592 = vst.msk [vmem:[#allocation3 + $0x158] sm:$0xff] %vm3474, %v7444
    %7593 = vst.msk [vmem:[#allocation3 + $0x160] sm:$0xff] %vm3474, %v7446
    %7594 = vst.msk [vmem:[#allocation3 + $0x168] sm:$0xff] %vm3474, %v7448
    %7595 = vst.msk [vmem:[#allocation3 + $0x170] sm:$0xff] %vm3474, %v7450
    %7596 = vst.msk [vmem:[#allocation3 + $0x178] sm:$0xff] %vm3474, %v7452
    %7597 = vst.msk [vmem:[#allocation3 + $0x180] sm:$0xff] %vm3474, %v7454
    %7598 = vst.msk [vmem:[#allocation3 + $0x188] sm:$0xff] %vm3474, %v7456
    %7599 = vst.msk [vmem:[#allocation3 + $0x190] sm:$0xff] %vm3474, %v7458
    %7600 = vst.msk [vmem:[#allocation3 + $0x198] sm:$0xff] %vm3474, %v7460
    %7601 = vst.msk [vmem:[#allocation3 + $0x1a0] sm:$0xff] %vm3474, %v7462
    %7602 = vst.msk [vmem:[#allocation3 + $0x1a8] sm:$0xff] %vm3474, %v7464
    %7603 = vst.msk [vmem:[#allocation3 + $0x1b0] sm:$0xff] %vm3474, %v7466
    %7604 = vst.msk [vmem:[#allocation3 + $0x1b8] sm:$0xff] %vm3474, %v7468
    %7605 = vst.msk [vmem:[#allocation3 + $0x1c0] sm:$0xff] %vm3474, %v7470
    %7606 = vst.msk [vmem:[#allocation3 + $0x1c8] sm:$0xff] %vm3474, %v7472
    %7607 = vst.msk [vmem:[#allocation3 + $0x1d0] sm:$0xff] %vm3474, %v7474
    %7608 = vst.msk [vmem:[#allocation3 + $0x1d8] sm:$0xff] %vm3474, %v7476
    %7609 = vst.msk [vmem:[#allocation3 + $0x1e0] sm:$0xff] %vm3474, %v7478
    %7610 = vst.msk [vmem:[#allocation3 + $0x1e8] sm:$0xff] %vm3474, %v7480
    %7611 = vst.msk [vmem:[#allocation3 + $0x1f0] sm:$0xff] %vm3474, %v7482
    %7612 = vst.msk [vmem:[#allocation3 + $0x1f8] sm:$0xff] %vm3474, %v7484
    %v7613 = vld [vmem:[#allocation3] sm:$0xff]
    %v7614 = vld [vmem:[#allocation3 + $0x8] sm:$0xff]
    %v7615 = vld [vmem:[#allocation3 + $0x10] sm:$0xff]
    %v7616 = vld [vmem:[#allocation3 + $0x18] sm:$0xff]
    %v7617 = vld [vmem:[#allocation3 + $0x20] sm:$0xff]
    %v7618 = vld [vmem:[#allocation3 + $0x28] sm:$0xff]
    %v7619 = vld [vmem:[#allocation3 + $0x30] sm:$0xff]
    %v7620 = vld [vmem:[#allocation3 + $0x38] sm:$0xff]
    %v7621 = vld [vmem:[#allocation3 + $0x40] sm:$0xff]
    %v7622 = vld [vmem:[#allocation3 + $0x48] sm:$0xff]
    %v7623 = vld [vmem:[#allocation3 + $0x50] sm:$0xff]
    %v7624 = vld [vmem:[#allocation3 + $0x58] sm:$0xff]
    %v7625 = vld [vmem:[#allocation3 + $0x60] sm:$0xff]
    %v7626 = vld [vmem:[#allocation3 + $0x68] sm:$0xff]
    %v7627 = vld [vmem:[#allocation3 + $0x70] sm:$0xff]
    %v7628 = vld [vmem:[#allocation3 + $0x78] sm:$0xff]
    %v7629 = vld [vmem:[#allocation3 + $0x80] sm:$0xff]
    %v7630 = vld [vmem:[#allocation3 + $0x88] sm:$0xff]
    %v7631 = vld [vmem:[#allocation3 + $0x90] sm:$0xff]
    %v7632 = vld [vmem:[#allocation3 + $0x98] sm:$0xff]
    %v7633 = vld [vmem:[#allocation3 + $0xa0] sm:$0xff]
    %v7634 = vld [vmem:[#allocation3 + $0xa8] sm:$0xff]
    %v7635 = vld [vmem:[#allocation3 + $0xb0] sm:$0xff]
    %v7636 = vld [vmem:[#allocation3 + $0xb8] sm:$0xff]
    %v7637 = vld [vmem:[#allocation3 + $0xc0] sm:$0xff]
    %v7638 = vld [vmem:[#allocation3 + $0xc8] sm:$0xff]
    %v7639 = vld [vmem:[#allocation3 + $0xd0] sm:$0xff]
    %v7640 = vld [vmem:[#allocation3 + $0xd8] sm:$0xff]
    %v7641 = vld [vmem:[#allocation3 + $0xe0] sm:$0xff]
    %v7642 = vld [vmem:[#allocation3 + $0xe8] sm:$0xff]
    %v7643 = vld [vmem:[#allocation3 + $0xf0] sm:$0xff]
    %v7644 = vld [vmem:[#allocation3 + $0xf8] sm:$0xff]
    %v7645 = vld [vmem:[#allocation3 + $0x100] sm:$0xff]
    %v7646 = vld [vmem:[#allocation3 + $0x108] sm:$0xff]
    %v7647 = vld [vmem:[#allocation3 + $0x110] sm:$0xff]
    %v7648 = vld [vmem:[#allocation3 + $0x118] sm:$0xff]
    %v7649 = vld [vmem:[#allocation3 + $0x120] sm:$0xff]
    %v7650 = vld [vmem:[#allocation3 + $0x128] sm:$0xff]
    %v7651 = vld [vmem:[#allocation3 + $0x130] sm:$0xff]
    %v7652 = vld [vmem:[#allocation3 + $0x138] sm:$0xff]
    %v7653 = vld [vmem:[#allocation3 + $0x140] sm:$0xff]
    %v7654 = vld [vmem:[#allocation3 + $0x148] sm:$0xff]
    %v7655 = vld [vmem:[#allocation3 + $0x150] sm:$0xff]
    %v7656 = vld [vmem:[#allocation3 + $0x158] sm:$0xff]
    %v7657 = vld [vmem:[#allocation3 + $0x160] sm:$0xff]
    %v7658 = vld [vmem:[#allocation3 + $0x168] sm:$0xff]
    %v7659 = vld [vmem:[#allocation3 + $0x170] sm:$0xff]
    %v7660 = vld [vmem:[#allocation3 + $0x178] sm:$0xff]
    %v7661 = vld [vmem:[#allocation3 + $0x180] sm:$0xff]
    %v7662 = vld [vmem:[#allocation3 + $0x188] sm:$0xff]
    %v7663 = vld [vmem:[#allocation3 + $0x190] sm:$0xff]
    %v7664 = vld [vmem:[#allocation3 + $0x198] sm:$0xff]
    %v7665 = vld [vmem:[#allocation3 + $0x1a0] sm:$0xff]
    %v7666 = vld [vmem:[#allocation3 + $0x1a8] sm:$0xff]
    %v7667 = vld [vmem:[#allocation3 + $0x1b0] sm:$0xff]
    %v7668 = vld [vmem:[#allocation3 + $0x1b8] sm:$0xff]
    %v7669 = vld [vmem:[#allocation3 + $0x1c0] sm:$0xff]
    %v7670 = vld [vmem:[#allocation3 + $0x1c8] sm:$0xff]
    %v7671 = vld [vmem:[#allocation3 + $0x1d0] sm:$0xff]
    %v7672 = vld [vmem:[#allocation3 + $0x1d8] sm:$0xff]
    %v7673 = vld [vmem:[#allocation3 + $0x1e0] sm:$0xff]
    %v7674 = vld [vmem:[#allocation3 + $0x1e8] sm:$0xff]
    %v7675 = vld [vmem:[#allocation3 + $0x1f0] sm:$0xff]
    %v7676 = vld [vmem:[#allocation3 + $0x1f8] sm:$0xff]
    %v7677 = vpack.c.bf16 %v7614, %v7613
    %v7678 = vpack.c.bf16 %v7616, %v7615
    %v7679 = vpack.c.bf16 %v7618, %v7617
    %v7680 = vpack.c.bf16 %v7620, %v7619
    %v7681 = vpack.c.bf16 %v7622, %v7621
    %v7682 = vpack.c.bf16 %v7624, %v7623
    %v7683 = vpack.c.bf16 %v7626, %v7625
    %v7684 = vpack.c.bf16 %v7628, %v7627
    %v7685 = vpack.c.bf16 %v7630, %v7629
    %v7686 = vpack.c.bf16 %v7632, %v7631
    %v7687 = vpack.c.bf16 %v7634, %v7633
    %v7688 = vpack.c.bf16 %v7636, %v7635
    %v7689 = vpack.c.bf16 %v7638, %v7637
    %v7690 = vpack.c.bf16 %v7640, %v7639
    %v7691 = vpack.c.bf16 %v7642, %v7641
    %v7692 = vpack.c.bf16 %v7644, %v7643
    %v7693 = vpack.c.bf16 %v7646, %v7645
    %v7694 = vpack.c.bf16 %v7648, %v7647
    %v7695 = vpack.c.bf16 %v7650, %v7649
    %v7696 = vpack.c.bf16 %v7652, %v7651
    %v7697 = vpack.c.bf16 %v7654, %v7653
    %v7698 = vpack.c.bf16 %v7656, %v7655
    %v7699 = vpack.c.bf16 %v7658, %v7657
    %v7700 = vpack.c.bf16 %v7660, %v7659
    %v7701 = vpack.c.bf16 %v7662, %v7661
    %v7702 = vpack.c.bf16 %v7664, %v7663
    %v7703 = vpack.c.bf16 %v7666, %v7665
    %v7704 = vpack.c.bf16 %v7668, %v7667
    %v7705 = vpack.c.bf16 %v7670, %v7669
    %v7706 = vpack.c.bf16 %v7672, %v7671
    %v7707 = vpack.c.bf16 %v7674, %v7673
    %v7708 = vpack.c.bf16 %v7676, %v7675
    %v7709 = vld [vmem:[%s4] sm:$0xf]
    %v7710 = vld [vmem:[%s4 + $0x4] sm:$0xf]
    %v7711 = vld [vmem:[%s4 + $0x8] sm:$0xf]
    %v7712 = vld [vmem:[%s4 + $0xc] sm:$0xf]
    %v7713 = vld [vmem:[%s4 + $0x10] sm:$0xf]
    %v7714 = vld [vmem:[%s4 + $0x14] sm:$0xf]
    %v7715 = vld [vmem:[%s4 + $0x18] sm:$0xf]
    %v7716 = vld [vmem:[%s4 + $0x1c] sm:$0xf]
    %v7717 = vld [vmem:[%s4 + $0x20] sm:$0xf]
    %v7718 = vld [vmem:[%s4 + $0x24] sm:$0xf]
    %v7719 = vld [vmem:[%s4 + $0x28] sm:$0xf]
    %v7720 = vld [vmem:[%s4 + $0x2c] sm:$0xf]
    %v7721 = vld [vmem:[%s4 + $0x30] sm:$0xf]
    %v7722 = vld [vmem:[%s4 + $0x34] sm:$0xf]
    %v7723 = vld [vmem:[%s4 + $0x38] sm:$0xf]
    %v7724 = vld [vmem:[%s4 + $0x3c] sm:$0xf]
    %v7741 = vunpack.c.l.b16 %v7709
    %v7742 = vunpack.c.l.b16 %v7710
    %v7743 = vunpack.c.l.b16 %v7711
    %v7744 = vunpack.c.l.b16 %v7712
    %v7745 = vunpack.c.l.b16 %v7713
    %v7746 = vunpack.c.l.b16 %v7714
    %v7747 = vunpack.c.l.b16 %v7715
    %v7748 = vunpack.c.l.b16 %v7716
    %v7749 = vunpack.c.l.b16 %v7717
    %v7750 = vunpack.c.l.b16 %v7718
    %v7751 = vunpack.c.l.b16 %v7719
    %v7752 = vunpack.c.l.b16 %v7720
    %v7753 = vunpack.c.l.b16 %v7721
    %v7754 = vunpack.c.l.b16 %v7722
    %v7755 = vunpack.c.l.b16 %v7723
    %v7756 = vunpack.c.l.b16 %v7724
    %v7757 = vpack.c.b16 %v7742, %v7741
    %v7758 = vpack.c.b16 %v7744, %v7743
    %v7759 = vpack.c.b16 %v7746, %v7745
    %v7760 = vpack.c.b16 %v7748, %v7747
    %v7761 = vpack.c.b16 %v7750, %v7749
    %v7762 = vpack.c.b16 %v7752, %v7751
    %v7763 = vpack.c.b16 %v7754, %v7753
    %v7764 = vpack.c.b16 %v7756, %v7755
    %7773 = vmatpush.bf16.msra.mxu0 %v7764
    %7774 = vmatpush.bf16.msra.mxu0 %v7763
    %7775 = vmatpush.bf16.msra.mxu0 %v7762
    %7776 = vmatpush.bf16.msra.mxu0 %v7761
    %7777 = vmatpush.bf16.msra.mxu0 %v7760
    %7778 = vmatpush.bf16.msra.mxu0 %v7759
    %7779 = vmatpush.bf16.msra.mxu0 %v7758
    %7780 = vmatpush.bf16.msra.mxu0 %v7757
    %7781 = vmatmul.bf16.gmra.mxu0 %v7677
    %v7782 = vpop.f32.mrf.mxu0
    %v7783 = vadd.f32 0.0, %v7782
    %v7784 = vpop.f32.mrf.mxu0
    %v7785 = vadd.f32 0.0, %v7784
    %7786 = vmatmul.bf16.gmra.mxu0 %v7678
    %v7787 = vpop.f32.mrf.mxu0
    %v7788 = vadd.f32 0.0, %v7787
    %v7789 = vpop.f32.mrf.mxu0
    %v7790 = vadd.f32 0.0, %v7789
    %7791 = vmatmul.bf16.gmra.mxu0 %v7679
    %v7792 = vpop.f32.mrf.mxu0
    %v7793 = vadd.f32 0.0, %v7792
    %v7794 = vpop.f32.mrf.mxu0
    %v7795 = vadd.f32 0.0, %v7794
    %7796 = vmatmul.bf16.gmra.mxu0 %v7680
    %v7797 = vpop.f32.mrf.mxu0
    %v7798 = vadd.f32 0.0, %v7797
    %v7799 = vpop.f32.mrf.mxu0
    %v7800 = vadd.f32 0.0, %v7799
    %7801 = vmatmul.bf16.gmra.mxu0 %v7681
    %v7802 = vpop.f32.mrf.mxu0
    %v7803 = vadd.f32 0.0, %v7802
    %v7804 = vpop.f32.mrf.mxu0
    %v7805 = vadd.f32 0.0, %v7804
    %7806 = vmatmul.bf16.gmra.mxu0 %v7682
    %v7807 = vpop.f32.mrf.mxu0
    %v7808 = vadd.f32 0.0, %v7807
    %v7809 = vpop.f32.mrf.mxu0
    %v7810 = vadd.f32 0.0, %v7809
    %7811 = vmatmul.bf16.gmra.mxu0 %v7683
    %v7812 = vpop.f32.mrf.mxu0
    %v7813 = vadd.f32 0.0, %v7812
    %v7814 = vpop.f32.mrf.mxu0
    %v7815 = vadd.f32 0.0, %v7814
    %7816 = vmatmul.bf16.gmra.mxu0 %v7684
    %v7817 = vpop.f32.mrf.mxu0
    %v7818 = vadd.f32 0.0, %v7817
    %v7819 = vpop.f32.mrf.mxu0
    %v7820 = vadd.f32 0.0, %v7819
    %7821 = vmatmul.bf16.gmra.mxu0 %v7685
    %v7822 = vpop.f32.mrf.mxu0
    %v7823 = vadd.f32 0.0, %v7822
    %v7824 = vpop.f32.mrf.mxu0
    %v7825 = vadd.f32 0.0, %v7824
    %7826 = vmatmul.bf16.gmra.mxu0 %v7686
    %v7827 = vpop.f32.mrf.mxu0
    %v7828 = vadd.f32 0.0, %v7827
    %v7829 = vpop.f32.mrf.mxu0
    %v7830 = vadd.f32 0.0, %v7829
    %7831 = vmatmul.bf16.gmra.mxu0 %v7687
    %v7832 = vpop.f32.mrf.mxu0
    %v7833 = vadd.f32 0.0, %v7832
    %v7834 = vpop.f32.mrf.mxu0
    %v7835 = vadd.f32 0.0, %v7834
    %7836 = vmatmul.bf16.gmra.mxu0 %v7688
    %v7837 = vpop.f32.mrf.mxu0
    %v7838 = vadd.f32 0.0, %v7837
    %v7839 = vpop.f32.mrf.mxu0
    %v7840 = vadd.f32 0.0, %v7839
    %7841 = vmatmul.bf16.gmra.mxu0 %v7689
    %v7842 = vpop.f32.mrf.mxu0
    %v7843 = vadd.f32 0.0, %v7842
    %v7844 = vpop.f32.mrf.mxu0
    %v7845 = vadd.f32 0.0, %v7844
    %7846 = vmatmul.bf16.gmra.mxu0 %v7690
    %v7847 = vpop.f32.mrf.mxu0
    %v7848 = vadd.f32 0.0, %v7847
    %v7849 = vpop.f32.mrf.mxu0
    %v7850 = vadd.f32 0.0, %v7849
    %7851 = vmatmul.bf16.gmra.mxu0 %v7691
    %v7852 = vpop.f32.mrf.mxu0
    %v7853 = vadd.f32 0.0, %v7852
    %v7854 = vpop.f32.mrf.mxu0
    %v7855 = vadd.f32 0.0, %v7854
    %7856 = vmatmul.bf16.gmra.mxu0 %v7692
    %v7857 = vpop.f32.mrf.mxu0
    %v7858 = vadd.f32 0.0, %v7857
    %v7859 = vpop.f32.mrf.mxu0
    %v7860 = vadd.f32 0.0, %v7859
    %7861 = vmatmul.bf16.gmra.mxu0 %v7693
    %v7862 = vpop.f32.mrf.mxu0
    %v7863 = vadd.f32 0.0, %v7862
    %v7864 = vpop.f32.mrf.mxu0
    %v7865 = vadd.f32 0.0, %v7864
    %7866 = vmatmul.bf16.gmra.mxu0 %v7694
    %v7867 = vpop.f32.mrf.mxu0
    %v7868 = vadd.f32 0.0, %v7867
    %v7869 = vpop.f32.mrf.mxu0
    %v7870 = vadd.f32 0.0, %v7869
    %7871 = vmatmul.bf16.gmra.mxu0 %v7695
    %v7872 = vpop.f32.mrf.mxu0
    %v7873 = vadd.f32 0.0, %v7872
    %v7874 = vpop.f32.mrf.mxu0
    %v7875 = vadd.f32 0.0, %v7874
    %7876 = vmatmul.bf16.gmra.mxu0 %v7696
    %v7877 = vpop.f32.mrf.mxu0
    %v7878 = vadd.f32 0.0, %v7877
    %v7879 = vpop.f32.mrf.mxu0
    %v7880 = vadd.f32 0.0, %v7879
    %7881 = vmatmul.bf16.gmra.mxu0 %v7697
    %v7882 = vpop.f32.mrf.mxu0
    %v7883 = vadd.f32 0.0, %v7882
    %v7884 = vpop.f32.mrf.mxu0
    %v7885 = vadd.f32 0.0, %v7884
    %7886 = vmatmul.bf16.gmra.mxu0 %v7698
    %v7887 = vpop.f32.mrf.mxu0
    %v7888 = vadd.f32 0.0, %v7887
    %v7889 = vpop.f32.mrf.mxu0
    %v7890 = vadd.f32 0.0, %v7889
    %7891 = vmatmul.bf16.gmra.mxu0 %v7699
    %v7892 = vpop.f32.mrf.mxu0
    %v7893 = vadd.f32 0.0, %v7892
    %v7894 = vpop.f32.mrf.mxu0
    %v7895 = vadd.f32 0.0, %v7894
    %7896 = vmatmul.bf16.gmra.mxu0 %v7700
    %v7897 = vpop.f32.mrf.mxu0
    %v7898 = vadd.f32 0.0, %v7897
    %v7899 = vpop.f32.mrf.mxu0
    %v7900 = vadd.f32 0.0, %v7899
    %7901 = vmatmul.bf16.gmra.mxu0 %v7701
    %v7902 = vpop.f32.mrf.mxu0
    %v7903 = vadd.f32 0.0, %v7902
    %v7904 = vpop.f32.mrf.mxu0
    %v7905 = vadd.f32 0.0, %v7904
    %7906 = vmatmul.bf16.gmra.mxu0 %v7702
    %v7907 = vpop.f32.mrf.mxu0
    %v7908 = vadd.f32 0.0, %v7907
    %v7909 = vpop.f32.mrf.mxu0
    %v7910 = vadd.f32 0.0, %v7909
    %7911 = vmatmul.bf16.gmra.mxu0 %v7703
    %v7912 = vpop.f32.mrf.mxu0
    %v7913 = vadd.f32 0.0, %v7912
    %v7914 = vpop.f32.mrf.mxu0
    %v7915 = vadd.f32 0.0, %v7914
    %7916 = vmatmul.bf16.gmra.mxu0 %v7704
    %v7917 = vpop.f32.mrf.mxu0
    %v7918 = vadd.f32 0.0, %v7917
    %v7919 = vpop.f32.mrf.mxu0
    %v7920 = vadd.f32 0.0, %v7919
    %7921 = vmatmul.bf16.gmra.mxu0 %v7705
    %v7922 = vpop.f32.mrf.mxu0
    %v7923 = vadd.f32 0.0, %v7922
    %v7924 = vpop.f32.mrf.mxu0
    %v7925 = vadd.f32 0.0, %v7924
    %7926 = vmatmul.bf16.gmra.mxu0 %v7706
    %v7927 = vpop.f32.mrf.mxu0
    %v7928 = vadd.f32 0.0, %v7927
    %v7929 = vpop.f32.mrf.mxu0
    %v7930 = vadd.f32 0.0, %v7929
    %7931 = vmatmul.bf16.gmra.mxu0 %v7707
    %v7932 = vpop.f32.mrf.mxu0
    %v7933 = vadd.f32 0.0, %v7932
    %v7934 = vpop.f32.mrf.mxu0
    %v7935 = vadd.f32 0.0, %v7934
    %7936 = vmatmul.bf16.gmra.mxu0 %v7708
    %v7937 = vpop.f32.mrf.mxu0
    %v7938 = vadd.f32 0.0, %v7937
    %v7939 = vpop.f32.mrf.mxu0
    %v7940 = vadd.f32 0.0, %v7939
    %7941 = vdwg.mxu0
    %v7942 = vadd.f32 %v7783, %v7785
    %v7943 = vadd.f32 %v7942, %v7788
    %v7944 = vadd.f32 %v7943, %v7790
    %v7945 = vadd.f32 %v7944, %v7793
    %v7946 = vadd.f32 %v7945, %v7795
    %v7947 = vadd.f32 %v7946, %v7798
    %v7948 = vadd.f32 %v7947, %v7800
    %v7949 = vadd.f32 %v7948, %v7803
    %v7950 = vadd.f32 %v7949, %v7805
    %v7951 = vadd.f32 %v7950, %v7808
    %v7952 = vadd.f32 %v7951, %v7810
    %v7953 = vadd.f32 %v7952, %v7813
    %v7954 = vadd.f32 %v7953, %v7815
    %v7955 = vadd.f32 %v7954, %v7818
    %v7956 = vadd.f32 %v7955, %v7820
    %v7957 = vadd.f32 %v7956, %v7823
    %v7958 = vadd.f32 %v7957, %v7825
    %v7959 = vadd.f32 %v7958, %v7828
    %v7960 = vadd.f32 %v7959, %v7830
    %v7961 = vadd.f32 %v7960, %v7833
    %v7962 = vadd.f32 %v7961, %v7835
    %v7963 = vadd.f32 %v7962, %v7838
    %v7964 = vadd.f32 %v7963, %v7840
    %v7965 = vadd.f32 %v7964, %v7843
    %v7966 = vadd.f32 %v7965, %v7845
    %v7967 = vadd.f32 %v7966, %v7848
    %v7968 = vadd.f32 %v7967, %v7850
    %v7969 = vadd.f32 %v7968, %v7853
    %v7970 = vadd.f32 %v7969, %v7855
    %v7971 = vadd.f32 %v7970, %v7858
    %v7972 = vadd.f32 %v7971, %v7860
    %v7973 = vadd.f32 %v7972, %v7863
    %v7974 = vadd.f32 %v7973, %v7865
    %v7975 = vadd.f32 %v7974, %v7868
    %v7976 = vadd.f32 %v7975, %v7870
    %v7977 = vadd.f32 %v7976, %v7873
    %v7978 = vadd.f32 %v7977, %v7875
    %v7979 = vadd.f32 %v7978, %v7878
    %v7980 = vadd.f32 %v7979, %v7880
    %v7981 = vadd.f32 %v7980, %v7883
    %v7982 = vadd.f32 %v7981, %v7885
    %v7983 = vadd.f32 %v7982, %v7888
    %v7984 = vadd.f32 %v7983, %v7890
    %v7985 = vadd.f32 %v7984, %v7893
    %v7986 = vadd.f32 %v7985, %v7895
    %v7987 = vadd.f32 %v7986, %v7898
    %v7988 = vadd.f32 %v7987, %v7900
    %v7989 = vadd.f32 %v7988, %v7903
    %v7990 = vadd.f32 %v7989, %v7905
    %v7991 = vadd.f32 %v7990, %v7908
    %v7992 = vadd.f32 %v7991, %v7910
    %v7993 = vadd.f32 %v7992, %v7913
    %v7994 = vadd.f32 %v7993, %v7915
    %v7995 = vadd.f32 %v7994, %v7918
    %v7996 = vadd.f32 %v7995, %v7920
    %v7997 = vadd.f32 %v7996, %v7923
    %v7998 = vadd.f32 %v7997, %v7925
    %v7999 = vadd.f32 %v7998, %v7928
    %v8000 = vadd.f32 %v7999, %v7930
    %v8001 = vadd.f32 %v8000, %v7933
    %v8002 = vadd.f32 %v8001, %v7935
    %v8003 = vadd.f32 %v8002, %v7938
    %v8004 = vadd.f32 %v8003, %v7940
    %v8005 = vrot.slane %v8004, 4
    %v8006 = vadd.f32 %v8004, %v8005
    %v8007 = vrot.slane %v8006, 2
    %v8008 = vadd.f32 %v8006, %v8007
    %v8009 = vrot.slane %v8008, 1
    %v8010 = vadd.f32 %v8008, %v8009
    %v8011 = vmul.f32 %v7783, %v7783
    %v8012 = vmul.f32 %v7785, %v7785
    %v8013 = vmul.f32 %v7788, %v7788
    %v8014 = vmul.f32 %v7790, %v7790
    %v8015 = vmul.f32 %v7793, %v7793
    %v8016 = vmul.f32 %v7795, %v7795
    %v8017 = vmul.f32 %v7798, %v7798
    %v8018 = vmul.f32 %v7800, %v7800
    %v8019 = vmul.f32 %v7803, %v7803
    %v8020 = vmul.f32 %v7805, %v7805
    %v8021 = vmul.f32 %v7808, %v7808
    %v8022 = vmul.f32 %v7810, %v7810
    %v8023 = vmul.f32 %v7813, %v7813
    %v8024 = vmul.f32 %v7815, %v7815
    %v8025 = vmul.f32 %v7818, %v7818
    %v8026 = vmul.f32 %v7820, %v7820
    %v8027 = vmul.f32 %v7823, %v7823
    %v8028 = vmul.f32 %v7825, %v7825
    %v8029 = vmul.f32 %v7828, %v7828
    %v8030 = vmul.f32 %v7830, %v7830
    %v8031 = vmul.f32 %v7833, %v7833
    %v8032 = vmul.f32 %v7835, %v7835
    %v8033 = vmul.f32 %v7838, %v7838
    %v8034 = vmul.f32 %v7840, %v7840
    %v8035 = vmul.f32 %v7843, %v7843
    %v8036 = vmul.f32 %v7845, %v7845
    %v8037 = vmul.f32 %v7848, %v7848
    %v8038 = vmul.f32 %v7850, %v7850
    %v8039 = vmul.f32 %v7853, %v7853
    %v8040 = vmul.f32 %v7855, %v7855
    %v8041 = vmul.f32 %v7858, %v7858
    %v8042 = vmul.f32 %v7860, %v7860
    %v8043 = vmul.f32 %v7863, %v7863
    %v8044 = vmul.f32 %v7865, %v7865
    %v8045 = vmul.f32 %v7868, %v7868
    %v8046 = vmul.f32 %v7870, %v7870
    %v8047 = vmul.f32 %v7873, %v7873
    %v8048 = vmul.f32 %v7875, %v7875
    %v8049 = vmul.f32 %v7878, %v7878
    %v8050 = vmul.f32 %v7880, %v7880
    %v8051 = vmul.f32 %v7883, %v7883
    %v8052 = vmul.f32 %v7885, %v7885
    %v8053 = vmul.f32 %v7888, %v7888
    %v8054 = vmul.f32 %v7890, %v7890
    %v8055 = vmul.f32 %v7893, %v7893
    %v8056 = vmul.f32 %v7895, %v7895
    %v8057 = vmul.f32 %v7898, %v7898
    %v8058 = vmul.f32 %v7900, %v7900
    %v8059 = vmul.f32 %v7903, %v7903
    %v8060 = vmul.f32 %v7905, %v7905
    %v8061 = vmul.f32 %v7908, %v7908
    %v8062 = vmul.f32 %v7910, %v7910
    %v8063 = vmul.f32 %v7913, %v7913
    %v8064 = vmul.f32 %v7915, %v7915
    %v8065 = vmul.f32 %v7918, %v7918
    %v8066 = vmul.f32 %v7920, %v7920
    %v8067 = vmul.f32 %v7923, %v7923
    %v8068 = vmul.f32 %v7925, %v7925
    %v8069 = vmul.f32 %v7928, %v7928
    %v8070 = vmul.f32 %v7930, %v7930
    %v8071 = vmul.f32 %v7933, %v7933
    %v8072 = vmul.f32 %v7935, %v7935
    %v8073 = vmul.f32 %v7938, %v7938
    %v8074 = vmul.f32 %v7940, %v7940
    %v8075 = vadd.f32 %v8011, %v8012
    %v8076 = vadd.f32 %v8075, %v8013
    %v8077 = vadd.f32 %v8076, %v8014
    %v8078 = vadd.f32 %v8077, %v8015
    %v8079 = vadd.f32 %v8078, %v8016
    %v8080 = vadd.f32 %v8079, %v8017
    %v8081 = vadd.f32 %v8080, %v8018
    %v8082 = vadd.f32 %v8081, %v8019
    %v8083 = vadd.f32 %v8082, %v8020
    %v8084 = vadd.f32 %v8083, %v8021
    %v8085 = vadd.f32 %v8084, %v8022
    %v8086 = vadd.f32 %v8085, %v8023
    %v8087 = vadd.f32 %v8086, %v8024
    %v8088 = vadd.f32 %v8087, %v8025
    %v8089 = vadd.f32 %v8088, %v8026
    %v8090 = vadd.f32 %v8089, %v8027
    %v8091 = vadd.f32 %v8090, %v8028
    %v8092 = vadd.f32 %v8091, %v8029
    %v8093 = vadd.f32 %v8092, %v8030
    %v8094 = vadd.f32 %v8093, %v8031
    %v8095 = vadd.f32 %v8094, %v8032
    %v8096 = vadd.f32 %v8095, %v8033
    %v8097 = vadd.f32 %v8096, %v8034
    %v8098 = vadd.f32 %v8097, %v8035
    %v8099 = vadd.f32 %v8098, %v8036
    %v8100 = vadd.f32 %v8099, %v8037
    %v8101 = vadd.f32 %v8100, %v8038
    %v8102 = vadd.f32 %v8101, %v8039
    %v8103 = vadd.f32 %v8102, %v8040
    %v8104 = vadd.f32 %v8103, %v8041
    %v8105 = vadd.f32 %v8104, %v8042
    %v8106 = vadd.f32 %v8105, %v8043
    %v8107 = vadd.f32 %v8106, %v8044
    %v8108 = vadd.f32 %v8107, %v8045
    %v8109 = vadd.f32 %v8108, %v8046
    %v8110 = vadd.f32 %v8109, %v8047
    %v8111 = vadd.f32 %v8110, %v8048
    %v8112 = vadd.f32 %v8111, %v8049
    %v8113 = vadd.f32 %v8112, %v8050
    %v8114 = vadd.f32 %v8113, %v8051
    %v8115 = vadd.f32 %v8114, %v8052
    %v8116 = vadd.f32 %v8115, %v8053
    %v8117 = vadd.f32 %v8116, %v8054
    %v8118 = vadd.f32 %v8117, %v8055
    %v8119 = vadd.f32 %v8118, %v8056
    %v8120 = vadd.f32 %v8119, %v8057
    %v8121 = vadd.f32 %v8120, %v8058
    %v8122 = vadd.f32 %v8121, %v8059
    %v8123 = vadd.f32 %v8122, %v8060
    %v8124 = vadd.f32 %v8123, %v8061
    %v8125 = vadd.f32 %v8124, %v8062
    %v8126 = vadd.f32 %v8125, %v8063
    %v8127 = vadd.f32 %v8126, %v8064
    %v8128 = vadd.f32 %v8127, %v8065
    %v8129 = vadd.f32 %v8128, %v8066
    %v8130 = vadd.f32 %v8129, %v8067
    %v8131 = vadd.f32 %v8130, %v8068
    %v8132 = vadd.f32 %v8131, %v8069
    %v8133 = vadd.f32 %v8132, %v8070
    %v8134 = vadd.f32 %v8133, %v8071
    %v8135 = vadd.f32 %v8134, %v8072
    %v8136 = vadd.f32 %v8135, %v8073
    %v8137 = vadd.f32 %v8136, %v8074
    %v8138 = vrot.slane %v8137, 4
    %v8139 = vadd.f32 %v8137, %v8138
    %v8140 = vrot.slane %v8139, 2
    %v8141 = vadd.f32 %v8139, %v8140
    %v8142 = vrot.slane %v8141, 1
    %v8143 = vadd.f32 %v8141, %v8142
    %v8144 = vmul.f32 %v8010, 0.001953125
    %v8145 = vmul.f32 %v8143, 0.001953125
    %v8146 = vmul.f32 %v8144, %v8144
    %v8147 = vsub.f32 %v8145, %v8146
    %v8148 = vmax.f32 %v8147, 0.0
    %v8149 = vadd.f32 %v8148, 1e-05
    %v8150 = vrsqrt.pop %v8149
    %v8151 = vmul.f32 %v8150, %v8149
    %v8152 = vmul.f32 %v8151, %v8150
    %v8153 = vmul.f32 0.5, %v8152
    %v8154 = vsub.f32 1.5, %v8153
    %v8155 = vmul.f32 %v8150, %v8154
    %vm8156 = vweird.f32 %v8149
    %vm8157 = vweird.f32 %v8150
    %vm8158 = vmor %vm8156, %vm8157
    %v8159 = vsel %vm8158, %v8150, %v8155
    %v8160 = vld [vmem:[%s5] sm:$0x1]
    %v8161 = vmul.f32 %v8159, %v8160
    %v8162 = vsub.f32 %v7783, %v8144
    %v8163 = vsub.f32 %v7785, %v8144
    %v8164 = vsub.f32 %v7788, %v8144
    %v8165 = vsub.f32 %v7790, %v8144
    %v8166 = vsub.f32 %v7793, %v8144
    %v8167 = vsub.f32 %v7795, %v8144
    %v8168 = vsub.f32 %v7798, %v8144
    %v8169 = vsub.f32 %v7800, %v8144
    %v8170 = vsub.f32 %v7803, %v8144
    %v8171 = vsub.f32 %v7805, %v8144
    %v8172 = vsub.f32 %v7808, %v8144
    %v8173 = vsub.f32 %v7810, %v8144
    %v8174 = vsub.f32 %v7813, %v8144
    %v8175 = vsub.f32 %v7815, %v8144
    %v8176 = vsub.f32 %v7818, %v8144
    %v8177 = vsub.f32 %v7820, %v8144
    %v8178 = vsub.f32 %v7823, %v8144
    %v8179 = vsub.f32 %v7825, %v8144
    %v8180 = vsub.f32 %v7828, %v8144
    %v8181 = vsub.f32 %v7830, %v8144
    %v8182 = vsub.f32 %v7833, %v8144
    %v8183 = vsub.f32 %v7835, %v8144
    %v8184 = vsub.f32 %v7838, %v8144
    %v8185 = vsub.f32 %v7840, %v8144
    %v8186 = vsub.f32 %v7843, %v8144
    %v8187 = vsub.f32 %v7845, %v8144
    %v8188 = vsub.f32 %v7848, %v8144
    %v8189 = vsub.f32 %v7850, %v8144
    %v8190 = vsub.f32 %v7853, %v8144
    %v8191 = vsub.f32 %v7855, %v8144
    %v8192 = vsub.f32 %v7858, %v8144
    %v8193 = vsub.f32 %v7860, %v8144
    %v8194 = vsub.f32 %v7863, %v8144
    %v8195 = vsub.f32 %v7865, %v8144
    %v8196 = vsub.f32 %v7868, %v8144
    %v8197 = vsub.f32 %v7870, %v8144
    %v8198 = vsub.f32 %v7873, %v8144
    %v8199 = vsub.f32 %v7875, %v8144
    %v8200 = vsub.f32 %v7878, %v8144
    %v8201 = vsub.f32 %v7880, %v8144
    %v8202 = vsub.f32 %v7883, %v8144
    %v8203 = vsub.f32 %v7885, %v8144
    %v8204 = vsub.f32 %v7888, %v8144
    %v8205 = vsub.f32 %v7890, %v8144
    %v8206 = vsub.f32 %v7893, %v8144
    %v8207 = vsub.f32 %v7895, %v8144
    %v8208 = vsub.f32 %v7898, %v8144
    %v8209 = vsub.f32 %v7900, %v8144
    %v8210 = vsub.f32 %v7903, %v8144
    %v8211 = vsub.f32 %v7905, %v8144
    %v8212 = vsub.f32 %v7908, %v8144
    %v8213 = vsub.f32 %v7910, %v8144
    %v8214 = vsub.f32 %v7913, %v8144
    %v8215 = vsub.f32 %v7915, %v8144
    %v8216 = vsub.f32 %v7918, %v8144
    %v8217 = vsub.f32 %v7920, %v8144
    %v8218 = vsub.f32 %v7923, %v8144
    %v8219 = vsub.f32 %v7925, %v8144
    %v8220 = vsub.f32 %v7928, %v8144
    %v8221 = vsub.f32 %v7930, %v8144
    %v8222 = vsub.f32 %v7933, %v8144
    %v8223 = vsub.f32 %v7935, %v8144
    %v8224 = vsub.f32 %v7938, %v8144
    %v8225 = vsub.f32 %v7940, %v8144
    %v8226 = vperm.slane %v8161, 0
    %v8227 = vmul.f32 %v8162, %v8226
    %v8228 = vmul.f32 %v8163, %v8226
    %v8229 = vmul.f32 %v8164, %v8226
    %v8230 = vmul.f32 %v8165, %v8226
    %v8231 = vmul.f32 %v8166, %v8226
    %v8232 = vmul.f32 %v8167, %v8226
    %v8233 = vmul.f32 %v8168, %v8226
    %v8234 = vmul.f32 %v8169, %v8226
    %v8235 = vmul.f32 %v8170, %v8226
    %v8236 = vmul.f32 %v8171, %v8226
    %v8237 = vmul.f32 %v8172, %v8226
    %v8238 = vmul.f32 %v8173, %v8226
    %v8239 = vmul.f32 %v8174, %v8226
    %v8240 = vmul.f32 %v8175, %v8226
    %v8241 = vmul.f32 %v8176, %v8226
    %v8242 = vmul.f32 %v8177, %v8226
    %v8243 = vmul.f32 %v8178, %v8226
    %v8244 = vmul.f32 %v8179, %v8226
    %v8245 = vmul.f32 %v8180, %v8226
    %v8246 = vmul.f32 %v8181, %v8226
    %v8247 = vmul.f32 %v8182, %v8226
    %v8248 = vmul.f32 %v8183, %v8226
    %v8249 = vmul.f32 %v8184, %v8226
    %v8250 = vmul.f32 %v8185, %v8226
    %v8251 = vmul.f32 %v8186, %v8226
    %v8252 = vmul.f32 %v8187, %v8226
    %v8253 = vmul.f32 %v8188, %v8226
    %v8254 = vmul.f32 %v8189, %v8226
    %v8255 = vmul.f32 %v8190, %v8226
    %v8256 = vmul.f32 %v8191, %v8226
    %v8257 = vmul.f32 %v8192, %v8226
    %v8258 = vmul.f32 %v8193, %v8226
    %v8259 = vmul.f32 %v8194, %v8226
    %v8260 = vmul.f32 %v8195, %v8226
    %v8261 = vmul.f32 %v8196, %v8226
    %v8262 = vmul.f32 %v8197, %v8226
    %v8263 = vmul.f32 %v8198, %v8226
    %v8264 = vmul.f32 %v8199, %v8226
    %v8265 = vmul.f32 %v8200, %v8226
    %v8266 = vmul.f32 %v8201, %v8226
    %v8267 = vmul.f32 %v8202, %v8226
    %v8268 = vmul.f32 %v8203, %v8226
    %v8269 = vmul.f32 %v8204, %v8226
    %v8270 = vmul.f32 %v8205, %v8226
    %v8271 = vmul.f32 %v8206, %v8226
    %v8272 = vmul.f32 %v8207, %v8226
    %v8273 = vmul.f32 %v8208, %v8226
    %v8274 = vmul.f32 %v8209, %v8226
    %v8275 = vmul.f32 %v8210, %v8226
    %v8276 = vmul.f32 %v8211, %v8226
    %v8277 = vmul.f32 %v8212, %v8226
    %v8278 = vmul.f32 %v8213, %v8226
    %v8279 = vmul.f32 %v8214, %v8226
    %v8280 = vmul.f32 %v8215, %v8226
    %v8281 = vmul.f32 %v8216, %v8226
    %v8282 = vmul.f32 %v8217, %v8226
    %v8283 = vmul.f32 %v8218, %v8226
    %v8284 = vmul.f32 %v8219, %v8226
    %v8285 = vmul.f32 %v8220, %v8226
    %v8286 = vmul.f32 %v8221, %v8226
    %v8287 = vmul.f32 %v8222, %v8226
    %v8288 = vmul.f32 %v8223, %v8226
    %v8289 = vmul.f32 %v8224, %v8226
    %v8290 = vmul.f32 %v8225, %v8226
    %v8291 = vld [vmem:[%s6] sm:$0x1]
    %v8293 = vperm.slane %v8291, 0
    %v8295 = vadd.f32 %v8227, %v8293
    %v8296 = vadd.f32 %v8228, %v8293
    %v8297 = vadd.f32 %v8229, %v8293
    %v8298 = vadd.f32 %v8230, %v8293
    %v8299 = vadd.f32 %v8231, %v8293
    %v8300 = vadd.f32 %v8232, %v8293
    %v8301 = vadd.f32 %v8233, %v8293
    %v8302 = vadd.f32 %v8234, %v8293
    %v8303 = vadd.f32 %v8235, %v8293
    %v8304 = vadd.f32 %v8236, %v8293
    %v8305 = vadd.f32 %v8237, %v8293
    %v8306 = vadd.f32 %v8238, %v8293
    %v8307 = vadd.f32 %v8239, %v8293
    %v8308 = vadd.f32 %v8240, %v8293
    %v8309 = vadd.f32 %v8241, %v8293
    %v8310 = vadd.f32 %v8242, %v8293
    %v8311 = vadd.f32 %v8243, %v8293
    %v8312 = vadd.f32 %v8244, %v8293
    %v8313 = vadd.f32 %v8245, %v8293
    %v8314 = vadd.f32 %v8246, %v8293
    %v8315 = vadd.f32 %v8247, %v8293
    %v8316 = vadd.f32 %v8248, %v8293
    %v8317 = vadd.f32 %v8249, %v8293
    %v8318 = vadd.f32 %v8250, %v8293
    %v8319 = vadd.f32 %v8251, %v8293
    %v8320 = vadd.f32 %v8252, %v8293
    %v8321 = vadd.f32 %v8253, %v8293
    %v8322 = vadd.f32 %v8254, %v8293
    %v8323 = vadd.f32 %v8255, %v8293
    %v8324 = vadd.f32 %v8256, %v8293
    %v8325 = vadd.f32 %v8257, %v8293
    %v8326 = vadd.f32 %v8258, %v8293
    %v8327 = vadd.f32 %v8259, %v8293
    %v8328 = vadd.f32 %v8260, %v8293
    %v8329 = vadd.f32 %v8261, %v8293
    %v8330 = vadd.f32 %v8262, %v8293
    %v8331 = vadd.f32 %v8263, %v8293
    %v8332 = vadd.f32 %v8264, %v8293
    %v8333 = vadd.f32 %v8265, %v8293
    %v8334 = vadd.f32 %v8266, %v8293
    %v8335 = vadd.f32 %v8267, %v8293
    %v8336 = vadd.f32 %v8268, %v8293
    %v8337 = vadd.f32 %v8269, %v8293
    %v8338 = vadd.f32 %v8270, %v8293
    %v8339 = vadd.f32 %v8271, %v8293
    %v8340 = vadd.f32 %v8272, %v8293
    %v8341 = vadd.f32 %v8273, %v8293
    %v8342 = vadd.f32 %v8274, %v8293
    %v8343 = vadd.f32 %v8275, %v8293
    %v8344 = vadd.f32 %v8276, %v8293
    %v8345 = vadd.f32 %v8277, %v8293
    %v8346 = vadd.f32 %v8278, %v8293
    %v8347 = vadd.f32 %v8279, %v8293
    %v8348 = vadd.f32 %v8280, %v8293
    %v8349 = vadd.f32 %v8281, %v8293
    %v8350 = vadd.f32 %v8282, %v8293
    %v8351 = vadd.f32 %v8283, %v8293
    %v8352 = vadd.f32 %v8284, %v8293
    %v8353 = vadd.f32 %v8285, %v8293
    %v8354 = vadd.f32 %v8286, %v8293
    %v8355 = vadd.f32 %v8287, %v8293
    %v8356 = vadd.f32 %v8288, %v8293
    %v8357 = vadd.f32 %v8289, %v8293
    %v8358 = vadd.f32 %v8290, %v8293
    %v8359 = vld [vmem:[%s0] sm:$0xff]
    %v8360 = vld [vmem:[%s0 + $0x8] sm:$0xff]
    %v8361 = vld [vmem:[%s0 + $0x10] sm:$0xff]
    %v8362 = vld [vmem:[%s0 + $0x18] sm:$0xff]
    %v8363 = vld [vmem:[%s0 + $0x20] sm:$0xff]
    %v8364 = vld [vmem:[%s0 + $0x28] sm:$0xff]
    %v8365 = vld [vmem:[%s0 + $0x30] sm:$0xff]
    %v8366 = vld [vmem:[%s0 + $0x38] sm:$0xff]
    %v8367 = vld [vmem:[%s0 + $0x40] sm:$0xff]
    %v8368 = vld [vmem:[%s0 + $0x48] sm:$0xff]
    %v8369 = vld [vmem:[%s0 + $0x50] sm:$0xff]
    %v8370 = vld [vmem:[%s0 + $0x58] sm:$0xff]
    %v8371 = vld [vmem:[%s0 + $0x60] sm:$0xff]
    %v8372 = vld [vmem:[%s0 + $0x68] sm:$0xff]
    %v8373 = vld [vmem:[%s0 + $0x70] sm:$0xff]
    %v8374 = vld [vmem:[%s0 + $0x78] sm:$0xff]
    %v8375 = vld [vmem:[%s0 + $0x80] sm:$0xff]
    %v8376 = vld [vmem:[%s0 + $0x88] sm:$0xff]
    %v8377 = vld [vmem:[%s0 + $0x90] sm:$0xff]
    %v8378 = vld [vmem:[%s0 + $0x98] sm:$0xff]
    %v8379 = vld [vmem:[%s0 + $0xa0] sm:$0xff]
    %v8380 = vld [vmem:[%s0 + $0xa8] sm:$0xff]
    %v8381 = vld [vmem:[%s0 + $0xb0] sm:$0xff]
    %v8382 = vld [vmem:[%s0 + $0xb8] sm:$0xff]
    %v8383 = vld [vmem:[%s0 + $0xc0] sm:$0xff]
    %v8384 = vld [vmem:[%s0 + $0xc8] sm:$0xff]
    %v8385 = vld [vmem:[%s0 + $0xd0] sm:$0xff]
    %v8386 = vld [vmem:[%s0 + $0xd8] sm:$0xff]
    %v8387 = vld [vmem:[%s0 + $0xe0] sm:$0xff]
    %v8388 = vld [vmem:[%s0 + $0xe8] sm:$0xff]
    %v8389 = vld [vmem:[%s0 + $0xf0] sm:$0xff]
    %v8390 = vld [vmem:[%s0 + $0xf8] sm:$0xff]
    %v8391 = vld [vmem:[%s0 + $0x100] sm:$0xff]
    %v8392 = vld [vmem:[%s0 + $0x108] sm:$0xff]
    %v8393 = vld [vmem:[%s0 + $0x110] sm:$0xff]
    %v8394 = vld [vmem:[%s0 + $0x118] sm:$0xff]
    %v8395 = vld [vmem:[%s0 + $0x120] sm:$0xff]
    %v8396 = vld [vmem:[%s0 + $0x128] sm:$0xff]
    %v8397 = vld [vmem:[%s0 + $0x130] sm:$0xff]
    %v8398 = vld [vmem:[%s0 + $0x138] sm:$0xff]
    %v8399 = vld [vmem:[%s0 + $0x140] sm:$0xff]
    %v8400 = vld [vmem:[%s0 + $0x148] sm:$0xff]
    %v8401 = vld [vmem:[%s0 + $0x150] sm:$0xff]
    %v8402 = vld [vmem:[%s0 + $0x158] sm:$0xff]
    %v8403 = vld [vmem:[%s0 + $0x160] sm:$0xff]
    %v8404 = vld [vmem:[%s0 + $0x168] sm:$0xff]
    %v8405 = vld [vmem:[%s0 + $0x170] sm:$0xff]
    %v8406 = vld [vmem:[%s0 + $0x178] sm:$0xff]
    %v8407 = vld [vmem:[%s0 + $0x180] sm:$0xff]
    %v8408 = vld [vmem:[%s0 + $0x188] sm:$0xff]
    %v8409 = vld [vmem:[%s0 + $0x190] sm:$0xff]
    %v8410 = vld [vmem:[%s0 + $0x198] sm:$0xff]
    %v8411 = vld [vmem:[%s0 + $0x1a0] sm:$0xff]
    %v8412 = vld [vmem:[%s0 + $0x1a8] sm:$0xff]
    %v8413 = vld [vmem:[%s0 + $0x1b0] sm:$0xff]
    %v8414 = vld [vmem:[%s0 + $0x1b8] sm:$0xff]
    %v8415 = vld [vmem:[%s0 + $0x1c0] sm:$0xff]
    %v8416 = vld [vmem:[%s0 + $0x1c8] sm:$0xff]
    %v8417 = vld [vmem:[%s0 + $0x1d0] sm:$0xff]
    %v8418 = vld [vmem:[%s0 + $0x1d8] sm:$0xff]
    %v8419 = vld [vmem:[%s0 + $0x1e0] sm:$0xff]
    %v8420 = vld [vmem:[%s0 + $0x1e8] sm:$0xff]
    %v8421 = vld [vmem:[%s0 + $0x1f0] sm:$0xff]
    %v8422 = vld [vmem:[%s0 + $0x1f8] sm:$0xff]
    %v8423 = vsel %vm27, %v8359, 0.0
    %v8424 = vsel %vm27, %v8360, 0.0
    %v8425 = vsel %vm27, %v8361, 0.0
    %v8426 = vsel %vm27, %v8362, 0.0
    %v8427 = vsel %vm27, %v8363, 0.0
    %v8428 = vsel %vm27, %v8364, 0.0
    %v8429 = vsel %vm27, %v8365, 0.0
    %v8430 = vsel %vm27, %v8366, 0.0
    %v8431 = vsel %vm27, %v8367, 0.0
    %v8432 = vsel %vm27, %v8368, 0.0
    %v8433 = vsel %vm27, %v8369, 0.0
    %v8434 = vsel %vm27, %v8370, 0.0
    %v8435 = vsel %vm27, %v8371, 0.0
    %v8436 = vsel %vm27, %v8372, 0.0
    %v8437 = vsel %vm27, %v8373, 0.0
    %v8438 = vsel %vm27, %v8374, 0.0
    %v8439 = vsel %vm27, %v8375, 0.0
    %v8440 = vsel %vm27, %v8376, 0.0
    %v8441 = vsel %vm27, %v8377, 0.0
    %v8442 = vsel %vm27, %v8378, 0.0
    %v8443 = vsel %vm27, %v8379, 0.0
    %v8444 = vsel %vm27, %v8380, 0.0
    %v8445 = vsel %vm27, %v8381, 0.0
    %v8446 = vsel %vm27, %v8382, 0.0
    %v8447 = vsel %vm27, %v8383, 0.0
    %v8448 = vsel %vm27, %v8384, 0.0
    %v8449 = vsel %vm27, %v8385, 0.0
    %v8450 = vsel %vm27, %v8386, 0.0
    %v8451 = vsel %vm27, %v8387, 0.0
    %v8452 = vsel %vm27, %v8388, 0.0
    %v8453 = vsel %vm27, %v8389, 0.0
    %v8454 = vsel %vm27, %v8390, 0.0
    %v8455 = vsel %vm27, %v8391, 0.0
    %v8456 = vsel %vm27, %v8392, 0.0
    %v8457 = vsel %vm27, %v8393, 0.0
    %v8458 = vsel %vm27, %v8394, 0.0
    %v8459 = vsel %vm27, %v8395, 0.0
    %v8460 = vsel %vm27, %v8396, 0.0
    %v8461 = vsel %vm27, %v8397, 0.0
    %v8462 = vsel %vm27, %v8398, 0.0
    %v8463 = vsel %vm27, %v8399, 0.0
    %v8464 = vsel %vm27, %v8400, 0.0
    %v8465 = vsel %vm27, %v8401, 0.0
    %v8466 = vsel %vm27, %v8402, 0.0
    %v8467 = vsel %vm27, %v8403, 0.0
    %v8468 = vsel %vm27, %v8404, 0.0
    %v8469 = vsel %vm27, %v8405, 0.0
    %v8470 = vsel %vm27, %v8406, 0.0
    %v8471 = vsel %vm27, %v8407, 0.0
    %v8472 = vsel %vm27, %v8408, 0.0
    %v8473 = vsel %vm27, %v8409, 0.0
    %v8474 = vsel %vm27, %v8410, 0.0
    %v8475 = vsel %vm27, %v8411, 0.0
    %v8476 = vsel %vm27, %v8412, 0.0
    %v8477 = vsel %vm27, %v8413, 0.0
    %v8478 = vsel %vm27, %v8414, 0.0
    %v8479 = vsel %vm27, %v8415, 0.0
    %v8480 = vsel %vm27, %v8416, 0.0
    %v8481 = vsel %vm27, %v8417, 0.0
    %v8482 = vsel %vm27, %v8418, 0.0
    %v8483 = vsel %vm27, %v8419, 0.0
    %v8484 = vsel %vm27, %v8420, 0.0
    %v8485 = vsel %vm27, %v8421, 0.0
    %v8486 = vsel %vm27, %v8422, 0.0
    %v8487 = vadd.f32 %v8295, %v8423
    %v8488 = vadd.f32 %v8296, %v8424
    %v8489 = vadd.f32 %v8297, %v8425
    %v8490 = vadd.f32 %v8298, %v8426
    %v8491 = vadd.f32 %v8299, %v8427
    %v8492 = vadd.f32 %v8300, %v8428
    %v8493 = vadd.f32 %v8301, %v8429
    %v8494 = vadd.f32 %v8302, %v8430
    %v8495 = vadd.f32 %v8303, %v8431
    %v8496 = vadd.f32 %v8304, %v8432
    %v8497 = vadd.f32 %v8305, %v8433
    %v8498 = vadd.f32 %v8306, %v8434
    %v8499 = vadd.f32 %v8307, %v8435
    %v8500 = vadd.f32 %v8308, %v8436
    %v8501 = vadd.f32 %v8309, %v8437
    %v8502 = vadd.f32 %v8310, %v8438
    %v8503 = vadd.f32 %v8311, %v8439
    %v8504 = vadd.f32 %v8312, %v8440
    %v8505 = vadd.f32 %v8313, %v8441
    %v8506 = vadd.f32 %v8314, %v8442
    %v8507 = vadd.f32 %v8315, %v8443
    %v8508 = vadd.f32 %v8316, %v8444
    %v8509 = vadd.f32 %v8317, %v8445
    %v8510 = vadd.f32 %v8318, %v8446
    %v8511 = vadd.f32 %v8319, %v8447
    %v8512 = vadd.f32 %v8320, %v8448
    %v8513 = vadd.f32 %v8321, %v8449
    %v8514 = vadd.f32 %v8322, %v8450
    %v8515 = vadd.f32 %v8323, %v8451
    %v8516 = vadd.f32 %v8324, %v8452
    %v8517 = vadd.f32 %v8325, %v8453
    %v8518 = vadd.f32 %v8326, %v8454
    %v8519 = vadd.f32 %v8327, %v8455
    %v8520 = vadd.f32 %v8328, %v8456
    %v8521 = vadd.f32 %v8329, %v8457
    %v8522 = vadd.f32 %v8330, %v8458
    %v8523 = vadd.f32 %v8331, %v8459
    %v8524 = vadd.f32 %v8332, %v8460
    %v8525 = vadd.f32 %v8333, %v8461
    %v8526 = vadd.f32 %v8334, %v8462
    %v8527 = vadd.f32 %v8335, %v8463
    %v8528 = vadd.f32 %v8336, %v8464
    %v8529 = vadd.f32 %v8337, %v8465
    %v8530 = vadd.f32 %v8338, %v8466
    %v8531 = vadd.f32 %v8339, %v8467
    %v8532 = vadd.f32 %v8340, %v8468
    %v8533 = vadd.f32 %v8341, %v8469
    %v8534 = vadd.f32 %v8342, %v8470
    %v8535 = vadd.f32 %v8343, %v8471
    %v8536 = vadd.f32 %v8344, %v8472
    %v8537 = vadd.f32 %v8345, %v8473
    %v8538 = vadd.f32 %v8346, %v8474
    %v8539 = vadd.f32 %v8347, %v8475
    %v8540 = vadd.f32 %v8348, %v8476
    %v8541 = vadd.f32 %v8349, %v8477
    %v8542 = vadd.f32 %v8350, %v8478
    %v8543 = vadd.f32 %v8351, %v8479
    %v8544 = vadd.f32 %v8352, %v8480
    %v8545 = vadd.f32 %v8353, %v8481
    %v8546 = vadd.f32 %v8354, %v8482
    %v8547 = vadd.f32 %v8355, %v8483
    %v8548 = vadd.f32 %v8356, %v8484
    %v8549 = vadd.f32 %v8357, %v8485
    %v8550 = vadd.f32 %v8358, %v8486
    %v8551 = vmax.f32 %v8487, 0.0
    %v8552 = vmax.f32 %v8488, 0.0
    %v8553 = vmax.f32 %v8489, 0.0
    %v8554 = vmax.f32 %v8490, 0.0
    %v8555 = vmax.f32 %v8491, 0.0
    %v8556 = vmax.f32 %v8492, 0.0
    %v8557 = vmax.f32 %v8493, 0.0
    %v8558 = vmax.f32 %v8494, 0.0
    %v8559 = vmax.f32 %v8495, 0.0
    %v8560 = vmax.f32 %v8496, 0.0
    %v8561 = vmax.f32 %v8497, 0.0
    %v8562 = vmax.f32 %v8498, 0.0
    %v8563 = vmax.f32 %v8499, 0.0
    %v8564 = vmax.f32 %v8500, 0.0
    %v8565 = vmax.f32 %v8501, 0.0
    %v8566 = vmax.f32 %v8502, 0.0
    %v8567 = vmax.f32 %v8503, 0.0
    %v8568 = vmax.f32 %v8504, 0.0
    %v8569 = vmax.f32 %v8505, 0.0
    %v8570 = vmax.f32 %v8506, 0.0
    %v8571 = vmax.f32 %v8507, 0.0
    %v8572 = vmax.f32 %v8508, 0.0
    %v8573 = vmax.f32 %v8509, 0.0
    %v8574 = vmax.f32 %v8510, 0.0
    %v8575 = vmax.f32 %v8511, 0.0
    %v8576 = vmax.f32 %v8512, 0.0
    %v8577 = vmax.f32 %v8513, 0.0
    %v8578 = vmax.f32 %v8514, 0.0
    %v8579 = vmax.f32 %v8515, 0.0
    %v8580 = vmax.f32 %v8516, 0.0
    %v8581 = vmax.f32 %v8517, 0.0
    %v8582 = vmax.f32 %v8518, 0.0
    %v8583 = vmax.f32 %v8519, 0.0
    %v8584 = vmax.f32 %v8520, 0.0
    %v8585 = vmax.f32 %v8521, 0.0
    %v8586 = vmax.f32 %v8522, 0.0
    %v8587 = vmax.f32 %v8523, 0.0
    %v8588 = vmax.f32 %v8524, 0.0
    %v8589 = vmax.f32 %v8525, 0.0
    %v8590 = vmax.f32 %v8526, 0.0
    %v8591 = vmax.f32 %v8527, 0.0
    %v8592 = vmax.f32 %v8528, 0.0
    %v8593 = vmax.f32 %v8529, 0.0
    %v8594 = vmax.f32 %v8530, 0.0
    %v8595 = vmax.f32 %v8531, 0.0
    %v8596 = vmax.f32 %v8532, 0.0
    %v8597 = vmax.f32 %v8533, 0.0
    %v8598 = vmax.f32 %v8534, 0.0
    %v8599 = vmax.f32 %v8535, 0.0
    %v8600 = vmax.f32 %v8536, 0.0
    %v8601 = vmax.f32 %v8537, 0.0
    %v8602 = vmax.f32 %v8538, 0.0
    %v8603 = vmax.f32 %v8539, 0.0
    %v8604 = vmax.f32 %v8540, 0.0
    %v8605 = vmax.f32 %v8541, 0.0
    %v8606 = vmax.f32 %v8542, 0.0
    %v8607 = vmax.f32 %v8543, 0.0
    %v8608 = vmax.f32 %v8544, 0.0
    %v8609 = vmax.f32 %v8545, 0.0
    %v8610 = vmax.f32 %v8546, 0.0
    %v8611 = vmax.f32 %v8547, 0.0
    %v8612 = vmax.f32 %v8548, 0.0
    %v8613 = vmax.f32 %v8549, 0.0
    %v8614 = vmax.f32 %v8550, 0.0
    %8615 = vst [vmem:[#allocation4] sm:$0xff] %v8551
    %8616 = vst [vmem:[#allocation4 + $0x8] sm:$0xff] %v8552
    %8617 = vst [vmem:[#allocation4 + $0x10] sm:$0xff] %v8553
    %8618 = vst [vmem:[#allocation4 + $0x18] sm:$0xff] %v8554
    %8619 = vst [vmem:[#allocation4 + $0x20] sm:$0xff] %v8555
    %8620 = vst [vmem:[#allocation4 + $0x28] sm:$0xff] %v8556
    %8621 = vst [vmem:[#allocation4 + $0x30] sm:$0xff] %v8557
    %8622 = vst [vmem:[#allocation4 + $0x38] sm:$0xff] %v8558
    %8623 = vst [vmem:[#allocation4 + $0x40] sm:$0xff] %v8559
    %8624 = vst [vmem:[#allocation4 + $0x48] sm:$0xff] %v8560
    %8625 = vst [vmem:[#allocation4 + $0x50] sm:$0xff] %v8561
    %8626 = vst [vmem:[#allocation4 + $0x58] sm:$0xff] %v8562
    %8627 = vst [vmem:[#allocation4 + $0x60] sm:$0xff] %v8563
    %8628 = vst [vmem:[#allocation4 + $0x68] sm:$0xff] %v8564
    %8629 = vst [vmem:[#allocation4 + $0x70] sm:$0xff] %v8565
    %8630 = vst [vmem:[#allocation4 + $0x78] sm:$0xff] %v8566
    %8631 = vst [vmem:[#allocation4 + $0x80] sm:$0xff] %v8567
    %8632 = vst [vmem:[#allocation4 + $0x88] sm:$0xff] %v8568
    %8633 = vst [vmem:[#allocation4 + $0x90] sm:$0xff] %v8569
    %8634 = vst [vmem:[#allocation4 + $0x98] sm:$0xff] %v8570
    %8635 = vst [vmem:[#allocation4 + $0xa0] sm:$0xff] %v8571
    %8636 = vst [vmem:[#allocation4 + $0xa8] sm:$0xff] %v8572
    %8637 = vst [vmem:[#allocation4 + $0xb0] sm:$0xff] %v8573
    %8638 = vst [vmem:[#allocation4 + $0xb8] sm:$0xff] %v8574
    %8639 = vst [vmem:[#allocation4 + $0xc0] sm:$0xff] %v8575
    %8640 = vst [vmem:[#allocation4 + $0xc8] sm:$0xff] %v8576
    %8641 = vst [vmem:[#allocation4 + $0xd0] sm:$0xff] %v8577
    %8642 = vst [vmem:[#allocation4 + $0xd8] sm:$0xff] %v8578
    %8643 = vst [vmem:[#allocation4 + $0xe0] sm:$0xff] %v8579
    %8644 = vst [vmem:[#allocation4 + $0xe8] sm:$0xff] %v8580
    %8645 = vst [vmem:[#allocation4 + $0xf0] sm:$0xff] %v8581
    %8646 = vst [vmem:[#allocation4 + $0xf8] sm:$0xff] %v8582
    %8647 = vst [vmem:[#allocation4 + $0x100] sm:$0xff] %v8583
    %8648 = vst [vmem:[#allocation4 + $0x108] sm:$0xff] %v8584
    %8649 = vst [vmem:[#allocation4 + $0x110] sm:$0xff] %v8585
    %8650 = vst [vmem:[#allocation4 + $0x118] sm:$0xff] %v8586
    %8651 = vst [vmem:[#allocation4 + $0x120] sm:$0xff] %v8587
    %8652 = vst [vmem:[#allocation4 + $0x128] sm:$0xff] %v8588
    %8653 = vst [vmem:[#allocation4 + $0x130] sm:$0xff] %v8589
    %8654 = vst [vmem:[#allocation4 + $0x138] sm:$0xff] %v8590
    %8655 = vst [vmem:[#allocation4 + $0x140] sm:$0xff] %v8591
    %8656 = vst [vmem:[#allocation4 + $0x148] sm:$0xff] %v8592
    %8657 = vst [vmem:[#allocation4 + $0x150] sm:$0xff] %v8593
    %8658 = vst [vmem:[#allocation4 + $0x158] sm:$0xff] %v8594
    %8659 = vst [vmem:[#allocation4 + $0x160] sm:$0xff] %v8595
    %8660 = vst [vmem:[#allocation4 + $0x168] sm:$0xff] %v8596
    %8661 = vst [vmem:[#allocation4 + $0x170] sm:$0xff] %v8597
    %8662 = vst [vmem:[#allocation4 + $0x178] sm:$0xff] %v8598
    %8663 = vst [vmem:[#allocation4 + $0x180] sm:$0xff] %v8599
    %8664 = vst [vmem:[#allocation4 + $0x188] sm:$0xff] %v8600
    %8665 = vst [vmem:[#allocation4 + $0x190] sm:$0xff] %v8601
    %8666 = vst [vmem:[#allocation4 + $0x198] sm:$0xff] %v8602
    %8667 = vst [vmem:[#allocation4 + $0x1a0] sm:$0xff] %v8603
    %8668 = vst [vmem:[#allocation4 + $0x1a8] sm:$0xff] %v8604
    %8669 = vst [vmem:[#allocation4 + $0x1b0] sm:$0xff] %v8605
    %8670 = vst [vmem:[#allocation4 + $0x1b8] sm:$0xff] %v8606
    %8671 = vst [vmem:[#allocation4 + $0x1c0] sm:$0xff] %v8607
    %8672 = vst [vmem:[#allocation4 + $0x1c8] sm:$0xff] %v8608
    %8673 = vst [vmem:[#allocation4 + $0x1d0] sm:$0xff] %v8609
    %8674 = vst [vmem:[#allocation4 + $0x1d8] sm:$0xff] %v8610
    %8675 = vst [vmem:[#allocation4 + $0x1e0] sm:$0xff] %v8611
    %8676 = vst [vmem:[#allocation4 + $0x1e8] sm:$0xff] %v8612
    %8677 = vst [vmem:[#allocation4 + $0x1f0] sm:$0xff] %v8613
    %8678 = vst [vmem:[#allocation4 + $0x1f8] sm:$0xff] %v8614
    // Predicated region
    $region30: #{tpu_custom_call.1} parent=1 // pred_check
      _
    $region31: #{tpu_custom_call.1} parent=1 // pred_check_branch
      %8680 = sbr.rel (0) target = $region33
    $region32: #{tpu_custom_call.1} parent=1 // pred_region
      %8682 = vsyncadd [#allocation5], 0
      %s8683 = sshll.u32 [#allocation4], 4
      %s8684 = int_to_ptr.vmem [resolvable:$true] %s8683
      %s8685 = sshll.u32 %s7, 4
      %s8686 = int_to_ptr.hbm [resolvable:$true] %s8685
      %8691 = dma.vmem_to_hbm [thread:$0]  %s8684, 8192, %s8686, [#allocation5], 128, 128, 8
    $region33: #{tpu_custom_call.1} parent=1 // pred_fallthru
      _
    // Predicated region
    $region34: #{tpu_custom_call.1} parent=1 // pred_check
      _
    $region35: #{tpu_custom_call.1} parent=1 // pred_check_branch
      %8693 = sbr.rel (0) target = $region37
    $region36: #{tpu_custom_call.1} parent=1 // pred_region
      %8695 = dma.done [#allocation5], 8192
    $region37: #{tpu_custom_call.1} parent=1 // pred_fallthru
      _
    %8696 = vsyncpa [#allocation5], 1

</llo_original>
